<compile_context>
chip_gen: v7x
topology: tpu7x:2x2x1
jax: 0.10.0
libtpu: 0.0.40
codegen_flags: <defaults>
</compile_context>

<pallas_src>
import math
import functools

import jax
import jax.numpy as jnp
from jax.experimental import pallas as pl
from jax.experimental.pallas import tpu as pltpu

EPS = 1e-8                       # ConditionalTransformerLayer default eps
COMPUTE_DTYPE = jnp.bfloat16     # activation / matmul operand dtype (f32 acc)


# ----------------------- generation-aware budgeting [r8,9] ------------------

def _detect_vmem_capacity():
    try:
        info_fn = getattr(pltpu, "get_tpu_info", None)
        if info_fn is not None:
            cap = getattr(info_fn(), "vmem_capacity_bytes", None)
            if cap:
                return int(cap)
    except Exception:
        pass
    return 128 * 1024 * 1024


_VMEM_CAP = _detect_vmem_capacity()
_SMALL_VMEM = _VMEM_CAP <= 80 * 1024 * 1024          # v7x-class (64 MiB)
_VMEM_LIMIT = min(max(_VMEM_CAP // 2, 32 * 1024 * 1024), 64 * 1024 * 1024)


def _tile(dim, pref, align=1):
    """Largest (8/128-aligned) divisor of `dim` that is <= pref; falls back to
    the full extent, which is always a legal block shape.  [r11]"""
    if dim <= pref:
        return dim
    c = (pref // align) * align
    while c >= align:
        if dim % c == 0:
            return c
        c -= align
    return dim      # full extent fallback (may be large for odd dims)


# --------------------------------------------------------------------------
# Generic tiled matmul (K-accumulated), optionally with a fused residual add.
# Operands are bf16 (no per-step casts [r1]); accumulation is f32.
# --------------------------------------------------------------------------

def _matmul_kernel(x_ref, w_ref, o_ref, acc_ref):
    @pl.when(pl.program_id(2) == 0)
    def _init():
        acc_ref[...] = jnp.zeros_like(acc_ref)

    acc_ref[...] += jnp.dot(x_ref[...], w_ref[...],
                            preferred_element_type=jnp.float32)

    @pl.when(pl.program_id(2) == pl.num_programs(2) - 1)
    def _fin():
        o_ref[...] = acc_ref[...].astype(o_ref.dtype)


def _matmul_res_kernel(x_ref, w_ref, r_ref, o_ref, acc_ref):
    @pl.when(pl.program_id(2) == 0)
    def _init():
        acc_ref[...] = jnp.zeros_like(acc_ref)

    acc_ref[...] += jnp.dot(x_ref[...], w_ref[...],
                            preferred_element_type=jnp.float32)

    @pl.when(pl.program_id(2) == pl.num_programs(2) - 1)
    def _fin():
        o_ref[...] = (acc_ref[...] + r_ref[...].astype(jnp.float32)).astype(o_ref.dtype)


def linear(x2d, w, residual=None, tm=None, tn=None, tk=None):
    """x2d: (M, K) bf16, w: (K, N) bf16, optional residual (M, N) fused at
    finalize.  Output is bf16 [r1]."""
    M, K = x2d.shape
    N = w.shape[1]
    if tm is None:
        tm = 256 if _SMALL_VMEM else 512         # bigger tiles on 128 MiB parts [r9]
    if tn is None:
        tn = 256
    if tk is None:
        tk = 512 if _SMALL_VMEM else 1024
    tm, tn, tk = _tile(M, tm, 8), _tile(N, tn, 128), _tile(K, tk, 128)
    # Keep at least one 'parallel' axis with extent >= 2 for dual-TC chips [r10]
    if M // tm == 1 and N // tn == 1:
        if tn % 256 == 0:
            tn //= 2
        elif tm % 16 == 0:
            tm //= 2
    grid = (M // tm, N // tn, K // tk)

    in_specs = [
        pl.BlockSpec((tm, tk), lambda i, j, k: (i, k)),
        pl.BlockSpec((tk, tn), lambda i, j, k: (k, j)),
    ]
    args = [x2d, w]
    kernel = _matmul_kernel
    if residual is not None:
        in_specs.append(pl.BlockSpec((tm, tn), lambda i, j, k: (i, j)))
        args.append(residual)
        kernel = _matmul_res_kernel

    return pl.pallas_call(
        kernel,
        out_shape=jax.ShapeDtypeStruct((M, N), COMPUTE_DTYPE),
        grid_spec=pltpu.PrefetchScalarGridSpec(
            num_scalar_prefetch=0,
            grid=grid,
            in_specs=in_specs,
            out_specs=pl.BlockSpec((tm, tn), lambda i, j, k: (i, j)),
            scratch_shapes=[pltpu.VMEM((tm, tn), jnp.float32)],
        ),
        compiler_params=pltpu.CompilerParams(
            dimension_semantics=("parallel", "parallel", "arbitrary"),
            vmem_limit_bytes=_VMEM_LIMIT),
    )(*args)


# --------------------------------------------------------------------------
# RMSNorm fused into a projection prologue.  The normalized activation is
# computed once per row tile (at j == 0) and cached in bf16 VMEM scratch [r7].
# --------------------------------------------------------------------------

def _norm_matmul_kernel(x_ref, g_ref, w_ref, o_ref, xn_ref, *, eps):
    @pl.when(pl.program_id(1) == 0)
    def _prologue():
        x = x_ref[...].astype(jnp.float32)                 # (tm, H)
        ms = jnp.mean(x * x, axis=-1, keepdims=True)
        xn_ref[...] = (x * jax.lax.rsqrt(ms + eps)
                       * g_ref[...].astype(jnp.float32)).astype(xn_ref.dtype)

    o_ref[...] = jnp.dot(xn_ref[...], w_ref[...],
                         preferred_element_type=jnp.float32).astype(o_ref.dtype)


def rmsnorm_linear(x2d, gamma, w, eps=EPS, tm=None, tn=256):
    M, H = x2d.shape
    N = w.shape[1]
    if tm is None:
        tm = 128 if _SMALL_VMEM else 256
    tm, tn = _tile(M, tm, 8), _tile(N, tn, 128)
    if M // tm == 1 and tm % 16 == 0:                      # dual-TC work [r10]
        tm //= 2
    grid = (M // tm, N // tn)
    return pl.pallas_call(
        functools.partial(_norm_matmul_kernel, eps=eps),
        out_shape=jax.ShapeDtypeStruct((M, N), COMPUTE_DTYPE),
        grid_spec=pltpu.PrefetchScalarGridSpec(
            num_scalar_prefetch=0,
            grid=grid,
            in_specs=[
                pl.BlockSpec((tm, H), lambda i, j: (i, 0)),
                pl.BlockSpec((1, H), lambda i, j: (0, 0)),
                pl.BlockSpec((H, tn), lambda i, j: (0, j)),
            ],
            out_specs=pl.BlockSpec((tm, tn), lambda i, j: (i, j)),
            scratch_shapes=[pltpu.VMEM((tm, H), COMPUTE_DTYPE)],   # cached xn [r7]
        ),
        compiler_params=pltpu.CompilerParams(
            # j must be 'arbitrary' so the cached xn (written at j == 0) is
            # valid for all j of a given i on the same core.
            dimension_semantics=("parallel", "arbitrary"),
            vmem_limit_bytes=_VMEM_LIMIT),
    )(x2d, gamma.reshape(1, -1), w)


# --------------------------------------------------------------------------
# Fused SwiGLU block: RMSNorm -> (x@w1, x@w2) -> silu(gate)*up -> @w3 (+res),
# tiled over the MLP hidden dim F with an f32 accumulator.  The normalized x
# is cached once per row tile in bf16 scratch [r7].
# --------------------------------------------------------------------------

def _swiglu_kernel(x_ref, g_ref, w1_ref, w2_ref, w3_ref, r_ref, o_ref,
                   acc_ref, xn_ref, *, eps):
    @pl.when(pl.program_id(1) == 0)
    def _init():
        acc_ref[...] = jnp.zeros_like(acc_ref)
        x = x_ref[...].astype(jnp.float32)
        ms = jnp.mean(x * x, axis=-1, keepdims=True)
        xn_ref[...] = (x * jax.lax.rsqrt(ms + eps)
                       * g_ref[...].astype(jnp.float32)).astype(xn_ref.dtype)

    xn = xn_ref[...]
    gate = jnp.dot(xn, w1_ref[...], preferred_element_type=jnp.float32)
    up = jnp.dot(xn, w2_ref[...], preferred_element_type=jnp.float32)
    h = gate * jax.nn.sigmoid(gate) * up                   # SiLU(gate) * up
    acc_ref[...] += jnp.dot(h.astype(COMPUTE_DTYPE), w3_ref[...],
                            preferred_element_type=jnp.float32)

    @pl.when(pl.program_id(1) == pl.num_programs(1) - 1)
    def _fin():
        o_ref[...] = (acc_ref[...] + r_ref[...].astype(jnp.float32)).astype(o_ref.dtype)


def swiglu_block(x2d, gamma, w1, w2, w3, residual, eps=EPS, tm=None, tf=None):
    M, H = x2d.shape
    F = w1.shape[1]
    if tm is None:
        tm = 128 if _SMALL_VMEM else 256
    if tf is None:
        tf = 256 if _SMALL_VMEM else 512                   # [r8]
    tm, tf = _tile(M, tm, 8), _tile(F, tf, 128)
    if M // tm == 1 and tm % 16 == 0:                      # dual-TC work [r10]
        tm //= 2
    grid = (M // tm, F // tf)
    return pl.pallas_call(
        functools.partial(_swiglu_kernel, eps=eps),
        out_shape=jax.ShapeDtypeStruct((M, H), COMPUTE_DTYPE),
        grid_spec=pltpu.PrefetchScalarGridSpec(
            num_scalar_prefetch=0,
            grid=grid,
            in_specs=[
                pl.BlockSpec((tm, H), lambda i, f: (i, 0)),
                pl.BlockSpec((1, H), lambda i, f: (0, 0)),
                pl.BlockSpec((H, tf), lambda i, f: (0, f)),
                pl.BlockSpec((H, tf), lambda i, f: (0, f)),
                pl.BlockSpec((tf, H), lambda i, f: (f, 0)),
                pl.BlockSpec((tm, H), lambda i, f: (i, 0)),
            ],
            out_specs=pl.BlockSpec((tm, H), lambda i, f: (i, 0)),
            scratch_shapes=[pltpu.VMEM((tm, H), jnp.float32),      # down-proj acc
                            pltpu.VMEM((tm, H), COMPUTE_DTYPE)],   # cached xn [r7]
        ),
        compiler_params=pltpu.CompilerParams(
            dimension_semantics=("parallel", "arbitrary"),
            vmem_limit_bytes=_VMEM_LIMIT),
    )(x2d, gamma.reshape(1, -1), w1, w2, w3, residual)


# --------------------------------------------------------------------------
# Fused RoPE + flash attention.
#   * grid = (batch, q-tile, kv-tile); online-softmax state lives in VMEM.
#   * q / [k|v] / output travel as lane-dense (B, S, NH*D) slabs, so no
#     host-side head split/merge transposes are needed at all      [r4, r5].
#   * RoPE = x*cos + (x @ Rblockdiag)*sin in one matmul per tensor [r3]; the
#     softmax scale is pre-folded into the q cos/sin tables; roped q is built
#     once per q tile and cached in bf16 scratch                   [r2].
#   * per-head score / PV matmuls contract the last dims directly (no k.T).
# --------------------------------------------------------------------------

def _attn_kernel(rm_ref, q_ref, kv_ref, cq_ref, sq_ref, ck_ref, sk_ref, o_ref,
                 qrot_ref, m_ref, l_ref, acc_ref, *, num_heads, head_size):
    NH, D = num_heads, head_size
    QW = NH * D
    ki = pl.program_id(2)
    rmat = rm_ref[...]                                     # (QW, QW) bf16, fetched once

    @pl.when(ki == 0)
    def _init():
        qb = q_ref[0]                                      # (tq, QW) bf16
        q_rot = jax.lax.dot_general(qb, rmat, (((1,), (0,)), ((), ())),
                                    preferred_element_type=jnp.float32)
        qr = qb.astype(jnp.float32) * cq_ref[...] + q_rot * sq_ref[...]
        qrot_ref[...] = qr.astype(qrot_ref.dtype)          # roped + pre-scaled q [r2]
        m_ref[...] = jnp.full_like(m_ref, -jnp.inf)
        l_ref[...] = jnp.zeros_like(l_ref)
        acc_ref[...] = jnp.zeros_like(acc_ref)

    kvb = kv_ref[0]                                        # (tkv, 2*QW) bf16
    kb = kvb[:, :QW]
    vb = kvb[:, QW:]
    k_rot = jax.lax.dot_general(kb, rmat, (((1,), (0,)), ((), ())),
                                preferred_element_type=jnp.float32)
    kr = (kb.astype(jnp.float32) * ck_ref[...] + k_rot * sk_ref[...]).astype(kb.dtype)

    q_all = qrot_ref[...]                                  # (tq, QW) bf16
    m_prev_all = m_ref[...]                                # (tq, NH) f32   [r12]
    l_prev_all = l_ref[...]
    m_cols, l_cols = [], []
    for h in range(NH):                                    # static unroll over heads
        sl = slice(h * D, (h + 1) * D)
        # QK^T without materializing a transpose: contract the last dims.
        s = jax.lax.dot_general(q_all[:, sl], kr[:, sl], (((1,), (1,)), ((), ())),
                                preferred_element_type=jnp.float32)   # (tq, tkv)
        m_prev = m_prev_all[:, h:h + 1]
        m_new = jnp.maximum(m_prev, jnp.max(s, axis=-1, keepdims=True))
        alpha = jnp.exp(m_prev - m_new)
        p = jnp.exp(s - m_new)
        l_new = alpha * l_prev_all[:, h:h + 1] + jnp.sum(p, axis=-1, keepdims=True)
        acc_ref[h] = alpha * acc_ref[h] + jax.lax.dot_general(
            p.astype(vb.dtype), vb[:, sl], (((1,), (0,)), ((), ())),
            preferred_element_type=jnp.float32)
        m_cols.append(m_new)
        l_cols.append(l_new)
    # full-width stores for the packed stats (no masked per-lane stores) [r12]
    m_ref[...] = jnp.concatenate(m_cols, axis=-1)
    l_ref[...] = jnp.concatenate(l_cols, axis=-1)

    @pl.when(ki == pl.num_programs(2) - 1)
    def _fin():
        inv_l = pl.reciprocal(l_ref[...], approx=True)     # (tq, NH)
        out = jnp.concatenate(
            [acc_ref[h] * inv_l[:, h:h + 1] for h in range(NH)], axis=-1)
        o_ref[0] = out.astype(o_ref.dtype)                 # one lane-dense store [r4]


def attention_core(q, kv, rmat, cos_q, sin_q, cos_k, sin_k, *,
                   num_heads, head_size, tq_pref=None, tkv_pref=512):
    """q: (B, Sq, NH*D) bf16; kv: (B, Skv, 2*NH*D) bf16 packed [k | v];
    cos/sin: (S, NH*D) f32 per-head-tiled tables (q tables pre-scaled)."""
    B, Sq, QW = q.shape
    _, Skv, KVW = kv.shape
    assert QW == num_heads * head_size and KVW == 2 * QW
    if tq_pref is None:
        tq_pref = 256 if _SMALL_VMEM else 512              # bounded q residency [r6]
    tq = _tile(Sq, tq_pref, 8)
    tkv = _tile(Skv, tkv_pref, 8)
    grid = (B, Sq // tq, Skv // tkv)
    kernel = functools.partial(_attn_kernel, num_heads=num_heads, head_size=head_size)
    return pl.pallas_call(
        kernel,
        out_shape=jax.ShapeDtypeStruct((B, Sq, QW), COMPUTE_DTYPE),
        grid_spec=pltpu.PrefetchScalarGridSpec(
            num_scalar_prefetch=0,
            grid=grid,
            in_specs=[
                pl.BlockSpec((QW, QW), lambda b, qi, ki: (0, 0)),          # rot matrix
                pl.BlockSpec((1, tq, QW), lambda b, qi, ki: (b, qi, 0)),   # q
                pl.BlockSpec((1, tkv, KVW), lambda b, qi, ki: (b, ki, 0)), # packed k|v
                pl.BlockSpec((tq, QW), lambda b, qi, ki: (qi, 0)),         # cos_q * scale
                pl.BlockSpec((tq, QW), lambda b, qi, ki: (qi, 0)),         # sin_q * scale
                pl.BlockSpec((tkv, QW), lambda b, qi, ki: (ki, 0)),        # cos_k
                pl.BlockSpec((tkv, QW), lambda b, qi, ki: (ki, 0)),        # sin_k
            ],
            out_specs=pl.BlockSpec((1, tq, QW), lambda b, qi, ki: (b, qi, 0)),
            scratch_shapes=[
                pltpu.VMEM((tq, QW), COMPUTE_DTYPE),                # roped q   [r2]
                pltpu.VMEM((tq, num_heads), jnp.float32),           # running max [r12]
                pltpu.VMEM((tq, num_heads), jnp.float32),           # running sum [r12]
                pltpu.VMEM((num_heads, tq, head_size), jnp.float32),  # per-head acc
            ],
        ),
        compiler_params=pltpu.CompilerParams(
            dimension_semantics=("parallel", "parallel", "arbitrary"),
            vmem_limit_bytes=_VMEM_LIMIT),
    )(rmat, q, kv, cos_q, sin_q, cos_k, sin_k)


# --------------------------- RoPE tables (host) -----------------------------

def rope_tables(seq_len, head_size, num_heads, freq_base):
    """Per-head-tiled (lane-dense) cos/sin tables of shape (S, NH*D)."""
    half = head_size // 2
    inv_freq = 1.0 / (freq_base ** (jnp.arange(half, dtype=jnp.float32) / half))
    pos = jnp.arange(seq_len, dtype=jnp.float32)
    ang = pos[:, None] * inv_freq[None, :]
    cos = jnp.concatenate([jnp.cos(ang), jnp.cos(ang)], axis=-1)     # (S, D)
    sin = jnp.concatenate([jnp.sin(ang), jnp.sin(ang)], axis=-1)
    return jnp.tile(cos, (1, num_heads)), jnp.tile(sin, (1, num_heads))


def packed_rotate_matrix(num_heads, head_size, dtype):
    """Block-diagonal +/-1 matrix so that (x @ R) == rotate_half(x) applied
    independently to each head's D-wide lane slice (x packed as (.., NH*D)).
    NOTE: at very large NH*D this should become per-head roll/slices; here it
    is a single cheap lane-dense MXU op."""
    D, half = head_size, head_size // 2
    W = num_heads * head_size
    rr = jnp.arange(W)[:, None]
    cc = jnp.arange(W)[None, :]
    same_head = (rr // D) == (cc // D)
    jmod = cc % D
    neg = same_head & (rr == cc + half) & (jmod < half)    # out[j]   = -x[j+half]
    pos = same_head & (rr == cc - half) & (jmod >= half)   # out[j]   =  x[j-half]
    r = jnp.where(neg, -1.0, 0.0) + jnp.where(pos, 1.0, 0.0)
    return r.astype(dtype)


# ------------------------------- Model glue --------------------------------
# All host-side reshapes below only split/merge leading dims or split the
# trailing packed dim -> no XLA transposes / extra activation HBM passes [r5].

def self_attention_block(x, lp, num_heads, head_size, rope_q, rope_k, rmat, eps):
    B, S, H = x.shape
    NHD = num_heads * head_size
    x_flat = x.reshape(B * S, H)
    # ln1 fused into both projections; wk|wv fused into one wide matmul.
    q = rmsnorm_linear(x_flat, lp["ln1_w"], lp["self_wq"], eps=eps).reshape(B, S, NHD)
    kv = rmsnorm_linear(x_flat, lp["ln1_w"], lp["self_wkv"], eps=eps).reshape(B, S, 2 * NHD)
    o = attention_core(q, kv, rmat, rope_q[0], rope_q[1], rope_k[0], rope_k[1],
                       num_heads=num_heads, head_size=head_size)
    # out-projection with the residual add fused into its epilogue.
    out = linear(o.reshape(B * S, NHD), lp["self_wo"], residual=x_flat)
    return out.reshape(B, S, H)


def cross_attention_block(x, cond, lp, num_heads, head_size, rope_q, rope_k, rmat, eps):
    B, Sq, H = x.shape
    Skv = cond.shape[1]
    NHD = num_heads * head_size
    x_flat = x.reshape(B * Sq, H)
    q = rmsnorm_linear(x_flat, lp["ln2_w"], lp["cross_wq"], eps=eps).reshape(B, Sq, NHD)
    # k/v projections act on the (un-normalized) conditioning sequence.
    kv = linear(cond.reshape(B * Skv, H), lp["cross_wkv"]).reshape(B, Skv, 2 * NHD)
    o = attention_core(q, kv, rmat, rope_q[0], rope_q[1], rope_k[0], rope_k[1],
                       num_heads=num_heads, head_size=head_size)
    out = linear(o.reshape(B * Sq, NHD), lp["cross_wo"], residual=x_flat)
    return out.reshape(B, Sq, H)


def conditional_transformer(input_embeds, cond_embeds, params, *, num_heads,
                            head_size, freq_base=10000.0, eps=EPS):
    B, S_in, H = input_embeds.shape
    S_cond = cond_embeds.shape[1]
    scale = 1.0 / math.sqrt(head_size)

    cos_in, sin_in = rope_tables(S_in, head_size, num_heads, freq_base)
    cos_cd, sin_cd = rope_tables(S_cond, head_size, num_heads, freq_base)
    rope_q = (cos_in * scale, sin_in * scale)   # softmax scale folded into q tables
    self_rope_k = (cos_in, sin_in)
    cross_rope_k = (cos_cd, sin_cd)             # fresh 0-based positions over cond
    rmat = packed_rotate_matrix(num_heads, head_size, COMPUTE_DTYPE)

    x = input_embeds.astype(COMPUTE_DTYPE)      # bf16 residual stream [r1]
    cond = cond_embeds.astype(COMPUTE_DTYPE)
    for lp in params["layers"]:
        x = self_attention_block(x, lp, num_heads, head_size,
                                 rope_q, self_rope_k, rmat, eps)
        x = cross_attention_block(x, cond, lp, num_heads, head_size,
                                  rope_q, cross_rope_k, rmat, eps)
        x_flat = x.reshape(B * S_in, H)
        x = swiglu_block(x_flat, lp["ln3_w"], lp["mlp_w1"], lp["mlp_w2"],
                         lp["mlp_w3"], x_flat, eps=eps).reshape(B, S_in, H)
    return x.astype(jnp.float32)


def init_params(key, hidden, num_heads, head_size, num_layers):
    nhd = num_heads * head_size
    f = hidden * 8 // 3                                    # SwiGLU hidden_features

    def lin(k, fan_in, fan_out):
        # Stored pre-transposed (fan_in, fan_out) and in bf16 for the MXU.
        w = jax.random.normal(k, (fan_in, fan_out), jnp.float32) / math.sqrt(fan_in)
        return w.astype(COMPUTE_DTYPE)

    layers = []
    for _ in range(num_layers):
        key, *ks = jax.random.split(key, 10)
        layers.append({
            "ln1_w": jnp.ones((hidden,), jnp.float32),
            "ln2_w": jnp.ones((hidden,), jnp.float32),
            "ln3_w": jnp.ones((hidden,), jnp.float32),
            "self_wq": lin(ks[0], hidden, nhd),
            "self_wkv": lin(ks[1], hidden, 2 * nhd),       # columns packed [wk | wv]
            "self_wo": lin(ks[2], nhd, hidden),
            "cross_wq": lin(ks[3], hidden, nhd),
            "cross_wkv": lin(ks[4], hidden, 2 * nhd),
            "cross_wo": lin(ks[5], nhd, hidden),
            "mlp_w1": lin(ks[6], hidden, f),
            "mlp_w2": lin(ks[7], hidden, f),
            "mlp_w3": lin(ks[8], f, hidden),
        })
    return {"layers": layers}


if __name__ == "__main__":
    B, S_in, S_cond = 2, 8, 12
    hidden, num_heads, head_size, num_layers = 32, 4, 8, 2

    key = jax.random.PRNGKey(0)
    kx, kc, kp = jax.random.split(key, 3)
    input_embeds = jax.random.normal(kx, (B, S_in, hidden), jnp.float32)
    cond_embeds = jax.random.normal(kc, (B, S_cond, hidden), jnp.float32)
    params = init_params(kp, hidden, num_heads, head_size, num_layers)

    fwd = jax.jit(functools.partial(conditional_transformer,
                                    num_heads=num_heads, head_size=head_size))
    out = fwd(input_embeds, cond_embeds, params)
    jax.block_until_ready(out)
    assert out.shape == (B, S_in, hidden)
    assert bool(jnp.all(jnp.isfinite(out)))
    print("KERNEL_OK")
</pallas_src>

<mosaic_0001>
module attributes {stable_mosaic.version = 11 : i64} {
  func.func @_norm_matmul_kernel(%arg0: i32, %arg1: i32, %arg2: memref<8x32xbf16, #tpu.memory_space<vmem>>, %arg3: memref<1x32xf32, #tpu.memory_space<vmem>>, %arg4: memref<32x64xbf16, #tpu.memory_space<vmem>>, %arg5: memref<8x64xbf16, #tpu.memory_space<vmem>>, %arg6: memref<8x32xbf16, #tpu.memory_space<vmem>>) attributes {dimension_semantics = [#tpu.dimension_semantics<parallel>, #tpu.dimension_semantics<arbitrary>], iteration_bounds = array<i64: 2, 1>, scalar_prefetch = 0 : i64, scratch_operands = 1 : i64, tpu.core_type = #tpu.core_type<tc>, window_params = [{transform_indices = @transform_0, window_bounds = array<i64: 8, 32>}, {pipeline_mode = #tpu.pipeline_mode<synchronous>, transform_indices = @transform_1, window_bounds = array<i64: 1, 32>}, {transform_indices = @transform_2, window_bounds = array<i64: 32, 64>}, {transform_indices = @transform_3, window_bounds = array<i64: 8, 64>}]} {
    %c0_i32 = arith.constant 0 : i32
    %0 = arith.cmpi eq, %arg1, %c0_i32 : i32
    %1 = arith.extui %0 : i1 to i32
    %c0_i32_0 = arith.constant 0 : i32
    %2 = arith.cmpi ne, %1, %c0_i32_0 : i32
    scf.if %2 {
      %c0_6 = arith.constant 0 : index
      %c0_7 = arith.constant 0 : index
      %8 = vector.load %arg2[%c0_6, %c0_7] : memref<8x32xbf16, #tpu.memory_space<vmem>>, vector<8x32xbf16>
      %9 = arith.extf %8 : vector<8x32xbf16> to vector<8x32xf32>
      %10 = arith.mulf %9, %9 : vector<8x32xf32>
      %cst_8 = arith.constant dense<0.000000e+00> : vector<8xf32>
      %11 = vector.multi_reduction <add>, %10, %cst_8 [1] : vector<8x32xf32> to vector<8xf32>
      %12 = vector.shape_cast %11 : vector<8xf32> to vector<8x1xf32>
      %cst_9 = arith.constant 3.200000e+01 : f32
      %13 = vector.broadcast %cst_9 : f32 to vector<8x1xf32>
      %14 = arith.divf %12, %13 : vector<8x1xf32>
      %cst_10 = arith.constant 9.99999993E-9 : f32
      %15 = vector.broadcast %cst_10 : f32 to vector<8x1xf32>
      %16 = arith.addf %14, %15 : vector<8x1xf32>
      %17 = math.rsqrt %16 : vector<8x1xf32>
      %18 = vector.broadcast %17 : vector<8x1xf32> to vector<8x32xf32>
      %19 = arith.mulf %9, %18 : vector<8x32xf32>
      %c0_11 = arith.constant 0 : index
      %c0_12 = arith.constant 0 : index
      %20 = vector.load %arg3[%c0_11, %c0_12] : memref<1x32xf32, #tpu.memory_space<vmem>>, vector<1x32xf32>
      %21 = vector.broadcast %20 : vector<1x32xf32> to vector<8x32xf32>
      %22 = arith.mulf %19, %21 : vector<8x32xf32>
      %23 = arith.truncf %22 : vector<8x32xf32> to vector<8x32xbf16>
      %c0_13 = arith.constant 0 : index
      %c0_14 = arith.constant 0 : index
      %24 = vector.load %arg6[%c0_13, %c0_14] : memref<8x32xbf16, #tpu.memory_space<vmem>>, vector<8x32xbf16>
      tpu.vector_store %arg6[%c0_13, %c0_14], %23 {strides = array<i32>} : memref<8x32xbf16, #tpu.memory_space<vmem>>, vector<8x32xbf16>,
    } else {
    }
    %c0 = arith.constant 0 : index
    %c0_1 = arith.constant 0 : index
    %3 = vector.load %arg6[%c0, %c0_1] : memref<8x32xbf16, #tpu.memory_space<vmem>>, vector<8x32xbf16>
    %c0_2 = arith.constant 0 : index
    %c0_3 = arith.constant 0 : index
    %4 = vector.load %arg4[%c0_2, %c0_3] : memref<32x64xbf16, #tpu.memory_space<vmem>>, vector<32x64xbf16>
    %cst = arith.constant dense<0.000000e+00> : vector<8x64xf32>
    %5 = tpu.matmul %3, %4, %cst {dimension_numbers = #tpu.dot_dimension_numbers<[1], [0], [0], [1], [0, 0, 1, 1], [], []>} : vector<8x32xbf16>, vector<32x64xbf16>, vector<8x64xf32> -> vector<8x64xf32>
    %6 = arith.truncf %5 : vector<8x64xf32> to vector<8x64xbf16>
    %c0_4 = arith.constant 0 : index
    %c0_5 = arith.constant 0 : index
    %7 = vector.load %arg5[%c0_4, %c0_5] : memref<8x64xbf16, #tpu.memory_space<vmem>>, vector<8x64xbf16>
    tpu.vector_store %arg5[%c0_4, %c0_5], %6 {strides = array<i32>} : memref<8x64xbf16, #tpu.memory_space<vmem>>, vector<8x64xbf16>,
    return
  }
  func.func @transform_0(%arg0: i32, %arg1: i32) -> (i32, i32) {
    %c0_i32 = arith.constant 0 : i32
    %c0_i32_0 = arith.constant 0 : i32
    return %arg0, %c0_i32 : i32, i32
  }
  func.func @transform_1(%arg0: i32, %arg1: i32) -> (i32, i32) {
    %c0_i32 = arith.constant 0 : i32
    %c0_i32_0 = arith.constant 0 : i32
    %c0_i32_1 = arith.constant 0 : i32
    return %c0_i32, %c0_i32_0 : i32, i32
  }
  func.func @transform_2(%arg0: i32, %arg1: i32) -> (i32, i32) {
    %c0_i32 = arith.constant 0 : i32
    %c0_i32_0 = arith.constant 0 : i32
    return %c0_i32, %arg1 : i32, i32
  }
  func.func @transform_3(%arg0: i32, %arg1: i32) -> (i32, i32) {
    %c0_i32 = arith.constant 0 : i32
    return %arg0, %arg1 : i32, i32
  }
}

module attributes {stable_mosaic.version = 11 : i64} {
  func.func @_norm_matmul_kernel(%arg0: i32, %arg1: i32, %arg2: memref<8x32xbf16, #tpu.memory_space<vmem>>, %arg3: memref<1x32xf32, #tpu.memory_space<vmem>>, %arg4: memref<32x32xbf16, #tpu.memory_space<vmem>>, %arg5: memref<8x32xbf16, #tpu.memory_space<vmem>>, %arg6: memref<8x32xbf16, #tpu.memory_space<vmem>>) attributes {dimension_semantics = [#tpu.dimension_semantics<parallel>, #tpu.dimension_semantics<arbitrary>], iteration_bounds = array<i64: 2, 1>, scalar_prefetch = 0 : i64, scratch_operands = 1 : i64, tpu.core_type = #tpu.core_type<tc>, window_params = [{transform_indices = @transform_0, window_bounds = array<i64: 8, 32>}, {pipeline_mode = #tpu.pipeline_mode<synchronous>, transform_indices = @transform_1, window_bounds = array<i64: 1, 32>}, {transform_indices = @transform_2, window_bounds = array<i64: 32, 32>}, {transform_indices = @transform_3, window_bounds = array<i64: 8, 32>}]} {
    %c0_i32 = arith.constant 0 : i32
    %0 = arith.cmpi eq, %arg1, %c0_i32 : i32
    %1 = arith.extui %0 : i1 to i32
    %c0_i32_0 = arith.constant 0 : i32
    %2 = arith.cmpi ne, %1, %c0_i32_0 : i32
    scf.if %2 {
      %c0_6 = arith.constant 0 : index
      %c0_7 = arith.constant 0 : index
      %8 = vector.load %arg2[%c0_6, %c0_7] : memref<8x32xbf16, #tpu.memory_space<vmem>>, vector<8x32xbf16>
      %9 = arith.extf %8 : vector<8x32xbf16> to vector<8x32xf32>
      %10 = arith.mulf %9, %9 : vector<8x32xf32>
      %cst_8 = arith.constant dense<0.000000e+00> : vector<8xf32>
      %11 = vector.multi_reduction <add>, %10, %cst_8 [1] : vector<8x32xf32> to vector<8xf32>
      %12 = vector.shape_cast %11 : vector<8xf32> to vector<8x1xf32>
      %cst_9 = arith.constant 3.200000e+01 : f32
      %13 = vector.broadcast %cst_9 : f32 to vector<8x1xf32>
      %14 = arith.divf %12, %13 : vector<8x1xf32>
      %cst_10 = arith.constant 9.99999993E-9 : f32
      %15 = vector.broadcast %cst_10 : f32 to vector<8x1xf32>
      %16 = arith.addf %14, %15 : vector<8x1xf32>
      %17 = math.rsqrt %16 : vector<8x1xf32>
      %18 = vector.broadcast %17 : vector<8x1xf32> to vector<8x32xf32>
      %19 = arith.mulf %9, %18 : vector<8x32xf32>
      %c0_11 = arith.constant 0 : index
      %c0_12 = arith.constant 0 : index
      %20 = vector.load %arg3[%c0_11, %c0_12] : memref<1x32xf32, #tpu.memory_space<vmem>>, vector<1x32xf32>
      %21 = vector.broadcast %20 : vector<1x32xf32> to vector<8x32xf32>
      %22 = arith.mulf %19, %21 : vector<8x32xf32>
      %23 = arith.truncf %22 : vector<8x32xf32> to vector<8x32xbf16>
      %c0_13 = arith.constant 0 : index
      %c0_14 = arith.constant 0 : index
      %24 = vector.load %arg6[%c0_13, %c0_14] : memref<8x32xbf16, #tpu.memory_space<vmem>>, vector<8x32xbf16>
      tpu.vector_store %arg6[%c0_13, %c0_14], %23 {strides = array<i32>} : memref<8x32xbf16, #tpu.memory_space<vmem>>, vector<8x32xbf16>,
    } else {
    }
    %c0 = arith.constant 0 : index
    %c0_1 = arith.constant 0 : index
    %3 = vector.load %arg6[%c0, %c0_1] : memref<8x32xbf16, #tpu.memory_space<vmem>>, vector<8x32xbf16>
    %c0_2 = arith.constant 0 : index
    %c0_3 = arith.constant 0 : index
    %4 = vector.load %arg4[%c0_2, %c0_3] : memref<32x32xbf16, #tpu.memory_space<vmem>>, vector<32x32xbf16>
    %cst = arith.constant dense<0.000000e+00> : vector<8x32xf32>
    %5 = tpu.matmul %3, %4, %cst {dimension_numbers = #tpu.dot_dimension_numbers<[1], [0], [0], [1], [0, 0, 1, 1], [], []>} : vector<8x32xbf16>, vector<32x32xbf16>, vector<8x32xf32> -> vector<8x32xf32>
    %6 = arith.truncf %5 : vector<8x32xf32> to vector<8x32xbf16>
    %c0_4 = arith.constant 0 : index
    %c0_5 = arith.constant 0 : index
    %7 = vector.load %arg5[%c0_4, %c0_5] : memref<8x32xbf16, #tpu.memory_space<vmem>>, vector<8x32xbf16>
    tpu.vector_store %arg5[%c0_4, %c0_5], %6 {strides = array<i32>} : memref<8x32xbf16, #tpu.memory_space<vmem>>, vector<8x32xbf16>,
    return
  }
  func.func @transform_0(%arg0: i32, %arg1: i32) -> (i32, i32) {
    %c0_i32 = arith.constant 0 : i32
    %c0_i32_0 = arith.constant 0 : i32
    return %arg0, %c0_i32 : i32, i32
  }
  func.func @transform_1(%arg0: i32, %arg1: i32) -> (i32, i32) {
    %c0_i32 = arith.constant 0 : i32
    %c0_i32_0 = arith.constant 0 : i32
    %c0_i32_1 = arith.constant 0 : i32
    return %c0_i32, %c0_i32_0 : i32, i32
  }
  func.func @transform_2(%arg0: i32, %arg1: i32) -> (i32, i32) {
    %c0_i32 = arith.constant 0 : i32
    %c0_i32_0 = arith.constant 0 : i32
    return %c0_i32, %arg1 : i32, i32
  }
  func.func @transform_3(%arg0: i32, %arg1: i32) -> (i32, i32) {
    %c0_i32 = arith.constant 0 : i32
    return %arg0, %arg1 : i32, i32
  }
}

module attributes {stable_mosaic.version = 11 : i64} {
  func.func @_matmul_res_kernel(%arg0: i32, %arg1: i32, %arg2: i32, %arg3: memref<8x32xbf16, #tpu.memory_space<vmem>>, %arg4: memref<32x32xbf16, #tpu.memory_space<vmem>>, %arg5: memref<8x32xbf16, #tpu.memory_space<vmem>>, %arg6: memref<8x32xbf16, #tpu.memory_space<vmem>>, %arg7: memref<8x32xf32, #tpu.memory_space<vmem>>) attributes {dimension_semantics = [#tpu.dimension_semantics<parallel>, #tpu.dimension_semantics<parallel>, #tpu.dimension_semantics<arbitrary>], iteration_bounds = array<i64: 2, 1, 1>, scalar_prefetch = 0 : i64, scratch_operands = 1 : i64, tpu.core_type = #tpu.core_type<tc>, window_params = [{transform_indices = @transform_0, window_bounds = array<i64: 8, 32>}, {transform_indices = @transform_1, window_bounds = array<i64: 32, 32>}, {transform_indices = @transform_2, window_bounds = array<i64: 8, 32>}, {transform_indices = @transform_3, window_bounds = array<i64: 8, 32>}]} {
    %c0_i32 = arith.constant 0 : i32
    %0 = arith.cmpi eq, %arg2, %c0_i32 : i32
    %1 = arith.extui %0 : i1 to i32
    %c0_i32_0 = arith.constant 0 : i32
    %2 = arith.cmpi ne, %1, %c0_i32_0 : i32
    scf.if %2 {
      %cst_10 = arith.constant 0.000000e+00 : f32
      %12 = vector.broadcast %cst_10 : f32 to vector<8x32xf32>
      %c0_11 = arith.constant 0 : index
      %c0_12 = arith.constant 0 : index
      %13 = vector.load %arg7[%c0_11, %c0_12] : memref<8x32xf32, #tpu.memory_space<vmem>>, vector<8x32xf32>
      tpu.vector_store %arg7[%c0_11, %c0_12], %12 {strides = array<i32>} : memref<8x32xf32, #tpu.memory_space<vmem>>, vector<8x32xf32>,
    } else {
    }
    %c0 = arith.constant 0 : index
    %c0_1 = arith.constant 0 : index
    %3 = vector.load %arg7[%c0, %c0_1] : memref<8x32xf32, #tpu.memory_space<vmem>>, vector<8x32xf32>
    %c0_2 = arith.constant 0 : index
    %c0_3 = arith.constant 0 : index
    %4 = vector.load %arg3[%c0_2, %c0_3] : memref<8x32xbf16, #tpu.memory_space<vmem>>, vector<8x32xbf16>
    %c0_4 = arith.constant 0 : index
    %c0_5 = arith.constant 0 : index
    %5 = vector.load %arg4[%c0_4, %c0_5] : memref<32x32xbf16, #tpu.memory_space<vmem>>, vector<32x32xbf16>
    %cst = arith.constant dense<0.000000e+00> : vector<8x32xf32>
    %6 = tpu.matmul %4, %5, %cst {dimension_numbers = #tpu.dot_dimension_numbers<[1], [0], [0], [1], [0, 0, 1, 1], [], []>} : vector<8x32xbf16>, vector<32x32xbf16>, vector<8x32xf32> -> vector<8x32xf32>
    %7 = arith.addf %3, %6 : vector<8x32xf32>
    %c0_6 = arith.constant 0 : index
    %c0_7 = arith.constant 0 : index
    %8 = vector.load %arg7[%c0_6, %c0_7] : memref<8x32xf32, #tpu.memory_space<vmem>>, vector<8x32xf32>
    tpu.vector_store %arg7[%c0_6, %c0_7], %7 {strides = array<i32>} : memref<8x32xf32, #tpu.memory_space<vmem>>, vector<8x32xf32>,
    %c0_i32_8 = arith.constant 0 : i32
    %9 = arith.cmpi eq, %arg2, %c0_i32_8 : i32
    %10 = arith.extui %9 : i1 to i32
    %c0_i32_9 = arith.constant 0 : i32
    %11 = arith.cmpi ne, %10, %c0_i32_9 : i32
    scf.if %11 {
      %c0_10 = arith.constant 0 : index
      %c0_11 = arith.constant 0 : index
      %12 = vector.load %arg7[%c0_10, %c0_11] : memref<8x32xf32, #tpu.memory_space<vmem>>, vector<8x32xf32>
      %c0_12 = arith.constant 0 : index
      %c0_13 = arith.constant 0 : index
      %13 = vector.load %arg5[%c0_12, %c0_13] : memref<8x32xbf16, #tpu.memory_space<vmem>>, vector<8x32xbf16>
      %14 = arith.extf %13 : vector<8x32xbf16> to vector<8x32xf32>
      %15 = arith.addf %12, %14 : vector<8x32xf32>
      %16 = arith.truncf %15 : vector<8x32xf32> to vector<8x32xbf16>
      %c0_14 = arith.constant 0 : index
      %c0_15 = arith.constant 0 : index
      %17 = vector.load %arg6[%c0_14, %c0_15] : memref<8x32xbf16, #tpu.memory_space<vmem>>, vector<8x32xbf16>
      tpu.vector_store %arg6[%c0_14, %c0_15], %16 {strides = array<i32>} : memref<8x32xbf16, #tpu.memory_space<vmem>>, vector<8x32xbf16>,
    } else {
    }
    return
  }
  func.func @transform_0(%arg0: i32, %arg1: i32, %arg2: i32) -> (i32, i32) {
    %c0_i32 = arith.constant 0 : i32
    return %arg0, %arg2 : i32, i32
  }
  func.func @transform_1(%arg0: i32, %arg1: i32, %arg2: i32) -> (i32, i32) {
    %c0_i32 = arith.constant 0 : i32
    return %arg2, %arg1 : i32, i32
  }
  func.func @transform_2(%arg0: i32, %arg1: i32, %arg2: i32) -> (i32, i32) {
    %c0_i32 = arith.constant 0 : i32
    return %arg0, %arg1 : i32, i32
  }
  func.func @transform_3(%arg0: i32, %arg1: i32, %arg2: i32) -> (i32, i32) {
    %c0_i32 = arith.constant 0 : i32
    return %arg0, %arg1 : i32, i32
  }
}

module attributes {stable_mosaic.version = 11 : i64} {
  func.func @_attn_kernel(%arg0: i32, %arg1: i32, %arg2: i32, %arg3: memref<32x32xbf16, #tpu.memory_space<vmem>>, %arg4: memref<1x8x32xbf16, #tpu.memory_space<vmem>>, %arg5: memref<1x8x64xbf16, #tpu.memory_space<vmem>>, %arg6: memref<8x32xf32, #tpu.memory_space<vmem>>, %arg7: memref<8x32xf32, #tpu.memory_space<vmem>>, %arg8: memref<8x32xf32, #tpu.memory_space<vmem>>, %arg9: memref<8x32xf32, #tpu.memory_space<vmem>>, %arg10: memref<1x8x32xbf16, #tpu.memory_space<vmem>>, %arg11: memref<8x32xbf16, #tpu.memory_space<vmem>>, %arg12: memref<8x4xf32, #tpu.memory_space<vmem>>, %arg13: memref<8x4xf32, #tpu.memory_space<vmem>>, %arg14: memref<4x8x8xf32, #tpu.memory_space<vmem>>) attributes {dimension_semantics = [#tpu.dimension_semantics<parallel>, #tpu.dimension_semantics<parallel>, #tpu.dimension_semantics<arbitrary>], iteration_bounds = array<i64: 2, 1, 1>, scalar_prefetch = 0 : i64, scratch_operands = 4 : i64, tpu.core_type = #tpu.core_type<tc>, window_params = [{pipeline_mode = #tpu.pipeline_mode<synchronous>, transform_indices = @transform_0, window_bounds = array<i64: 32, 32>}, {transform_indices = @transform_1, window_bounds = array<i64: 1, 8, 32>}, {transform_indices = @transform_2, window_bounds = array<i64: 1, 8, 64>}, {transform_indices = @transform_3, window_bounds = array<i64: 8, 32>}, {transform_indices = @transform_4, window_bounds = array<i64: 8, 32>}, {transform_indices = @transform_5, window_bounds = array<i64: 8, 32>}, {transform_indices = @transform_6, window_bounds = array<i64: 8, 32>}, {transform_indices = @transform_7, window_bounds = array<i64: 1, 8, 32>}]} {
    %c0 = arith.constant 0 : index
    %c0_0 = arith.constant 0 : index
    %0 = vector.load %arg3[%c0, %c0_0] : memref<32x32xbf16, #tpu.memory_space<vmem>>, vector<32x32xbf16>
    %c0_i32 = arith.constant 0 : i32
    %1 = arith.cmpi eq, %arg2, %c0_i32 : i32
    %2 = arith.extui %1 : i1 to i32
    %c0_i32_1 = arith.constant 0 : i32
    %3 = arith.cmpi ne, %2, %c0_i32_1 : i32
    scf.if %3 {
      %c0_58 = arith.constant 0 : index
      %c0_59 = arith.constant 0 : index
      %c0_60 = arith.constant 0 : index
      %138 = vector.load %arg4[%c0_58, %c0_59, %c0_60] : memref<1x8x32xbf16, #tpu.memory_space<vmem>>, vector<1x8x32xbf16>
      %139 = vector.shape_cast %138 : vector<1x8x32xbf16> to vector<8x32xbf16>
      %cst_61 = arith.constant dense<0.000000e+00> : vector<8x32xf32>
      %140 = tpu.matmul %139, %0, %cst_61 {dimension_numbers = #tpu.dot_dimension_numbers<[1], [0], [0], [1], [0, 0, 1, 1], [], []>} : vector<8x32xbf16>, vector<32x32xbf16>, vector<8x32xf32> -> vector<8x32xf32>
      %141 = arith.extf %139 : vector<8x32xbf16> to vector<8x32xf32>
      %c0_62 = arith.constant 0 : index
      %c0_63 = arith.constant 0 : index
      %142 = vector.load %arg6[%c0_62, %c0_63] : memref<8x32xf32, #tpu.memory_space<vmem>>, vector<8x32xf32>
      %143 = arith.mulf %141, %142 : vector<8x32xf32>
      %c0_64 = arith.constant 0 : index
      %c0_65 = arith.constant 0 : index
      %144 = vector.load %arg7[%c0_64, %c0_65] : memref<8x32xf32, #tpu.memory_space<vmem>>, vector<8x32xf32>
      %145 = arith.mulf %140, %144 : vector<8x32xf32>
      %146 = arith.addf %143, %145 : vector<8x32xf32>
      %147 = arith.truncf %146 : vector<8x32xf32> to vector<8x32xbf16>
      %c0_66 = arith.constant 0 : index
      %c0_67 = arith.constant 0 : index
      %148 = vector.load %arg11[%c0_66, %c0_67] : memref<8x32xbf16, #tpu.memory_space<vmem>>, vector<8x32xbf16>
      tpu.vector_store %arg11[%c0_66, %c0_67], %147 {strides = array<i32>} : memref<8x32xbf16, #tpu.memory_space<vmem>>, vector<8x32xbf16>,
      %cst_68 = arith.constant 0xFF800000 : f32
      %149 = vector.broadcast %cst_68 : f32 to vector<8x4xf32>
      %c0_69 = arith.constant 0 : index
      %c0_70 = arith.constant 0 : index
      %150 = vector.load %arg12[%c0_69, %c0_70] : memref<8x4xf32, #tpu.memory_space<vmem>>, vector<8x4xf32>
      tpu.vector_store %arg12[%c0_69, %c0_70], %149 {strides = array<i32>} : memref<8x4xf32, #tpu.memory_space<vmem>>, vector<8x4xf32>,
      %cst_71 = arith.constant 0.000000e+00 : f32
      %151 = vector.broadcast %cst_71 : f32 to vector<8x4xf32>
      %c0_72 = arith.constant 0 : index
      %c0_73 = arith.constant 0 : index
      %152 = vector.load %arg13[%c0_72, %c0_73] : memref<8x4xf32, #tpu.memory_space<vmem>>, vector<8x4xf32>
      tpu.vector_store %arg13[%c0_72, %c0_73], %151 {strides = array<i32>} : memref<8x4xf32, #tpu.memory_space<vmem>>, vector<8x4xf32>,
      %cst_74 = arith.constant 0.000000e+00 : f32
      %153 = vector.broadcast %cst_74 : f32 to vector<4x8x8xf32>
      %c0_75 = arith.constant 0 : index
      %c0_76 = arith.constant 0 : index
      %c0_77 = arith.constant 0 : index
      %154 = vector.load %arg14[%c0_75, %c0_76, %c0_77] : memref<4x8x8xf32, #tpu.memory_space<vmem>>, vector<4x8x8xf32>
      tpu.vector_store %arg14[%c0_75, %c0_76, %c0_77], %153 {strides = array<i32>} : memref<4x8x8xf32, #tpu.memory_space<vmem>>, vector<4x8x8xf32>,
    } else {
    }
    %c0_2 = arith.constant 0 : index
    %c0_3 = arith.constant 0 : index
    %c0_4 = arith.constant 0 : index
    %4 = vector.load %arg5[%c0_2, %c0_3, %c0_4] : memref<1x8x64xbf16, #tpu.memory_space<vmem>>, vector<1x8x64xbf16>
    %5 = vector.shape_cast %4 : vector<1x8x64xbf16> to vector<8x64xbf16>
    %6 = vector.extract_strided_slice %5 {offsets = [0, 0], sizes = [8, 32], strides = [1, 1]} : vector<8x64xbf16> to vector<8x32xbf16>
    %7 = vector.extract_strided_slice %5 {offsets = [0, 32], sizes = [8, 32], strides = [1, 1]} : vector<8x64xbf16> to vector<8x32xbf16>
    %cst = arith.constant dense<0.000000e+00> : vector<8x32xf32>
    %8 = tpu.matmul %6, %0, %cst {dimension_numbers = #tpu.dot_dimension_numbers<[1], [0], [0], [1], [0, 0, 1, 1], [], []>} : vector<8x32xbf16>, vector<32x32xbf16>, vector<8x32xf32> -> vector<8x32xf32>
    %9 = arith.extf %6 : vector<8x32xbf16> to vector<8x32xf32>
    %c0_5 = arith.constant 0 : index
    %c0_6 = arith.constant 0 : index
    %10 = vector.load %arg8[%c0_5, %c0_6] : memref<8x32xf32, #tpu.memory_space<vmem>>, vector<8x32xf32>
    %11 = arith.mulf %9, %10 : vector<8x32xf32>
    %c0_7 = arith.constant 0 : index
    %c0_8 = arith.constant 0 : index
    %12 = vector.load %arg9[%c0_7, %c0_8] : memref<8x32xf32, #tpu.memory_space<vmem>>, vector<8x32xf32>
    %13 = arith.mulf %8, %12 : vector<8x32xf32>
    %14 = arith.addf %11, %13 : vector<8x32xf32>
    %15 = arith.truncf %14 : vector<8x32xf32> to vector<8x32xbf16>
    %c0_9 = arith.constant 0 : index
    %c0_10 = arith.constant 0 : index
    %16 = vector.load %arg11[%c0_9, %c0_10] : memref<8x32xbf16, #tpu.memory_space<vmem>>, vector<8x32xbf16>
    %c0_11 = arith.constant 0 : index
    %c0_12 = arith.constant 0 : index
    %17 = vector.load %arg12[%c0_11, %c0_12] : memref<8x4xf32, #tpu.memory_space<vmem>>, vector<8x4xf32>
    %c0_13 = arith.constant 0 : index
    %c0_14 = arith.constant 0 : index
    %18 = vector.load %arg13[%c0_13, %c0_14] : memref<8x4xf32, #tpu.memory_space<vmem>>, vector<8x4xf32>
    %19 = vector.extract_strided_slice %16 {offsets = [0, 0], sizes = [8, 8], strides = [1, 1]} : vector<8x32xbf16> to vector<8x8xbf16>
    %20 = vector.extract_strided_slice %15 {offsets = [0, 0], sizes = [8, 8], strides = [1, 1]} : vector<8x32xbf16> to vector<8x8xbf16>
    %cst_15 = arith.constant dense<0.000000e+00> : vector<8x8xf32>
    %21 = tpu.matmul %19, %20, %cst_15 {dimension_numbers = #tpu.dot_dimension_numbers<[1], [1], [0], [0], [0, 0, 1, 0], [], []>} : vector<8x8xbf16>, vector<8x8xbf16>, vector<8x8xf32> -> vector<8x8xf32>
    %22 = vector.extract_strided_slice %17 {offsets = [0, 0], sizes = [8, 1], strides = [1, 1]} : vector<8x4xf32> to vector<8x1xf32>
    %cst_16 = arith.constant dense<0xFF800000> : vector<8xf32>
    %23 = vector.multi_reduction <maximumf>, %21, %cst_16 [1] : vector<8x8xf32> to vector<8xf32>
    %24 = vector.shape_cast %23 : vector<8xf32> to vector<8x1xf32>
    %25 = arith.maximumf %22, %24 : vector<8x1xf32>
    %26 = arith.subf %22, %25 : vector<8x1xf32>
    %27 = math.exp %26 : vector<8x1xf32>
    %28 = vector.broadcast %25 : vector<8x1xf32> to vector<8x8xf32>
    %29 = arith.subf %21, %28 : vector<8x8xf32>
    %30 = math.exp %29 : vector<8x8xf32>
    %31 = vector.extract_strided_slice %18 {offsets = [0, 0], sizes = [8, 1], strides = [1, 1]} : vector<8x4xf32> to vector<8x1xf32>
    %32 = arith.mulf %27, %31 : vector<8x1xf32>
    %cst_17 = arith.constant dense<0.000000e+00> : vector<8xf32>
    %33 = vector.multi_reduction <add>, %30, %cst_17 [1] : vector<8x8xf32> to vector<8xf32>
    %34 = vector.shape_cast %33 : vector<8xf32> to vector<8x1xf32>
    %35 = arith.addf %32, %34 : vector<8x1xf32>
    %c0_18 = arith.constant 0 : index
    %c0_19 = arith.constant 0 : index
    %c0_20 = arith.constant 0 : index
    %36 = vector.load %arg14[%c0_18, %c0_19, %c0_20] : memref<4x8x8xf32, #tpu.memory_space<vmem>>, vector<1x8x8xf32>
    %37 = vector.shape_cast %36 : vector<1x8x8xf32> to vector<8x8xf32>
    %38 = vector.broadcast %27 : vector<8x1xf32> to vector<8x8xf32>
    %39 = arith.mulf %38, %37 : vector<8x8xf32>
    %40 = arith.truncf %30 : vector<8x8xf32> to vector<8x8xbf16>
    %41 = vector.extract_strided_slice %7 {offsets = [0, 0], sizes = [8, 8], strides = [1, 1]} : vector<8x32xbf16> to vector<8x8xbf16>
    %cst_21 = arith.constant dense<0.000000e+00> : vector<8x8xf32>
    %42 = tpu.matmul %40, %41, %cst_21 {dimension_numbers = #tpu.dot_dimension_numbers<[1], [0], [0], [1], [0, 0, 1, 1], [], []>} : vector<8x8xbf16>, vector<8x8xbf16>, vector<8x8xf32> -> vector<8x8xf32>
    %43 = arith.addf %39, %42 : vector<8x8xf32>
    %c0_22 = arith.constant 0 : index
    %c0_23 = arith.constant 0 : index
    %c0_24 = arith.constant 0 : index
    %44 = vector.load %arg14[%c0_22, %c0_23, %c0_24] : memref<4x8x8xf32, #tpu.memory_space<vmem>>, vector<1x8x8xf32>
    %45 = vector.shape_cast %44 : vector<1x8x8xf32> to vector<8x8xf32>
    %46 = vector.shape_cast %43 : vector<8x8xf32> to vector<1x8x8xf32>
    tpu.vector_store %arg14[%c0_22, %c0_23, %c0_24], %46 {strides = array<i32>} : memref<4x8x8xf32, #tpu.memory_space<vmem>>, vector<1x8x8xf32>,
    %47 = vector.extract_strided_slice %16 {offsets = [0, 8], sizes = [8, 8], strides = [1, 1]} : vector<8x32xbf16> to vector<8x8xbf16>
    %48 = vector.extract_strided_slice %15 {offsets = [0, 8], sizes = [8, 8], strides = [1, 1]} : vector<8x32xbf16> to vector<8x8xbf16>
    %cst_25 = arith.constant dense<0.000000e+00> : vector<8x8xf32>
    %49 = tpu.matmul %47, %48, %cst_25 {dimension_numbers = #tpu.dot_dimension_numbers<[1], [1], [0], [0], [0, 0, 1, 0], [], []>} : vector<8x8xbf16>, vector<8x8xbf16>, vector<8x8xf32> -> vector<8x8xf32>
    %50 = vector.extract_strided_slice %17 {offsets = [0, 1], sizes = [8, 1], strides = [1, 1]} : vector<8x4xf32> to vector<8x1xf32>
    %cst_26 = arith.constant dense<0xFF800000> : vector<8xf32>
    %51 = vector.multi_reduction <maximumf>, %49, %cst_26 [1] : vector<8x8xf32> to vector<8xf32>
    %52 = vector.shape_cast %51 : vector<8xf32> to vector<8x1xf32>
    %53 = arith.maximumf %50, %52 : vector<8x1xf32>
    %54 = arith.subf %50, %53 : vector<8x1xf32>
    %55 = math.exp %54 : vector<8x1xf32>
    %56 = vector.broadcast %53 : vector<8x1xf32> to vector<8x8xf32>
    %57 = arith.subf %49, %56 : vector<8x8xf32>
    %58 = math.exp %57 : vector<8x8xf32>
    %59 = vector.extract_strided_slice %18 {offsets = [0, 1], sizes = [8, 1], strides = [1, 1]} : vector<8x4xf32> to vector<8x1xf32>
    %60 = arith.mulf %55, %59 : vector<8x1xf32>
    %cst_27 = arith.constant dense<0.000000e+00> : vector<8xf32>
    %61 = vector.multi_reduction <add>, %58, %cst_27 [1] : vector<8x8xf32> to vector<8xf32>
    %62 = vector.shape_cast %61 : vector<8xf32> to vector<8x1xf32>
    %63 = arith.addf %60, %62 : vector<8x1xf32>
    %c1 = arith.constant 1 : index
    %c0_28 = arith.constant 0 : index
    %c0_29 = arith.constant 0 : index
    %64 = vector.load %arg14[%c1, %c0_28, %c0_29] : memref<4x8x8xf32, #tpu.memory_space<vmem>>, vector<1x8x8xf32>
    %65 = vector.shape_cast %64 : vector<1x8x8xf32> to vector<8x8xf32>
    %66 = vector.broadcast %55 : vector<8x1xf32> to vector<8x8xf32>
    %67 = arith.mulf %66, %65 : vector<8x8xf32>
    %68 = arith.truncf %58 : vector<8x8xf32> to vector<8x8xbf16>
    %69 = vector.extract_strided_slice %7 {offsets = [0, 8], sizes = [8, 8], strides = [1, 1]} : vector<8x32xbf16> to vector<8x8xbf16>
    %cst_30 = arith.constant dense<0.000000e+00> : vector<8x8xf32>
    %70 = tpu.matmul %68, %69, %cst_30 {dimension_numbers = #tpu.dot_dimension_numbers<[1], [0], [0], [1], [0, 0, 1, 1], [], []>} : vector<8x8xbf16>, vector<8x8xbf16>, vector<8x8xf32> -> vector<8x8xf32>
    %71 = arith.addf %67, %70 : vector<8x8xf32>
    %c1_31 = arith.constant 1 : index
    %c0_32 = arith.constant 0 : index
    %c0_33 = arith.constant 0 : index
    %72 = vector.load %arg14[%c1_31, %c0_32, %c0_33] : memref<4x8x8xf32, #tpu.memory_space<vmem>>, vector<1x8x8xf32>
    %73 = vector.shape_cast %72 : vector<1x8x8xf32> to vector<8x8xf32>
    %74 = vector.shape_cast %71 : vector<8x8xf32> to vector<1x8x8xf32>
    tpu.vector_store %arg14[%c1_31, %c0_32, %c0_33], %74 {strides = array<i32>} : memref<4x8x8xf32, #tpu.memory_space<vmem>>, vector<1x8x8xf32>,
    %75 = vector.extract_strided_slice %16 {offsets = [0, 16], sizes = [8, 8], strides = [1, 1]} : vector<8x32xbf16> to vector<8x8xbf16>
    %76 = vector.extract_strided_slice %15 {offsets = [0, 16], sizes = [8, 8], strides = [1, 1]} : vector<8x32xbf16> to vector<8x8xbf16>
    %cst_34 = arith.constant dense<0.000000e+00> : vector<8x8xf32>
    %77 = tpu.matmul %75, %76, %cst_34 {dimension_numbers = #tpu.dot_dimension_numbers<[1], [1], [0], [0], [0, 0, 1, 0], [], []>} : vector<8x8xbf16>, vector<8x8xbf16>, vector<8x8xf32> -> vector<8x8xf32>
    %78 = vector.extract_strided_slice %17 {offsets = [0, 2], sizes = [8, 1], strides = [1, 1]} : vector<8x4xf32> to vector<8x1xf32>
    %cst_35 = arith.constant dense<0xFF800000> : vector<8xf32>
    %79 = vector.multi_reduction <maximumf>, %77, %cst_35 [1] : vector<8x8xf32> to vector<8xf32>
    %80 = vector.shape_cast %79 : vector<8xf32> to vector<8x1xf32>
    %81 = arith.maximumf %78, %80 : vector<8x1xf32>
    %82 = arith.subf %78, %81 : vector<8x1xf32>
    %83 = math.exp %82 : vector<8x1xf32>
    %84 = vector.broadcast %81 : vector<8x1xf32> to vector<8x8xf32>
    %85 = arith.subf %77, %84 : vector<8x8xf32>
    %86 = math.exp %85 : vector<8x8xf32>
    %87 = vector.extract_strided_slice %18 {offsets = [0, 2], sizes = [8, 1], strides = [1, 1]} : vector<8x4xf32> to vector<8x1xf32>
    %88 = arith.mulf %83, %87 : vector<8x1xf32>
    %cst_36 = arith.constant dense<0.000000e+00> : vector<8xf32>
    %89 = vector.multi_reduction <add>, %86, %cst_36 [1] : vector<8x8xf32> to vector<8xf32>
    %90 = vector.shape_cast %89 : vector<8xf32> to vector<8x1xf32>
    %91 = arith.addf %88, %90 : vector<8x1xf32>
    %c2 = arith.constant 2 : index
    %c0_37 = arith.constant 0 : index
    %c0_38 = arith.constant 0 : index
    %92 = vector.load %arg14[%c2, %c0_37, %c0_38] : memref<4x8x8xf32, #tpu.memory_space<vmem>>, vector<1x8x8xf32>
    %93 = vector.shape_cast %92 : vector<1x8x8xf32> to vector<8x8xf32>
    %94 = vector.broadcast %83 : vector<8x1xf32> to vector<8x8xf32>
    %95 = arith.mulf %94, %93 : vector<8x8xf32>
    %96 = arith.truncf %86 : vector<8x8xf32> to vector<8x8xbf16>
    %97 = vector.extract_strided_slice %7 {offsets = [0, 16], sizes = [8, 8], strides = [1, 1]} : vector<8x32xbf16> to vector<8x8xbf16>
    %cst_39 = arith.constant dense<0.000000e+00> : vector<8x8xf32>
    %98 = tpu.matmul %96, %97, %cst_39 {dimension_numbers = #tpu.dot_dimension_numbers<[1], [0], [0], [1], [0, 0, 1, 1], [], []>} : vector<8x8xbf16>, vector<8x8xbf16>, vector<8x8xf32> -> vector<8x8xf32>
    %99 = arith.addf %95, %98 : vector<8x8xf32>
    %c2_40 = arith.constant 2 : index
    %c0_41 = arith.constant 0 : index
    %c0_42 = arith.constant 0 : index
    %100 = vector.load %arg14[%c2_40, %c0_41, %c0_42] : memref<4x8x8xf32, #tpu.memory_space<vmem>>, vector<1x8x8xf32>
    %101 = vector.shape_cast %100 : vector<1x8x8xf32> to vector<8x8xf32>
    %102 = vector.shape_cast %99 : vector<8x8xf32> to vector<1x8x8xf32>
    tpu.vector_store %arg14[%c2_40, %c0_41, %c0_42], %102 {strides = array<i32>} : memref<4x8x8xf32, #tpu.memory_space<vmem>>, vector<1x8x8xf32>,
    %103 = vector.extract_strided_slice %16 {offsets = [0, 24], sizes = [8, 8], strides = [1, 1]} : vector<8x32xbf16> to vector<8x8xbf16>
    %104 = vector.extract_strided_slice %15 {offsets = [0, 24], sizes = [8, 8], strides = [1, 1]} : vector<8x32xbf16> to vector<8x8xbf16>
    %cst_43 = arith.constant dense<0.000000e+00> : vector<8x8xf32>
    %105 = tpu.matmul %103, %104, %cst_43 {dimension_numbers = #tpu.dot_dimension_numbers<[1], [1], [0], [0], [0, 0, 1, 0], [], []>} : vector<8x8xbf16>, vector<8x8xbf16>, vector<8x8xf32> -> vector<8x8xf32>
    %106 = vector.extract_strided_slice %17 {offsets = [0, 3], sizes = [8, 1], strides = [1, 1]} : vector<8x4xf32> to vector<8x1xf32>
    %cst_44 = arith.constant dense<0xFF800000> : vector<8xf32>
    %107 = vector.multi_reduction <maximumf>, %105, %cst_44 [1] : vector<8x8xf32> to vector<8xf32>
    %108 = vector.shape_cast %107 : vector<8xf32> to vector<8x1xf32>
    %109 = arith.maximumf %106, %108 : vector<8x1xf32>
    %110 = arith.subf %106, %109 : vector<8x1xf32>
    %111 = math.exp %110 : vector<8x1xf32>
    %112 = vector.broadcast %109 : vector<8x1xf32> to vector<8x8xf32>
    %113 = arith.subf %105, %112 : vector<8x8xf32>
    %114 = math.exp %113 : vector<8x8xf32>
    %115 = vector.extract_strided_slice %18 {offsets = [0, 3], sizes = [8, 1], strides = [1, 1]} : vector<8x4xf32> to vector<8x1xf32>
    %116 = arith.mulf %111, %115 : vector<8x1xf32>
    %cst_45 = arith.constant dense<0.000000e+00> : vector<8xf32>
    %117 = vector.multi_reduction <add>, %114, %cst_45 [1] : vector<8x8xf32> to vector<8xf32>
    %118 = vector.shape_cast %117 : vector<8xf32> to vector<8x1xf32>
    %119 = arith.addf %116, %118 : vector<8x1xf32>
    %c3 = arith.constant 3 : index
    %c0_46 = arith.constant 0 : index
    %c0_47 = arith.constant 0 : index
    %120 = vector.load %arg14[%c3, %c0_46, %c0_47] : memref<4x8x8xf32, #tpu.memory_space<vmem>>, vector<1x8x8xf32>
    %121 = vector.shape_cast %120 : vector<1x8x8xf32> to vector<8x8xf32>
    %122 = vector.broadcast %111 : vector<8x1xf32> to vector<8x8xf32>
    %123 = arith.mulf %122, %121 : vector<8x8xf32>
    %124 = arith.truncf %114 : vector<8x8xf32> to vector<8x8xbf16>
    %125 = vector.extract_strided_slice %7 {offsets = [0, 24], sizes = [8, 8], strides = [1, 1]} : vector<8x32xbf16> to vector<8x8xbf16>
    %cst_48 = arith.constant dense<0.000000e+00> : vector<8x8xf32>
    %126 = tpu.matmul %124, %125, %cst_48 {dimension_numbers = #tpu.dot_dimension_numbers<[1], [0], [0], [1], [0, 0, 1, 1], [], []>} : vector<8x8xbf16>, vector<8x8xbf16>, vector<8x8xf32> -> vector<8x8xf32>
    %127 = arith.addf %123, %126 : vector<8x8xf32>
    %c3_49 = arith.constant 3 : index
    %c0_50 = arith.constant 0 : index
    %c0_51 = arith.constant 0 : index
    %128 = vector.load %arg14[%c3_49, %c0_50, %c0_51] : memref<4x8x8xf32, #tpu.memory_space<vmem>>, vector<1x8x8xf32>
    %129 = vector.shape_cast %128 : vector<1x8x8xf32> to vector<8x8xf32>
    %130 = vector.shape_cast %127 : vector<8x8xf32> to vector<1x8x8xf32>
    tpu.vector_store %arg14[%c3_49, %c0_50, %c0_51], %130 {strides = array<i32>} : memref<4x8x8xf32, #tpu.memory_space<vmem>>, vector<1x8x8xf32>,
    %131 = tpu.concatenate %25, %53, %81, %109 in 1 : vector<8x1xf32>, vector<8x1xf32>, vector<8x1xf32>, vector<8x1xf32> -> vector<8x4xf32>
    %c0_52 = arith.constant 0 : index
    %c0_53 = arith.constant 0 : index
    %132 = vector.load %arg12[%c0_52, %c0_53] : memref<8x4xf32, #tpu.memory_space<vmem>>, vector<8x4xf32>
    tpu.vector_store %arg12[%c0_52, %c0_53], %131 {strides = array<i32>} : memref<8x4xf32, #tpu.memory_space<vmem>>, vector<8x4xf32>,
    %133 = tpu.concatenate %35, %63, %91, %119 in 1 : vector<8x1xf32>, vector<8x1xf32>, vector<8x1xf32>, vector<8x1xf32> -> vector<8x4xf32>
    %c0_54 = arith.constant 0 : index
    %c0_55 = arith.constant 0 : index
    %134 = vector.load %arg13[%c0_54, %c0_55] : memref<8x4xf32, #tpu.memory_space<vmem>>, vector<8x4xf32>
    tpu.vector_store %arg13[%c0_54, %c0_55], %133 {strides = array<i32>} : memref<8x4xf32, #tpu.memory_space<vmem>>, vector<8x4xf32>,
    %c0_i32_56 = arith.constant 0 : i32
    %135 = arith.cmpi eq, %arg2, %c0_i32_56 : i32
    %136 = arith.extui %135 : i1 to i32
    %c0_i32_57 = arith.constant 0 : i32
    %137 = arith.cmpi ne, %136, %c0_i32_57 : i32
    scf.if %137 {
      %c0_58 = arith.constant 0 : index
      %c0_59 = arith.constant 0 : index
      %138 = vector.load %arg13[%c0_58, %c0_59] : memref<8x4xf32, #tpu.memory_space<vmem>>, vector<8x4xf32>
      %139 = tpu.reciprocal %138 {approx = true} : vector<8x4xf32> -> vector<8x4xf32>
      %c0_60 = arith.constant 0 : index
      %c0_61 = arith.constant 0 : index
      %c0_62 = arith.constant 0 : index
      %140 = vector.load %arg14[%c0_60, %c0_61, %c0_62] : memref<4x8x8xf32, #tpu.memory_space<vmem>>, vector<1x8x8xf32>
      %141 = vector.shape_cast %140 : vector<1x8x8xf32> to vector<8x8xf32>
      %142 = vector.extract_strided_slice %139 {offsets = [0, 0], sizes = [8, 1], strides = [1, 1]} : vector<8x4xf32> to vector<8x1xf32>
      %143 = vector.broadcast %142 : vector<8x1xf32> to vector<8x8xf32>
      %144 = arith.mulf %141, %143 : vector<8x8xf32>
      %c1_63 = arith.constant 1 : index
      %c0_64 = arith.constant 0 : index
      %c0_65 = arith.constant 0 : index
      %145 = vector.load %arg14[%c1_63, %c0_64, %c0_65] : memref<4x8x8xf32, #tpu.memory_space<vmem>>, vector<1x8x8xf32>
      %146 = vector.shape_cast %145 : vector<1x8x8xf32> to vector<8x8xf32>
      %147 = vector.extract_strided_slice %139 {offsets = [0, 1], sizes = [8, 1], strides = [1, 1]} : vector<8x4xf32> to vector<8x1xf32>
      %148 = vector.broadcast %147 : vector<8x1xf32> to vector<8x8xf32>
      %149 = arith.mulf %146, %148 : vector<8x8xf32>
      %c2_66 = arith.constant 2 : index
      %c0_67 = arith.constant 0 : index
      %c0_68 = arith.constant 0 : index
      %150 = vector.load %arg14[%c2_66, %c0_67, %c0_68] : memref<4x8x8xf32, #tpu.memory_space<vmem>>, vector<1x8x8xf32>
      %151 = vector.shape_cast %150 : vector<1x8x8xf32> to vector<8x8xf32>
      %152 = vector.extract_strided_slice %139 {offsets = [0, 2], sizes = [8, 1], strides = [1, 1]} : vector<8x4xf32> to vector<8x1xf32>
      %153 = vector.broadcast %152 : vector<8x1xf32> to vector<8x8xf32>
      %154 = arith.mulf %151, %153 : vector<8x8xf32>
      %c3_69 = arith.constant 3 : index
      %c0_70 = arith.constant 0 : index
      %c0_71 = arith.constant 0 : index
      %155 = vector.load %arg14[%c3_69, %c0_70, %c0_71] : memref<4x8x8xf32, #tpu.memory_space<vmem>>, vector<1x8x8xf32>
      %156 = vector.shape_cast %155 : vector<1x8x8xf32> to vector<8x8xf32>
      %157 = vector.extract_strided_slice %139 {offsets = [0, 3], sizes = [8, 1], strides = [1, 1]} : vector<8x4xf32> to vector<8x1xf32>
      %158 = vector.broadcast %157 : vector<8x1xf32> to vector<8x8xf32>
      %159 = arith.mulf %156, %158 : vector<8x8xf32>
      %160 = tpu.concatenate %144, %149, %154, %159 in 1 : vector<8x8xf32>, vector<8x8xf32>, vector<8x8xf32>, vector<8x8xf32> -> vector<8x32xf32>
      %161 = arith.truncf %160 : vector<8x32xf32> to vector<8x32xbf16>
      %c0_72 = arith.constant 0 : index
      %c0_73 = arith.constant 0 : index
      %c0_74 = arith.constant 0 : index
      %162 = vector.load %arg10[%c0_72, %c0_73, %c0_74] : memref<1x8x32xbf16, #tpu.memory_space<vmem>>, vector<1x8x32xbf16>
      %163 = vector.shape_cast %162 : vector<1x8x32xbf16> to vector<8x32xbf16>
      %164 = vector.shape_cast %161 : vector<8x32xbf16> to vector<1x8x32xbf16>
      tpu.vector_store %arg10[%c0_72, %c0_73, %c0_74], %164 {strides = array<i32>} : memref<1x8x32xbf16, #tpu.memory_space<vmem>>, vector<1x8x32xbf16>,
    } else {
    }
    return
  }
  func.func @transform_0(%arg0: i32, %arg1: i32, %arg2: i32) -> (i32, i32) {
    %c0_i32 = arith.constant 0 : i32
    %c0_i32_0 = arith.constant 0 : i32
    %c0_i32_1 = arith.constant 0 : i32
    return %c0_i32, %c0_i32_0 : i32, i32
  }
  func.func @transform_1(%arg0: i32, %arg1: i32, %arg2: i32) -> (i32, i32, i32) {
    %c0_i32 = arith.constant 0 : i32
    %c0_i32_0 = arith.constant 0 : i32
    return %arg0, %arg1, %c0_i32 : i32, i32, i32
  }
  func.func @transform_2(%arg0: i32, %arg1: i32, %arg2: i32) -> (i32, i32, i32) {
    %c0_i32 = arith.constant 0 : i32
    %c0_i32_0 = arith.constant 0 : i32
    return %arg0, %arg2, %c0_i32 : i32, i32, i32
  }
  func.func @transform_3(%arg0: i32, %arg1: i32, %arg2: i32) -> (i32, i32) {
    %c0_i32 = arith.constant 0 : i32
    %c0_i32_0 = arith.constant 0 : i32
    return %arg1, %c0_i32 : i32, i32
  }
  func.func @transform_4(%arg0: i32, %arg1: i32, %arg2: i32) -> (i32, i32) {
    %c0_i32 = arith.constant 0 : i32
    %c0_i32_0 = arith.constant 0 : i32
    return %arg1, %c0_i32 : i32, i32
  }
  func.func @transform_5(%arg0: i32, %arg1: i32, %arg2: i32) -> (i32, i32) {
    %c0_i32 = arith.constant 0 : i32
    %c0_i32_0 = arith.constant 0 : i32
    return %arg2, %c0_i32 : i32, i32
  }
  func.func @transform_6(%arg0: i32, %arg1: i32, %arg2: i32) -> (i32, i32) {
    %c0_i32 = arith.constant 0 : i32
    %c0_i32_0 = arith.constant 0 : i32
    return %arg2, %c0_i32 : i32, i32
  }
  func.func @transform_7(%arg0: i32, %arg1: i32, %arg2: i32) -> (i32, i32, i32) {
    %c0_i32 = arith.constant 0 : i32
    %c0_i32_0 = arith.constant 0 : i32
    return %arg0, %arg1, %c0_i32 : i32, i32, i32
  }
}

module attributes {stable_mosaic.version = 11 : i64} {
  func.func @_matmul_kernel(%arg0: i32, %arg1: i32, %arg2: i32, %arg3: memref<24x32xbf16, #tpu.memory_space<vmem>>, %arg4: memref<32x64xbf16, #tpu.memory_space<vmem>>, %arg5: memref<24x64xbf16, #tpu.memory_space<vmem>>, %arg6: memref<24x64xf32, #tpu.memory_space<vmem>>) attributes {dimension_semantics = [#tpu.dimension_semantics<parallel>, #tpu.dimension_semantics<parallel>, #tpu.dimension_semantics<arbitrary>], iteration_bounds = array<i64: 1, 1, 1>, scalar_prefetch = 0 : i64, scratch_operands = 1 : i64, tpu.core_type = #tpu.core_type<tc>, window_params = [{transform_indices = @transform_0, window_bounds = array<i64: 24, 32>}, {transform_indices = @transform_1, window_bounds = array<i64: 32, 64>}, {transform_indices = @transform_2, window_bounds = array<i64: 24, 64>}]} {
    %c0_i32 = arith.constant 0 : i32
    %0 = arith.cmpi eq, %arg2, %c0_i32 : i32
    %1 = arith.extui %0 : i1 to i32
    %c0_i32_0 = arith.constant 0 : i32
    %2 = arith.cmpi ne, %1, %c0_i32_0 : i32
    scf.if %2 {
      %cst_10 = arith.constant 0.000000e+00 : f32
      %12 = vector.broadcast %cst_10 : f32 to vector<24x64xf32>
      %c0_11 = arith.constant 0 : index
      %c0_12 = arith.constant 0 : index
      %13 = vector.load %arg6[%c0_11, %c0_12] : memref<24x64xf32, #tpu.memory_space<vmem>>, vector<24x64xf32>
      tpu.vector_store %arg6[%c0_11, %c0_12], %12 {strides = array<i32>} : memref<24x64xf32, #tpu.memory_space<vmem>>, vector<24x64xf32>,
    } else {
    }
    %c0 = arith.constant 0 : index
    %c0_1 = arith.constant 0 : index
    %3 = vector.load %arg6[%c0, %c0_1] : memref<24x64xf32, #tpu.memory_space<vmem>>, vector<24x64xf32>
    %c0_2 = arith.constant 0 : index
    %c0_3 = arith.constant 0 : index
    %4 = vector.load %arg3[%c0_2, %c0_3] : memref<24x32xbf16, #tpu.memory_space<vmem>>, vector<24x32xbf16>
    %c0_4 = arith.constant 0 : index
    %c0_5 = arith.constant 0 : index
    %5 = vector.load %arg4[%c0_4, %c0_5] : memref<32x64xbf16, #tpu.memory_space<vmem>>, vector<32x64xbf16>
    %cst = arith.constant dense<0.000000e+00> : vector<24x64xf32>
    %6 = tpu.matmul %4, %5, %cst {dimension_numbers = #tpu.dot_dimension_numbers<[1], [0], [0], [1], [0, 0, 1, 1], [], []>} : vector<24x32xbf16>, vector<32x64xbf16>, vector<24x64xf32> -> vector<24x64xf32>
    %7 = arith.addf %3, %6 : vector<24x64xf32>
    %c0_6 = arith.constant 0 : index
    %c0_7 = arith.constant 0 : index
    %8 = vector.load %arg6[%c0_6, %c0_7] : memref<24x64xf32, #tpu.memory_space<vmem>>, vector<24x64xf32>
    tpu.vector_store %arg6[%c0_6, %c0_7], %7 {strides = array<i32>} : memref<24x64xf32, #tpu.memory_space<vmem>>, vector<24x64xf32>,
    %c0_i32_8 = arith.constant 0 : i32
    %9 = arith.cmpi eq, %arg2, %c0_i32_8 : i32
    %10 = arith.extui %9 : i1 to i32
    %c0_i32_9 = arith.constant 0 : i32
    %11 = arith.cmpi ne, %10, %c0_i32_9 : i32
    scf.if %11 {
      %c0_10 = arith.constant 0 : index
      %c0_11 = arith.constant 0 : index
      %12 = vector.load %arg6[%c0_10, %c0_11] : memref<24x64xf32, #tpu.memory_space<vmem>>, vector<24x64xf32>
      %13 = arith.truncf %12 : vector<24x64xf32> to vector<24x64xbf16>
      %c0_12 = arith.constant 0 : index
      %c0_13 = arith.constant 0 : index
      %14 = vector.load %arg5[%c0_12, %c0_13] : memref<24x64xbf16, #tpu.memory_space<vmem>>, vector<24x64xbf16>
      tpu.vector_store %arg5[%c0_12, %c0_13], %13 {strides = array<i32>} : memref<24x64xbf16, #tpu.memory_space<vmem>>, vector<24x64xbf16>,
    } else {
    }
    return
  }
  func.func @transform_0(%arg0: i32, %arg1: i32, %arg2: i32) -> (i32, i32) {
    %c0_i32 = arith.constant 0 : i32
    return %arg0, %arg2 : i32, i32
  }
  func.func @transform_1(%arg0: i32, %arg1: i32, %arg2: i32) -> (i32, i32) {
    %c0_i32 = arith.constant 0 : i32
    return %arg2, %arg1 : i32, i32
  }
  func.func @transform_2(%arg0: i32, %arg1: i32, %arg2: i32) -> (i32, i32) {
    %c0_i32 = arith.constant 0 : i32
    return %arg0, %arg1 : i32, i32
  }
}

module attributes {stable_mosaic.version = 11 : i64} {
  func.func @_attn_kernel(%arg0: i32, %arg1: i32, %arg2: i32, %arg3: memref<32x32xbf16, #tpu.memory_space<vmem>>, %arg4: memref<1x8x32xbf16, #tpu.memory_space<vmem>>, %arg5: memref<1x12x64xbf16, #tpu.memory_space<vmem>>, %arg6: memref<8x32xf32, #tpu.memory_space<vmem>>, %arg7: memref<8x32xf32, #tpu.memory_space<vmem>>, %arg8: memref<12x32xf32, #tpu.memory_space<vmem>>, %arg9: memref<12x32xf32, #tpu.memory_space<vmem>>, %arg10: memref<1x8x32xbf16, #tpu.memory_space<vmem>>, %arg11: memref<8x32xbf16, #tpu.memory_space<vmem>>, %arg12: memref<8x4xf32, #tpu.memory_space<vmem>>, %arg13: memref<8x4xf32, #tpu.memory_space<vmem>>, %arg14: memref<4x8x8xf32, #tpu.memory_space<vmem>>) attributes {dimension_semantics = [#tpu.dimension_semantics<parallel>, #tpu.dimension_semantics<parallel>, #tpu.dimension_semantics<arbitrary>], iteration_bounds = array<i64: 2, 1, 1>, scalar_prefetch = 0 : i64, scratch_operands = 4 : i64, tpu.core_type = #tpu.core_type<tc>, window_params = [{pipeline_mode = #tpu.pipeline_mode<synchronous>, transform_indices = @transform_0, window_bounds = array<i64: 32, 32>}, {transform_indices = @transform_1, window_bounds = array<i64: 1, 8, 32>}, {transform_indices = @transform_2, window_bounds = array<i64: 1, 12, 64>}, {transform_indices = @transform_3, window_bounds = array<i64: 8, 32>}, {transform_indices = @transform_4, window_bounds = array<i64: 8, 32>}, {transform_indices = @transform_5, window_bounds = array<i64: 12, 32>}, {transform_indices = @transform_6, window_bounds = array<i64: 12, 32>}, {transform_indices = @transform_7, window_bounds = array<i64: 1, 8, 32>}]} {
    %c0 = arith.constant 0 : index
    %c0_0 = arith.constant 0 : index
    %0 = vector.load %arg3[%c0, %c0_0] : memref<32x32xbf16, #tpu.memory_space<vmem>>, vector<32x32xbf16>
    %c0_i32 = arith.constant 0 : i32
    %1 = arith.cmpi eq, %arg2, %c0_i32 : i32
    %2 = arith.extui %1 : i1 to i32
    %c0_i32_1 = arith.constant 0 : i32
    %3 = arith.cmpi ne, %2, %c0_i32_1 : i32
    scf.if %3 {
      %c0_58 = arith.constant 0 : index
      %c0_59 = arith.constant 0 : index
      %c0_60 = arith.constant 0 : index
      %138 = vector.load %arg4[%c0_58, %c0_59, %c0_60] : memref<1x8x32xbf16, #tpu.memory_space<vmem>>, vector<1x8x32xbf16>
      %139 = vector.shape_cast %138 : vector<1x8x32xbf16> to vector<8x32xbf16>
      %cst_61 = arith.constant dense<0.000000e+00> : vector<8x32xf32>
      %140 = tpu.matmul %139, %0, %cst_61 {dimension_numbers = #tpu.dot_dimension_numbers<[1], [0], [0], [1], [0, 0, 1, 1], [], []>} : vector<8x32xbf16>, vector<32x32xbf16>, vector<8x32xf32> -> vector<8x32xf32>
      %141 = arith.extf %139 : vector<8x32xbf16> to vector<8x32xf32>
      %c0_62 = arith.constant 0 : index
      %c0_63 = arith.constant 0 : index
      %142 = vector.load %arg6[%c0_62, %c0_63] : memref<8x32xf32, #tpu.memory_space<vmem>>, vector<8x32xf32>
      %143 = arith.mulf %141, %142 : vector<8x32xf32>
      %c0_64 = arith.constant 0 : index
      %c0_65 = arith.constant 0 : index
      %144 = vector.load %arg7[%c0_64, %c0_65] : memref<8x32xf32, #tpu.memory_space<vmem>>, vector<8x32xf32>
      %145 = arith.mulf %140, %144 : vector<8x32xf32>
      %146 = arith.addf %143, %145 : vector<8x32xf32>
      %147 = arith.truncf %146 : vector<8x32xf32> to vector<8x32xbf16>
      %c0_66 = arith.constant 0 : index
      %c0_67 = arith.constant 0 : index
      %148 = vector.load %arg11[%c0_66, %c0_67] : memref<8x32xbf16, #tpu.memory_space<vmem>>, vector<8x32xbf16>
      tpu.vector_store %arg11[%c0_66, %c0_67], %147 {strides = array<i32>} : memref<8x32xbf16, #tpu.memory_space<vmem>>, vector<8x32xbf16>,
      %cst_68 = arith.constant 0xFF800000 : f32
      %149 = vector.broadcast %cst_68 : f32 to vector<8x4xf32>
      %c0_69 = arith.constant 0 : index
      %c0_70 = arith.constant 0 : index
      %150 = vector.load %arg12[%c0_69, %c0_70] : memref<8x4xf32, #tpu.memory_space<vmem>>, vector<8x4xf32>
      tpu.vector_store %arg12[%c0_69, %c0_70], %149 {strides = array<i32>} : memref<8x4xf32, #tpu.memory_space<vmem>>, vector<8x4xf32>,
      %cst_71 = arith.constant 0.000000e+00 : f32
      %151 = vector.broadcast %cst_71 : f32 to vector<8x4xf32>
      %c0_72 = arith.constant 0 : index
      %c0_73 = arith.constant 0 : index
      %152 = vector.load %arg13[%c0_72, %c0_73] : memref<8x4xf32, #tpu.memory_space<vmem>>, vector<8x4xf32>
      tpu.vector_store %arg13[%c0_72, %c0_73], %151 {strides = array<i32>} : memref<8x4xf32, #tpu.memory_space<vmem>>, vector<8x4xf32>,
      %cst_74 = arith.constant 0.000000e+00 : f32
      %153 = vector.broadcast %cst_74 : f32 to vector<4x8x8xf32>
      %c0_75 = arith.constant 0 : index
      %c0_76 = arith.constant 0 : index
      %c0_77 = arith.constant 0 : index
      %154 = vector.load %arg14[%c0_75, %c0_76, %c0_77] : memref<4x8x8xf32, #tpu.memory_space<vmem>>, vector<4x8x8xf32>
      tpu.vector_store %arg14[%c0_75, %c0_76, %c0_77], %153 {strides = array<i32>} : memref<4x8x8xf32, #tpu.memory_space<vmem>>, vector<4x8x8xf32>,
    } else {
    }
    %c0_2 = arith.constant 0 : index
    %c0_3 = arith.constant 0 : index
    %c0_4 = arith.constant 0 : index
    %4 = vector.load %arg5[%c0_2, %c0_3, %c0_4] : memref<1x12x64xbf16, #tpu.memory_space<vmem>>, vector<1x12x64xbf16>
    %5 = vector.shape_cast %4 : vector<1x12x64xbf16> to vector<12x64xbf16>
    %6 = vector.extract_strided_slice %5 {offsets = [0, 0], sizes = [12, 32], strides = [1, 1]} : vector<12x64xbf16> to vector<12x32xbf16>
    %7 = vector.extract_strided_slice %5 {offsets = [0, 32], sizes = [12, 32], strides = [1, 1]} : vector<12x64xbf16> to vector<12x32xbf16>
    %cst = arith.constant dense<0.000000e+00> : vector<12x32xf32>
    %8 = tpu.matmul %6, %0, %cst {dimension_numbers = #tpu.dot_dimension_numbers<[1], [0], [0], [1], [0, 0, 1, 1], [], []>} : vector<12x32xbf16>, vector<32x32xbf16>, vector<12x32xf32> -> vector<12x32xf32>
    %9 = arith.extf %6 : vector<12x32xbf16> to vector<12x32xf32>
    %c0_5 = arith.constant 0 : index
    %c0_6 = arith.constant 0 : index
    %10 = vector.load %arg8[%c0_5, %c0_6] : memref<12x32xf32, #tpu.memory_space<vmem>>, vector<12x32xf32>
    %11 = arith.mulf %9, %10 : vector<12x32xf32>
    %c0_7 = arith.constant 0 : index
    %c0_8 = arith.constant 0 : index
    %12 = vector.load %arg9[%c0_7, %c0_8] : memref<12x32xf32, #tpu.memory_space<vmem>>, vector<12x32xf32>
    %13 = arith.mulf %8, %12 : vector<12x32xf32>
    %14 = arith.addf %11, %13 : vector<12x32xf32>
    %15 = arith.truncf %14 : vector<12x32xf32> to vector<12x32xbf16>
    %c0_9 = arith.constant 0 : index
    %c0_10 = arith.constant 0 : index
    %16 = vector.load %arg11[%c0_9, %c0_10] : memref<8x32xbf16, #tpu.memory_space<vmem>>, vector<8x32xbf16>
    %c0_11 = arith.constant 0 : index
    %c0_12 = arith.constant 0 : index
    %17 = vector.load %arg12[%c0_11, %c0_12] : memref<8x4xf32, #tpu.memory_space<vmem>>, vector<8x4xf32>
    %c0_13 = arith.constant 0 : index
    %c0_14 = arith.constant 0 : index
    %18 = vector.load %arg13[%c0_13, %c0_14] : memref<8x4xf32, #tpu.memory_space<vmem>>, vector<8x4xf32>
    %19 = vector.extract_strided_slice %16 {offsets = [0, 0], sizes = [8, 8], strides = [1, 1]} : vector<8x32xbf16> to vector<8x8xbf16>
    %20 = vector.extract_strided_slice %15 {offsets = [0, 0], sizes = [12, 8], strides = [1, 1]} : vector<12x32xbf16> to vector<12x8xbf16>
    %cst_15 = arith.constant dense<0.000000e+00> : vector<8x12xf32>
    %21 = tpu.matmul %19, %20, %cst_15 {dimension_numbers = #tpu.dot_dimension_numbers<[1], [1], [0], [0], [0, 0, 1, 0], [], []>} : vector<8x8xbf16>, vector<12x8xbf16>, vector<8x12xf32> -> vector<8x12xf32>
    %22 = vector.extract_strided_slice %17 {offsets = [0, 0], sizes = [8, 1], strides = [1, 1]} : vector<8x4xf32> to vector<8x1xf32>
    %cst_16 = arith.constant dense<0xFF800000> : vector<8xf32>
    %23 = vector.multi_reduction <maximumf>, %21, %cst_16 [1] : vector<8x12xf32> to vector<8xf32>
    %24 = vector.shape_cast %23 : vector<8xf32> to vector<8x1xf32>
    %25 = arith.maximumf %22, %24 : vector<8x1xf32>
    %26 = arith.subf %22, %25 : vector<8x1xf32>
    %27 = math.exp %26 : vector<8x1xf32>
    %28 = vector.broadcast %25 : vector<8x1xf32> to vector<8x12xf32>
    %29 = arith.subf %21, %28 : vector<8x12xf32>
    %30 = math.exp %29 : vector<8x12xf32>
    %31 = vector.extract_strided_slice %18 {offsets = [0, 0], sizes = [8, 1], strides = [1, 1]} : vector<8x4xf32> to vector<8x1xf32>
    %32 = arith.mulf %27, %31 : vector<8x1xf32>
    %cst_17 = arith.constant dense<0.000000e+00> : vector<8xf32>
    %33 = vector.multi_reduction <add>, %30, %cst_17 [1] : vector<8x12xf32> to vector<8xf32>
    %34 = vector.shape_cast %33 : vector<8xf32> to vector<8x1xf32>
    %35 = arith.addf %32, %34 : vector<8x1xf32>
    %c0_18 = arith.constant 0 : index
    %c0_19 = arith.constant 0 : index
    %c0_20 = arith.constant 0 : index
    %36 = vector.load %arg14[%c0_18, %c0_19, %c0_20] : memref<4x8x8xf32, #tpu.memory_space<vmem>>, vector<1x8x8xf32>
    %37 = vector.shape_cast %36 : vector<1x8x8xf32> to vector<8x8xf32>
    %38 = vector.broadcast %27 : vector<8x1xf32> to vector<8x8xf32>
    %39 = arith.mulf %38, %37 : vector<8x8xf32>
    %40 = arith.truncf %30 : vector<8x12xf32> to vector<8x12xbf16>
    %41 = vector.extract_strided_slice %7 {offsets = [0, 0], sizes = [12, 8], strides = [1, 1]} : vector<12x32xbf16> to vector<12x8xbf16>
    %cst_21 = arith.constant dense<0.000000e+00> : vector<8x8xf32>
    %42 = tpu.matmul %40, %41, %cst_21 {dimension_numbers = #tpu.dot_dimension_numbers<[1], [0], [0], [1], [0, 0, 1, 1], [], []>} : vector<8x12xbf16>, vector<12x8xbf16>, vector<8x8xf32> -> vector<8x8xf32>
    %43 = arith.addf %39, %42 : vector<8x8xf32>
    %c0_22 = arith.constant 0 : index
    %c0_23 = arith.constant 0 : index
    %c0_24 = arith.constant 0 : index
    %44 = vector.load %arg14[%c0_22, %c0_23, %c0_24] : memref<4x8x8xf32, #tpu.memory_space<vmem>>, vector<1x8x8xf32>
    %45 = vector.shape_cast %44 : vector<1x8x8xf32> to vector<8x8xf32>
    %46 = vector.shape_cast %43 : vector<8x8xf32> to vector<1x8x8xf32>
    tpu.vector_store %arg14[%c0_22, %c0_23, %c0_24], %46 {strides = array<i32>} : memref<4x8x8xf32, #tpu.memory_space<vmem>>, vector<1x8x8xf32>,
    %47 = vector.extract_strided_slice %16 {offsets = [0, 8], sizes = [8, 8], strides = [1, 1]} : vector<8x32xbf16> to vector<8x8xbf16>
    %48 = vector.extract_strided_slice %15 {offsets = [0, 8], sizes = [12, 8], strides = [1, 1]} : vector<12x32xbf16> to vector<12x8xbf16>
    %cst_25 = arith.constant dense<0.000000e+00> : vector<8x12xf32>
    %49 = tpu.matmul %47, %48, %cst_25 {dimension_numbers = #tpu.dot_dimension_numbers<[1], [1], [0], [0], [0, 0, 1, 0], [], []>} : vector<8x8xbf16>, vector<12x8xbf16>, vector<8x12xf32> -> vector<8x12xf32>
    %50 = vector.extract_strided_slice %17 {offsets = [0, 1], sizes = [8, 1], strides = [1, 1]} : vector<8x4xf32> to vector<8x1xf32>
    %cst_26 = arith.constant dense<0xFF800000> : vector<8xf32>
    %51 = vector.multi_reduction <maximumf>, %49, %cst_26 [1] : vector<8x12xf32> to vector<8xf32>
    %52 = vector.shape_cast %51 : vector<8xf32> to vector<8x1xf32>
    %53 = arith.maximumf %50, %52 : vector<8x1xf32>
    %54 = arith.subf %50, %53 : vector<8x1xf32>
    %55 = math.exp %54 : vector<8x1xf32>
    %56 = vector.broadcast %53 : vector<8x1xf32> to vector<8x12xf32>
    %57 = arith.subf %49, %56 : vector<8x12xf32>
    %58 = math.exp %57 : vector<8x12xf32>
    %59 = vector.extract_strided_slice %18 {offsets = [0, 1], sizes = [8, 1], strides = [1, 1]} : vector<8x4xf32> to vector<8x1xf32>
    %60 = arith.mulf %55, %59 : vector<8x1xf32>
    %cst_27 = arith.constant dense<0.000000e+00> : vector<8xf32>
    %61 = vector.multi_reduction <add>, %58, %cst_27 [1] : vector<8x12xf32> to vector<8xf32>
    %62 = vector.shape_cast %61 : vector<8xf32> to vector<8x1xf32>
    %63 = arith.addf %60, %62 : vector<8x1xf32>
    %c1 = arith.constant 1 : index
    %c0_28 = arith.constant 0 : index
    %c0_29 = arith.constant 0 : index
    %64 = vector.load %arg14[%c1, %c0_28, %c0_29] : memref<4x8x8xf32, #tpu.memory_space<vmem>>, vector<1x8x8xf32>
    %65 = vector.shape_cast %64 : vector<1x8x8xf32> to vector<8x8xf32>
    %66 = vector.broadcast %55 : vector<8x1xf32> to vector<8x8xf32>
    %67 = arith.mulf %66, %65 : vector<8x8xf32>
    %68 = arith.truncf %58 : vector<8x12xf32> to vector<8x12xbf16>
    %69 = vector.extract_strided_slice %7 {offsets = [0, 8], sizes = [12, 8], strides = [1, 1]} : vector<12x32xbf16> to vector<12x8xbf16>
    %cst_30 = arith.constant dense<0.000000e+00> : vector<8x8xf32>
    %70 = tpu.matmul %68, %69, %cst_30 {dimension_numbers = #tpu.dot_dimension_numbers<[1], [0], [0], [1], [0, 0, 1, 1], [], []>} : vector<8x12xbf16>, vector<12x8xbf16>, vector<8x8xf32> -> vector<8x8xf32>
    %71 = arith.addf %67, %70 : vector<8x8xf32>
    %c1_31 = arith.constant 1 : index
    %c0_32 = arith.constant 0 : index
    %c0_33 = arith.constant 0 : index
    %72 = vector.load %arg14[%c1_31, %c0_32, %c0_33] : memref<4x8x8xf32, #tpu.memory_space<vmem>>, vector<1x8x8xf32>
    %73 = vector.shape_cast %72 : vector<1x8x8xf32> to vector<8x8xf32>
    %74 = vector.shape_cast %71 : vector<8x8xf32> to vector<1x8x8xf32>
    tpu.vector_store %arg14[%c1_31, %c0_32, %c0_33], %74 {strides = array<i32>} : memref<4x8x8xf32, #tpu.memory_space<vmem>>, vector<1x8x8xf32>,
    %75 = vector.extract_strided_slice %16 {offsets = [0, 16], sizes = [8, 8], strides = [1, 1]} : vector<8x32xbf16> to vector<8x8xbf16>
    %76 = vector.extract_strided_slice %15 {offsets = [0, 16], sizes = [12, 8], strides = [1, 1]} : vector<12x32xbf16> to vector<12x8xbf16>
    %cst_34 = arith.constant dense<0.000000e+00> : vector<8x12xf32>
    %77 = tpu.matmul %75, %76, %cst_34 {dimension_numbers = #tpu.dot_dimension_numbers<[1], [1], [0], [0], [0, 0, 1, 0], [], []>} : vector<8x8xbf16>, vector<12x8xbf16>, vector<8x12xf32> -> vector<8x12xf32>
    %78 = vector.extract_strided_slice %17 {offsets = [0, 2], sizes = [8, 1], strides = [1, 1]} : vector<8x4xf32> to vector<8x1xf32>
    %cst_35 = arith.constant dense<0xFF800000> : vector<8xf32>
    %79 = vector.multi_reduction <maximumf>, %77, %cst_35 [1] : vector<8x12xf32> to vector<8xf32>
    %80 = vector.shape_cast %79 : vector<8xf32> to vector<8x1xf32>
    %81 = arith.maximumf %78, %80 : vector<8x1xf32>
    %82 = arith.subf %78, %81 : vector<8x1xf32>
    %83 = math.exp %82 : vector<8x1xf32>
    %84 = vector.broadcast %81 : vector<8x1xf32> to vector<8x12xf32>
    %85 = arith.subf %77, %84 : vector<8x12xf32>
    %86 = math.exp %85 : vector<8x12xf32>
    %87 = vector.extract_strided_slice %18 {offsets = [0, 2], sizes = [8, 1], strides = [1, 1]} : vector<8x4xf32> to vector<8x1xf32>
    %88 = arith.mulf %83, %87 : vector<8x1xf32>
    %cst_36 = arith.constant dense<0.000000e+00> : vector<8xf32>
    %89 = vector.multi_reduction <add>, %86, %cst_36 [1] : vector<8x12xf32> to vector<8xf32>
    %90 = vector.shape_cast %89 : vector<8xf32> to vector<8x1xf32>
    %91 = arith.addf %88, %90 : vector<8x1xf32>
    %c2 = arith.constant 2 : index
    %c0_37 = arith.constant 0 : index
    %c0_38 = arith.constant 0 : index
    %92 = vector.load %arg14[%c2, %c0_37, %c0_38] : memref<4x8x8xf32, #tpu.memory_space<vmem>>, vector<1x8x8xf32>
    %93 = vector.shape_cast %92 : vector<1x8x8xf32> to vector<8x8xf32>
    %94 = vector.broadcast %83 : vector<8x1xf32> to vector<8x8xf32>
    %95 = arith.mulf %94, %93 : vector<8x8xf32>
    %96 = arith.truncf %86 : vector<8x12xf32> to vector<8x12xbf16>
    %97 = vector.extract_strided_slice %7 {offsets = [0, 16], sizes = [12, 8], strides = [1, 1]} : vector<12x32xbf16> to vector<12x8xbf16>
    %cst_39 = arith.constant dense<0.000000e+00> : vector<8x8xf32>
    %98 = tpu.matmul %96, %97, %cst_39 {dimension_numbers = #tpu.dot_dimension_numbers<[1], [0], [0], [1], [0, 0, 1, 1], [], []>} : vector<8x12xbf16>, vector<12x8xbf16>, vector<8x8xf32> -> vector<8x8xf32>
    %99 = arith.addf %95, %98 : vector<8x8xf32>
    %c2_40 = arith.constant 2 : index
    %c0_41 = arith.constant 0 : index
    %c0_42 = arith.constant 0 : index
    %100 = vector.load %arg14[%c2_40, %c0_41, %c0_42] : memref<4x8x8xf32, #tpu.memory_space<vmem>>, vector<1x8x8xf32>
    %101 = vector.shape_cast %100 : vector<1x8x8xf32> to vector<8x8xf32>
    %102 = vector.shape_cast %99 : vector<8x8xf32> to vector<1x8x8xf32>
    tpu.vector_store %arg14[%c2_40, %c0_41, %c0_42], %102 {strides = array<i32>} : memref<4x8x8xf32, #tpu.memory_space<vmem>>, vector<1x8x8xf32>,
    %103 = vector.extract_strided_slice %16 {offsets = [0, 24], sizes = [8, 8], strides = [1, 1]} : vector<8x32xbf16> to vector<8x8xbf16>
    %104 = vector.extract_strided_slice %15 {offsets = [0, 24], sizes = [12, 8], strides = [1, 1]} : vector<12x32xbf16> to vector<12x8xbf16>
    %cst_43 = arith.constant dense<0.000000e+00> : vector<8x12xf32>
    %105 = tpu.matmul %103, %104, %cst_43 {dimension_numbers = #tpu.dot_dimension_numbers<[1], [1], [0], [0], [0, 0, 1, 0], [], []>} : vector<8x8xbf16>, vector<12x8xbf16>, vector<8x12xf32> -> vector<8x12xf32>
    %106 = vector.extract_strided_slice %17 {offsets = [0, 3], sizes = [8, 1], strides = [1, 1]} : vector<8x4xf32> to vector<8x1xf32>
    %cst_44 = arith.constant dense<0xFF800000> : vector<8xf32>
    %107 = vector.multi_reduction <maximumf>, %105, %cst_44 [1] : vector<8x12xf32> to vector<8xf32>
    %108 = vector.shape_cast %107 : vector<8xf32> to vector<8x1xf32>
    %109 = arith.maximumf %106, %108 : vector<8x1xf32>
    %110 = arith.subf %106, %109 : vector<8x1xf32>
    %111 = math.exp %110 : vector<8x1xf32>
    %112 = vector.broadcast %109 : vector<8x1xf32> to vector<8x12xf32>
    %113 = arith.subf %105, %112 : vector<8x12xf32>
    %114 = math.exp %113 : vector<8x12xf32>
    %115 = vector.extract_strided_slice %18 {offsets = [0, 3], sizes = [8, 1], strides = [1, 1]} : vector<8x4xf32> to vector<8x1xf32>
    %116 = arith.mulf %111, %115 : vector<8x1xf32>
    %cst_45 = arith.constant dense<0.000000e+00> : vector<8xf32>
    %117 = vector.multi_reduction <add>, %114, %cst_45 [1] : vector<8x12xf32> to vector<8xf32>
    %118 = vector.shape_cast %117 : vector<8xf32> to vector<8x1xf32>
    %119 = arith.addf %116, %118 : vector<8x1xf32>
    %c3 = arith.constant 3 : index
    %c0_46 = arith.constant 0 : index
    %c0_47 = arith.constant 0 : index
    %120 = vector.load %arg14[%c3, %c0_46, %c0_47] : memref<4x8x8xf32, #tpu.memory_space<vmem>>, vector<1x8x8xf32>
    %121 = vector.shape_cast %120 : vector<1x8x8xf32> to vector<8x8xf32>
    %122 = vector.broadcast %111 : vector<8x1xf32> to vector<8x8xf32>
    %123 = arith.mulf %122, %121 : vector<8x8xf32>
    %124 = arith.truncf %114 : vector<8x12xf32> to vector<8x12xbf16>
    %125 = vector.extract_strided_slice %7 {offsets = [0, 24], sizes = [12, 8], strides = [1, 1]} : vector<12x32xbf16> to vector<12x8xbf16>
    %cst_48 = arith.constant dense<0.000000e+00> : vector<8x8xf32>
    %126 = tpu.matmul %124, %125, %cst_48 {dimension_numbers = #tpu.dot_dimension_numbers<[1], [0], [0], [1], [0, 0, 1, 1], [], []>} : vector<8x12xbf16>, vector<12x8xbf16>, vector<8x8xf32> -> vector<8x8xf32>
    %127 = arith.addf %123, %126 : vector<8x8xf32>
    %c3_49 = arith.constant 3 : index
    %c0_50 = arith.constant 0 : index
    %c0_51 = arith.constant 0 : index
    %128 = vector.load %arg14[%c3_49, %c0_50, %c0_51] : memref<4x8x8xf32, #tpu.memory_space<vmem>>, vector<1x8x8xf32>
    %129 = vector.shape_cast %128 : vector<1x8x8xf32> to vector<8x8xf32>
    %130 = vector.shape_cast %127 : vector<8x8xf32> to vector<1x8x8xf32>
    tpu.vector_store %arg14[%c3_49, %c0_50, %c0_51], %130 {strides = array<i32>} : memref<4x8x8xf32, #tpu.memory_space<vmem>>, vector<1x8x8xf32>,
    %131 = tpu.concatenate %25, %53, %81, %109 in 1 : vector<8x1xf32>, vector<8x1xf32>, vector<8x1xf32>, vector<8x1xf32> -> vector<8x4xf32>
    %c0_52 = arith.constant 0 : index
    %c0_53 = arith.constant 0 : index
    %132 = vector.load %arg12[%c0_52, %c0_53] : memref<8x4xf32, #tpu.memory_space<vmem>>, vector<8x4xf32>
    tpu.vector_store %arg12[%c0_52, %c0_53], %131 {strides = array<i32>} : memref<8x4xf32, #tpu.memory_space<vmem>>, vector<8x4xf32>,
    %133 = tpu.concatenate %35, %63, %91, %119 in 1 : vector<8x1xf32>, vector<8x1xf32>, vector<8x1xf32>, vector<8x1xf32> -> vector<8x4xf32>
    %c0_54 = arith.constant 0 : index
    %c0_55 = arith.constant 0 : index
    %134 = vector.load %arg13[%c0_54, %c0_55] : memref<8x4xf32, #tpu.memory_space<vmem>>, vector<8x4xf32>
    tpu.vector_store %arg13[%c0_54, %c0_55], %133 {strides = array<i32>} : memref<8x4xf32, #tpu.memory_space<vmem>>, vector<8x4xf32>,
    %c0_i32_56 = arith.constant 0 : i32
    %135 = arith.cmpi eq, %arg2, %c0_i32_56 : i32
    %136 = arith.extui %135 : i1 to i32
    %c0_i32_57 = arith.constant 0 : i32
    %137 = arith.cmpi ne, %136, %c0_i32_57 : i32
    scf.if %137 {
      %c0_58 = arith.constant 0 : index
      %c0_59 = arith.constant 0 : index
      %138 = vector.load %arg13[%c0_58, %c0_59] : memref<8x4xf32, #tpu.memory_space<vmem>>, vector<8x4xf32>
      %139 = tpu.reciprocal %138 {approx = true} : vector<8x4xf32> -> vector<8x4xf32>
      %c0_60 = arith.constant 0 : index
      %c0_61 = arith.constant 0 : index
      %c0_62 = arith.constant 0 : index
      %140 = vector.load %arg14[%c0_60, %c0_61, %c0_62] : memref<4x8x8xf32, #tpu.memory_space<vmem>>, vector<1x8x8xf32>
      %141 = vector.shape_cast %140 : vector<1x8x8xf32> to vector<8x8xf32>
      %142 = vector.extract_strided_slice %139 {offsets = [0, 0], sizes = [8, 1], strides = [1, 1]} : vector<8x4xf32> to vector<8x1xf32>
      %143 = vector.broadcast %142 : vector<8x1xf32> to vector<8x8xf32>
      %144 = arith.mulf %141, %143 : vector<8x8xf32>
      %c1_63 = arith.constant 1 : index
      %c0_64 = arith.constant 0 : index
      %c0_65 = arith.constant 0 : index
      %145 = vector.load %arg14[%c1_63, %c0_64, %c0_65] : memref<4x8x8xf32, #tpu.memory_space<vmem>>, vector<1x8x8xf32>
      %146 = vector.shape_cast %145 : vector<1x8x8xf32> to vector<8x8xf32>
      %147 = vector.extract_strided_slice %139 {offsets = [0, 1], sizes = [8, 1], strides = [1, 1]} : vector<8x4xf32> to vector<8x1xf32>
      %148 = vector.broadcast %147 : vector<8x1xf32> to vector<8x8xf32>
      %149 = arith.mulf %146, %148 : vector<8x8xf32>
      %c2_66 = arith.constant 2 : index
      %c0_67 = arith.constant 0 : index
      %c0_68 = arith.constant 0 : index
      %150 = vector.load %arg14[%c2_66, %c0_67, %c0_68] : memref<4x8x8xf32, #tpu.memory_space<vmem>>, vector<1x8x8xf32>
      %151 = vector.shape_cast %150 : vector<1x8x8xf32> to vector<8x8xf32>
      %152 = vector.extract_strided_slice %139 {offsets = [0, 2], sizes = [8, 1], strides = [1, 1]} : vector<8x4xf32> to vector<8x1xf32>
      %153 = vector.broadcast %152 : vector<8x1xf32> to vector<8x8xf32>
      %154 = arith.mulf %151, %153 : vector<8x8xf32>
      %c3_69 = arith.constant 3 : index
      %c0_70 = arith.constant 0 : index
      %c0_71 = arith.constant 0 : index
      %155 = vector.load %arg14[%c3_69, %c0_70, %c0_71] : memref<4x8x8xf32, #tpu.memory_space<vmem>>, vector<1x8x8xf32>
      %156 = vector.shape_cast %155 : vector<1x8x8xf32> to vector<8x8xf32>
      %157 = vector.extract_strided_slice %139 {offsets = [0, 3], sizes = [8, 1], strides = [1, 1]} : vector<8x4xf32> to vector<8x1xf32>
      %158 = vector.broadcast %157 : vector<8x1xf32> to vector<8x8xf32>
      %159 = arith.mulf %156, %158 : vector<8x8xf32>
      %160 = tpu.concatenate %144, %149, %154, %159 in 1 : vector<8x8xf32>, vector<8x8xf32>, vector<8x8xf32>, vector<8x8xf32> -> vector<8x32xf32>
      %161 = arith.truncf %160 : vector<8x32xf32> to vector<8x32xbf16>
      %c0_72 = arith.constant 0 : index
      %c0_73 = arith.constant 0 : index
      %c0_74 = arith.constant 0 : index
      %162 = vector.load %arg10[%c0_72, %c0_73, %c0_74] : memref<1x8x32xbf16, #tpu.memory_space<vmem>>, vector<1x8x32xbf16>
      %163 = vector.shape_cast %162 : vector<1x8x32xbf16> to vector<8x32xbf16>
      %164 = vector.shape_cast %161 : vector<8x32xbf16> to vector<1x8x32xbf16>
      tpu.vector_store %arg10[%c0_72, %c0_73, %c0_74], %164 {strides = array<i32>} : memref<1x8x32xbf16, #tpu.memory_space<vmem>>, vector<1x8x32xbf16>,
    } else {
    }
    return
  }
  func.func @transform_0(%arg0: i32, %arg1: i32, %arg2: i32) -> (i32, i32) {
    %c0_i32 = arith.constant 0 : i32
    %c0_i32_0 = arith.constant 0 : i32
    %c0_i32_1 = arith.constant 0 : i32
    return %c0_i32, %c0_i32_0 : i32, i32
  }
  func.func @transform_1(%arg0: i32, %arg1: i32, %arg2: i32) -> (i32, i32, i32) {
    %c0_i32 = arith.constant 0 : i32
    %c0_i32_0 = arith.constant 0 : i32
    return %arg0, %arg1, %c0_i32 : i32, i32, i32
  }
  func.func @transform_2(%arg0: i32, %arg1: i32, %arg2: i32) -> (i32, i32, i32) {
    %c0_i32 = arith.constant 0 : i32
    %c0_i32_0 = arith.constant 0 : i32
    return %arg0, %arg2, %c0_i32 : i32, i32, i32
  }
  func.func @transform_3(%arg0: i32, %arg1: i32, %arg2: i32) -> (i32, i32) {
    %c0_i32 = arith.constant 0 : i32
    %c0_i32_0 = arith.constant 0 : i32
    return %arg1, %c0_i32 : i32, i32
  }
  func.func @transform_4(%arg0: i32, %arg1: i32, %arg2: i32) -> (i32, i32) {
    %c0_i32 = arith.constant 0 : i32
    %c0_i32_0 = arith.constant 0 : i32
    return %arg1, %c0_i32 : i32, i32
  }
  func.func @transform_5(%arg0: i32, %arg1: i32, %arg2: i32) -> (i32, i32) {
    %c0_i32 = arith.constant 0 : i32
    %c0_i32_0 = arith.constant 0 : i32
    return %arg2, %c0_i32 : i32, i32
  }
  func.func @transform_6(%arg0: i32, %arg1: i32, %arg2: i32) -> (i32, i32) {
    %c0_i32 = arith.constant 0 : i32
    %c0_i32_0 = arith.constant 0 : i32
    return %arg2, %c0_i32 : i32, i32
  }
  func.func @transform_7(%arg0: i32, %arg1: i32, %arg2: i32) -> (i32, i32, i32) {
    %c0_i32 = arith.constant 0 : i32
    %c0_i32_0 = arith.constant 0 : i32
    return %arg0, %arg1, %c0_i32 : i32, i32, i32
  }
}

module attributes {stable_mosaic.version = 11 : i64} {
  func.func @_swiglu_kernel(%arg0: i32, %arg1: i32, %arg2: memref<8x32xbf16, #tpu.memory_space<vmem>>, %arg3: memref<1x32xf32, #tpu.memory_space<vmem>>, %arg4: memref<32x85xbf16, #tpu.memory_space<vmem>>, %arg5: memref<32x85xbf16, #tpu.memory_space<vmem>>, %arg6: memref<85x32xbf16, #tpu.memory_space<vmem>>, %arg7: memref<8x32xbf16, #tpu.memory_space<vmem>>, %arg8: memref<8x32xbf16, #tpu.memory_space<vmem>>, %arg9: memref<8x32xf32, #tpu.memory_space<vmem>>, %arg10: memref<8x32xbf16, #tpu.memory_space<vmem>>) attributes {dimension_semantics = [#tpu.dimension_semantics<parallel>, #tpu.dimension_semantics<arbitrary>], iteration_bounds = array<i64: 2, 1>, scalar_prefetch = 0 : i64, scratch_operands = 2 : i64, tpu.core_type = #tpu.core_type<tc>, window_params = [{transform_indices = @transform_0, window_bounds = array<i64: 8, 32>}, {pipeline_mode = #tpu.pipeline_mode<synchronous>, transform_indices = @transform_1, window_bounds = array<i64: 1, 32>}, {transform_indices = @transform_2, window_bounds = array<i64: 32, 85>}, {transform_indices = @transform_3, window_bounds = array<i64: 32, 85>}, {transform_indices = @transform_4, window_bounds = array<i64: 85, 32>}, {transform_indices = @transform_5, window_bounds = array<i64: 8, 32>}, {transform_indices = @transform_6, window_bounds = array<i64: 8, 32>}]} {
    %c0_i32 = arith.constant 0 : i32
    %0 = arith.cmpi eq, %arg1, %c0_i32 : i32
    %1 = arith.extui %0 : i1 to i32
    %c0_i32_0 = arith.constant 0 : i32
    %2 = arith.cmpi ne, %1, %c0_i32_0 : i32
    scf.if %2 {
      %cst_17 = arith.constant 0.000000e+00 : f32
      %24 = vector.broadcast %cst_17 : f32 to vector<8x32xf32>
      %c0_18 = arith.constant 0 : index
      %c0_19 = arith.constant 0 : index
      %25 = vector.load %arg9[%c0_18, %c0_19] : memref<8x32xf32, #tpu.memory_space<vmem>>, vector<8x32xf32>
      tpu.vector_store %arg9[%c0_18, %c0_19], %24 {strides = array<i32>} : memref<8x32xf32, #tpu.memory_space<vmem>>, vector<8x32xf32>,
      %c0_20 = arith.constant 0 : index
      %c0_21 = arith.constant 0 : index
      %26 = vector.load %arg2[%c0_20, %c0_21] : memref<8x32xbf16, #tpu.memory_space<vmem>>, vector<8x32xbf16>
      %27 = arith.extf %26 : vector<8x32xbf16> to vector<8x32xf32>
      %28 = arith.mulf %27, %27 : vector<8x32xf32>
      %cst_22 = arith.constant dense<0.000000e+00> : vector<8xf32>
      %29 = vector.multi_reduction <add>, %28, %cst_22 [1] : vector<8x32xf32> to vector<8xf32>
      %30 = vector.shape_cast %29 : vector<8xf32> to vector<8x1xf32>
      %cst_23 = arith.constant 3.200000e+01 : f32
      %31 = vector.broadcast %cst_23 : f32 to vector<8x1xf32>
      %32 = arith.divf %30, %31 : vector<8x1xf32>
      %cst_24 = arith.constant 9.99999993E-9 : f32
      %33 = vector.broadcast %cst_24 : f32 to vector<8x1xf32>
      %34 = arith.addf %32, %33 : vector<8x1xf32>
      %35 = math.rsqrt %34 : vector<8x1xf32>
      %36 = vector.broadcast %35 : vector<8x1xf32> to vector<8x32xf32>
      %37 = arith.mulf %27, %36 : vector<8x32xf32>
      %c0_25 = arith.constant 0 : index
      %c0_26 = arith.constant 0 : index
      %38 = vector.load %arg3[%c0_25, %c0_26] : memref<1x32xf32, #tpu.memory_space<vmem>>, vector<1x32xf32>
      %39 = vector.broadcast %38 : vector<1x32xf32> to vector<8x32xf32>
      %40 = arith.mulf %37, %39 : vector<8x32xf32>
      %41 = arith.truncf %40 : vector<8x32xf32> to vector<8x32xbf16>
      %c0_27 = arith.constant 0 : index
      %c0_28 = arith.constant 0 : index
      %42 = vector.load %arg10[%c0_27, %c0_28] : memref<8x32xbf16, #tpu.memory_space<vmem>>, vector<8x32xbf16>
      tpu.vector_store %arg10[%c0_27, %c0_28], %41 {strides = array<i32>} : memref<8x32xbf16, #tpu.memory_space<vmem>>, vector<8x32xbf16>,
    } else {
    }
    %c0 = arith.constant 0 : index
    %c0_1 = arith.constant 0 : index
    %3 = vector.load %arg10[%c0, %c0_1] : memref<8x32xbf16, #tpu.memory_space<vmem>>, vector<8x32xbf16>
    %c0_2 = arith.constant 0 : index
    %c0_3 = arith.constant 0 : index
    %4 = vector.load %arg4[%c0_2, %c0_3] : memref<32x85xbf16, #tpu.memory_space<vmem>>, vector<32x85xbf16>
    %cst = arith.constant dense<0.000000e+00> : vector<8x85xf32>
    %5 = tpu.matmul %3, %4, %cst {dimension_numbers = #tpu.dot_dimension_numbers<[1], [0], [0], [1], [0, 0, 1, 1], [], []>} : vector<8x32xbf16>, vector<32x85xbf16>, vector<8x85xf32> -> vector<8x85xf32>
    %c0_4 = arith.constant 0 : index
    %c0_5 = arith.constant 0 : index
    %6 = vector.load %arg5[%c0_4, %c0_5] : memref<32x85xbf16, #tpu.memory_space<vmem>>, vector<32x85xbf16>
    %cst_6 = arith.constant dense<0.000000e+00> : vector<8x85xf32>
    %7 = tpu.matmul %3, %6, %cst_6 {dimension_numbers = #tpu.dot_dimension_numbers<[1], [0], [0], [1], [0, 0, 1, 1], [], []>} : vector<8x32xbf16>, vector<32x85xbf16>, vector<8x85xf32> -> vector<8x85xf32>
    %8 = arith.negf %5 : vector<8x85xf32>
    %9 = math.exp %8 : vector<8x85xf32>
    %cst_7 = arith.constant 1.000000e+00 : f32
    %10 = vector.broadcast %cst_7 : f32 to vector<8x85xf32>
    %11 = arith.addf %10, %9 : vector<8x85xf32>
    %12 = arith.divf %10, %11 : vector<8x85xf32>
    %13 = arith.mulf %5, %12 : vector<8x85xf32>
    %14 = arith.mulf %13, %7 : vector<8x85xf32>
    %c0_8 = arith.constant 0 : index
    %c0_9 = arith.constant 0 : index
    %15 = vector.load %arg9[%c0_8, %c0_9] : memref<8x32xf32, #tpu.memory_space<vmem>>, vector<8x32xf32>
    %16 = arith.truncf %14 : vector<8x85xf32> to vector<8x85xbf16>
    %c0_10 = arith.constant 0 : index
    %c0_11 = arith.constant 0 : index
    %17 = vector.load %arg6[%c0_10, %c0_11] : memref<85x32xbf16, #tpu.memory_space<vmem>>, vector<85x32xbf16>
    %cst_12 = arith.constant dense<0.000000e+00> : vector<8x32xf32>
    %18 = tpu.matmul %16, %17, %cst_12 {dimension_numbers = #tpu.dot_dimension_numbers<[1], [0], [0], [1], [0, 0, 1, 1], [], []>} : vector<8x85xbf16>, vector<85x32xbf16>, vector<8x32xf32> -> vector<8x32xf32>
    %19 = arith.addf %15, %18 : vector<8x32xf32>
    %c0_13 = arith.constant 0 : index
    %c0_14 = arith.constant 0 : index
    %20 = vector.load %arg9[%c0_13, %c0_14] : memref<8x32xf32, #tpu.memory_space<vmem>>, vector<8x32xf32>
    tpu.vector_store %arg9[%c0_13, %c0_14], %19 {strides = array<i32>} : memref<8x32xf32, #tpu.memory_space<vmem>>, vector<8x32xf32>,
    %c0_i32_15 = arith.constant 0 : i32
    %21 = arith.cmpi eq, %arg1, %c0_i32_15 : i32
    %22 = arith.extui %21 : i1 to i32
    %c0_i32_16 = arith.constant 0 : i32
    %23 = arith.cmpi ne, %22, %c0_i32_16 : i32
    scf.if %23 {
      %c0_17 = arith.constant 0 : index
      %c0_18 = arith.constant 0 : index
      %24 = vector.load %arg9[%c0_17, %c0_18] : memref<8x32xf32, #tpu.memory_space<vmem>>, vector<8x32xf32>
      %c0_19 = arith.constant 0 : index
      %c0_20 = arith.constant 0 : index
      %25 = vector.load %arg7[%c0_19, %c0_20] : memref<8x32xbf16, #tpu.memory_space<vmem>>, vector<8x32xbf16>
      %26 = arith.extf %25 : vector<8x32xbf16> to vector<8x32xf32>
      %27 = arith.addf %24, %26 : vector<8x32xf32>
      %28 = arith.truncf %27 : vector<8x32xf32> to vector<8x32xbf16>
      %c0_21 = arith.constant 0 : index
      %c0_22 = arith.constant 0 : index
      %29 = vector.load %arg8[%c0_21, %c0_22] : memref<8x32xbf16, #tpu.memory_space<vmem>>, vector<8x32xbf16>
      tpu.vector_store %arg8[%c0_21, %c0_22], %28 {strides = array<i32>} : memref<8x32xbf16, #tpu.memory_space<vmem>>, vector<8x32xbf16>,
    } else {
    }
    return
  }
  func.func @transform_0(%arg0: i32, %arg1: i32) -> (i32, i32) {
    %c0_i32 = arith.constant 0 : i32
    %c0_i32_0 = arith.constant 0 : i32
    return %arg0, %c0_i32 : i32, i32
  }
  func.func @transform_1(%arg0: i32, %arg1: i32) -> (i32, i32) {
    %c0_i32 = arith.constant 0 : i32
    %c0_i32_0 = arith.constant 0 : i32
    %c0_i32_1 = arith.constant 0 : i32
    return %c0_i32, %c0_i32_0 : i32, i32
  }
  func.func @transform_2(%arg0: i32, %arg1: i32) -> (i32, i32) {
    %c0_i32 = arith.constant 0 : i32
    %c0_i32_0 = arith.constant 0 : i32
    return %c0_i32, %arg1 : i32, i32
  }
  func.func @transform_3(%arg0: i32, %arg1: i32) -> (i32, i32) {
    %c0_i32 = arith.constant 0 : i32
    %c0_i32_0 = arith.constant 0 : i32
    return %c0_i32, %arg1 : i32, i32
  }
  func.func @transform_4(%arg0: i32, %arg1: i32) -> (i32, i32) {
    %c0_i32 = arith.constant 0 : i32
    %c0_i32_0 = arith.constant 0 : i32
    return %arg1, %c0_i32 : i32, i32
  }
  func.func @transform_5(%arg0: i32, %arg1: i32) -> (i32, i32) {
    %c0_i32 = arith.constant 0 : i32
    %c0_i32_0 = arith.constant 0 : i32
    return %arg0, %c0_i32 : i32, i32
  }
  func.func @transform_6(%arg0: i32, %arg1: i32) -> (i32, i32) {
    %c0_i32 = arith.constant 0 : i32
    %c0_i32_0 = arith.constant 0 : i32
    return %arg0, %c0_i32 : i32, i32
  }
}

</mosaic_0001>

<llo_original>
// kernel: tile.29
$region0: #{tile.29}
  %s0 = inlined_call_operand.vmem [shape: f32[8,4,8], index: 0, kind: input, shape index: {}]
  %s1 = inlined_call_operand.vmem [shape: f32[8,32], index: 1, kind: output, shape index: {}]
  $region1: #{tile.29} parent=0
    #allocation0 [shape = 'u8[32768]{0}', space=vmem, size = 0x8000, scoped, tag = 'scoped mem for input reshape']
    %s3 = sshllo.u32 0, 4
    %s4 = smul.addr 4, 7
    %s5 = scalar_lea.vmem %s0, %s4
    %v6 = vld [vmem:[%s5] sm:%s3]
    %s7 = scalar_lea.vmem [#allocation0], 56
    %8 = vst [vmem:[%s7] sm:%s3] %v6
    %s9 = smul.addr 4, 6
    %s10 = scalar_lea.vmem %s0, %s9
    %v11 = vld [vmem:[%s10] sm:%s3]
    %s12 = scalar_lea.vmem [#allocation0], 48
    %13 = vst [vmem:[%s12] sm:%s3] %v11
    %s14 = smul.addr 4, 5
    %s15 = scalar_lea.vmem %s0, %s14
    %v16 = vld [vmem:[%s15] sm:%s3]
    %s17 = scalar_lea.vmem [#allocation0], 40
    %18 = vst [vmem:[%s17] sm:%s3] %v16
    %s19 = smul.addr 4, 4
    %s20 = scalar_lea.vmem %s0, %s19
    %v21 = vld [vmem:[%s20] sm:%s3]
    %s22 = scalar_lea.vmem [#allocation0], 32
    %23 = vst [vmem:[%s22] sm:%s3] %v21
    %s24 = smul.addr 4, 3
    %s25 = scalar_lea.vmem %s0, %s24
    %v26 = vld [vmem:[%s25] sm:%s3]
    %s27 = scalar_lea.vmem [#allocation0], 24
    %28 = vst [vmem:[%s27] sm:%s3] %v26
    %s29 = smul.addr 4, 2
    %s30 = scalar_lea.vmem %s0, %s29
    %v31 = vld [vmem:[%s30] sm:%s3]
    %s32 = scalar_lea.vmem [#allocation0], 16
    %33 = vst [vmem:[%s32] sm:%s3] %v31
    %s34 = scalar_lea.vmem %s0, 4
    %v35 = vld [vmem:[%s34] sm:%s3]
    %s36 = scalar_lea.vmem [#allocation0], 8
    %37 = vst [vmem:[%s36] sm:%s3] %v35
    %v38 = vld [vmem:[%s0] sm:%s3]
    %39 = vst [vmem:[#allocation0] sm:%s3] %v38
    %v40 = vld [vmem:[#allocation0] ss:$8 sm:$0xf]
    %v41 = vld [vmem:[#allocation0] ss:$8 sm:$0xf0]
    %vm42 = vcmask 1047556
    %v43 = vsel %vm42, %v41, %v40
    %vm44 = vcmask 64512
    %45 = vst.msk [vmem:[%s1] sm:$0xff] %vm44, %v43
    %s46 = scalar_lea.vmem [#allocation0], 3
    %v47 = vld [vmem:[%s46] ss:$8 sm:$0xf]
    %s48 = scalar_lea.vmem [#allocation0], 3
    %v49 = vld [vmem:[%s48] ss:$8 sm:$0xf0]
    %vm50 = vcmask 1047556
    %v51 = vsel %vm50, %v49, %v47
    %52 = vrot.lane.b32.xlu0 %v51, 24
    %v53 = vpop.permute.xlu0 %52
    %vm54 = vcmask 261312
    %55 = vst.msk [vmem:[%s1] sm:$0xff] %vm54, %v53
    %s56 = scalar_lea.vmem [#allocation0], 2
    %v57 = vld [vmem:[%s56] ss:$8 sm:$0xf]
    %s58 = scalar_lea.vmem [#allocation0], 2
    %v59 = vld [vmem:[%s58] ss:$8 sm:$0xf0]
    %vm60 = vcmask 1047556
    %v61 = vsel %vm60, %v59, %v57
    %62 = vrot.lane.b32.xlu0 %v61, 16
    %v63 = vpop.permute.xlu0 %62
    %vm64 = vcmask 195712
    %65 = vst.msk [vmem:[%s1] sm:$0xff] %vm64, %v63
    %s66 = scalar_lea.vmem [#allocation0], 1
    %v67 = vld [vmem:[%s66] ss:$8 sm:$0xf]
    %s68 = scalar_lea.vmem [#allocation0], 1
    %v69 = vld [vmem:[%s68] ss:$8 sm:$0xf0]
    %vm70 = vcmask 1047556
    %v71 = vsel %vm70, %v69, %v67
    %72 = vrot.lane.b32.xlu0 %v71, 8
    %v73 = vpop.permute.xlu0 %72
    %vm74 = vcmask 130112
    %75 = vst.msk [vmem:[%s1] sm:$0xff] %vm74, %v73

// kernel: conditional_transformer.18
$region0: #{conditional_transformer.18}
  #allocation0 [shape = 'u32[]', space=smem, size = 0x4, offset = 0x4, fixed_abs, tag = 'smem constant byte address 0x4 - core index']
  #allocation1 [shape = 'u32[144,128]{1,0:T(1,128)}', space=vmem, size = 0x12000, scoped, tag = 'internal scratch']
  #allocation2 [shape = 'bf16[8,32]{1,0:T(8,128)(2,1)}', space=vmem, size = 0x800, scoped, tag = 'scratch operand']
  %s0 = inlined_call_operand.hbm [shape: bf16[16,32], index: 0, kind: input, shape index: {}]
  %s1 = inlined_call_operand.hbm [shape: f32[1,32], index: 1, kind: input, shape index: {}]
  %s2 = inlined_call_operand.hbm [shape: bf16[32,32], index: 2, kind: input, shape index: {}]
  %s3 = inlined_call_operand.hbm [shape: bf16[16,32], index: 3, kind: output, shape index: {}]
  %s4 = sld [smem:[#allocation0]]
  $region61: #{conditional_transformer.18} parent=0
    _
  %s6 = ssub.s32 1, %s4
  %s7 = scalar_select 0, %s6, %s4
  $region1: #{conditional_transformer.18} parent=0
    #allocation3 [shape = 'u8[4096]{0}', space=vmem, size = 0x1000, scoped, tag = 'input window, operand 0']
    #allocation4 [shape = 's32[2]{0}', space=sflag, size = 0x8, scoped, tag = 'scoped memory for conditional_transformer.18']
    #allocation5 [shape = 's32[2]{0}', space=sflag, size = 0x8, scoped, tag = 'scoped memory for conditional_transformer.18']
    #allocation6 [shape = 'u8[512]{0}', space=vmem, size = 0x400, scoped, tag = 'input window, operand 1, single buffered']
    #allocation7 [shape = 's32[1]{0}', space=sflag, size = 0x4, scoped, tag = 'scoped memory for conditional_transformer.18']
    #allocation8 [shape = 'u8[8192]{0}', space=vmem, size = 0x2000, scoped, tag = 'input window, operand 2, single buffered']
    #allocation9 [shape = 'u8[4096]{0}', space=vmem, size = 0x1000, scoped, tag = 'output window, operand 0']
    %8 = vsyncpa [#allocation4], 0
    %s9 = scalar_lea.sflag [#allocation4], 1
    %10 = vsyncpa %s9, 0
    %11 = vsyncpa [#allocation7], 0
    %12 = vsyncpa [#allocation5], 0
    %s13 = scalar_lea.sflag [#allocation5], 1
    %14 = vsyncpa %s13, 0
    loop: start=0, step=1, limit=4
    $region2: #{conditional_transformer.18} parent=1 // loop_pre_header
      _
    $region3: #{conditional_transformer.18} parent=1 // loop_header
      %s16 = sphi 0, %s20
      %p17 = scmp.ge.s32.totalorder %s16, 4
      %s23 = sphi 0, %s35
      %s24 = sphi 0, %s31
      %s25 = sphi 0, %s23
      %s26 = sphi 0, %s24
      %s27 = sphi 0, %s25
      %s28 = sphi 0, %s26
      %s38 = sphi 0, %s40
      %s41 = sphi 0, %s38
      %s42 = sphi 0, %s41
      %s58 = sphi 0, %s42
      %s62 = sphi 0, %s62
      %s64 = sphi 0, %s62
      %s65 = sphi 0, %s64
      %s79 = sphi 0, %s65
      %s85 = sphi 0, %s87
      %s88 = sphi 0, %s85
      %s89 = sphi 0, %s88
      %s105 = sphi 0, %s89
      %s113 = sphi 0, %s115
      %s116 = sphi 0, %s113
      %s117 = sphi 0, %s116
      %s133 = sphi 0, %s117
    $region4: #{conditional_transformer.18} parent=1 // loop_header_branch
      %19 = sbr.rel (%p17) target = $region8
    $region5: #{conditional_transformer.18} parent=1 // loop_body
      %s21 = ssub.s32 %s16, 1
      %s22 = ssub.s32 %s16, 2
      %s29 = sadd.s32 1, %s24
      %p30 = scmp.ge.s32.totalorder %s29, 1
      %s31 = scalar_select %p30, 0, %s29
      %s32 = sadd.s32 1, %s23
      %s33 = scalar_select %p30, %s32, %s23
      %p34 = scmp.ge.s32.totalorder %s33, 2
      %s35 = scalar_select %p34, 0, %s33
      %s36 = ssub.s32 %s23, %s35
      %p37 = scmp.eq.s32.totalorder %s36, 0
      %s39 = sadd.s32 %s38, 1
      %s40 = scalar_select %p37, %s38, %s39
      %p43 = pneg %p37
      %p44 = scmp.eq.s32.totalorder %s16, 1
      %p45 = por %p43, %p44
      %p46 = scmp.ne.s32.totalorder %s38, %s41
      %p47 = scmp.eq.s32.totalorder %s16, 0
      %p48 = por %p46, %p47
      %p49 = scmp.ne.s32.totalorder %s38, %s41
      %p50 = scmp.eq.s32.totalorder %s21, 1
      %p51 = por %p49, %p50
      %p52 = scmp.ne.s32.totalorder %s41, %s42
      %p53 = scmp.eq.s32.totalorder %s21, 0
      %p54 = por %p52, %p53
      %p55 = scmp.ne.s32.totalorder %s41, %s42
      %p56 = scmp.eq.s32.totalorder %s22, 1
      %p57 = por %p55, %p56
      %p59 = scmp.ne.s32.totalorder %s42, %s58
      %p60 = scmp.eq.s32.totalorder %s22, 0
      %p61 = por %p59, %p60
      %s63 = sadd.s32 %s62, 1
      %p66 = scmp.eq.s32.totalorder %s16, 1
      %p67 = scmp.ne.s32.totalorder %s62, %s64
      %p68 = scmp.eq.s32.totalorder %s16, 0
      %p69 = por %p67, %p68
      %p70 = scmp.ne.s32.totalorder %s62, %s64
      %p71 = scmp.eq.s32.totalorder %s21, 1
      %p72 = por %p70, %p71
      %p73 = scmp.ne.s32.totalorder %s64, %s65
      %p74 = scmp.eq.s32.totalorder %s21, 0
      %p75 = por %p73, %p74
      %p76 = scmp.ne.s32.totalorder %s64, %s65
      %p77 = scmp.eq.s32.totalorder %s22, 1
      %p78 = por %p76, %p77
      %p80 = scmp.ne.s32.totalorder %s65, %s79
      %p81 = scmp.eq.s32.totalorder %s22, 0
      %p82 = por %p80, %p81
      %s83 = ssub.s32 %s24, %s31
      %p84 = scmp.eq.s32.totalorder %s83, 0
      %s86 = sadd.s32 %s85, 1
      %s87 = scalar_select %p84, %s85, %s86
      %p90 = pneg %p84
      %p91 = scmp.eq.s32.totalorder %s16, 1
      %p92 = por %p90, %p91
      %p93 = scmp.ne.s32.totalorder %s85, %s88
      %p94 = scmp.eq.s32.totalorder %s16, 0
      %p95 = por %p93, %p94
      %p96 = scmp.ne.s32.totalorder %s85, %s88
      %p97 = scmp.eq.s32.totalorder %s21, 1
      %p98 = por %p96, %p97
      %p99 = scmp.ne.s32.totalorder %s88, %s89
      %p100 = scmp.eq.s32.totalorder %s21, 0
      %p101 = por %p99, %p100
      %p102 = scmp.ne.s32.totalorder %s88, %s89
      %p103 = scmp.eq.s32.totalorder %s22, 1
      %p104 = por %p102, %p103
      %p106 = scmp.ne.s32.totalorder %s89, %s105
      %p107 = scmp.eq.s32.totalorder %s22, 0
      %p108 = por %p106, %p107
      %s109 = ssub.s32 %s23, %s35
      %s110 = ssub.s32 %s24, %s31
      %s111 = sor.u32 %s109, %s110
      %p112 = scmp.eq.s32.totalorder %s111, 0
      %s114 = sadd.s32 %s113, 1
      %s115 = scalar_select %p112, %s113, %s114
      %p118 = pneg %p112
      %p119 = scmp.eq.s32.totalorder %s16, 1
      %p120 = por %p118, %p119
      %p121 = scmp.ne.s32.totalorder %s113, %s116
      %p122 = scmp.eq.s32.totalorder %s16, 0
      %p123 = por %p121, %p122
      %p124 = scmp.ne.s32.totalorder %s113, %s116
      %p125 = scmp.eq.s32.totalorder %s21, 1
      %p126 = por %p124, %p125
      %p127 = scmp.ne.s32.totalorder %s116, %s117
      %p128 = scmp.eq.s32.totalorder %s21, 0
      %p129 = por %p127, %p128
      %p130 = scmp.ne.s32.totalorder %s116, %s117
      %p131 = scmp.eq.s32.totalorder %s22, 1
      %p132 = por %p130, %p131
      %p134 = scmp.ne.s32.totalorder %s117, %s133
      %p135 = scmp.eq.s32.totalorder %s22, 0
      %p136 = por %p134, %p135
      %p137 = scmp.le.s32.totalorder 1, %s16
      %p138 = scmp.lt.s32.totalorder %s16, 3
      %p139 = pnand %p137, %p138
      %p140 = pneg %p139
      // Predicated region
      $region9: #{conditional_transformer.18} parent=5 // pred_check
        _
      $region10: #{conditional_transformer.18} parent=5 // pred_check_branch
        %142 = sbr.rel (%p139) target = $region12
      $region11: #{conditional_transformer.18} parent=5 // pred_region
        %s143 = ssub.s32 %s16, 1
        // Predicated region
        $region13: #{conditional_transformer.18} parent=11 // pred_check
          %p144 = pneg %p75
        $region14: #{conditional_transformer.18} parent=11 // pred_check_branch
          %146 = sbr.rel (%p144) target = $region16
        $region15: #{conditional_transformer.18} parent=11 // pred_region
          %s148 = ssub.s32 16, 16
          %149 = vsyncadd [#allocation7], %s148
          %s151 = sshll.u32 [#allocation6], 4
          %s152 = int_to_ptr.vmem [resolvable:$true] %s151
          %154 = dma.hbm_to_vmem [thread:$0]  %s1, 16, %s152, [#allocation7]
        $region16: #{conditional_transformer.18} parent=11 // pred_fallthru
          _
        // Predicated region
        $region17: #{conditional_transformer.18} parent=11 // pred_check
          %p155 = pneg %p101
        $region18: #{conditional_transformer.18} parent=11 // pred_check_branch
          %157 = sbr.rel (%p155) target = $region20
        $region19: #{conditional_transformer.18} parent=11 // pred_region
          %s159 = ssub.s32 256, 256
          %160 = vsyncadd [#allocation7], %s159
          %s161 = smul.addr %s26, 64
          %s162 = scalar_lea.hbm %s2, %s161
          %s163 = sshll.u32 [#allocation8], 4
          %s164 = int_to_ptr.vmem [resolvable:$true] %s163
          %169 = dma.hbm_to_vmem [thread:$0]  %s162, 256, %s164, [#allocation7], 64, 64, 4
        $region20: #{conditional_transformer.18} parent=11 // pred_fallthru
          _
      $region12: #{conditional_transformer.18} parent=5 // pred_fallthru
        _
      %p170 = scmp.lt.s32.totalorder %s16, 2
      // Predicated region
      $region21: #{conditional_transformer.18} parent=5 // pred_check
        %p171 = pneg %p170
      $region22: #{conditional_transformer.18} parent=5 // pred_check_branch
        %173 = sbr.rel (%p171) target = $region24
      $region23: #{conditional_transformer.18} parent=5 // pred_region
        // Predicated region
        $region25: #{conditional_transformer.18} parent=23 // pred_check
          %p174 = pneg %p48
        $region26: #{conditional_transformer.18} parent=23 // pred_check_branch
          %176 = sbr.rel (%p174) target = $region28
        $region27: #{conditional_transformer.18} parent=23 // pred_region
          %s177 = sand.u32 %s38, 1
          %s178 = scalar_lea.sflag [#allocation4], %s177
          %s179 = sand.u32 %s38, 1
          %s180 = smul.addr %s179, 4
          %s181 = scalar_lea.vmem [#allocation3], %s180
          %s183 = ssub.s32 64, 64
          %184 = vsyncadd %s178, %s183
          %s185 = smul.addr %s23, 64
          %s186 = scalar_lea.hbm %s0, %s185
          %s188 = sshll.u32 %s181, 4
          %s189 = int_to_ptr.vmem [resolvable:$true] %s188
          %191 = dma.hbm_to_vmem [thread:$0]  %s186, 64, %s189, %s178
        $region28: #{conditional_transformer.18} parent=23 // pred_fallthru
          _
      $region24: #{conditional_transformer.18} parent=5 // pred_fallthru
        _
      %p192 = scmp.le.s32.totalorder 1, %s16
      %p193 = scmp.lt.s32.totalorder %s16, 3
      %p194 = pnand %p192, %p193
      %p195 = pneg %p194
      // Predicated region
      $region29: #{conditional_transformer.18} parent=5 // pred_check
        _
      $region30: #{conditional_transformer.18} parent=5 // pred_check_branch
        %197 = sbr.rel (%p194) target = $region32
      $region31: #{conditional_transformer.18} parent=5 // pred_region
        %s198 = ssub.s32 %s16, 1
        %s199 = sand.u32 %s41, 1
        %s200 = scalar_lea.sflag [#allocation4], %s199
        %s201 = sand.u32 %s41, 1
        %s202 = smul.addr %s201, 4
        %s203 = scalar_lea.vmem [#allocation3], %s202
        // Predicated region
        $region33: #{conditional_transformer.18} parent=31 // pred_check
          %p204 = pneg %p54
        $region34: #{conditional_transformer.18} parent=31 // pred_check_branch
          %206 = sbr.rel (%p204) target = $region36
        $region35: #{conditional_transformer.18} parent=31 // pred_region
          %207 = dma.done %s200, 64
        $region36: #{conditional_transformer.18} parent=31 // pred_fallthru
          _
        // Predicated region
        $region37: #{conditional_transformer.18} parent=31 // pred_check
          %p208 = pneg %p75
        $region38: #{conditional_transformer.18} parent=31 // pred_check_branch
          %210 = sbr.rel (%p208) target = $region40
        $region39: #{conditional_transformer.18} parent=31 // pred_region
          %211 = dma.done [#allocation7], 16
        $region40: #{conditional_transformer.18} parent=31 // pred_fallthru
          _
        // Predicated region
        $region41: #{conditional_transformer.18} parent=31 // pred_check
          %p212 = pneg %p101
        $region42: #{conditional_transformer.18} parent=31 // pred_check_branch
          %214 = sbr.rel (%p212) target = $region44
        $region43: #{conditional_transformer.18} parent=31 // pred_region
          %215 = dma.done [#allocation7], 256
        $region44: #{conditional_transformer.18} parent=31 // pred_fallthru
          _
        %s216 = sand.u32 %s41, 1
        %s217 = scalar_lea.sflag [#allocation4], %s216
        %s218 = sand.u32 %s41, 1
        %s219 = smul.addr %s218, 4
        %s220 = scalar_lea.vmem [#allocation3], %s219
        %p221 = pneg %p54
        %p222 = pneg %p51
        %p223 = pneg %p75
        %p224 = pneg %p72
        %p225 = pneg %p101
        %p226 = pneg %p98
        %p227 = pneg %p129
        %p228 = pneg %p126
        %s229 = sand.u32 %s116, 1
        %s230 = scalar_lea.sflag [#allocation5], %s229
        %s231 = sand.u32 %s116, 1
        %s232 = smul.addr %s231, 4
        %s233 = scalar_lea.vmem [#allocation9], %s232
        %p235 = scmp.eq.s32.totalorder %s26, 0
        // Predicated region
        $region45: #{conditional_transformer.18} parent=31 // pred_check
          %p236 = pneg %p235
        $region46: #{conditional_transformer.18} parent=31 // pred_check_branch
          %238 = sbr.rel (%p236) target = $region48
        $region47: #{conditional_transformer.18} parent=31 // pred_region
          %v239 = vld [vmem:[%s203] sm:$0xf]
          %v240 = vunpack.c.l.bf16 %v239
          %v241 = vmul.f32 %v240, %v240
          %vm242 = vcmask 261120
          %v243 = vsel %vm242, %v241, 0.0
          %244 = vadd.xlane.f32.xlu0 %v243
          %v245 = vpop.xlane.xlu0 %244
          %v246 = vrcp.pop 32.0
          %v247 = vmul.f32 %v245, %v246
          %v248 = vadd.f32 %v247, 1e-08
          %v249 = vrsqrt.pop %v248
          %v250 = vmul.f32 %v240, %v249
          %v251 = vld [vmem:[#allocation6] sm:$0x1]
          %v253 = vlaneseq
          %v254 = vshrl.u32 %v253, 7
          %v255 = vsub.s32 0, %v254
          %v256 = vrot.slane %v251, %v255
          %v258 = vmul.f32 %v250, %v256
          %v259 = vpack.c.bf16 %v258, %v258
          %vm260 = vcmask 257024
          %261 = vst.msk [vmem:[#allocation2] sm:$0xf] %vm260, %v259
        $region48: #{conditional_transformer.18} parent=31 // pred_fallthru
          _
        %v262 = vld [vmem:[#allocation2] sm:$0xf]
        %v263 = vld [vmem:[#allocation8] sm:$0xf]
        %v264 = vld [vmem:[#allocation8 + $0x4] sm:$0xf]
        %v265 = vld [vmem:[#allocation8 + $0x8] sm:$0xf]
        %v266 = vld [vmem:[#allocation8 + $0xc] sm:$0xf]
        %v271 = vunpack.c.l.b16 %v263
        %v272 = vunpack.c.l.b16 %v264
        %v273 = vunpack.c.l.b16 %v265
        %v274 = vunpack.c.l.b16 %v266
        %v275 = vpack.c.b16 %v272, %v271
        %v276 = vpack.c.b16 %v274, %v273
        %vm279 = vcmask 261120
        %v281 = vsel %vm279, %v262, 0
        %283 = vmatprep.subr.bf16.mxu0 0
        %284 = vmatpush1.bf16.msra.mxu0 %v275
        %285 = vmatprep.subr.bf16.mxu0 0
        %286 = vmatpush1.bf16.msra.mxu0 %v276
        %287 = vmatprep.subr.bf16.mxu0 0
        %288 = vmatpush1.bf16.msra.mxu0 0
        %289 = vmatprep.subr.bf16.mxu0 0
        %290 = vmatpush1.bf16.msra.mxu0 0
        %291 = vmatprep.subr.bf16.mxu0 0
        %292 = vmatpush1.bf16.msra.mxu0 0
        %293 = vmatprep.subr.bf16.mxu0 0
        %294 = vmatpush1.bf16.msra.mxu0 0
        %295 = vmatprep.subr.bf16.mxu0 0
        %296 = vmatpush1.bf16.msra.mxu0 0
        %297 = vmatprep.subr.bf16.mxu0 0
        %298 = vmatpush1.bf16.msra.mxu0 0
        %299 = vmatprep.subr.bf16.mxu0 0
        %300 = vmatpush1.bf16.msra.mxu0 0
        %301 = vmatprep.subr.bf16.mxu0 0
        %302 = vmatpush1.bf16.msra.mxu0 0
        %303 = vmatprep.subr.bf16.mxu0 0
        %304 = vmatpush1.bf16.msra.mxu0 0
        %305 = vmatprep.subr.bf16.mxu0 0
        %306 = vmatpush1.bf16.msra.mxu0 0
        %307 = vmatprep.subr.bf16.mxu0 0
        %308 = vmatpush1.bf16.msra.mxu0 0
        %309 = vmatprep.subr.bf16.mxu0 0
        %310 = vmatpush1.bf16.msra.mxu0 0
        %311 = vmatprep.subr.bf16.mxu0 0
        %312 = vmatpush1.bf16.msra.mxu0 0
        %313 = vmatprep.subr.bf16.mxu0 0
        %314 = vmatpush1.bf16.msra.mxu0 0
        %315 = vmatprep.mubr.bf16.mxu0 0
        %316 = vmatmul.mubr.bf16.gmra.mrb[0].mxu0 %v281
        %v317 = vpop.f32.mrb[0].mxu0
        %v318 = vadd.f32 0.0, %v317
        %v319 = vpop.f32.mrb[0].mxu0
        %v320 = vpop.f32.mrb[0].mxu0
        %v321 = vpop.f32.mrb[0].mxu0
        %322 = vdwg.mxu0
        %v323 = vpack.c.bf16 %v318, %v318
        %vm324 = vcmask 257024
        %325 = vst.msk [vmem:[%s233] sm:$0xf] %vm324, %v323
        %s326 = sand.u32 %s116, 1
        %s327 = scalar_lea.sflag [#allocation5], %s326
        %s328 = sand.u32 %s116, 1
        %s329 = smul.addr %s328, 4
        %s330 = scalar_lea.vmem [#allocation9], %s329
        // Predicated region
        $region49: #{conditional_transformer.18} parent=31 // pred_check
          %p331 = pneg %p126
        $region50: #{conditional_transformer.18} parent=31 // pred_check_branch
          %333 = sbr.rel (%p331) target = $region52
        $region51: #{conditional_transformer.18} parent=31 // pred_region
          %s335 = ssub.s32 64, 64
          %336 = vsyncadd %s327, %s335
          %s337 = sadd.s32 %s26, %s25
          %s338 = smul.addr %s337, 64
          %s339 = scalar_lea.hbm %s3, %s338
          %s341 = sshll.u32 %s330, 4
          %s342 = int_to_ptr.vmem [resolvable:$true] %s341
          %344 = dma.vmem_to_hbm [thread:$0]  %s342, 64, %s339, %s327
        $region52: #{conditional_transformer.18} parent=31 // pred_fallthru
          _
      $region32: #{conditional_transformer.18} parent=5 // pred_fallthru
        _
      %p345 = scmp.le.s32.totalorder 2, %s16
      // Predicated region
      $region53: #{conditional_transformer.18} parent=5 // pred_check
        %p346 = pneg %p345
      $region54: #{conditional_transformer.18} parent=5 // pred_check_branch
        %348 = sbr.rel (%p346) target = $region56
      $region55: #{conditional_transformer.18} parent=5 // pred_region
        %s349 = ssub.s32 %s16, 2
        // Predicated region
        $region57: #{conditional_transformer.18} parent=55 // pred_check
          %p350 = pneg %p132
        $region58: #{conditional_transformer.18} parent=55 // pred_check_branch
          %352 = sbr.rel (%p350) target = $region60
        $region59: #{conditional_transformer.18} parent=55 // pred_region
          %s353 = sand.u32 %s117, 1
          %s354 = scalar_lea.sflag [#allocation5], %s353
          %s355 = sand.u32 %s117, 1
          %s356 = smul.addr %s355, 4
          %s357 = scalar_lea.vmem [#allocation9], %s356
          %358 = dma.done %s354, 64
        $region60: #{conditional_transformer.18} parent=55 // pred_fallthru
          _
      $region56: #{conditional_transformer.18} parent=5 // pred_fallthru
        _
    $region6: #{conditional_transformer.18} parent=1 // loop_footer
      %s20 = sadd.s32 1, %s16
    $region7: #{conditional_transformer.18} parent=1 // loop_footer_branch
      %15 = sbr.rel target = $region3
    $region8: #{conditional_transformer.18} parent=1 // loop_exit
      _
    %359 = vsyncpa [#allocation4], 1
    %s360 = scalar_lea.sflag [#allocation4], 1
    %361 = vsyncpa %s360, 1
    %362 = vsyncpa [#allocation7], 1
    %363 = vsyncpa [#allocation5], 1
    %s364 = scalar_lea.sflag [#allocation5], 1
    %365 = vsyncpa %s364, 1

// kernel: conditional_transformer.21
$region0: #{conditional_transformer.21}
  #allocation0 [shape = 'u32[]', space=smem, size = 0x4, offset = 0x4, fixed_abs, tag = 'smem constant byte address 0x4 - core index']
  #allocation1 [shape = 'u32[144,128]{1,0:T(1,128)}', space=vmem, size = 0x12000, scoped, tag = 'internal scratch']
  #allocation2 [shape = 'f32[8,32]{1,0:T(8,128)}', space=vmem, size = 0x1000, scoped, tag = 'scratch operand']
  %s0 = inlined_call_operand.hbm [shape: bf16[16,32], index: 0, kind: input, shape index: {}]
  %s1 = inlined_call_operand.hbm [shape: bf16[32,32], index: 1, kind: input, shape index: {}]
  %s2 = inlined_call_operand.hbm [shape: bf16[16,32], index: 2, kind: input, shape index: {}]
  %s3 = inlined_call_operand.hbm [shape: bf16[16,32], index: 3, kind: output, shape index: {}]
  %s4 = sld [smem:[#allocation0]]
  $region65: #{conditional_transformer.21} parent=0
    _
  %s6 = ssub.s32 1, %s4
  %s7 = scalar_select 0, %s6, %s4
  $region1: #{conditional_transformer.21} parent=0
    #allocation3 [shape = 'u8[4096]{0}', space=vmem, size = 0x1000, scoped, tag = 'input window, operand 0']
    #allocation4 [shape = 's32[2]{0}', space=sflag, size = 0x8, scoped, tag = 'scoped memory for conditional_transformer.21']
    #allocation5 [shape = 's32[2]{0}', space=sflag, size = 0x8, scoped, tag = 'scoped memory for conditional_transformer.21']
    #allocation6 [shape = 'u8[8192]{0}', space=vmem, size = 0x2000, scoped, tag = 'input window, operand 1, single buffered']
    #allocation7 [shape = 's32[1]{0}', space=sflag, size = 0x4, scoped, tag = 'scoped memory for conditional_transformer.21']
    #allocation8 [shape = 'u8[4096]{0}', space=vmem, size = 0x1000, scoped, tag = 'input window, operand 2']
    #allocation9 [shape = 'u8[4096]{0}', space=vmem, size = 0x1000, scoped, tag = 'output window, operand 0']
    %8 = vsyncpa [#allocation4], 0
    %s9 = scalar_lea.sflag [#allocation4], 1
    %10 = vsyncpa %s9, 0
    %11 = vsyncpa [#allocation7], 0
    %12 = vsyncpa [#allocation5], 0
    %s13 = scalar_lea.sflag [#allocation5], 1
    %14 = vsyncpa %s13, 0
    loop: start=0, step=1, limit=4
    $region2: #{conditional_transformer.21} parent=1 // loop_pre_header
      _
    $region3: #{conditional_transformer.21} parent=1 // loop_header
      %s16 = sphi 0, %s20
      %p17 = scmp.ge.s32.totalorder %s16, 4
      %s23 = sphi 0, %s42
      %s24 = sphi 0, %s38
      %s25 = sphi 0, %s34
      %s26 = sphi 0, %s23
      %s27 = sphi 0, %s24
      %s28 = sphi 0, %s25
      %s29 = sphi 0, %s26
      %s30 = sphi 0, %s27
      %s31 = sphi 0, %s28
      %s47 = sphi 0, %s49
      %s50 = sphi 0, %s47
      %s51 = sphi 0, %s50
      %s67 = sphi 0, %s51
      %s75 = sphi 0, %s77
      %s78 = sphi 0, %s75
      %s79 = sphi 0, %s78
      %s95 = sphi 0, %s79
      %s103 = sphi 0, %s105
      %s106 = sphi 0, %s103
      %s107 = sphi 0, %s106
      %s123 = sphi 0, %s107
      %s131 = sphi 0, %s133
      %s134 = sphi 0, %s131
      %s135 = sphi 0, %s134
      %s151 = sphi 0, %s135
    $region4: #{conditional_transformer.21} parent=1 // loop_header_branch
      %19 = sbr.rel (%p17) target = $region8
    $region5: #{conditional_transformer.21} parent=1 // loop_body
      %s21 = ssub.s32 %s16, 1
      %s22 = ssub.s32 %s16, 2
      %s32 = sadd.s32 1, %s25
      %p33 = scmp.ge.s32.totalorder %s32, 1
      %s34 = scalar_select %p33, 0, %s32
      %s35 = sadd.s32 1, %s24
      %s36 = scalar_select %p33, %s35, %s24
      %p37 = scmp.ge.s32.totalorder %s36, 1
      %s38 = scalar_select %p37, 0, %s36
      %s39 = sadd.s32 1, %s23
      %s40 = scalar_select %p37, %s39, %s23
      %p41 = scmp.ge.s32.totalorder %s40, 2
      %s42 = scalar_select %p41, 0, %s40
      %s43 = ssub.s32 %s23, %s42
      %s44 = ssub.s32 %s25, %s34
      %s45 = sor.u32 %s43, %s44
      %p46 = scmp.eq.s32.totalorder %s45, 0
      %s48 = sadd.s32 %s47, 1
      %s49 = scalar_select %p46, %s47, %s48
      %p52 = pneg %p46
      %p53 = scmp.eq.s32.totalorder %s16, 1
      %p54 = por %p52, %p53
      %p55 = scmp.ne.s32.totalorder %s47, %s50
      %p56 = scmp.eq.s32.totalorder %s16, 0
      %p57 = por %p55, %p56
      %p58 = scmp.ne.s32.totalorder %s47, %s50
      %p59 = scmp.eq.s32.totalorder %s21, 1
      %p60 = por %p58, %p59
      %p61 = scmp.ne.s32.totalorder %s50, %s51
      %p62 = scmp.eq.s32.totalorder %s21, 0
      %p63 = por %p61, %p62
      %p64 = scmp.ne.s32.totalorder %s50, %s51
      %p65 = scmp.eq.s32.totalorder %s22, 1
      %p66 = por %p64, %p65
      %p68 = scmp.ne.s32.totalorder %s51, %s67
      %p69 = scmp.eq.s32.totalorder %s22, 0
      %p70 = por %p68, %p69
      %s71 = ssub.s32 %s25, %s34
      %s72 = ssub.s32 %s24, %s38
      %s73 = sor.u32 %s71, %s72
      %p74 = scmp.eq.s32.totalorder %s73, 0
      %s76 = sadd.s32 %s75, 1
      %s77 = scalar_select %p74, %s75, %s76
      %p80 = pneg %p74
      %p81 = scmp.eq.s32.totalorder %s16, 1
      %p82 = por %p80, %p81
      %p83 = scmp.ne.s32.totalorder %s75, %s78
      %p84 = scmp.eq.s32.totalorder %s16, 0
      %p85 = por %p83, %p84
      %p86 = scmp.ne.s32.totalorder %s75, %s78
      %p87 = scmp.eq.s32.totalorder %s21, 1
      %p88 = por %p86, %p87
      %p89 = scmp.ne.s32.totalorder %s78, %s79
      %p90 = scmp.eq.s32.totalorder %s21, 0
      %p91 = por %p89, %p90
      %p92 = scmp.ne.s32.totalorder %s78, %s79
      %p93 = scmp.eq.s32.totalorder %s22, 1
      %p94 = por %p92, %p93
      %p96 = scmp.ne.s32.totalorder %s79, %s95
      %p97 = scmp.eq.s32.totalorder %s22, 0
      %p98 = por %p96, %p97
      %s99 = ssub.s32 %s23, %s42
      %s100 = ssub.s32 %s24, %s38
      %s101 = sor.u32 %s99, %s100
      %p102 = scmp.eq.s32.totalorder %s101, 0
      %s104 = sadd.s32 %s103, 1
      %s105 = scalar_select %p102, %s103, %s104
      %p108 = pneg %p102
      %p109 = scmp.eq.s32.totalorder %s16, 1
      %p110 = por %p108, %p109
      %p111 = scmp.ne.s32.totalorder %s103, %s106
      %p112 = scmp.eq.s32.totalorder %s16, 0
      %p113 = por %p111, %p112
      %p114 = scmp.ne.s32.totalorder %s103, %s106
      %p115 = scmp.eq.s32.totalorder %s21, 1
      %p116 = por %p114, %p115
      %p117 = scmp.ne.s32.totalorder %s106, %s107
      %p118 = scmp.eq.s32.totalorder %s21, 0
      %p119 = por %p117, %p118
      %p120 = scmp.ne.s32.totalorder %s106, %s107
      %p121 = scmp.eq.s32.totalorder %s22, 1
      %p122 = por %p120, %p121
      %p124 = scmp.ne.s32.totalorder %s107, %s123
      %p125 = scmp.eq.s32.totalorder %s22, 0
      %p126 = por %p124, %p125
      %s127 = ssub.s32 %s23, %s42
      %s128 = ssub.s32 %s24, %s38
      %s129 = sor.u32 %s127, %s128
      %p130 = scmp.eq.s32.totalorder %s129, 0
      %s132 = sadd.s32 %s131, 1
      %s133 = scalar_select %p130, %s131, %s132
      %p136 = pneg %p130
      %p137 = scmp.eq.s32.totalorder %s16, 1
      %p138 = por %p136, %p137
      %p139 = scmp.ne.s32.totalorder %s131, %s134
      %p140 = scmp.eq.s32.totalorder %s16, 0
      %p141 = por %p139, %p140
      %p142 = scmp.ne.s32.totalorder %s131, %s134
      %p143 = scmp.eq.s32.totalorder %s21, 1
      %p144 = por %p142, %p143
      %p145 = scmp.ne.s32.totalorder %s134, %s135
      %p146 = scmp.eq.s32.totalorder %s21, 0
      %p147 = por %p145, %p146
      %p148 = scmp.ne.s32.totalorder %s134, %s135
      %p149 = scmp.eq.s32.totalorder %s22, 1
      %p150 = por %p148, %p149
      %p152 = scmp.ne.s32.totalorder %s135, %s151
      %p153 = scmp.eq.s32.totalorder %s22, 0
      %p154 = por %p152, %p153
      %p155 = scmp.le.s32.totalorder 1, %s16
      %p156 = scmp.lt.s32.totalorder %s16, 3
      %p157 = pnand %p155, %p156
      %p158 = pneg %p157
      // Predicated region
      $region9: #{conditional_transformer.21} parent=5 // pred_check
        _
      $region10: #{conditional_transformer.21} parent=5 // pred_check_branch
        %160 = sbr.rel (%p157) target = $region12
      $region11: #{conditional_transformer.21} parent=5 // pred_region
        %s161 = ssub.s32 %s16, 1
        // Predicated region
        $region13: #{conditional_transformer.21} parent=11 // pred_check
          %p162 = pneg %p91
        $region14: #{conditional_transformer.21} parent=11 // pred_check_branch
          %164 = sbr.rel (%p162) target = $region16
        $region15: #{conditional_transformer.21} parent=11 // pred_region
          %s165 = smul.u32 4, %s28
          %s167 = ssub.s32 256, 256
          %168 = vsyncadd [#allocation7], %s167
          %s169 = sadd.s32 %s27, %s165
          %s170 = smul.addr %s169, 64
          %s171 = scalar_lea.hbm %s1, %s170
          %s172 = sshll.u32 [#allocation6], 4
          %s173 = int_to_ptr.vmem [resolvable:$true] %s172
          %178 = dma.hbm_to_vmem [thread:$0]  %s171, 256, %s173, [#allocation7], 64, 64, 4
        $region16: #{conditional_transformer.21} parent=11 // pred_fallthru
          _
      $region12: #{conditional_transformer.21} parent=5 // pred_fallthru
        _
      %p179 = scmp.lt.s32.totalorder %s16, 2
      // Predicated region
      $region17: #{conditional_transformer.21} parent=5 // pred_check
        %p180 = pneg %p179
      $region18: #{conditional_transformer.21} parent=5 // pred_check_branch
        %182 = sbr.rel (%p180) target = $region20
      $region19: #{conditional_transformer.21} parent=5 // pred_region
        // Predicated region
        $region21: #{conditional_transformer.21} parent=19 // pred_check
          %p183 = pneg %p57
        $region22: #{conditional_transformer.21} parent=19 // pred_check_branch
          %185 = sbr.rel (%p183) target = $region24
        $region23: #{conditional_transformer.21} parent=19 // pred_region
          %s186 = sand.u32 %s16, 1
          %s187 = scalar_lea.sflag [#allocation4], %s186
          %s188 = sand.u32 %s47, 1
          %s189 = smul.addr %s188, 4
          %s190 = scalar_lea.vmem [#allocation3], %s189
          %s192 = ssub.s32 64, 64
          %193 = vsyncadd %s187, %s192
          %s194 = sadd.s32 %s25, %s23
          %s195 = smul.addr %s194, 64
          %s196 = scalar_lea.hbm %s0, %s195
          %s198 = sshll.u32 %s190, 4
          %s199 = int_to_ptr.vmem [resolvable:$true] %s198
          %201 = dma.hbm_to_vmem [thread:$0]  %s196, 64, %s199, %s187
        $region24: #{conditional_transformer.21} parent=19 // pred_fallthru
          _
        // Predicated region
        $region25: #{conditional_transformer.21} parent=19 // pred_check
          %p202 = pneg %p113
        $region26: #{conditional_transformer.21} parent=19 // pred_check_branch
          %204 = sbr.rel (%p202) target = $region28
        $region27: #{conditional_transformer.21} parent=19 // pred_region
          %s205 = sand.u32 %s16, 1
          %s206 = scalar_lea.sflag [#allocation4], %s205
          %s207 = sand.u32 %s103, 1
          %s208 = smul.addr %s207, 4
          %s209 = scalar_lea.vmem [#allocation8], %s208
          %s211 = ssub.s32 64, 64
          %212 = vsyncadd %s206, %s211
          %s213 = sadd.s32 %s24, %s23
          %s214 = smul.addr %s213, 64
          %s215 = scalar_lea.hbm %s2, %s214
          %s217 = sshll.u32 %s209, 4
          %s218 = int_to_ptr.vmem [resolvable:$true] %s217
          %220 = dma.hbm_to_vmem [thread:$0]  %s215, 64, %s218, %s206
        $region28: #{conditional_transformer.21} parent=19 // pred_fallthru
          _
      $region20: #{conditional_transformer.21} parent=5 // pred_fallthru
        _
      %p221 = scmp.le.s32.totalorder 1, %s16
      %p222 = scmp.lt.s32.totalorder %s16, 3
      %p223 = pnand %p221, %p222
      %p224 = pneg %p223
      // Predicated region
      $region29: #{conditional_transformer.21} parent=5 // pred_check
        _
      $region30: #{conditional_transformer.21} parent=5 // pred_check_branch
        %226 = sbr.rel (%p223) target = $region32
      $region31: #{conditional_transformer.21} parent=5 // pred_region
        %s227 = ssub.s32 %s16, 1
        %s228 = sand.u32 %s21, 1
        %s229 = scalar_lea.sflag [#allocation4], %s228
        %s230 = sand.u32 %s50, 1
        %s231 = smul.addr %s230, 4
        %s232 = scalar_lea.vmem [#allocation3], %s231
        // Predicated region
        $region33: #{conditional_transformer.21} parent=31 // pred_check
          %p233 = pneg %p63
        $region34: #{conditional_transformer.21} parent=31 // pred_check_branch
          %235 = sbr.rel (%p233) target = $region36
        $region35: #{conditional_transformer.21} parent=31 // pred_region
          %236 = dma.done %s229, 64
        $region36: #{conditional_transformer.21} parent=31 // pred_fallthru
          _
        // Predicated region
        $region37: #{conditional_transformer.21} parent=31 // pred_check
          %p237 = pneg %p91
        $region38: #{conditional_transformer.21} parent=31 // pred_check_branch
          %239 = sbr.rel (%p237) target = $region40
        $region39: #{conditional_transformer.21} parent=31 // pred_region
          %240 = dma.done [#allocation7], 256
        $region40: #{conditional_transformer.21} parent=31 // pred_fallthru
          _
        %s241 = sand.u32 %s21, 1
        %s242 = scalar_lea.sflag [#allocation4], %s241
        %s243 = sand.u32 %s106, 1
        %s244 = smul.addr %s243, 4
        %s245 = scalar_lea.vmem [#allocation8], %s244
        // Predicated region
        $region41: #{conditional_transformer.21} parent=31 // pred_check
          %p246 = pneg %p119
        $region42: #{conditional_transformer.21} parent=31 // pred_check_branch
          %248 = sbr.rel (%p246) target = $region44
        $region43: #{conditional_transformer.21} parent=31 // pred_region
          %249 = dma.done %s242, 64
        $region44: #{conditional_transformer.21} parent=31 // pred_fallthru
          _
        %s250 = sand.u32 %s21, 1
        %s251 = scalar_lea.sflag [#allocation4], %s250
        %s252 = sand.u32 %s50, 1
        %s253 = smul.addr %s252, 4
        %s254 = scalar_lea.vmem [#allocation3], %s253
        %p255 = pneg %p63
        %p256 = pneg %p60
        %p257 = pneg %p91
        %p258 = pneg %p88
        %s259 = sand.u32 %s21, 1
        %s260 = scalar_lea.sflag [#allocation4], %s259
        %s261 = sand.u32 %s106, 1
        %s262 = smul.addr %s261, 4
        %s263 = scalar_lea.vmem [#allocation8], %s262
        %p264 = pneg %p119
        %p265 = pneg %p116
        %p266 = pneg %p147
        %p267 = pneg %p144
        %s268 = sand.u32 %s134, 1
        %s269 = scalar_lea.sflag [#allocation5], %s268
        %s270 = sand.u32 %s134, 1
        %s271 = smul.addr %s270, 4
        %s272 = scalar_lea.vmem [#allocation9], %s271
        %s273 = smul.u32 4, %s28
        %p275 = scmp.eq.s32.totalorder %s28, 0
        // Predicated region
        $region45: #{conditional_transformer.21} parent=31 // pred_check
          %p276 = pneg %p275
        $region46: #{conditional_transformer.21} parent=31 // pred_check_branch
          %278 = sbr.rel (%p276) target = $region48
        $region47: #{conditional_transformer.21} parent=31 // pred_region
          %vm279 = vcmask 261120
          %280 = vst.msk [vmem:[#allocation2] sm:$0xff] %vm279, 0.0
        $region48: #{conditional_transformer.21} parent=31 // pred_fallthru
          _
        %v281 = vld [vmem:[#allocation2] sm:$0xff]
        %v282 = vld [vmem:[%s232] sm:$0xf]
        %v283 = vld [vmem:[#allocation6] sm:$0xf]
        %v284 = vld [vmem:[#allocation6 + $0x4] sm:$0xf]
        %v285 = vld [vmem:[#allocation6 + $0x8] sm:$0xf]
        %v286 = vld [vmem:[#allocation6 + $0xc] sm:$0xf]
        %v291 = vunpack.c.l.b16 %v283
        %v292 = vunpack.c.l.b16 %v284
        %v293 = vunpack.c.l.b16 %v285
        %v294 = vunpack.c.l.b16 %v286
        %v295 = vpack.c.b16 %v292, %v291
        %v296 = vpack.c.b16 %v294, %v293
        %vm299 = vcmask 261120
        %v301 = vsel %vm299, %v282, 0
        %303 = vmatprep.subr.bf16.mxu0 0
        %304 = vmatpush1.bf16.msra.mxu0 %v295
        %305 = vmatprep.subr.bf16.mxu0 0
        %306 = vmatpush1.bf16.msra.mxu0 %v296
        %307 = vmatprep.subr.bf16.mxu0 0
        %308 = vmatpush1.bf16.msra.mxu0 0
        %309 = vmatprep.subr.bf16.mxu0 0
        %310 = vmatpush1.bf16.msra.mxu0 0
        %311 = vmatprep.subr.bf16.mxu0 0
        %312 = vmatpush1.bf16.msra.mxu0 0
        %313 = vmatprep.subr.bf16.mxu0 0
        %314 = vmatpush1.bf16.msra.mxu0 0
        %315 = vmatprep.subr.bf16.mxu0 0
        %316 = vmatpush1.bf16.msra.mxu0 0
        %317 = vmatprep.subr.bf16.mxu0 0
        %318 = vmatpush1.bf16.msra.mxu0 0
        %319 = vmatprep.subr.bf16.mxu0 0
        %320 = vmatpush1.bf16.msra.mxu0 0
        %321 = vmatprep.subr.bf16.mxu0 0
        %322 = vmatpush1.bf16.msra.mxu0 0
        %323 = vmatprep.subr.bf16.mxu0 0
        %324 = vmatpush1.bf16.msra.mxu0 0
        %325 = vmatprep.subr.bf16.mxu0 0
        %326 = vmatpush1.bf16.msra.mxu0 0
        %327 = vmatprep.subr.bf16.mxu0 0
        %328 = vmatpush1.bf16.msra.mxu0 0
        %329 = vmatprep.subr.bf16.mxu0 0
        %330 = vmatpush1.bf16.msra.mxu0 0
        %331 = vmatprep.subr.bf16.mxu0 0
        %332 = vmatpush1.bf16.msra.mxu0 0
        %333 = vmatprep.subr.bf16.mxu0 0
        %334 = vmatpush1.bf16.msra.mxu0 0
        %335 = vmatprep.mubr.bf16.mxu0 0
        %336 = vmatmul.mubr.bf16.gmra.mrb[0].mxu0 %v301
        %v337 = vpop.f32.mrb[0].mxu0
        %v338 = vadd.f32 0.0, %v337
        %v339 = vpop.f32.mrb[0].mxu0
        %v340 = vpop.f32.mrb[0].mxu0
        %v341 = vpop.f32.mrb[0].mxu0
        %342 = vdwg.mxu0
        %v343 = vadd.f32 %v281, %v338
        %344 = vst.msk [vmem:[#allocation2] sm:$0xff] %vm299, %v343
        // Predicated region
        $region49: #{conditional_transformer.21} parent=31 // pred_check
          %p345 = pneg %p275
        $region50: #{conditional_transformer.21} parent=31 // pred_check_branch
          %347 = sbr.rel (%p345) target = $region52
        $region51: #{conditional_transformer.21} parent=31 // pred_region
          %v348 = vld [vmem:[#allocation2] sm:$0xff]
          %v349 = vld [vmem:[%s245] sm:$0xf]
          %v350 = vunpack.c.l.bf16 %v349
          %v351 = vadd.f32 %v348, %v350
          %v352 = vpack.c.bf16 %v351, %v351
          %vm353 = vcmask 257024
          %354 = vst.msk [vmem:[%s272] sm:$0xf] %vm353, %v352
        $region52: #{conditional_transformer.21} parent=31 // pred_fallthru
          _
        %s355 = sand.u32 %s134, 1
        %s356 = scalar_lea.sflag [#allocation5], %s355
        %s357 = sand.u32 %s134, 1
        %s358 = smul.addr %s357, 4
        %s359 = scalar_lea.vmem [#allocation9], %s358
        // Predicated region
        $region53: #{conditional_transformer.21} parent=31 // pred_check
          %p360 = pneg %p144
        $region54: #{conditional_transformer.21} parent=31 // pred_check_branch
          %362 = sbr.rel (%p360) target = $region56
        $region55: #{conditional_transformer.21} parent=31 // pred_region
          %s364 = ssub.s32 64, 64
          %365 = vsyncadd %s356, %s364
          %s366 = sadd.s32 %s27, %s26
          %s367 = smul.addr %s366, 64
          %s368 = scalar_lea.hbm %s3, %s367
          %s370 = sshll.u32 %s359, 4
          %s371 = int_to_ptr.vmem [resolvable:$true] %s370
          %373 = dma.vmem_to_hbm [thread:$0]  %s371, 64, %s368, %s356
        $region56: #{conditional_transformer.21} parent=31 // pred_fallthru
          _
      $region32: #{conditional_transformer.21} parent=5 // pred_fallthru
        _
      %p374 = scmp.le.s32.totalorder 2, %s16
      // Predicated region
      $region57: #{conditional_transformer.21} parent=5 // pred_check
        %p375 = pneg %p374
      $region58: #{conditional_transformer.21} parent=5 // pred_check_branch
        %377 = sbr.rel (%p375) target = $region60
      $region59: #{conditional_transformer.21} parent=5 // pred_region
        %s378 = ssub.s32 %s16, 2
        // Predicated region
        $region61: #{conditional_transformer.21} parent=59 // pred_check
          %p379 = pneg %p150
        $region62: #{conditional_transformer.21} parent=59 // pred_check_branch
          %381 = sbr.rel (%p379) target = $region64
        $region63: #{conditional_transformer.21} parent=59 // pred_region
          %s382 = sand.u32 %s135, 1
          %s383 = scalar_lea.sflag [#allocation5], %s382
          %s384 = sand.u32 %s135, 1
          %s385 = smul.addr %s384, 4
          %s386 = scalar_lea.vmem [#allocation9], %s385
          %387 = dma.done %s383, 64
        $region64: #{conditional_transformer.21} parent=59 // pred_fallthru
          _
      $region60: #{conditional_transformer.21} parent=5 // pred_fallthru
        _
    $region6: #{conditional_transformer.21} parent=1 // loop_footer
      %s20 = sadd.s32 1, %s16
    $region7: #{conditional_transformer.21} parent=1 // loop_footer_branch
      %15 = sbr.rel target = $region3
    $region8: #{conditional_transformer.21} parent=1 // loop_exit
      _
    %388 = vsyncpa [#allocation4], 1
    %s389 = scalar_lea.sflag [#allocation4], 1
    %390 = vsyncpa %s389, 1
    %391 = vsyncpa [#allocation7], 1
    %392 = vsyncpa [#allocation5], 1
    %s393 = scalar_lea.sflag [#allocation5], 1
    %394 = vsyncpa %s393, 1

// kernel: conditional_transformer.19
$region0: #{conditional_transformer.19}
  #allocation0 [shape = 'u32[]', space=smem, size = 0x4, offset = 0x4, fixed_abs, tag = 'smem constant byte address 0x4 - core index']
  #allocation1 [shape = 'u32[144,128]{1,0:T(1,128)}', space=vmem, size = 0x12000, scoped, tag = 'internal scratch']
  #allocation2 [shape = 'bf16[8,32]{1,0:T(8,128)(2,1)}', space=vmem, size = 0x800, scoped, tag = 'scratch operand']
  %s0 = inlined_call_operand.hbm [shape: bf16[16,32], index: 0, kind: input, shape index: {}]
  %s1 = inlined_call_operand.hbm [shape: f32[1,32], index: 1, kind: input, shape index: {}]
  %s2 = inlined_call_operand.hbm [shape: bf16[32,64], index: 2, kind: input, shape index: {}]
  %s3 = inlined_call_operand.hbm [shape: bf16[16,64], index: 3, kind: output, shape index: {}]
  %s4 = sld [smem:[#allocation0]]
  $region61: #{conditional_transformer.19} parent=0
    _
  %s6 = ssub.s32 1, %s4
  %s7 = scalar_select 0, %s6, %s4
  $region1: #{conditional_transformer.19} parent=0
    #allocation3 [shape = 'u8[4096]{0}', space=vmem, size = 0x1000, scoped, tag = 'input window, operand 0']
    #allocation4 [shape = 's32[2]{0}', space=sflag, size = 0x8, scoped, tag = 'scoped memory for conditional_transformer.19']
    #allocation5 [shape = 's32[2]{0}', space=sflag, size = 0x8, scoped, tag = 'scoped memory for conditional_transformer.19']
    #allocation6 [shape = 'u8[512]{0}', space=vmem, size = 0x400, scoped, tag = 'input window, operand 1, single buffered']
    #allocation7 [shape = 's32[1]{0}', space=sflag, size = 0x4, scoped, tag = 'scoped memory for conditional_transformer.19']
    #allocation8 [shape = 'u8[8192]{0}', space=vmem, size = 0x2000, scoped, tag = 'input window, operand 2, single buffered']
    #allocation9 [shape = 'u8[4096]{0}', space=vmem, size = 0x1000, scoped, tag = 'output window, operand 0']
    %8 = vsyncpa [#allocation4], 0
    %s9 = scalar_lea.sflag [#allocation4], 1
    %10 = vsyncpa %s9, 0
    %11 = vsyncpa [#allocation7], 0
    %12 = vsyncpa [#allocation5], 0
    %s13 = scalar_lea.sflag [#allocation5], 1
    %14 = vsyncpa %s13, 0
    loop: start=0, step=1, limit=4
    $region2: #{conditional_transformer.19} parent=1 // loop_pre_header
      _
    $region3: #{conditional_transformer.19} parent=1 // loop_header
      %s16 = sphi 0, %s20
      %p17 = scmp.ge.s32.totalorder %s16, 4
      %s23 = sphi 0, %s35
      %s24 = sphi 0, %s31
      %s25 = sphi 0, %s23
      %s26 = sphi 0, %s24
      %s27 = sphi 0, %s25
      %s28 = sphi 0, %s26
      %s38 = sphi 0, %s40
      %s41 = sphi 0, %s38
      %s42 = sphi 0, %s41
      %s58 = sphi 0, %s42
      %s62 = sphi 0, %s62
      %s64 = sphi 0, %s62
      %s65 = sphi 0, %s64
      %s79 = sphi 0, %s65
      %s85 = sphi 0, %s87
      %s88 = sphi 0, %s85
      %s89 = sphi 0, %s88
      %s105 = sphi 0, %s89
      %s113 = sphi 0, %s115
      %s116 = sphi 0, %s113
      %s117 = sphi 0, %s116
      %s133 = sphi 0, %s117
    $region4: #{conditional_transformer.19} parent=1 // loop_header_branch
      %19 = sbr.rel (%p17) target = $region8
    $region5: #{conditional_transformer.19} parent=1 // loop_body
      %s21 = ssub.s32 %s16, 1
      %s22 = ssub.s32 %s16, 2
      %s29 = sadd.s32 1, %s24
      %p30 = scmp.ge.s32.totalorder %s29, 1
      %s31 = scalar_select %p30, 0, %s29
      %s32 = sadd.s32 1, %s23
      %s33 = scalar_select %p30, %s32, %s23
      %p34 = scmp.ge.s32.totalorder %s33, 2
      %s35 = scalar_select %p34, 0, %s33
      %s36 = ssub.s32 %s23, %s35
      %p37 = scmp.eq.s32.totalorder %s36, 0
      %s39 = sadd.s32 %s38, 1
      %s40 = scalar_select %p37, %s38, %s39
      %p43 = pneg %p37
      %p44 = scmp.eq.s32.totalorder %s16, 1
      %p45 = por %p43, %p44
      %p46 = scmp.ne.s32.totalorder %s38, %s41
      %p47 = scmp.eq.s32.totalorder %s16, 0
      %p48 = por %p46, %p47
      %p49 = scmp.ne.s32.totalorder %s38, %s41
      %p50 = scmp.eq.s32.totalorder %s21, 1
      %p51 = por %p49, %p50
      %p52 = scmp.ne.s32.totalorder %s41, %s42
      %p53 = scmp.eq.s32.totalorder %s21, 0
      %p54 = por %p52, %p53
      %p55 = scmp.ne.s32.totalorder %s41, %s42
      %p56 = scmp.eq.s32.totalorder %s22, 1
      %p57 = por %p55, %p56
      %p59 = scmp.ne.s32.totalorder %s42, %s58
      %p60 = scmp.eq.s32.totalorder %s22, 0
      %p61 = por %p59, %p60
      %s63 = sadd.s32 %s62, 1
      %p66 = scmp.eq.s32.totalorder %s16, 1
      %p67 = scmp.ne.s32.totalorder %s62, %s64
      %p68 = scmp.eq.s32.totalorder %s16, 0
      %p69 = por %p67, %p68
      %p70 = scmp.ne.s32.totalorder %s62, %s64
      %p71 = scmp.eq.s32.totalorder %s21, 1
      %p72 = por %p70, %p71
      %p73 = scmp.ne.s32.totalorder %s64, %s65
      %p74 = scmp.eq.s32.totalorder %s21, 0
      %p75 = por %p73, %p74
      %p76 = scmp.ne.s32.totalorder %s64, %s65
      %p77 = scmp.eq.s32.totalorder %s22, 1
      %p78 = por %p76, %p77
      %p80 = scmp.ne.s32.totalorder %s65, %s79
      %p81 = scmp.eq.s32.totalorder %s22, 0
      %p82 = por %p80, %p81
      %s83 = ssub.s32 %s24, %s31
      %p84 = scmp.eq.s32.totalorder %s83, 0
      %s86 = sadd.s32 %s85, 1
      %s87 = scalar_select %p84, %s85, %s86
      %p90 = pneg %p84
      %p91 = scmp.eq.s32.totalorder %s16, 1
      %p92 = por %p90, %p91
      %p93 = scmp.ne.s32.totalorder %s85, %s88
      %p94 = scmp.eq.s32.totalorder %s16, 0
      %p95 = por %p93, %p94
      %p96 = scmp.ne.s32.totalorder %s85, %s88
      %p97 = scmp.eq.s32.totalorder %s21, 1
      %p98 = por %p96, %p97
      %p99 = scmp.ne.s32.totalorder %s88, %s89
      %p100 = scmp.eq.s32.totalorder %s21, 0
      %p101 = por %p99, %p100
      %p102 = scmp.ne.s32.totalorder %s88, %s89
      %p103 = scmp.eq.s32.totalorder %s22, 1
      %p104 = por %p102, %p103
      %p106 = scmp.ne.s32.totalorder %s89, %s105
      %p107 = scmp.eq.s32.totalorder %s22, 0
      %p108 = por %p106, %p107
      %s109 = ssub.s32 %s23, %s35
      %s110 = ssub.s32 %s24, %s31
      %s111 = sor.u32 %s109, %s110
      %p112 = scmp.eq.s32.totalorder %s111, 0
      %s114 = sadd.s32 %s113, 1
      %s115 = scalar_select %p112, %s113, %s114
      %p118 = pneg %p112
      %p119 = scmp.eq.s32.totalorder %s16, 1
      %p120 = por %p118, %p119
      %p121 = scmp.ne.s32.totalorder %s113, %s116
      %p122 = scmp.eq.s32.totalorder %s16, 0
      %p123 = por %p121, %p122
      %p124 = scmp.ne.s32.totalorder %s113, %s116
      %p125 = scmp.eq.s32.totalorder %s21, 1
      %p126 = por %p124, %p125
      %p127 = scmp.ne.s32.totalorder %s116, %s117
      %p128 = scmp.eq.s32.totalorder %s21, 0
      %p129 = por %p127, %p128
      %p130 = scmp.ne.s32.totalorder %s116, %s117
      %p131 = scmp.eq.s32.totalorder %s22, 1
      %p132 = por %p130, %p131
      %p134 = scmp.ne.s32.totalorder %s117, %s133
      %p135 = scmp.eq.s32.totalorder %s22, 0
      %p136 = por %p134, %p135
      %p137 = scmp.le.s32.totalorder 1, %s16
      %p138 = scmp.lt.s32.totalorder %s16, 3
      %p139 = pnand %p137, %p138
      %p140 = pneg %p139
      // Predicated region
      $region9: #{conditional_transformer.19} parent=5 // pred_check
        _
      $region10: #{conditional_transformer.19} parent=5 // pred_check_branch
        %142 = sbr.rel (%p139) target = $region12
      $region11: #{conditional_transformer.19} parent=5 // pred_region
        %s143 = ssub.s32 %s16, 1
        // Predicated region
        $region13: #{conditional_transformer.19} parent=11 // pred_check
          %p144 = pneg %p75
        $region14: #{conditional_transformer.19} parent=11 // pred_check_branch
          %146 = sbr.rel (%p144) target = $region16
        $region15: #{conditional_transformer.19} parent=11 // pred_region
          %s148 = ssub.s32 16, 16
          %149 = vsyncadd [#allocation7], %s148
          %s151 = sshll.u32 [#allocation6], 4
          %s152 = int_to_ptr.vmem [resolvable:$true] %s151
          %154 = dma.hbm_to_vmem [thread:$0]  %s1, 16, %s152, [#allocation7]
        $region16: #{conditional_transformer.19} parent=11 // pred_fallthru
          _
        // Predicated region
        $region17: #{conditional_transformer.19} parent=11 // pred_check
          %p155 = pneg %p101
        $region18: #{conditional_transformer.19} parent=11 // pred_check_branch
          %157 = sbr.rel (%p155) target = $region20
        $region19: #{conditional_transformer.19} parent=11 // pred_region
          %s159 = ssub.s32 256, 256
          %160 = vsyncadd [#allocation7], %s159
          %s161 = smul.addr %s26, 64
          %s162 = scalar_lea.hbm %s2, %s161
          %s163 = sshll.u32 [#allocation8], 4
          %s164 = int_to_ptr.vmem [resolvable:$true] %s163
          %169 = dma.hbm_to_vmem [thread:$0]  %s162, 256, %s164, [#allocation7], 64, 64, 4
        $region20: #{conditional_transformer.19} parent=11 // pred_fallthru
          _
      $region12: #{conditional_transformer.19} parent=5 // pred_fallthru
        _
      %p170 = scmp.lt.s32.totalorder %s16, 2
      // Predicated region
      $region21: #{conditional_transformer.19} parent=5 // pred_check
        %p171 = pneg %p170
      $region22: #{conditional_transformer.19} parent=5 // pred_check_branch
        %173 = sbr.rel (%p171) target = $region24
      $region23: #{conditional_transformer.19} parent=5 // pred_region
        // Predicated region
        $region25: #{conditional_transformer.19} parent=23 // pred_check
          %p174 = pneg %p48
        $region26: #{conditional_transformer.19} parent=23 // pred_check_branch
          %176 = sbr.rel (%p174) target = $region28
        $region27: #{conditional_transformer.19} parent=23 // pred_region
          %s177 = sand.u32 %s38, 1
          %s178 = scalar_lea.sflag [#allocation4], %s177
          %s179 = sand.u32 %s38, 1
          %s180 = smul.addr %s179, 4
          %s181 = scalar_lea.vmem [#allocation3], %s180
          %s183 = ssub.s32 64, 64
          %184 = vsyncadd %s178, %s183
          %s185 = smul.addr %s23, 64
          %s186 = scalar_lea.hbm %s0, %s185
          %s188 = sshll.u32 %s181, 4
          %s189 = int_to_ptr.vmem [resolvable:$true] %s188
          %191 = dma.hbm_to_vmem [thread:$0]  %s186, 64, %s189, %s178
        $region28: #{conditional_transformer.19} parent=23 // pred_fallthru
          _
      $region24: #{conditional_transformer.19} parent=5 // pred_fallthru
        _
      %p192 = scmp.le.s32.totalorder 1, %s16
      %p193 = scmp.lt.s32.totalorder %s16, 3
      %p194 = pnand %p192, %p193
      %p195 = pneg %p194
      // Predicated region
      $region29: #{conditional_transformer.19} parent=5 // pred_check
        _
      $region30: #{conditional_transformer.19} parent=5 // pred_check_branch
        %197 = sbr.rel (%p194) target = $region32
      $region31: #{conditional_transformer.19} parent=5 // pred_region
        %s198 = ssub.s32 %s16, 1
        %s199 = sand.u32 %s41, 1
        %s200 = scalar_lea.sflag [#allocation4], %s199
        %s201 = sand.u32 %s41, 1
        %s202 = smul.addr %s201, 4
        %s203 = scalar_lea.vmem [#allocation3], %s202
        // Predicated region
        $region33: #{conditional_transformer.19} parent=31 // pred_check
          %p204 = pneg %p54
        $region34: #{conditional_transformer.19} parent=31 // pred_check_branch
          %206 = sbr.rel (%p204) target = $region36
        $region35: #{conditional_transformer.19} parent=31 // pred_region
          %207 = dma.done %s200, 64
        $region36: #{conditional_transformer.19} parent=31 // pred_fallthru
          _
        // Predicated region
        $region37: #{conditional_transformer.19} parent=31 // pred_check
          %p208 = pneg %p75
        $region38: #{conditional_transformer.19} parent=31 // pred_check_branch
          %210 = sbr.rel (%p208) target = $region40
        $region39: #{conditional_transformer.19} parent=31 // pred_region
          %211 = dma.done [#allocation7], 16
        $region40: #{conditional_transformer.19} parent=31 // pred_fallthru
          _
        // Predicated region
        $region41: #{conditional_transformer.19} parent=31 // pred_check
          %p212 = pneg %p101
        $region42: #{conditional_transformer.19} parent=31 // pred_check_branch
          %214 = sbr.rel (%p212) target = $region44
        $region43: #{conditional_transformer.19} parent=31 // pred_region
          %215 = dma.done [#allocation7], 256
        $region44: #{conditional_transformer.19} parent=31 // pred_fallthru
          _
        %s216 = sand.u32 %s41, 1
        %s217 = scalar_lea.sflag [#allocation4], %s216
        %s218 = sand.u32 %s41, 1
        %s219 = smul.addr %s218, 4
        %s220 = scalar_lea.vmem [#allocation3], %s219
        %p221 = pneg %p54
        %p222 = pneg %p51
        %p223 = pneg %p75
        %p224 = pneg %p72
        %p225 = pneg %p101
        %p226 = pneg %p98
        %p227 = pneg %p129
        %p228 = pneg %p126
        %s229 = sand.u32 %s116, 1
        %s230 = scalar_lea.sflag [#allocation5], %s229
        %s231 = sand.u32 %s116, 1
        %s232 = smul.addr %s231, 4
        %s233 = scalar_lea.vmem [#allocation9], %s232
        %p235 = scmp.eq.s32.totalorder %s26, 0
        // Predicated region
        $region45: #{conditional_transformer.19} parent=31 // pred_check
          %p236 = pneg %p235
        $region46: #{conditional_transformer.19} parent=31 // pred_check_branch
          %238 = sbr.rel (%p236) target = $region48
        $region47: #{conditional_transformer.19} parent=31 // pred_region
          %v239 = vld [vmem:[%s203] sm:$0xf]
          %v240 = vunpack.c.l.bf16 %v239
          %v241 = vmul.f32 %v240, %v240
          %vm242 = vcmask 261120
          %v243 = vsel %vm242, %v241, 0.0
          %244 = vadd.xlane.f32.xlu0 %v243
          %v245 = vpop.xlane.xlu0 %244
          %v246 = vrcp.pop 32.0
          %v247 = vmul.f32 %v245, %v246
          %v248 = vadd.f32 %v247, 1e-08
          %v249 = vrsqrt.pop %v248
          %v250 = vmul.f32 %v240, %v249
          %v251 = vld [vmem:[#allocation6] sm:$0x1]
          %v253 = vlaneseq
          %v254 = vshrl.u32 %v253, 7
          %v255 = vsub.s32 0, %v254
          %v256 = vrot.slane %v251, %v255
          %v258 = vmul.f32 %v250, %v256
          %v259 = vpack.c.bf16 %v258, %v258
          %vm260 = vcmask 257024
          %261 = vst.msk [vmem:[#allocation2] sm:$0xf] %vm260, %v259
        $region48: #{conditional_transformer.19} parent=31 // pred_fallthru
          _
        %v262 = vld [vmem:[#allocation2] sm:$0xf]
        %v263 = vld [vmem:[#allocation8] sm:$0xf]
        %v264 = vld [vmem:[#allocation8 + $0x4] sm:$0xf]
        %v265 = vld [vmem:[#allocation8 + $0x8] sm:$0xf]
        %v266 = vld [vmem:[#allocation8 + $0xc] sm:$0xf]
        %v271 = vunpack.c.l.b16 %v263
        %v272 = vunpack.c.l.b16 %v264
        %v273 = vunpack.c.l.b16 %v265
        %v274 = vunpack.c.l.b16 %v266
        %v275 = vpack.c.b16 %v272, %v271
        %v276 = vpack.c.b16 %v274, %v273
        %vm279 = vcmask 261120
        %v281 = vsel %vm279, %v262, 0
        %283 = vmatprep.subr.bf16.mxu0 0
        %284 = vmatpush1.bf16.msra.mxu0 %v275
        %285 = vmatprep.subr.bf16.mxu0 0
        %286 = vmatpush1.bf16.msra.mxu0 %v276
        %287 = vmatprep.subr.bf16.mxu0 0
        %288 = vmatpush1.bf16.msra.mxu0 0
        %289 = vmatprep.subr.bf16.mxu0 0
        %290 = vmatpush1.bf16.msra.mxu0 0
        %291 = vmatprep.subr.bf16.mxu0 0
        %292 = vmatpush1.bf16.msra.mxu0 0
        %293 = vmatprep.subr.bf16.mxu0 0
        %294 = vmatpush1.bf16.msra.mxu0 0
        %295 = vmatprep.subr.bf16.mxu0 0
        %296 = vmatpush1.bf16.msra.mxu0 0
        %297 = vmatprep.subr.bf16.mxu0 0
        %298 = vmatpush1.bf16.msra.mxu0 0
        %299 = vmatprep.subr.bf16.mxu0 0
        %300 = vmatpush1.bf16.msra.mxu0 0
        %301 = vmatprep.subr.bf16.mxu0 0
        %302 = vmatpush1.bf16.msra.mxu0 0
        %303 = vmatprep.subr.bf16.mxu0 0
        %304 = vmatpush1.bf16.msra.mxu0 0
        %305 = vmatprep.subr.bf16.mxu0 0
        %306 = vmatpush1.bf16.msra.mxu0 0
        %307 = vmatprep.subr.bf16.mxu0 0
        %308 = vmatpush1.bf16.msra.mxu0 0
        %309 = vmatprep.subr.bf16.mxu0 0
        %310 = vmatpush1.bf16.msra.mxu0 0
        %311 = vmatprep.subr.bf16.mxu0 0
        %312 = vmatpush1.bf16.msra.mxu0 0
        %313 = vmatprep.subr.bf16.mxu0 0
        %314 = vmatpush1.bf16.msra.mxu0 0
        %315 = vmatprep.mubr.bf16.mxu0 0
        %316 = vmatmul.mubr.bf16.gmra.mrb[0].mxu0 %v281
        %v317 = vpop.f32.mrb[0].mxu0
        %v318 = vadd.f32 0.0, %v317
        %v319 = vpop.f32.mrb[0].mxu0
        %v320 = vpop.f32.mrb[0].mxu0
        %v321 = vpop.f32.mrb[0].mxu0
        %322 = vdwg.mxu0
        %v323 = vpack.c.bf16 %v318, %v318
        %vm324 = vcmask 519168
        %325 = vst.msk [vmem:[%s233] sm:$0xf] %vm324, %v323
        %s326 = sand.u32 %s116, 1
        %s327 = scalar_lea.sflag [#allocation5], %s326
        %s328 = sand.u32 %s116, 1
        %s329 = smul.addr %s328, 4
        %s330 = scalar_lea.vmem [#allocation9], %s329
        // Predicated region
        $region49: #{conditional_transformer.19} parent=31 // pred_check
          %p331 = pneg %p126
        $region50: #{conditional_transformer.19} parent=31 // pred_check_branch
          %333 = sbr.rel (%p331) target = $region52
        $region51: #{conditional_transformer.19} parent=31 // pred_region
          %s335 = ssub.s32 64, 64
          %336 = vsyncadd %s327, %s335
          %s337 = sadd.s32 %s26, %s25
          %s338 = smul.addr %s337, 64
          %s339 = scalar_lea.hbm %s3, %s338
          %s341 = sshll.u32 %s330, 4
          %s342 = int_to_ptr.vmem [resolvable:$true] %s341
          %344 = dma.vmem_to_hbm [thread:$0]  %s342, 64, %s339, %s327
        $region52: #{conditional_transformer.19} parent=31 // pred_fallthru
          _
      $region32: #{conditional_transformer.19} parent=5 // pred_fallthru
        _
      %p345 = scmp.le.s32.totalorder 2, %s16
      // Predicated region
      $region53: #{conditional_transformer.19} parent=5 // pred_check
        %p346 = pneg %p345
      $region54: #{conditional_transformer.19} parent=5 // pred_check_branch
        %348 = sbr.rel (%p346) target = $region56
      $region55: #{conditional_transformer.19} parent=5 // pred_region
        %s349 = ssub.s32 %s16, 2
        // Predicated region
        $region57: #{conditional_transformer.19} parent=55 // pred_check
          %p350 = pneg %p132
        $region58: #{conditional_transformer.19} parent=55 // pred_check_branch
          %352 = sbr.rel (%p350) target = $region60
        $region59: #{conditional_transformer.19} parent=55 // pred_region
          %s353 = sand.u32 %s117, 1
          %s354 = scalar_lea.sflag [#allocation5], %s353
          %s355 = sand.u32 %s117, 1
          %s356 = smul.addr %s355, 4
          %s357 = scalar_lea.vmem [#allocation9], %s356
          %358 = dma.done %s354, 64
        $region60: #{conditional_transformer.19} parent=55 // pred_fallthru
          _
      $region56: #{conditional_transformer.19} parent=5 // pred_fallthru
        _
    $region6: #{conditional_transformer.19} parent=1 // loop_footer
      %s20 = sadd.s32 1, %s16
    $region7: #{conditional_transformer.19} parent=1 // loop_footer_branch
      %15 = sbr.rel target = $region3
    $region8: #{conditional_transformer.19} parent=1 // loop_exit
      _
    %359 = vsyncpa [#allocation4], 1
    %s360 = scalar_lea.sflag [#allocation4], 1
    %361 = vsyncpa %s360, 1
    %362 = vsyncpa [#allocation7], 1
    %363 = vsyncpa [#allocation5], 1
    %s364 = scalar_lea.sflag [#allocation5], 1
    %365 = vsyncpa %s364, 1

// kernel: conditional_transformer.20
$region0: #{conditional_transformer.20}
  #allocation0 [shape = 'u32[]', space=smem, size = 0x4, offset = 0x4, fixed_abs, tag = 'smem constant byte address 0x4 - core index']
  #allocation1 [shape = 'u32[144,128]{1,0:T(1,128)}', space=vmem, size = 0x12000, scoped, tag = 'internal scratch']
  #allocation2 [shape = 'bf16[8,32]{1,0:T(8,128)(2,1)}', space=vmem, size = 0x800, scoped, tag = 'scratch operand']
  #allocation3 [shape = 'f32[8,4]{1,0:T(8,128)}', space=vmem, size = 0x1000, scoped, tag = 'scratch operand']
  #allocation4 [shape = 'f32[8,4]{1,0:T(8,128)}', space=vmem, size = 0x1000, scoped, tag = 'scratch operand']
  #allocation5 [shape = 'f32[4,8,8]{2,1,0:T(8,128)}', space=vmem, size = 0x4000, scoped, tag = 'scratch operand']
  %s0 = inlined_call_operand.hbm [shape: bf16[32,32], index: 0, kind: input, shape index: {}]
  %s1 = inlined_call_operand.hbm [shape: bf16[2,8,32], index: 1, kind: input, shape index: {}]
  %s2 = inlined_call_operand.hbm [shape: bf16[2,8,64], index: 2, kind: input, shape index: {}]
  %s3 = inlined_call_operand.hbm [shape: f32[8,32], index: 3, kind: input, shape index: {}]
  %s4 = inlined_call_operand.hbm [shape: f32[8,32], index: 4, kind: input, shape index: {}]
  %s5 = inlined_call_operand.hbm [shape: f32[8,32], index: 5, kind: input, shape index: {}]
  %s6 = inlined_call_operand.hbm [shape: f32[8,32], index: 6, kind: input, shape index: {}]
  %s7 = inlined_call_operand.hbm [shape: bf16[2,8,32], index: 7, kind: output, shape index: {}]
  %s8 = sld [smem:[#allocation0]]
  $region97: #{conditional_transformer.20} parent=0
    _
  %s10 = ssub.s32 1, %s8
  %s11 = scalar_select 0, %s10, %s8
  $region1: #{conditional_transformer.20} parent=0
    #allocation6 [shape = 'u8[8192]{0}', space=vmem, size = 0x2000, scoped, tag = 'input window, operand 0, single buffered']
    #allocation7 [shape = 's32[2]{0}', space=sflag, size = 0x8, scoped, tag = 'scoped memory for conditional_transformer.20']
    #allocation8 [shape = 's32[2]{0}', space=sflag, size = 0x8, scoped, tag = 'scoped memory for conditional_transformer.20']
    #allocation9 [shape = 'u8[4096]{0}', space=vmem, size = 0x1000, scoped, tag = 'input window, operand 1']
    #allocation10 [shape = 's32[2]{0}', space=sflag, size = 0x8, scoped, tag = 'scoped memory for conditional_transformer.20']
    #allocation11 [shape = 'u8[4096]{0}', space=vmem, size = 0x1000, scoped, tag = 'input window, operand 2']
    #allocation12 [shape = 'u8[4096]{0}', space=vmem, size = 0x1000, scoped, tag = 'input window, operand 3, single buffered']
    #allocation13 [shape = 's32[1]{0}', space=sflag, size = 0x4, scoped, tag = 'scoped memory for conditional_transformer.20']
    #allocation14 [shape = 'u8[4096]{0}', space=vmem, size = 0x1000, scoped, tag = 'input window, operand 4, single buffered']
    #allocation15 [shape = 'u8[4096]{0}', space=vmem, size = 0x1000, scoped, tag = 'input window, operand 5, single buffered']
    #allocation16 [shape = 's32[1]{0}', space=sflag, size = 0x4, scoped, tag = 'scoped memory for conditional_transformer.20']
    #allocation17 [shape = 'u8[4096]{0}', space=vmem, size = 0x1000, scoped, tag = 'input window, operand 6, single buffered']
    #allocation18 [shape = 'u8[4096]{0}', space=vmem, size = 0x1000, scoped, tag = 'output window, operand 0']
    %12 = vsyncpa [#allocation7], 0
    %13 = vsyncpa [#allocation10], 0
    %s14 = scalar_lea.sflag [#allocation10], 1
    %15 = vsyncpa %s14, 0
    %16 = vsyncpa [#allocation13], 0
    %17 = vsyncpa [#allocation16], 0
    %18 = vsyncpa [#allocation8], 0
    %s19 = scalar_lea.sflag [#allocation8], 1
    %20 = vsyncpa %s19, 0
    loop: start=0, step=1, limit=4
    $region2: #{conditional_transformer.20} parent=1 // loop_pre_header
      _
    $region3: #{conditional_transformer.20} parent=1 // loop_header
      %s22 = sphi 0, %s26
      %p23 = scmp.ge.s32.totalorder %s22, 4
      %s29 = sphi 0, %s48
      %s30 = sphi 0, %s44
      %s31 = sphi 0, %s40
      %s32 = sphi 0, %s29
      %s33 = sphi 0, %s30
      %s34 = sphi 0, %s31
      %s35 = sphi 0, %s32
      %s36 = sphi 0, %s33
      %s37 = sphi 0, %s34
      %s49 = sphi 0, %s49
      %s51 = sphi 0, %s49
      %s52 = sphi 0, %s51
      %s66 = sphi 0, %s52
      %s74 = sphi 0, %s76
      %s77 = sphi 0, %s74
      %s78 = sphi 0, %s77
      %s94 = sphi 0, %s78
      %s102 = sphi 0, %s104
      %s105 = sphi 0, %s102
      %s106 = sphi 0, %s105
      %s122 = sphi 0, %s106
      %s128 = sphi 0, %s130
      %s131 = sphi 0, %s128
      %s132 = sphi 0, %s131
      %s148 = sphi 0, %s132
      %s154 = sphi 0, %s156
      %s157 = sphi 0, %s154
      %s158 = sphi 0, %s157
      %s174 = sphi 0, %s158
      %s180 = sphi 0, %s182
      %s183 = sphi 0, %s180
      %s184 = sphi 0, %s183
      %s200 = sphi 0, %s184
      %s206 = sphi 0, %s208
      %s209 = sphi 0, %s206
      %s210 = sphi 0, %s209
      %s226 = sphi 0, %s210
      %s234 = sphi 0, %s236
      %s237 = sphi 0, %s234
      %s238 = sphi 0, %s237
      %s254 = sphi 0, %s238
    $region4: #{conditional_transformer.20} parent=1 // loop_header_branch
      %25 = sbr.rel (%p23) target = $region8
    $region5: #{conditional_transformer.20} parent=1 // loop_body
      %s27 = ssub.s32 %s22, 1
      %s28 = ssub.s32 %s22, 2
      %s38 = sadd.s32 1, %s31
      %p39 = scmp.ge.s32.totalorder %s38, 1
      %s40 = scalar_select %p39, 0, %s38
      %s41 = sadd.s32 1, %s30
      %s42 = scalar_select %p39, %s41, %s30
      %p43 = scmp.ge.s32.totalorder %s42, 1
      %s44 = scalar_select %p43, 0, %s42
      %s45 = sadd.s32 1, %s29
      %s46 = scalar_select %p43, %s45, %s29
      %p47 = scmp.ge.s32.totalorder %s46, 2
      %s48 = scalar_select %p47, 0, %s46
      %s50 = sadd.s32 %s49, 1
      %p53 = scmp.eq.s32.totalorder %s22, 1
      %p54 = scmp.ne.s32.totalorder %s49, %s51
      %p55 = scmp.eq.s32.totalorder %s22, 0
      %p56 = por %p54, %p55
      %p57 = scmp.ne.s32.totalorder %s49, %s51
      %p58 = scmp.eq.s32.totalorder %s27, 1
      %p59 = por %p57, %p58
      %p60 = scmp.ne.s32.totalorder %s51, %s52
      %p61 = scmp.eq.s32.totalorder %s27, 0
      %p62 = por %p60, %p61
      %p63 = scmp.ne.s32.totalorder %s51, %s52
      %p64 = scmp.eq.s32.totalorder %s28, 1
      %p65 = por %p63, %p64
      %p67 = scmp.ne.s32.totalorder %s52, %s66
      %p68 = scmp.eq.s32.totalorder %s28, 0
      %p69 = por %p67, %p68
      %s70 = ssub.s32 %s29, %s48
      %s71 = ssub.s32 %s30, %s44
      %s72 = sor.u32 %s70, %s71
      %p73 = scmp.eq.s32.totalorder %s72, 0
      %s75 = sadd.s32 %s74, 1
      %s76 = scalar_select %p73, %s74, %s75
      %p79 = pneg %p73
      %p80 = scmp.eq.s32.totalorder %s22, 1
      %p81 = por %p79, %p80
      %p82 = scmp.ne.s32.totalorder %s74, %s77
      %p83 = scmp.eq.s32.totalorder %s22, 0
      %p84 = por %p82, %p83
      %p85 = scmp.ne.s32.totalorder %s74, %s77
      %p86 = scmp.eq.s32.totalorder %s27, 1
      %p87 = por %p85, %p86
      %p88 = scmp.ne.s32.totalorder %s77, %s78
      %p89 = scmp.eq.s32.totalorder %s27, 0
      %p90 = por %p88, %p89
      %p91 = scmp.ne.s32.totalorder %s77, %s78
      %p92 = scmp.eq.s32.totalorder %s28, 1
      %p93 = por %p91, %p92
      %p95 = scmp.ne.s32.totalorder %s78, %s94
      %p96 = scmp.eq.s32.totalorder %s28, 0
      %p97 = por %p95, %p96
      %s98 = ssub.s32 %s29, %s48
      %s99 = ssub.s32 %s31, %s40
      %s100 = sor.u32 %s98, %s99
      %p101 = scmp.eq.s32.totalorder %s100, 0
      %s103 = sadd.s32 %s102, 1
      %s104 = scalar_select %p101, %s102, %s103
      %p107 = pneg %p101
      %p108 = scmp.eq.s32.totalorder %s22, 1
      %p109 = por %p107, %p108
      %p110 = scmp.ne.s32.totalorder %s102, %s105
      %p111 = scmp.eq.s32.totalorder %s22, 0
      %p112 = por %p110, %p111
      %p113 = scmp.ne.s32.totalorder %s102, %s105
      %p114 = scmp.eq.s32.totalorder %s27, 1
      %p115 = por %p113, %p114
      %p116 = scmp.ne.s32.totalorder %s105, %s106
      %p117 = scmp.eq.s32.totalorder %s27, 0
      %p118 = por %p116, %p117
      %p119 = scmp.ne.s32.totalorder %s105, %s106
      %p120 = scmp.eq.s32.totalorder %s28, 1
      %p121 = por %p119, %p120
      %p123 = scmp.ne.s32.totalorder %s106, %s122
      %p124 = scmp.eq.s32.totalorder %s28, 0
      %p125 = por %p123, %p124
      %s126 = ssub.s32 %s30, %s44
      %p127 = scmp.eq.s32.totalorder %s126, 0
      %s129 = sadd.s32 %s128, 1
      %s130 = scalar_select %p127, %s128, %s129
      %p133 = pneg %p127
      %p134 = scmp.eq.s32.totalorder %s22, 1
      %p135 = por %p133, %p134
      %p136 = scmp.ne.s32.totalorder %s128, %s131
      %p137 = scmp.eq.s32.totalorder %s22, 0
      %p138 = por %p136, %p137
      %p139 = scmp.ne.s32.totalorder %s128, %s131
      %p140 = scmp.eq.s32.totalorder %s27, 1
      %p141 = por %p139, %p140
      %p142 = scmp.ne.s32.totalorder %s131, %s132
      %p143 = scmp.eq.s32.totalorder %s27, 0
      %p144 = por %p142, %p143
      %p145 = scmp.ne.s32.totalorder %s131, %s132
      %p146 = scmp.eq.s32.totalorder %s28, 1
      %p147 = por %p145, %p146
      %p149 = scmp.ne.s32.totalorder %s132, %s148
      %p150 = scmp.eq.s32.totalorder %s28, 0
      %p151 = por %p149, %p150
      %s152 = ssub.s32 %s30, %s44
      %p153 = scmp.eq.s32.totalorder %s152, 0
      %s155 = sadd.s32 %s154, 1
      %s156 = scalar_select %p153, %s154, %s155
      %p159 = pneg %p153
      %p160 = scmp.eq.s32.totalorder %s22, 1
      %p161 = por %p159, %p160
      %p162 = scmp.ne.s32.totalorder %s154, %s157
      %p163 = scmp.eq.s32.totalorder %s22, 0
      %p164 = por %p162, %p163
      %p165 = scmp.ne.s32.totalorder %s154, %s157
      %p166 = scmp.eq.s32.totalorder %s27, 1
      %p167 = por %p165, %p166
      %p168 = scmp.ne.s32.totalorder %s157, %s158
      %p169 = scmp.eq.s32.totalorder %s27, 0
      %p170 = por %p168, %p169
      %p171 = scmp.ne.s32.totalorder %s157, %s158
      %p172 = scmp.eq.s32.totalorder %s28, 1
      %p173 = por %p171, %p172
      %p175 = scmp.ne.s32.totalorder %s158, %s174
      %p176 = scmp.eq.s32.totalorder %s28, 0
      %p177 = por %p175, %p176
      %s178 = ssub.s32 %s31, %s40
      %p179 = scmp.eq.s32.totalorder %s178, 0
      %s181 = sadd.s32 %s180, 1
      %s182 = scalar_select %p179, %s180, %s181
      %p185 = pneg %p179
      %p186 = scmp.eq.s32.totalorder %s22, 1
      %p187 = por %p185, %p186
      %p188 = scmp.ne.s32.totalorder %s180, %s183
      %p189 = scmp.eq.s32.totalorder %s22, 0
      %p190 = por %p188, %p189
      %p191 = scmp.ne.s32.totalorder %s180, %s183
      %p192 = scmp.eq.s32.totalorder %s27, 1
      %p193 = por %p191, %p192
      %p194 = scmp.ne.s32.totalorder %s183, %s184
      %p195 = scmp.eq.s32.totalorder %s27, 0
      %p196 = por %p194, %p195
      %p197 = scmp.ne.s32.totalorder %s183, %s184
      %p198 = scmp.eq.s32.totalorder %s28, 1
      %p199 = por %p197, %p198
      %p201 = scmp.ne.s32.totalorder %s184, %s200
      %p202 = scmp.eq.s32.totalorder %s28, 0
      %p203 = por %p201, %p202
      %s204 = ssub.s32 %s31, %s40
      %p205 = scmp.eq.s32.totalorder %s204, 0
      %s207 = sadd.s32 %s206, 1
      %s208 = scalar_select %p205, %s206, %s207
      %p211 = pneg %p205
      %p212 = scmp.eq.s32.totalorder %s22, 1
      %p213 = por %p211, %p212
      %p214 = scmp.ne.s32.totalorder %s206, %s209
      %p215 = scmp.eq.s32.totalorder %s22, 0
      %p216 = por %p214, %p215
      %p217 = scmp.ne.s32.totalorder %s206, %s209
      %p218 = scmp.eq.s32.totalorder %s27, 1
      %p219 = por %p217, %p218
      %p220 = scmp.ne.s32.totalorder %s209, %s210
      %p221 = scmp.eq.s32.totalorder %s27, 0
      %p222 = por %p220, %p221
      %p223 = scmp.ne.s32.totalorder %s209, %s210
      %p224 = scmp.eq.s32.totalorder %s28, 1
      %p225 = por %p223, %p224
      %p227 = scmp.ne.s32.totalorder %s210, %s226
      %p228 = scmp.eq.s32.totalorder %s28, 0
      %p229 = por %p227, %p228
      %s230 = ssub.s32 %s29, %s48
      %s231 = ssub.s32 %s30, %s44
      %s232 = sor.u32 %s230, %s231
      %p233 = scmp.eq.s32.totalorder %s232, 0
      %s235 = sadd.s32 %s234, 1
      %s236 = scalar_select %p233, %s234, %s235
      %p239 = pneg %p233
      %p240 = scmp.eq.s32.totalorder %s22, 1
      %p241 = por %p239, %p240
      %p242 = scmp.ne.s32.totalorder %s234, %s237
      %p243 = scmp.eq.s32.totalorder %s22, 0
      %p244 = por %p242, %p243
      %p245 = scmp.ne.s32.totalorder %s234, %s237
      %p246 = scmp.eq.s32.totalorder %s27, 1
      %p247 = por %p245, %p246
      %p248 = scmp.ne.s32.totalorder %s237, %s238
      %p249 = scmp.eq.s32.totalorder %s27, 0
      %p250 = por %p248, %p249
      %p251 = scmp.ne.s32.totalorder %s237, %s238
      %p252 = scmp.eq.s32.totalorder %s28, 1
      %p253 = por %p251, %p252
      %p255 = scmp.ne.s32.totalorder %s238, %s254
      %p256 = scmp.eq.s32.totalorder %s28, 0
      %p257 = por %p255, %p256
      %p258 = scmp.le.s32.totalorder 1, %s22
      %p259 = scmp.lt.s32.totalorder %s22, 3
      %p260 = pnand %p258, %p259
      %p261 = pneg %p260
      // Predicated region
      $region9: #{conditional_transformer.20} parent=5 // pred_check
        _
      $region10: #{conditional_transformer.20} parent=5 // pred_check_branch
        %263 = sbr.rel (%p260) target = $region12
      $region11: #{conditional_transformer.20} parent=5 // pred_region
        %s264 = ssub.s32 %s22, 1
        // Predicated region
        $region13: #{conditional_transformer.20} parent=11 // pred_check
          %p265 = pneg %p62
        $region14: #{conditional_transformer.20} parent=11 // pred_check_branch
          %267 = sbr.rel (%p265) target = $region16
        $region15: #{conditional_transformer.20} parent=11 // pred_region
          %s269 = ssub.s32 256, 256
          %270 = vsyncadd [#allocation7], %s269
          %s271 = sshll.u32 [#allocation6], 4
          %s272 = int_to_ptr.vmem [resolvable:$true] %s271
          %277 = dma.hbm_to_vmem [thread:$0]  %s0, 256, %s272, [#allocation7], 64, 64, 4
        $region16: #{conditional_transformer.20} parent=11 // pred_fallthru
          _
        // Predicated region
        $region17: #{conditional_transformer.20} parent=11 // pred_check
          %p278 = pneg %p144
        $region18: #{conditional_transformer.20} parent=11 // pred_check_branch
          %280 = sbr.rel (%p278) target = $region20
        $region19: #{conditional_transformer.20} parent=11 // pred_region
          %s282 = ssub.s32 128, 128
          %283 = vsyncadd [#allocation13], %s282
          %s284 = smul.addr %s33, 128
          %s285 = scalar_lea.hbm %s3, %s284
          %s287 = sshll.u32 [#allocation12], 4
          %s288 = int_to_ptr.vmem [resolvable:$true] %s287
          %290 = dma.hbm_to_vmem [thread:$0]  %s285, 128, %s288, [#allocation13]
        $region20: #{conditional_transformer.20} parent=11 // pred_fallthru
          _
        // Predicated region
        $region21: #{conditional_transformer.20} parent=11 // pred_check
          %p291 = pneg %p170
        $region22: #{conditional_transformer.20} parent=11 // pred_check_branch
          %293 = sbr.rel (%p291) target = $region24
        $region23: #{conditional_transformer.20} parent=11 // pred_region
          %s295 = ssub.s32 128, 128
          %296 = vsyncadd [#allocation13], %s295
          %s297 = smul.addr %s33, 128
          %s298 = scalar_lea.hbm %s4, %s297
          %s300 = sshll.u32 [#allocation14], 4
          %s301 = int_to_ptr.vmem [resolvable:$true] %s300
          %303 = dma.hbm_to_vmem [thread:$0]  %s298, 128, %s301, [#allocation13]
        $region24: #{conditional_transformer.20} parent=11 // pred_fallthru
          _
        // Predicated region
        $region25: #{conditional_transformer.20} parent=11 // pred_check
          %p304 = pneg %p196
        $region26: #{conditional_transformer.20} parent=11 // pred_check_branch
          %306 = sbr.rel (%p304) target = $region28
        $region27: #{conditional_transformer.20} parent=11 // pred_region
          %s308 = ssub.s32 128, 128
          %309 = vsyncadd [#allocation16], %s308
          %s310 = smul.addr %s34, 128
          %s311 = scalar_lea.hbm %s5, %s310
          %s313 = sshll.u32 [#allocation15], 4
          %s314 = int_to_ptr.vmem [resolvable:$true] %s313
          %316 = dma.hbm_to_vmem [thread:$0]  %s311, 128, %s314, [#allocation16]
        $region28: #{conditional_transformer.20} parent=11 // pred_fallthru
          _
        // Predicated region
        $region29: #{conditional_transformer.20} parent=11 // pred_check
          %p317 = pneg %p222
        $region30: #{conditional_transformer.20} parent=11 // pred_check_branch
          %319 = sbr.rel (%p317) target = $region32
        $region31: #{conditional_transformer.20} parent=11 // pred_region
          %s321 = ssub.s32 128, 128
          %322 = vsyncadd [#allocation16], %s321
          %s323 = smul.addr %s34, 128
          %s324 = scalar_lea.hbm %s6, %s323
          %s326 = sshll.u32 [#allocation17], 4
          %s327 = int_to_ptr.vmem [resolvable:$true] %s326
          %329 = dma.hbm_to_vmem [thread:$0]  %s324, 128, %s327, [#allocation16]
        $region32: #{conditional_transformer.20} parent=11 // pred_fallthru
          _
      $region12: #{conditional_transformer.20} parent=5 // pred_fallthru
        _
      %p330 = scmp.lt.s32.totalorder %s22, 2
      // Predicated region
      $region33: #{conditional_transformer.20} parent=5 // pred_check
        %p331 = pneg %p330
      $region34: #{conditional_transformer.20} parent=5 // pred_check_branch
        %333 = sbr.rel (%p331) target = $region36
      $region35: #{conditional_transformer.20} parent=5 // pred_region
        // Predicated region
        $region37: #{conditional_transformer.20} parent=35 // pred_check
          %p334 = pneg %p84
        $region38: #{conditional_transformer.20} parent=35 // pred_check_branch
          %336 = sbr.rel (%p334) target = $region40
        $region39: #{conditional_transformer.20} parent=35 // pred_region
          %s337 = sand.u32 %s22, 1
          %s338 = scalar_lea.sflag [#allocation10], %s337
          %s339 = sand.u32 %s74, 1
          %s340 = smul.addr %s339, 4
          %s341 = scalar_lea.vmem [#allocation9], %s340
          %s343 = ssub.s32 64, 64
          %344 = vsyncadd %s338, %s343
          %s345 = sadd.s32 %s30, %s29
          %s346 = smul.addr %s345, 64
          %s347 = scalar_lea.hbm %s1, %s346
          %s349 = sshll.u32 %s341, 4
          %s350 = int_to_ptr.vmem [resolvable:$true] %s349
          %352 = dma.hbm_to_vmem [thread:$0]  %s347, 64, %s350, %s338
        $region40: #{conditional_transformer.20} parent=35 // pred_fallthru
          _
        // Predicated region
        $region41: #{conditional_transformer.20} parent=35 // pred_check
          %p353 = pneg %p112
        $region42: #{conditional_transformer.20} parent=35 // pred_check_branch
          %355 = sbr.rel (%p353) target = $region44
        $region43: #{conditional_transformer.20} parent=35 // pred_region
          %s356 = sand.u32 %s22, 1
          %s357 = scalar_lea.sflag [#allocation10], %s356
          %s358 = sand.u32 %s102, 1
          %s359 = smul.addr %s358, 4
          %s360 = scalar_lea.vmem [#allocation11], %s359
          %s362 = ssub.s32 64, 64
          %363 = vsyncadd %s357, %s362
          %s364 = sadd.s32 %s31, %s29
          %s365 = smul.addr %s364, 64
          %s366 = scalar_lea.hbm %s2, %s365
          %s368 = sshll.u32 %s360, 4
          %s369 = int_to_ptr.vmem [resolvable:$true] %s368
          %371 = dma.hbm_to_vmem [thread:$0]  %s366, 64, %s369, %s357
        $region44: #{conditional_transformer.20} parent=35 // pred_fallthru
          _
      $region36: #{conditional_transformer.20} parent=5 // pred_fallthru
        _
      %p372 = scmp.le.s32.totalorder 1, %s22
      %p373 = scmp.lt.s32.totalorder %s22, 3
      %p374 = pnand %p372, %p373
      %p375 = pneg %p374
      // Predicated region
      $region45: #{conditional_transformer.20} parent=5 // pred_check
        _
      $region46: #{conditional_transformer.20} parent=5 // pred_check_branch
        %377 = sbr.rel (%p374) target = $region48
      $region47: #{conditional_transformer.20} parent=5 // pred_region
        %s378 = ssub.s32 %s22, 1
        // Predicated region
        $region49: #{conditional_transformer.20} parent=47 // pred_check
          %p379 = pneg %p62
        $region50: #{conditional_transformer.20} parent=47 // pred_check_branch
          %381 = sbr.rel (%p379) target = $region52
        $region51: #{conditional_transformer.20} parent=47 // pred_region
          %382 = dma.done [#allocation7], 256
        $region52: #{conditional_transformer.20} parent=47 // pred_fallthru
          _
        %s383 = sand.u32 %s27, 1
        %s384 = scalar_lea.sflag [#allocation10], %s383
        %s385 = sand.u32 %s77, 1
        %s386 = smul.addr %s385, 4
        %s387 = scalar_lea.vmem [#allocation9], %s386
        // Predicated region
        $region53: #{conditional_transformer.20} parent=47 // pred_check
          %p388 = pneg %p90
        $region54: #{conditional_transformer.20} parent=47 // pred_check_branch
          %390 = sbr.rel (%p388) target = $region56
        $region55: #{conditional_transformer.20} parent=47 // pred_region
          %391 = dma.done %s384, 64
        $region56: #{conditional_transformer.20} parent=47 // pred_fallthru
          _
        %s392 = sand.u32 %s27, 1
        %s393 = scalar_lea.sflag [#allocation10], %s392
        %s394 = sand.u32 %s105, 1
        %s395 = smul.addr %s394, 4
        %s396 = scalar_lea.vmem [#allocation11], %s395
        // Predicated region
        $region57: #{conditional_transformer.20} parent=47 // pred_check
          %p397 = pneg %p118
        $region58: #{conditional_transformer.20} parent=47 // pred_check_branch
          %399 = sbr.rel (%p397) target = $region60
        $region59: #{conditional_transformer.20} parent=47 // pred_region
          %400 = dma.done %s393, 64
        $region60: #{conditional_transformer.20} parent=47 // pred_fallthru
          _
        // Predicated region
        $region61: #{conditional_transformer.20} parent=47 // pred_check
          %p401 = pneg %p144
        $region62: #{conditional_transformer.20} parent=47 // pred_check_branch
          %403 = sbr.rel (%p401) target = $region64
        $region63: #{conditional_transformer.20} parent=47 // pred_region
          %404 = dma.done [#allocation13], 128
        $region64: #{conditional_transformer.20} parent=47 // pred_fallthru
          _
        // Predicated region
        $region65: #{conditional_transformer.20} parent=47 // pred_check
          %p405 = pneg %p170
        $region66: #{conditional_transformer.20} parent=47 // pred_check_branch
          %407 = sbr.rel (%p405) target = $region68
        $region67: #{conditional_transformer.20} parent=47 // pred_region
          %408 = dma.done [#allocation13], 128
        $region68: #{conditional_transformer.20} parent=47 // pred_fallthru
          _
        // Predicated region
        $region69: #{conditional_transformer.20} parent=47 // pred_check
          %p409 = pneg %p196
        $region70: #{conditional_transformer.20} parent=47 // pred_check_branch
          %411 = sbr.rel (%p409) target = $region72
        $region71: #{conditional_transformer.20} parent=47 // pred_region
          %412 = dma.done [#allocation16], 128
        $region72: #{conditional_transformer.20} parent=47 // pred_fallthru
          _
        // Predicated region
        $region73: #{conditional_transformer.20} parent=47 // pred_check
          %p413 = pneg %p222
        $region74: #{conditional_transformer.20} parent=47 // pred_check_branch
          %415 = sbr.rel (%p413) target = $region76
        $region75: #{conditional_transformer.20} parent=47 // pred_region
          %416 = dma.done [#allocation16], 128
        $region76: #{conditional_transformer.20} parent=47 // pred_fallthru
          _
        %p417 = pneg %p62
        %p418 = pneg %p59
        %s419 = sand.u32 %s27, 1
        %s420 = scalar_lea.sflag [#allocation10], %s419
        %s421 = sand.u32 %s77, 1
        %s422 = smul.addr %s421, 4
        %s423 = scalar_lea.vmem [#allocation9], %s422
        %p424 = pneg %p90
        %p425 = pneg %p87
        %s426 = sand.u32 %s27, 1
        %s427 = scalar_lea.sflag [#allocation10], %s426
        %s428 = sand.u32 %s105, 1
        %s429 = smul.addr %s428, 4
        %s430 = scalar_lea.vmem [#allocation11], %s429
        %p431 = pneg %p118
        %p432 = pneg %p115
        %p433 = pneg %p144
        %p434 = pneg %p141
        %p435 = pneg %p170
        %p436 = pneg %p167
        %p437 = pneg %p196
        %p438 = pneg %p193
        %p439 = pneg %p222
        %p440 = pneg %p219
        %p441 = pneg %p250
        %p442 = pneg %p247
        %s443 = sand.u32 %s237, 1
        %s444 = scalar_lea.sflag [#allocation8], %s443
        %s445 = sand.u32 %s237, 1
        %s446 = smul.addr %s445, 4
        %s447 = scalar_lea.vmem [#allocation18], %s446
        %v449 = vld [vmem:[#allocation6] sm:$0xf]
        %v450 = vld [vmem:[#allocation6 + $0x4] sm:$0xf]
        %v451 = vld [vmem:[#allocation6 + $0x8] sm:$0xf]
        %v452 = vld [vmem:[#allocation6 + $0xc] sm:$0xf]
        %p453 = scmp.eq.s32.totalorder %s34, 0
        // Predicated region
        $region77: #{conditional_transformer.20} parent=47 // pred_check
          %p454 = pneg %p453
        $region78: #{conditional_transformer.20} parent=47 // pred_check_branch
          %456 = sbr.rel (%p454) target = $region80
        $region79: #{conditional_transformer.20} parent=47 // pred_region
          %v457 = vld [vmem:[%s387] sm:$0xf]
          %v462 = vunpack.c.l.b16 %v449
          %v463 = vunpack.c.l.b16 %v450
          %v464 = vunpack.c.l.b16 %v451
          %v465 = vunpack.c.l.b16 %v452
          %v466 = vpack.c.b16 %v463, %v462
          %v467 = vpack.c.b16 %v465, %v464
          %vm470 = vcmask 261120
          %v472 = vsel %vm470, %v457, 0
          %474 = vmatprep.subr.bf16.mxu0 0
          %475 = vmatpush1.bf16.msra.mxu0 %v466
          %476 = vmatprep.subr.bf16.mxu0 0
          %477 = vmatpush1.bf16.msra.mxu0 %v467
          %478 = vmatprep.subr.bf16.mxu0 0
          %479 = vmatpush1.bf16.msra.mxu0 0
          %480 = vmatprep.subr.bf16.mxu0 0
          %481 = vmatpush1.bf16.msra.mxu0 0
          %482 = vmatprep.subr.bf16.mxu0 0
          %483 = vmatpush1.bf16.msra.mxu0 0
          %484 = vmatprep.subr.bf16.mxu0 0
          %485 = vmatpush1.bf16.msra.mxu0 0
          %486 = vmatprep.subr.bf16.mxu0 0
          %487 = vmatpush1.bf16.msra.mxu0 0
          %488 = vmatprep.subr.bf16.mxu0 0
          %489 = vmatpush1.bf16.msra.mxu0 0
          %490 = vmatprep.subr.bf16.mxu0 0
          %491 = vmatpush1.bf16.msra.mxu0 0
          %492 = vmatprep.subr.bf16.mxu0 0
          %493 = vmatpush1.bf16.msra.mxu0 0
          %494 = vmatprep.subr.bf16.mxu0 0
          %495 = vmatpush1.bf16.msra.mxu0 0
          %496 = vmatprep.subr.bf16.mxu0 0
          %497 = vmatpush1.bf16.msra.mxu0 0
          %498 = vmatprep.subr.bf16.mxu0 0
          %499 = vmatpush1.bf16.msra.mxu0 0
          %500 = vmatprep.subr.bf16.mxu0 0
          %501 = vmatpush1.bf16.msra.mxu0 0
          %502 = vmatprep.subr.bf16.mxu0 0
          %503 = vmatpush1.bf16.msra.mxu0 0
          %504 = vmatprep.subr.bf16.mxu0 0
          %505 = vmatpush1.bf16.msra.mxu0 0
          %506 = vmatprep.mubr.bf16.mxu0 0
          %507 = vmatmul.mubr.bf16.gmra.mrb[0].mxu0 %v472
          %v508 = vpop.f32.mrb[0].mxu0
          %v509 = vadd.f32 0.0, %v508
          %v510 = vpop.f32.mrb[0].mxu0
          %v511 = vpop.f32.mrb[0].mxu0
          %v512 = vpop.f32.mrb[0].mxu0
          %513 = vdwg.mxu0
          %v514 = vunpack.c.l.bf16 %v457
          %v515 = vld [vmem:[#allocation12] sm:$0xff]
          %v516 = vmul.f32 %v514, %v515
          %v517 = vld [vmem:[#allocation14] sm:$0xff]
          %v518 = vmul.f32 %v509, %v517
          %v519 = vadd.f32 %v516, %v518
          %v520 = vpack.c.bf16 %v519, %v519
          %vm521 = vcmask 257024
          %522 = vst.msk [vmem:[#allocation2] sm:$0xf] %vm521, %v520
          %vm523 = vcmask 31744
          %524 = vst.msk [vmem:[#allocation3] sm:$0xff] %vm523, -inf
          %525 = vst.msk [vmem:[#allocation4] sm:$0xff] %vm523, 0.0
          %vm526 = vcmask 64512
          %527 = vst.msk [vmem:[#allocation5] sm:$0xff] %vm526, 0.0
          %528 = vst.msk [vmem:[#allocation5 + $0x8] sm:$0xff] %vm526, 0.0
          %529 = vst.msk [vmem:[#allocation5 + $0x10] sm:$0xff] %vm526, 0.0
          %530 = vst.msk [vmem:[#allocation5 + $0x18] sm:$0xff] %vm526, 0.0
        $region80: #{conditional_transformer.20} parent=47 // pred_fallthru
          _
        %v531 = vld [vmem:[%s396] sm:$0xf]
        %v536 = vunpack.c.l.b16 %v449
        %v537 = vunpack.c.l.b16 %v450
        %v538 = vunpack.c.l.b16 %v451
        %v539 = vunpack.c.l.b16 %v452
        %v540 = vpack.c.b16 %v537, %v536
        %v541 = vpack.c.b16 %v539, %v538
        %vm544 = vcmask 261120
        %v546 = vsel %vm544, %v531, 0
        %548 = vmatprep.subr.bf16.mxu0 0
        %549 = vmatpush1.bf16.msra.mxu0 %v540
        %550 = vmatprep.subr.bf16.mxu0 0
        %551 = vmatpush1.bf16.msra.mxu0 %v541
        %552 = vmatprep.subr.bf16.mxu0 0
        %553 = vmatpush1.bf16.msra.mxu0 0
        %554 = vmatprep.subr.bf16.mxu0 0
        %555 = vmatpush1.bf16.msra.mxu0 0
        %556 = vmatprep.subr.bf16.mxu0 0
        %557 = vmatpush1.bf16.msra.mxu0 0
        %558 = vmatprep.subr.bf16.mxu0 0
        %559 = vmatpush1.bf16.msra.mxu0 0
        %560 = vmatprep.subr.bf16.mxu0 0
        %561 = vmatpush1.bf16.msra.mxu0 0
        %562 = vmatprep.subr.bf16.mxu0 0
        %563 = vmatpush1.bf16.msra.mxu0 0
        %564 = vmatprep.subr.bf16.mxu0 0
        %565 = vmatpush1.bf16.msra.mxu0 0
        %566 = vmatprep.subr.bf16.mxu0 0
        %567 = vmatpush1.bf16.msra.mxu0 0
        %568 = vmatprep.subr.bf16.mxu0 0
        %569 = vmatpush1.bf16.msra.mxu0 0
        %570 = vmatprep.subr.bf16.mxu0 0
        %571 = vmatpush1.bf16.msra.mxu0 0
        %572 = vmatprep.subr.bf16.mxu0 0
        %573 = vmatpush1.bf16.msra.mxu0 0
        %574 = vmatprep.subr.bf16.mxu0 0
        %575 = vmatpush1.bf16.msra.mxu0 0
        %576 = vmatprep.subr.bf16.mxu0 0
        %577 = vmatpush1.bf16.msra.mxu0 0
        %578 = vmatprep.subr.bf16.mxu0 0
        %579 = vmatpush1.bf16.msra.mxu0 0
        %580 = vmatprep.mubr.bf16.mxu0 0
        %581 = vmatmul.mubr.bf16.gmra.mrb[0].mxu0 %v546
        %v582 = vpop.f32.mrb[0].mxu0
        %v583 = vadd.f32 0.0, %v582
        %v584 = vpop.f32.mrb[0].mxu0
        %v585 = vpop.f32.mrb[0].mxu0
        %v586 = vpop.f32.mrb[0].mxu0
        %587 = vdwg.mxu0
        %v588 = vunpack.c.l.bf16 %v531
        %v589 = vld [vmem:[#allocation15] sm:$0xff]
        %v590 = vmul.f32 %v588, %v589
        %v591 = vld [vmem:[#allocation17] sm:$0xff]
        %v592 = vmul.f32 %v583, %v591
        %v593 = vadd.f32 %v590, %v592
        %v594 = vpack.c.bf16 %v593, %v593
        %v595 = vld [vmem:[#allocation2] sm:$0xf]
        %v596 = vld [vmem:[#allocation3] sm:$0xff]
        %v597 = vld [vmem:[#allocation4] sm:$0xff]
        %vm598 = vcmask 64512
        %v600 = vsel %vm598, %v595, 0
        %v603 = vsel %vm598, %v594, 0
        %605 = vmatprep.subr.bf16.mxu0 0
        %606 = vmatpush1.bf16.xpose.msra.mxu0 %v603
        %607 = vmatprep.subr.bf16.mxu0 0
        %608 = vmatpush1.bf16.xpose.msra.mxu0 0
        %609 = vmatprep.subr.bf16.mxu0 0
        %610 = vmatpush1.bf16.xpose.msra.mxu0 0
        %611 = vmatprep.subr.bf16.mxu0 0
        %612 = vmatpush1.bf16.xpose.msra.mxu0 0
        %613 = vmatprep.subr.bf16.mxu0 0
        %614 = vmatpush1.bf16.xpose.msra.mxu0 0
        %615 = vmatprep.subr.bf16.mxu0 0
        %616 = vmatpush1.bf16.xpose.msra.mxu0 0
        %617 = vmatprep.subr.bf16.mxu0 0
        %618 = vmatpush1.bf16.xpose.msra.mxu0 0
        %619 = vmatprep.subr.bf16.mxu0 0
        %620 = vmatpush1.bf16.xpose.msra.mxu0 0
        %621 = vmatprep.subr.bf16.mxu0 0
        %622 = vmatpush1.bf16.xpose.msra.mxu0 0
        %623 = vmatprep.subr.bf16.mxu0 0
        %624 = vmatpush1.bf16.xpose.msra.mxu0 0
        %625 = vmatprep.subr.bf16.mxu0 0
        %626 = vmatpush1.bf16.xpose.msra.mxu0 0
        %627 = vmatprep.subr.bf16.mxu0 0
        %628 = vmatpush1.bf16.xpose.msra.mxu0 0
        %629 = vmatprep.subr.bf16.mxu0 0
        %630 = vmatpush1.bf16.xpose.msra.mxu0 0
        %631 = vmatprep.subr.bf16.mxu0 0
        %632 = vmatpush1.bf16.xpose.msra.mxu0 0
        %633 = vmatprep.subr.bf16.mxu0 0
        %634 = vmatpush1.bf16.xpose.msra.mxu0 0
        %635 = vmatprep.subr.bf16.mxu0 0
        %636 = vmatpush1.bf16.xpose.msra.mxu0 0
        %637 = vmatprep.mubr.bf16.mxu0 0
        %638 = vmatmul.mubr.bf16.gmra.mrb[0].mxu0 %v600
        %v639 = vpop.f32.mrb[0].mxu0
        %v640 = vadd.f32 0.0, %v639
        %v641 = vpop.f32.mrb[0].mxu0
        %v642 = vpop.f32.mrb[0].mxu0
        %v643 = vpop.f32.mrb[0].mxu0
        %644 = vdwg.mxu0
        %v645 = vsel %vm598, %v640, -inf
        %646 = vmax.xlane.f32.xlu0 %v645
        %v647 = vpop.xlane.xlu0 %646
        %v648 = vmax.f32 %v596, %v647
        %v649 = vsub.f32 %v596, %v648
        %v650 = vmul.f32 %v649, 1.442695
        %v651 = vpow.pop %v650
        %653 = vset.pattern.permute.xlu0 0
        %654 = vperm.xlu0 %653, %v648
        %v655 = vpop.permute.xlu0 %654
        %v657 = vsub.f32 %v640, %v655
        %v658 = vmul.f32 %v657, 1.442695
        %v659 = vpow.pop %v658
        %v660 = vmul.f32 %v651, %v597
        %v661 = vsel %vm598, %v659, 0.0
        %662 = vadd.xlane.f32.xlu0 %v661
        %v663 = vpop.xlane.xlu0 %662
        %v664 = vadd.f32 %v660, %v663
        %v665 = vld [vmem:[#allocation5] sm:$0xff]
        %667 = vset.pattern.permute.xlu0 0
        %668 = vperm.xlu0 %667, %v651
        %v669 = vpop.permute.xlu0 %668
        %v671 = vmul.f32 %v669, %v665
        %v672 = vpack.c.bf16 %v659, %v659
        %v674 = vunpack.c.l.b16 %v531
        %v675 = vpack.c.b16 %v674, %v674
        %676 = vrot.lane.b32.xlu0 %v675, 96
        %v677 = vpop.permute.xlu0 %676
        %v679 = vsel %vm598, %v672, 0
        %vm681 = vcmask 1043456
        %v683 = vsel %vm681, %v677, 0
        %685 = vmatprep.subr.bf16.mxu0 0
        %686 = vmatpush1.bf16.msra.mxu0 %v683
        %687 = vmatprep.subr.bf16.mxu0 0
        %688 = vmatpush1.bf16.msra.mxu0 0
        %689 = vmatprep.subr.bf16.mxu0 0
        %690 = vmatpush1.bf16.msra.mxu0 0
        %691 = vmatprep.subr.bf16.mxu0 0
        %692 = vmatpush1.bf16.msra.mxu0 0
        %693 = vmatprep.subr.bf16.mxu0 0
        %694 = vmatpush1.bf16.msra.mxu0 0
        %695 = vmatprep.subr.bf16.mxu0 0
        %696 = vmatpush1.bf16.msra.mxu0 0
        %697 = vmatprep.subr.bf16.mxu0 0
        %698 = vmatpush1.bf16.msra.mxu0 0
        %699 = vmatprep.subr.bf16.mxu0 0
        %700 = vmatpush1.bf16.msra.mxu0 0
        %701 = vmatprep.subr.bf16.mxu0 0
        %702 = vmatpush1.bf16.msra.mxu0 0
        %703 = vmatprep.subr.bf16.mxu0 0
        %704 = vmatpush1.bf16.msra.mxu0 0
        %705 = vmatprep.subr.bf16.mxu0 0
        %706 = vmatpush1.bf16.msra.mxu0 0
        %707 = vmatprep.subr.bf16.mxu0 0
        %708 = vmatpush1.bf16.msra.mxu0 0
        %709 = vmatprep.subr.bf16.mxu0 0
        %710 = vmatpush1.bf16.msra.mxu0 0
        %711 = vmatprep.subr.bf16.mxu0 0
        %712 = vmatpush1.bf16.msra.mxu0 0
        %713 = vmatprep.subr.bf16.mxu0 0
        %714 = vmatpush1.bf16.msra.mxu0 0
        %715 = vmatprep.subr.bf16.mxu0 0
        %716 = vmatpush1.bf16.msra.mxu0 0
        %717 = vmatprep.mubr.bf16.mxu0 0
        %718 = vmatmul.mubr.bf16.gmra.mrb[0].mxu0 %v679
        %v719 = vpop.f32.mrb[0].mxu0
        %v720 = vadd.f32 0.0, %v719
        %v721 = vpop.f32.mrb[0].mxu0
        %v722 = vpop.f32.mrb[0].mxu0
        %v723 = vpop.f32.mrb[0].mxu0
        %724 = vdwg.mxu0
        %v725 = vadd.f32 %v671, %v720
        %726 = vst.msk [vmem:[#allocation5] sm:$0xff] %vm598, %v725
        %v728 = vunpack.c.l.b16 %v595
        %v729 = vpack.c.b16 %v728, %v728
        %730 = vrot.lane.b32.xlu0 %v729, 120
        %v731 = vpop.permute.xlu0 %730
        %733 = vrot.lane.b32.xlu0 %v594, 120
        %v734 = vpop.permute.xlu0 %733
        %v736 = vsel %vm598, %v731, 0
        %v739 = vsel %vm598, %v734, 0
        %741 = vmatprep.subr.bf16.mxu0 0
        %742 = vmatpush1.bf16.xpose.msra.mxu0 %v739
        %743 = vmatprep.subr.bf16.mxu0 0
        %744 = vmatpush1.bf16.xpose.msra.mxu0 0
        %745 = vmatprep.subr.bf16.mxu0 0
        %746 = vmatpush1.bf16.xpose.msra.mxu0 0
        %747 = vmatprep.subr.bf16.mxu0 0
        %748 = vmatpush1.bf16.xpose.msra.mxu0 0
        %749 = vmatprep.subr.bf16.mxu0 0
        %750 = vmatpush1.bf16.xpose.msra.mxu0 0
        %751 = vmatprep.subr.bf16.mxu0 0
        %752 = vmatpush1.bf16.xpose.msra.mxu0 0
        %753 = vmatprep.subr.bf16.mxu0 0
        %754 = vmatpush1.bf16.xpose.msra.mxu0 0
        %755 = vmatprep.subr.bf16.mxu0 0
        %756 = vmatpush1.bf16.xpose.msra.mxu0 0
        %757 = vmatprep.subr.bf16.mxu0 0
        %758 = vmatpush1.bf16.xpose.msra.mxu0 0
        %759 = vmatprep.subr.bf16.mxu0 0
        %760 = vmatpush1.bf16.xpose.msra.mxu0 0
        %761 = vmatprep.subr.bf16.mxu0 0
        %762 = vmatpush1.bf16.xpose.msra.mxu0 0
        %763 = vmatprep.subr.bf16.mxu0 0
        %764 = vmatpush1.bf16.xpose.msra.mxu0 0
        %765 = vmatprep.subr.bf16.mxu0 0
        %766 = vmatpush1.bf16.xpose.msra.mxu0 0
        %767 = vmatprep.subr.bf16.mxu0 0
        %768 = vmatpush1.bf16.xpose.msra.mxu0 0
        %769 = vmatprep.subr.bf16.mxu0 0
        %770 = vmatpush1.bf16.xpose.msra.mxu0 0
        %771 = vmatprep.subr.bf16.mxu0 0
        %772 = vmatpush1.bf16.xpose.msra.mxu0 0
        %773 = vmatprep.mubr.bf16.mxu0 0
        %774 = vmatmul.mubr.bf16.gmra.mrb[0].mxu0 %v736
        %v775 = vpop.f32.mrb[0].mxu0
        %v776 = vadd.f32 0.0, %v775
        %v777 = vpop.f32.mrb[0].mxu0
        %v778 = vpop.f32.mrb[0].mxu0
        %v779 = vpop.f32.mrb[0].mxu0
        %780 = vdwg.mxu0
        %v781 = vsel %vm598, %v776, -inf
        %782 = vmax.xlane.f32.xlu0 %v781
        %v783 = vpop.xlane.xlu0 %782
        %v784 = vmax.f32 %v596, %v783
        %v785 = vsub.f32 %v596, %v784
        %v786 = vmul.f32 %v785, 1.442695
        %v787 = vpow.pop %v786
        %789 = vset.pattern.permute.xlu0 1
        %790 = vperm.xlu0 %789, %v784
        %v791 = vpop.permute.xlu0 %790
        %v793 = vsub.f32 %v776, %v791
        %v794 = vmul.f32 %v793, 1.442695
        %v795 = vpow.pop %v794
        %v796 = vmul.f32 %v787, %v597
        %v797 = vsel %vm598, %v795, 0.0
        %798 = vadd.xlane.f32.xlu0 %v797
        %v799 = vpop.xlane.xlu0 %798
        %v800 = vadd.f32 %v796, %v799
        %s801 = scalar_lea.vmem [#allocation5], 8
        %v802 = vld [vmem:[%s801] sm:$0xff]
        %804 = vset.pattern.permute.xlu0 1
        %805 = vperm.xlu0 %804, %v787
        %v806 = vpop.permute.xlu0 %805
        %v808 = vmul.f32 %v806, %v802
        %v809 = vpack.c.bf16 %v795, %v795
        %810 = vrot.lane.b32.xlu0 %v675, 88
        %v811 = vpop.permute.xlu0 %810
        %v813 = vsel %vm598, %v809, 0
        %v816 = vsel %vm681, %v811, 0
        %818 = vmatprep.subr.bf16.mxu0 0
        %819 = vmatpush1.bf16.msra.mxu0 %v816
        %820 = vmatprep.subr.bf16.mxu0 0
        %821 = vmatpush1.bf16.msra.mxu0 0
        %822 = vmatprep.subr.bf16.mxu0 0
        %823 = vmatpush1.bf16.msra.mxu0 0
        %824 = vmatprep.subr.bf16.mxu0 0
        %825 = vmatpush1.bf16.msra.mxu0 0
        %826 = vmatprep.subr.bf16.mxu0 0
        %827 = vmatpush1.bf16.msra.mxu0 0
        %828 = vmatprep.subr.bf16.mxu0 0
        %829 = vmatpush1.bf16.msra.mxu0 0
        %830 = vmatprep.subr.bf16.mxu0 0
        %831 = vmatpush1.bf16.msra.mxu0 0
        %832 = vmatprep.subr.bf16.mxu0 0
        %833 = vmatpush1.bf16.msra.mxu0 0
        %834 = vmatprep.subr.bf16.mxu0 0
        %835 = vmatpush1.bf16.msra.mxu0 0
        %836 = vmatprep.subr.bf16.mxu0 0
        %837 = vmatpush1.bf16.msra.mxu0 0
        %838 = vmatprep.subr.bf16.mxu0 0
        %839 = vmatpush1.bf16.msra.mxu0 0
        %840 = vmatprep.subr.bf16.mxu0 0
        %841 = vmatpush1.bf16.msra.mxu0 0
        %842 = vmatprep.subr.bf16.mxu0 0
        %843 = vmatpush1.bf16.msra.mxu0 0
        %844 = vmatprep.subr.bf16.mxu0 0
        %845 = vmatpush1.bf16.msra.mxu0 0
        %846 = vmatprep.subr.bf16.mxu0 0
        %847 = vmatpush1.bf16.msra.mxu0 0
        %848 = vmatprep.subr.bf16.mxu0 0
        %849 = vmatpush1.bf16.msra.mxu0 0
        %850 = vmatprep.mubr.bf16.mxu0 0
        %851 = vmatmul.mubr.bf16.gmra.mrb[0].mxu0 %v813
        %v852 = vpop.f32.mrb[0].mxu0
        %v853 = vadd.f32 0.0, %v852
        %v854 = vpop.f32.mrb[0].mxu0
        %v855 = vpop.f32.mrb[0].mxu0
        %v856 = vpop.f32.mrb[0].mxu0
        %857 = vdwg.mxu0
        %v858 = vadd.f32 %v808, %v853
        %859 = vst.msk [vmem:[%s801] sm:$0xff] %vm598, %v858
        %860 = vrot.lane.b32.xlu0 %v729, 112
        %v861 = vpop.permute.xlu0 %860
        %862 = vrot.lane.b32.xlu0 %v594, 112
        %v863 = vpop.permute.xlu0 %862
        %v865 = vsel %vm598, %v861, 0
        %v868 = vsel %vm598, %v863, 0
        %870 = vmatprep.subr.bf16.mxu0 0
        %871 = vmatpush1.bf16.xpose.msra.mxu0 %v868
        %872 = vmatprep.subr.bf16.mxu0 0
        %873 = vmatpush1.bf16.xpose.msra.mxu0 0
        %874 = vmatprep.subr.bf16.mxu0 0
        %875 = vmatpush1.bf16.xpose.msra.mxu0 0
        %876 = vmatprep.subr.bf16.mxu0 0
        %877 = vmatpush1.bf16.xpose.msra.mxu0 0
        %878 = vmatprep.subr.bf16.mxu0 0
        %879 = vmatpush1.bf16.xpose.msra.mxu0 0
        %880 = vmatprep.subr.bf16.mxu0 0
        %881 = vmatpush1.bf16.xpose.msra.mxu0 0
        %882 = vmatprep.subr.bf16.mxu0 0
        %883 = vmatpush1.bf16.xpose.msra.mxu0 0
        %884 = vmatprep.subr.bf16.mxu0 0
        %885 = vmatpush1.bf16.xpose.msra.mxu0 0
        %886 = vmatprep.subr.bf16.mxu0 0
        %887 = vmatpush1.bf16.xpose.msra.mxu0 0
        %888 = vmatprep.subr.bf16.mxu0 0
        %889 = vmatpush1.bf16.xpose.msra.mxu0 0
        %890 = vmatprep.subr.bf16.mxu0 0
        %891 = vmatpush1.bf16.xpose.msra.mxu0 0
        %892 = vmatprep.subr.bf16.mxu0 0
        %893 = vmatpush1.bf16.xpose.msra.mxu0 0
        %894 = vmatprep.subr.bf16.mxu0 0
        %895 = vmatpush1.bf16.xpose.msra.mxu0 0
        %896 = vmatprep.subr.bf16.mxu0 0
        %897 = vmatpush1.bf16.xpose.msra.mxu0 0
        %898 = vmatprep.subr.bf16.mxu0 0
        %899 = vmatpush1.bf16.xpose.msra.mxu0 0
        %900 = vmatprep.subr.bf16.mxu0 0
        %901 = vmatpush1.bf16.xpose.msra.mxu0 0
        %902 = vmatprep.mubr.bf16.mxu0 0
        %903 = vmatmul.mubr.bf16.gmra.mrb[0].mxu0 %v865
        %v904 = vpop.f32.mrb[0].mxu0
        %v905 = vadd.f32 0.0, %v904
        %v906 = vpop.f32.mrb[0].mxu0
        %v907 = vpop.f32.mrb[0].mxu0
        %v908 = vpop.f32.mrb[0].mxu0
        %909 = vdwg.mxu0
        %v910 = vsel %vm598, %v905, -inf
        %911 = vmax.xlane.f32.xlu0 %v910
        %v912 = vpop.xlane.xlu0 %911
        %v913 = vmax.f32 %v596, %v912
        %v914 = vsub.f32 %v596, %v913
        %v915 = vmul.f32 %v914, 1.442695
        %v916 = vpow.pop %v915
        %918 = vset.pattern.permute.xlu0 2
        %919 = vperm.xlu0 %918, %v913
        %v920 = vpop.permute.xlu0 %919
        %v922 = vsub.f32 %v905, %v920
        %v923 = vmul.f32 %v922, 1.442695
        %v924 = vpow.pop %v923
        %v925 = vmul.f32 %v916, %v597
        %v926 = vsel %vm598, %v924, 0.0
        %927 = vadd.xlane.f32.xlu0 %v926
        %v928 = vpop.xlane.xlu0 %927
        %v929 = vadd.f32 %v925, %v928
        %s930 = scalar_lea.vmem [#allocation5], 16
        %v931 = vld [vmem:[%s930] sm:$0xff]
        %933 = vset.pattern.permute.xlu0 2
        %934 = vperm.xlu0 %933, %v916
        %v935 = vpop.permute.xlu0 %934
        %v937 = vmul.f32 %v935, %v931
        %v938 = vpack.c.bf16 %v924, %v924
        %939 = vrot.lane.b32.xlu0 %v675, 80
        %v940 = vpop.permute.xlu0 %939
        %v942 = vsel %vm598, %v938, 0
        %v945 = vsel %vm681, %v940, 0
        %947 = vmatprep.subr.bf16.mxu0 0
        %948 = vmatpush1.bf16.msra.mxu0 %v945
        %949 = vmatprep.subr.bf16.mxu0 0
        %950 = vmatpush1.bf16.msra.mxu0 0
        %951 = vmatprep.subr.bf16.mxu0 0
        %952 = vmatpush1.bf16.msra.mxu0 0
        %953 = vmatprep.subr.bf16.mxu0 0
        %954 = vmatpush1.bf16.msra.mxu0 0
        %955 = vmatprep.subr.bf16.mxu0 0
        %956 = vmatpush1.bf16.msra.mxu0 0
        %957 = vmatprep.subr.bf16.mxu0 0
        %958 = vmatpush1.bf16.msra.mxu0 0
        %959 = vmatprep.subr.bf16.mxu0 0
        %960 = vmatpush1.bf16.msra.mxu0 0
        %961 = vmatprep.subr.bf16.mxu0 0
        %962 = vmatpush1.bf16.msra.mxu0 0
        %963 = vmatprep.subr.bf16.mxu0 0
        %964 = vmatpush1.bf16.msra.mxu0 0
        %965 = vmatprep.subr.bf16.mxu0 0
        %966 = vmatpush1.bf16.msra.mxu0 0
        %967 = vmatprep.subr.bf16.mxu0 0
        %968 = vmatpush1.bf16.msra.mxu0 0
        %969 = vmatprep.subr.bf16.mxu0 0
        %970 = vmatpush1.bf16.msra.mxu0 0
        %971 = vmatprep.subr.bf16.mxu0 0
        %972 = vmatpush1.bf16.msra.mxu0 0
        %973 = vmatprep.subr.bf16.mxu0 0
        %974 = vmatpush1.bf16.msra.mxu0 0
        %975 = vmatprep.subr.bf16.mxu0 0
        %976 = vmatpush1.bf16.msra.mxu0 0
        %977 = vmatprep.subr.bf16.mxu0 0
        %978 = vmatpush1.bf16.msra.mxu0 0
        %979 = vmatprep.mubr.bf16.mxu0 0
        %980 = vmatmul.mubr.bf16.gmra.mrb[0].mxu0 %v942
        %v981 = vpop.f32.mrb[0].mxu0
        %v982 = vadd.f32 0.0, %v981
        %v983 = vpop.f32.mrb[0].mxu0
        %v984 = vpop.f32.mrb[0].mxu0
        %v985 = vpop.f32.mrb[0].mxu0
        %986 = vdwg.mxu0
        %v987 = vadd.f32 %v937, %v982
        %988 = vst.msk [vmem:[%s930] sm:$0xff] %vm598, %v987
        %989 = vrot.lane.b32.xlu0 %v729, 104
        %v990 = vpop.permute.xlu0 %989
        %991 = vrot.lane.b32.xlu0 %v594, 104
        %v992 = vpop.permute.xlu0 %991
        %v994 = vsel %vm598, %v990, 0
        %v997 = vsel %vm598, %v992, 0
        %999 = vmatprep.subr.bf16.mxu0 0
        %1000 = vmatpush1.bf16.xpose.msra.mxu0 %v997
        %1001 = vmatprep.subr.bf16.mxu0 0
        %1002 = vmatpush1.bf16.xpose.msra.mxu0 0
        %1003 = vmatprep.subr.bf16.mxu0 0
        %1004 = vmatpush1.bf16.xpose.msra.mxu0 0
        %1005 = vmatprep.subr.bf16.mxu0 0
        %1006 = vmatpush1.bf16.xpose.msra.mxu0 0
        %1007 = vmatprep.subr.bf16.mxu0 0
        %1008 = vmatpush1.bf16.xpose.msra.mxu0 0
        %1009 = vmatprep.subr.bf16.mxu0 0
        %1010 = vmatpush1.bf16.xpose.msra.mxu0 0
        %1011 = vmatprep.subr.bf16.mxu0 0
        %1012 = vmatpush1.bf16.xpose.msra.mxu0 0
        %1013 = vmatprep.subr.bf16.mxu0 0
        %1014 = vmatpush1.bf16.xpose.msra.mxu0 0
        %1015 = vmatprep.subr.bf16.mxu0 0
        %1016 = vmatpush1.bf16.xpose.msra.mxu0 0
        %1017 = vmatprep.subr.bf16.mxu0 0
        %1018 = vmatpush1.bf16.xpose.msra.mxu0 0
        %1019 = vmatprep.subr.bf16.mxu0 0
        %1020 = vmatpush1.bf16.xpose.msra.mxu0 0
        %1021 = vmatprep.subr.bf16.mxu0 0
        %1022 = vmatpush1.bf16.xpose.msra.mxu0 0
        %1023 = vmatprep.subr.bf16.mxu0 0
        %1024 = vmatpush1.bf16.xpose.msra.mxu0 0
        %1025 = vmatprep.subr.bf16.mxu0 0
        %1026 = vmatpush1.bf16.xpose.msra.mxu0 0
        %1027 = vmatprep.subr.bf16.mxu0 0
        %1028 = vmatpush1.bf16.xpose.msra.mxu0 0
        %1029 = vmatprep.subr.bf16.mxu0 0
        %1030 = vmatpush1.bf16.xpose.msra.mxu0 0
        %1031 = vmatprep.mubr.bf16.mxu0 0
        %1032 = vmatmul.mubr.bf16.gmra.mrb[0].mxu0 %v994
        %v1033 = vpop.f32.mrb[0].mxu0
        %v1034 = vadd.f32 0.0, %v1033
        %v1035 = vpop.f32.mrb[0].mxu0
        %v1036 = vpop.f32.mrb[0].mxu0
        %v1037 = vpop.f32.mrb[0].mxu0
        %1038 = vdwg.mxu0
        %v1039 = vsel %vm598, %v1034, -inf
        %1040 = vmax.xlane.f32.xlu0 %v1039
        %v1041 = vpop.xlane.xlu0 %1040
        %v1042 = vmax.f32 %v596, %v1041
        %v1043 = vsub.f32 %v596, %v1042
        %v1044 = vmul.f32 %v1043, 1.442695
        %v1045 = vpow.pop %v1044
        %1047 = vset.pattern.permute.xlu0 3
        %1048 = vperm.xlu0 %1047, %v1042
        %v1049 = vpop.permute.xlu0 %1048
        %v1051 = vsub.f32 %v1034, %v1049
        %v1052 = vmul.f32 %v1051, 1.442695
        %v1053 = vpow.pop %v1052
        %v1054 = vmul.f32 %v1045, %v597
        %v1055 = vsel %vm598, %v1053, 0.0
        %1056 = vadd.xlane.f32.xlu0 %v1055
        %v1057 = vpop.xlane.xlu0 %1056
        %v1058 = vadd.f32 %v1054, %v1057
        %s1059 = scalar_lea.vmem [#allocation5], 24
        %v1060 = vld [vmem:[%s1059] sm:$0xff]
        %1062 = vset.pattern.permute.xlu0 3
        %1063 = vperm.xlu0 %1062, %v1045
        %v1064 = vpop.permute.xlu0 %1063
        %v1066 = vmul.f32 %v1064, %v1060
        %v1067 = vpack.c.bf16 %v1053, %v1053
        %1068 = vrot.lane.b32.xlu0 %v675, 72
        %v1069 = vpop.permute.xlu0 %1068
        %v1071 = vsel %vm598, %v1067, 0
        %v1074 = vsel %vm681, %v1069, 0
        %1076 = vmatprep.subr.bf16.mxu0 0
        %1077 = vmatpush1.bf16.msra.mxu0 %v1074
        %1078 = vmatprep.subr.bf16.mxu0 0
        %1079 = vmatpush1.bf16.msra.mxu0 0
        %1080 = vmatprep.subr.bf16.mxu0 0
        %1081 = vmatpush1.bf16.msra.mxu0 0
        %1082 = vmatprep.subr.bf16.mxu0 0
        %1083 = vmatpush1.bf16.msra.mxu0 0
        %1084 = vmatprep.subr.bf16.mxu0 0
        %1085 = vmatpush1.bf16.msra.mxu0 0
        %1086 = vmatprep.subr.bf16.mxu0 0
        %1087 = vmatpush1.bf16.msra.mxu0 0
        %1088 = vmatprep.subr.bf16.mxu0 0
        %1089 = vmatpush1.bf16.msra.mxu0 0
        %1090 = vmatprep.subr.bf16.mxu0 0
        %1091 = vmatpush1.bf16.msra.mxu0 0
        %1092 = vmatprep.subr.bf16.mxu0 0
        %1093 = vmatpush1.bf16.msra.mxu0 0
        %1094 = vmatprep.subr.bf16.mxu0 0
        %1095 = vmatpush1.bf16.msra.mxu0 0
        %1096 = vmatprep.subr.bf16.mxu0 0
        %1097 = vmatpush1.bf16.msra.mxu0 0
        %1098 = vmatprep.subr.bf16.mxu0 0
        %1099 = vmatpush1.bf16.msra.mxu0 0
        %1100 = vmatprep.subr.bf16.mxu0 0
        %1101 = vmatpush1.bf16.msra.mxu0 0
        %1102 = vmatprep.subr.bf16.mxu0 0
        %1103 = vmatpush1.bf16.msra.mxu0 0
        %1104 = vmatprep.subr.bf16.mxu0 0
        %1105 = vmatpush1.bf16.msra.mxu0 0
        %1106 = vmatprep.subr.bf16.mxu0 0
        %1107 = vmatpush1.bf16.msra.mxu0 0
        %1108 = vmatprep.mubr.bf16.mxu0 0
        %1109 = vmatmul.mubr.bf16.gmra.mrb[0].mxu0 %v1071
        %v1110 = vpop.f32.mrb[0].mxu0
        %v1111 = vadd.f32 0.0, %v1110
        %v1112 = vpop.f32.mrb[0].mxu0
        %v1113 = vpop.f32.mrb[0].mxu0
        %v1114 = vpop.f32.mrb[0].mxu0
        %1115 = vdwg.mxu0
        %v1116 = vadd.f32 %v1066, %v1111
        %1117 = vst.msk [vmem:[%s1059] sm:$0xff] %vm598, %v1116
        %vm1118 = vcmask 7168
        %v1119 = vsel %vm1118, %v648, %v784
        %vm1120 = vcmask 15360
        %v1121 = vsel %vm1120, %v1119, %v913
        %vm1122 = vcmask 23552
        %v1123 = vsel %vm1122, %v1121, %v1042
        %vm1124 = vcmask 31744
        %1125 = vst.msk [vmem:[#allocation3] sm:$0xff] %vm1124, %v1123
        %v1126 = vsel %vm1118, %v664, %v800
        %v1127 = vsel %vm1120, %v1126, %v929
        %v1128 = vsel %vm1122, %v1127, %v1058
        %1129 = vst.msk [vmem:[#allocation4] sm:$0xff] %vm1124, %v1128
        // Predicated region
        $region81: #{conditional_transformer.20} parent=47 // pred_check
          %p1130 = pneg %p453
        $region82: #{conditional_transformer.20} parent=47 // pred_check_branch
          %1132 = sbr.rel (%p1130) target = $region84
        $region83: #{conditional_transformer.20} parent=47 // pred_region
          %v1133 = vld [vmem:[#allocation4] sm:$0xff]
          %v1134 = vrcp.pop %v1133
          %v1135 = vld [vmem:[#allocation5] sm:$0xff]
          %1137 = vset.pattern.permute.xlu0 0
          %1138 = vperm.xlu0 %1137, %v1134
          %v1139 = vpop.permute.xlu0 %1138
          %v1141 = vmul.f32 %v1135, %v1139
          %v1142 = vld [vmem:[%s801] sm:$0xff]
          %1143 = vset.pattern.permute.xlu0 1
          %1144 = vperm.xlu0 %1143, %v1134
          %v1145 = vpop.permute.xlu0 %1144
          %v1147 = vmul.f32 %v1142, %v1145
          %v1148 = vld [vmem:[%s930] sm:$0xff]
          %1149 = vset.pattern.permute.xlu0 2
          %1150 = vperm.xlu0 %1149, %v1134
          %v1151 = vpop.permute.xlu0 %1150
          %v1153 = vmul.f32 %v1148, %v1151
          %v1154 = vld [vmem:[%s1059] sm:$0xff]
          %1155 = vset.pattern.permute.xlu0 3
          %1156 = vperm.xlu0 %1155, %v1134
          %v1157 = vpop.permute.xlu0 %1156
          %v1159 = vmul.f32 %v1154, %v1157
          %1161 = vrot.lane.b32.xlu0 %v1147, 8
          %v1162 = vpop.permute.xlu0 %1161
          %1165 = vrot.lane.b32.xlu0 %v1153, 16
          %v1166 = vpop.permute.xlu0 %1165
          %1169 = vrot.lane.b32.xlu0 %v1159, 24
          %v1170 = vpop.permute.xlu0 %1169
          %v1172 = vsel %vm598, %v1141, %v1162
          %vm1173 = vcmask 130048
          %v1174 = vsel %vm1173, %v1172, %v1166
          %vm1175 = vcmask 195584
          %v1176 = vsel %vm1175, %v1174, %v1170
          %v1177 = vpack.c.bf16 %v1176, %v1176
          %vm1178 = vcmask 257024
          %1179 = vst.msk [vmem:[%s447] sm:$0xf] %vm1178, %v1177
        $region84: #{conditional_transformer.20} parent=47 // pred_fallthru
          _
        %s1180 = sand.u32 %s237, 1
        %s1181 = scalar_lea.sflag [#allocation8], %s1180
        %s1182 = sand.u32 %s237, 1
        %s1183 = smul.addr %s1182, 4
        %s1184 = scalar_lea.vmem [#allocation18], %s1183
        // Predicated region
        $region85: #{conditional_transformer.20} parent=47 // pred_check
          %p1185 = pneg %p247
        $region86: #{conditional_transformer.20} parent=47 // pred_check_branch
          %1187 = sbr.rel (%p1185) target = $region88
        $region87: #{conditional_transformer.20} parent=47 // pred_region
          %s1189 = ssub.s32 64, 64
          %1190 = vsyncadd %s1181, %s1189
          %s1191 = sadd.s32 %s33, %s32
          %s1192 = smul.addr %s1191, 64
          %s1193 = scalar_lea.hbm %s7, %s1192
          %s1195 = sshll.u32 %s1184, 4
          %s1196 = int_to_ptr.vmem [resolvable:$true] %s1195
          %1198 = dma.vmem_to_hbm [thread:$0]  %s1196, 64, %s1193, %s1181
        $region88: #{conditional_transformer.20} parent=47 // pred_fallthru
          _
      $region48: #{conditional_transformer.20} parent=5 // pred_fallthru
        _
      %p1199 = scmp.le.s32.totalorder 2, %s22
      // Predicated region
      $region89: #{conditional_transformer.20} parent=5 // pred_check
        %p1200 = pneg %p1199
      $region90: #{conditional_transformer.20} parent=5 // pred_check_branch
        %1202 = sbr.rel (%p1200) target = $region92
      $region91: #{conditional_transformer.20} parent=5 // pred_region
        %s1203 = ssub.s32 %s22, 2
        // Predicated region
        $region93: #{conditional_transformer.20} parent=91 // pred_check
          %p1204 = pneg %p253
        $region94: #{conditional_transformer.20} parent=91 // pred_check_branch
          %1206 = sbr.rel (%p1204) target = $region96
        $region95: #{conditional_transformer.20} parent=91 // pred_region
          %s1207 = sand.u32 %s238, 1
          %s1208 = scalar_lea.sflag [#allocation8], %s1207
          %s1209 = sand.u32 %s238, 1
          %s1210 = smul.addr %s1209, 4
          %s1211 = scalar_lea.vmem [#allocation18], %s1210
          %1212 = dma.done %s1208, 64
        $region96: #{conditional_transformer.20} parent=91 // pred_fallthru
          _
      $region92: #{conditional_transformer.20} parent=5 // pred_fallthru
        _
    $region6: #{conditional_transformer.20} parent=1 // loop_footer
      %s26 = sadd.s32 1, %s22
    $region7: #{conditional_transformer.20} parent=1 // loop_footer_branch
      %21 = sbr.rel target = $region3
    $region8: #{conditional_transformer.20} parent=1 // loop_exit
      _
    %1213 = vsyncpa [#allocation7], 1
    %s1214 = scalar_lea.sflag [#allocation7], 1
    %1215 = vsyncpa %s1214, 1
    %1216 = vsyncpa [#allocation10], 1
    %s1217 = scalar_lea.sflag [#allocation10], 1
    %1218 = vsyncpa %s1217, 1
    %1219 = vsyncpa [#allocation13], 1
    %1220 = vsyncpa [#allocation16], 1
    %1221 = vsyncpa [#allocation8], 1
    %s1222 = scalar_lea.sflag [#allocation8], 1
    %1223 = vsyncpa %s1222, 1

// kernel: conditional_transformer.23
$region0: #{conditional_transformer.23}
  #allocation0 [shape = 'u32[]', space=smem, size = 0x4, offset = 0x4, fixed_abs, tag = 'smem constant byte address 0x4 - core index']
  #allocation1 [shape = 'u32[144,128]{1,0:T(1,128)}', space=vmem, size = 0x12000, scoped, tag = 'internal scratch']
  #allocation2 [shape = 'f32[24,64]{1,0:T(8,128)}', space=vmem, size = 0x3000, scoped, tag = 'scratch operand']
  %s0 = inlined_call_operand.hbm [shape: bf16[24,32], index: 0, kind: input, shape index: {}]
  %s1 = inlined_call_operand.hbm [shape: bf16[32,64], index: 1, kind: input, shape index: {}]
  %s2 = inlined_call_operand.hbm [shape: bf16[24,64], index: 2, kind: output, shape index: {}]
  %s3 = sld [smem:[#allocation0]]
  $region34: #{conditional_transformer.23} parent=0
    _
  %s5 = ssub.s32 1, %s3
  %s6 = scalar_select 0, %s5, %s3
  $region1: #{conditional_transformer.23} parent=0
    #allocation3 [shape = 'u8[6144]{0}', space=vmem, size = 0x1800, scoped, tag = 'input window, operand 0, single buffered']
    #allocation4 [shape = 's32[1]{0}', space=sflag, size = 0x4, scoped, tag = 'scoped memory for conditional_transformer.23']
    #allocation5 [shape = 's32[1]{0}', space=sflag, size = 0x4, scoped, tag = 'scoped memory for conditional_transformer.23']
    #allocation6 [shape = 'u8[8192]{0}', space=vmem, size = 0x2000, scoped, tag = 'input window, operand 1, single buffered']
    #allocation7 [shape = 's32[1]{0}', space=sflag, size = 0x4, scoped, tag = 'scoped memory for conditional_transformer.23']
    #allocation8 [shape = 'u8[6144]{0}', space=vmem, size = 0x1800, scoped, tag = 'output window, operand 0, single buffered']
    %7 = vsyncpa [#allocation4], 0
    %8 = vsyncpa [#allocation7], 0
    %9 = vsyncpa [#allocation5], 0
    // Predicated region
    $region2: #{conditional_transformer.23} parent=1 // pred_check
      _
    $region3: #{conditional_transformer.23} parent=1 // pred_check_branch
      %11 = sbr.rel (0) target = $region5
    $region4: #{conditional_transformer.23} parent=1 // pred_region
      %s13 = ssub.s32 192, 192
      %14 = vsyncadd [#allocation4], %s13
      %s15 = sshll.u32 [#allocation3], 4
      %s16 = int_to_ptr.vmem [resolvable:$true] %s15
      %21 = dma.hbm_to_vmem [thread:$0]  %s0, 192, %s16, [#allocation4], 64, 64, 4
    $region5: #{conditional_transformer.23} parent=1 // pred_fallthru
      _
    // Predicated region
    $region6: #{conditional_transformer.23} parent=1 // pred_check
      _
    $region7: #{conditional_transformer.23} parent=1 // pred_check_branch
      %23 = sbr.rel (0) target = $region9
    $region8: #{conditional_transformer.23} parent=1 // pred_region
      %s25 = ssub.s32 256, 256
      %26 = vsyncadd [#allocation7], %s25
      %s27 = sshll.u32 [#allocation6], 4
      %s28 = int_to_ptr.vmem [resolvable:$true] %s27
      %33 = dma.hbm_to_vmem [thread:$0]  %s1, 256, %s28, [#allocation7], 64, 64, 4
    $region9: #{conditional_transformer.23} parent=1 // pred_fallthru
      _
    // Predicated region
    $region10: #{conditional_transformer.23} parent=1 // pred_check
      _
    $region11: #{conditional_transformer.23} parent=1 // pred_check_branch
      %35 = sbr.rel (0) target = $region13
    $region12: #{conditional_transformer.23} parent=1 // pred_region
      %36 = dma.done [#allocation4], 192
    $region13: #{conditional_transformer.23} parent=1 // pred_fallthru
      _
    // Predicated region
    $region14: #{conditional_transformer.23} parent=1 // pred_check
      _
    $region15: #{conditional_transformer.23} parent=1 // pred_check_branch
      %38 = sbr.rel (0) target = $region17
    $region16: #{conditional_transformer.23} parent=1 // pred_region
      %39 = dma.done [#allocation7], 256
    $region17: #{conditional_transformer.23} parent=1 // pred_fallthru
      _
    %p41 = scmp.eq.s32.totalorder 0, 0
    // Predicated region
    $region18: #{conditional_transformer.23} parent=1 // pred_check
      %p42 = pneg %p41
    $region19: #{conditional_transformer.23} parent=1 // pred_check_branch
      %44 = sbr.rel (%p42) target = $region21
    $region20: #{conditional_transformer.23} parent=1 // pred_region
      %vm45 = vcmask 523264
      %46 = vst.msk [vmem:[#allocation2] sm:$0xff] %vm45, 0.0
      %47 = vst.msk [vmem:[#allocation2 + $0x8] sm:$0xff] %vm45, 0.0
      %48 = vst.msk [vmem:[#allocation2 + $0x10] sm:$0xff] %vm45, 0.0
    $region21: #{conditional_transformer.23} parent=1 // pred_fallthru
      _
    %v49 = vld [vmem:[#allocation2] sm:$0xff]
    %v50 = vld [vmem:[#allocation2 + $0x8] sm:$0xff]
    %v51 = vld [vmem:[#allocation2 + $0x10] sm:$0xff]
    %v52 = vld [vmem:[#allocation3] sm:$0xf]
    %v53 = vld [vmem:[#allocation3 + $0x4] sm:$0xf]
    %v54 = vld [vmem:[#allocation3 + $0x8] sm:$0xf]
    %v55 = vld [vmem:[#allocation6] sm:$0xf]
    %v56 = vld [vmem:[#allocation6 + $0x4] sm:$0xf]
    %v57 = vld [vmem:[#allocation6 + $0x8] sm:$0xf]
    %v58 = vld [vmem:[#allocation6 + $0xc] sm:$0xf]
    %v62 = vunpack.c.l.b16 %v52
    %v63 = vunpack.c.l.b16 %v53
    %v64 = vunpack.c.l.b16 %v54
    %v65 = vpack.c.b16 %v63, %v62
    %v66 = vpack.c.b16 %v64, %v64
    %v71 = vunpack.c.l.b16 %v55
    %v72 = vunpack.c.l.b16 %v56
    %v73 = vunpack.c.l.b16 %v57
    %v74 = vunpack.c.l.b16 %v58
    %v75 = vpack.c.b16 %v72, %v71
    %v76 = vpack.c.b16 %v74, %v73
    %vm79 = vcmask 261120
    %v81 = vsel %vm79, %v65, 0
    %v84 = vsel %vm79, %v66, 0
    %86 = vmatprep.subr.bf16.mxu0 0
    %87 = vmatpush1.bf16.msra.mxu0 %v75
    %88 = vmatprep.subr.bf16.mxu0 0
    %89 = vmatpush1.bf16.msra.mxu0 %v76
    %90 = vmatprep.subr.bf16.mxu0 0
    %91 = vmatpush1.bf16.msra.mxu0 0
    %92 = vmatprep.subr.bf16.mxu0 0
    %93 = vmatpush1.bf16.msra.mxu0 0
    %94 = vmatprep.subr.bf16.mxu0 0
    %95 = vmatpush1.bf16.msra.mxu0 0
    %96 = vmatprep.subr.bf16.mxu0 0
    %97 = vmatpush1.bf16.msra.mxu0 0
    %98 = vmatprep.subr.bf16.mxu0 0
    %99 = vmatpush1.bf16.msra.mxu0 0
    %100 = vmatprep.subr.bf16.mxu0 0
    %101 = vmatpush1.bf16.msra.mxu0 0
    %102 = vmatprep.subr.bf16.mxu0 0
    %103 = vmatpush1.bf16.msra.mxu0 0
    %104 = vmatprep.subr.bf16.mxu0 0
    %105 = vmatpush1.bf16.msra.mxu0 0
    %106 = vmatprep.subr.bf16.mxu0 0
    %107 = vmatpush1.bf16.msra.mxu0 0
    %108 = vmatprep.subr.bf16.mxu0 0
    %109 = vmatpush1.bf16.msra.mxu0 0
    %110 = vmatprep.subr.bf16.mxu0 0
    %111 = vmatpush1.bf16.msra.mxu0 0
    %112 = vmatprep.subr.bf16.mxu0 0
    %113 = vmatpush1.bf16.msra.mxu0 0
    %114 = vmatprep.subr.bf16.mxu0 0
    %115 = vmatpush1.bf16.msra.mxu0 0
    %116 = vmatprep.subr.bf16.mxu0 0
    %117 = vmatpush1.bf16.msra.mxu0 0
    %118 = vmatprep.mubr.bf16.mxu0 0
    %119 = vmatmul.mubr.bf16.gmra.mrb[0].mxu0 %v81
    %v120 = vpop.f32.mrb[0].mxu0
    %v121 = vadd.f32 0.0, %v120
    %v122 = vpop.f32.mrb[0].mxu0
    %v123 = vpop.f32.mrb[0].mxu0
    %v124 = vadd.f32 0.0, %v123
    %v125 = vpop.f32.mrb[0].mxu0
    %126 = vmatprep.mubr.bf16.mxu0 0
    %127 = vmatmul.mubr.bf16.gmra.mrb[0].mxu0 %v84
    %v128 = vpop.f32.mrb[0].mxu0
    %v129 = vadd.f32 0.0, %v128
    %v130 = vpop.f32.mrb[0].mxu0
    %v131 = vpop.f32.mrb[0].mxu0
    %v132 = vpop.f32.mrb[0].mxu0
    %133 = vdwg.mxu0
    %v134 = vadd.f32 %v49, %v121
    %v135 = vadd.f32 %v50, %v124
    %v136 = vadd.f32 %v51, %v129
    %vm137 = vcmask 523264
    %138 = vst.msk [vmem:[#allocation2] sm:$0xff] %vm137, %v134
    %139 = vst.msk [vmem:[#allocation2 + $0x8] sm:$0xff] %vm137, %v135
    %140 = vst.msk [vmem:[#allocation2 + $0x10] sm:$0xff] %vm137, %v136
    // Predicated region
    $region22: #{conditional_transformer.23} parent=1 // pred_check
      %p141 = pneg %p41
    $region23: #{conditional_transformer.23} parent=1 // pred_check_branch
      %143 = sbr.rel (%p141) target = $region25
    $region24: #{conditional_transformer.23} parent=1 // pred_region
      %v144 = vld [vmem:[#allocation2] sm:$0xff]
      %v145 = vld [vmem:[#allocation2 + $0x8] sm:$0xff]
      %v146 = vld [vmem:[#allocation2 + $0x10] sm:$0xff]
      %v147 = vpack.c.bf16 %v145, %v144
      %v148 = vpack.c.bf16 %v146, %v146
      %v151 = vunpack.c.l.b16 %v147
      %v152 = vunpack.c.h.b16 %v147
      %v153 = vunpack.c.l.b16 %v148
      %v154 = vpack.c.b16 %v151, %v151
      %v155 = vpack.c.b16 %v152, %v152
      %v156 = vpack.c.b16 %v153, %v153
      %vm160 = vcmask 519168
      %161 = vst.msk [vmem:[#allocation8] sm:$0xf] %vm160, %v154
      %162 = vst.msk [vmem:[#allocation8 + $0x4] sm:$0xf] %vm160, %v155
      %163 = vst.msk [vmem:[#allocation8 + $0x8] sm:$0xf] %vm160, %v156
    $region25: #{conditional_transformer.23} parent=1 // pred_fallthru
      _
    // Predicated region
    $region26: #{conditional_transformer.23} parent=1 // pred_check
      _
    $region27: #{conditional_transformer.23} parent=1 // pred_check_branch
      %165 = sbr.rel (0) target = $region29
    $region28: #{conditional_transformer.23} parent=1 // pred_region
      %s167 = ssub.s32 192, 192
      %168 = vsyncadd [#allocation5], %s167
      %s169 = sshll.u32 [#allocation8], 4
      %s170 = int_to_ptr.vmem [resolvable:$true] %s169
      %175 = dma.vmem_to_hbm [thread:$0]  %s170, 192, %s2, [#allocation5], 64, 64, 4
    $region29: #{conditional_transformer.23} parent=1 // pred_fallthru
      _
    // Predicated region
    $region30: #{conditional_transformer.23} parent=1 // pred_check
      _
    $region31: #{conditional_transformer.23} parent=1 // pred_check_branch
      %177 = sbr.rel (0) target = $region33
    $region32: #{conditional_transformer.23} parent=1 // pred_region
      %178 = dma.done [#allocation5], 192
    $region33: #{conditional_transformer.23} parent=1 // pred_fallthru
      _
    %179 = vsyncpa [#allocation4], 1
    %180 = vsyncpa [#allocation7], 1
    %181 = vsyncpa [#allocation5], 1

// kernel: conditional_transformer.26
$region0: #{conditional_transformer.26}
  #allocation0 [shape = 'u32[]', space=smem, size = 0x4, offset = 0x4, fixed_abs, tag = 'smem constant byte address 0x4 - core index']
  #allocation1 [shape = 'u32[144,128]{1,0:T(1,128)}', space=vmem, size = 0x12000, scoped, tag = 'internal scratch']
  #allocation2 [shape = 'f32[8,32]{1,0:T(8,128)}', space=vmem, size = 0x1000, scoped, tag = 'scratch operand']
  #allocation3 [shape = 'bf16[8,32]{1,0:T(8,128)(2,1)}', space=vmem, size = 0x800, scoped, tag = 'scratch operand']
  %s0 = inlined_call_operand.hbm [shape: bf16[16,32], index: 0, kind: input, shape index: {}, may-alias: {0,5}]
  %s1 = inlined_call_operand.hbm [shape: f32[1,32], index: 1, kind: input, shape index: {}]
  %s2 = inlined_call_operand.hbm [shape: bf16[32,85], index: 2, kind: input, shape index: {}]
  %s3 = inlined_call_operand.hbm [shape: bf16[32,85], index: 3, kind: input, shape index: {}]
  %s4 = inlined_call_operand.hbm [shape: bf16[85,32], index: 4, kind: input, shape index: {}]
  %s5 = inlined_call_operand.hbm [shape: bf16[16,32], index: 5, kind: input, shape index: {}, may-alias: {0,5}]
  %s6 = inlined_call_operand.hbm [shape: bf16[16,32], index: 6, kind: output, shape index: {}]
  %s7 = sld [smem:[#allocation0]]
  $region89: #{conditional_transformer.26} parent=0
    _
  %s9 = ssub.s32 1, %s7
  %s10 = scalar_select 0, %s9, %s7
  $region1: #{conditional_transformer.26} parent=0
    #allocation4 [shape = 'u8[4096]{0}', space=vmem, size = 0x1000, scoped, tag = 'input window, operand 0']
    #allocation5 [shape = 's32[2]{0}', space=sflag, size = 0x8, scoped, tag = 'scoped memory for conditional_transformer.26']
    #allocation6 [shape = 's32[2]{0}', space=sflag, size = 0x8, scoped, tag = 'scoped memory for conditional_transformer.26']
    #allocation7 [shape = 'u8[512]{0}', space=vmem, size = 0x400, scoped, tag = 'input window, operand 1, single buffered']
    #allocation8 [shape = 's32[1]{0}', space=sflag, size = 0x4, scoped, tag = 'scoped memory for conditional_transformer.26']
    #allocation9 [shape = 'u8[8192]{0}', space=vmem, size = 0x2000, scoped, tag = 'input window, operand 2, single buffered']
    #allocation10 [shape = 'u8[8192]{0}', space=vmem, size = 0x2000, scoped, tag = 'input window, operand 3, single buffered']
    #allocation11 [shape = 's32[1]{0}', space=sflag, size = 0x4, scoped, tag = 'scoped memory for conditional_transformer.26']
    #allocation12 [shape = 'u8[22528]{0}', space=vmem, size = 0x5800, scoped, tag = 'input window, operand 4, single buffered']
    #allocation13 [shape = 'u8[4096]{0}', space=vmem, size = 0x1000, scoped, tag = 'input window, operand 5']
    #allocation14 [shape = 's32[2]{0}', space=sflag, size = 0x8, scoped, tag = 'scoped memory for conditional_transformer.26']
    #allocation15 [shape = 'u8[4096]{0}', space=vmem, size = 0x1000, scoped, tag = 'output window, operand 0']
    %11 = vsyncpa [#allocation5], 0
    %s12 = scalar_lea.sflag [#allocation5], 1
    %13 = vsyncpa %s12, 0
    %14 = vsyncpa [#allocation8], 0
    %15 = vsyncpa [#allocation11], 0
    %16 = vsyncpa [#allocation14], 0
    %s17 = scalar_lea.sflag [#allocation14], 1
    %18 = vsyncpa %s17, 0
    %19 = vsyncpa [#allocation6], 0
    %s20 = scalar_lea.sflag [#allocation6], 1
    %21 = vsyncpa %s20, 0
    loop: start=0, step=1, limit=4
    $region2: #{conditional_transformer.26} parent=1 // loop_pre_header
      _
    $region3: #{conditional_transformer.26} parent=1 // loop_header
      %s23 = sphi 0, %s27
      %p24 = scmp.ge.s32.totalorder %s23, 4
      %s30 = sphi 0, %s42
      %s31 = sphi 0, %s38
      %s32 = sphi 0, %s30
      %s33 = sphi 0, %s31
      %s34 = sphi 0, %s32
      %s35 = sphi 0, %s33
      %s45 = sphi 0, %s47
      %s48 = sphi 0, %s45
      %s49 = sphi 0, %s48
      %s65 = sphi 0, %s49
      %s69 = sphi 0, %s69
      %s71 = sphi 0, %s69
      %s72 = sphi 0, %s71
      %s86 = sphi 0, %s72
      %s92 = sphi 0, %s94
      %s95 = sphi 0, %s92
      %s96 = sphi 0, %s95
      %s112 = sphi 0, %s96
      %s118 = sphi 0, %s120
      %s121 = sphi 0, %s118
      %s122 = sphi 0, %s121
      %s138 = sphi 0, %s122
      %s144 = sphi 0, %s146
      %s147 = sphi 0, %s144
      %s148 = sphi 0, %s147
      %s164 = sphi 0, %s148
      %s170 = sphi 0, %s172
      %s173 = sphi 0, %s170
      %s174 = sphi 0, %s173
      %s190 = sphi 0, %s174
      %s196 = sphi 0, %s198
      %s199 = sphi 0, %s196
      %s200 = sphi 0, %s199
      %s216 = sphi 0, %s200
    $region4: #{conditional_transformer.26} parent=1 // loop_header_branch
      %26 = sbr.rel (%p24) target = $region8
    $region5: #{conditional_transformer.26} parent=1 // loop_body
      %s28 = ssub.s32 %s23, 1
      %s29 = ssub.s32 %s23, 2
      %s36 = sadd.s32 1, %s31
      %p37 = scmp.ge.s32.totalorder %s36, 1
      %s38 = scalar_select %p37, 0, %s36
      %s39 = sadd.s32 1, %s30
      %s40 = scalar_select %p37, %s39, %s30
      %p41 = scmp.ge.s32.totalorder %s40, 2
      %s42 = scalar_select %p41, 0, %s40
      %s43 = ssub.s32 %s30, %s42
      %p44 = scmp.eq.s32.totalorder %s43, 0
      %s46 = sadd.s32 %s45, 1
      %s47 = scalar_select %p44, %s45, %s46
      %p50 = pneg %p44
      %p51 = scmp.eq.s32.totalorder %s23, 1
      %p52 = por %p50, %p51
      %p53 = scmp.ne.s32.totalorder %s45, %s48
      %p54 = scmp.eq.s32.totalorder %s23, 0
      %p55 = por %p53, %p54
      %p56 = scmp.ne.s32.totalorder %s45, %s48
      %p57 = scmp.eq.s32.totalorder %s28, 1
      %p58 = por %p56, %p57
      %p59 = scmp.ne.s32.totalorder %s48, %s49
      %p60 = scmp.eq.s32.totalorder %s28, 0
      %p61 = por %p59, %p60
      %p62 = scmp.ne.s32.totalorder %s48, %s49
      %p63 = scmp.eq.s32.totalorder %s29, 1
      %p64 = por %p62, %p63
      %p66 = scmp.ne.s32.totalorder %s49, %s65
      %p67 = scmp.eq.s32.totalorder %s29, 0
      %p68 = por %p66, %p67
      %s70 = sadd.s32 %s69, 1
      %p73 = scmp.eq.s32.totalorder %s23, 1
      %p74 = scmp.ne.s32.totalorder %s69, %s71
      %p75 = scmp.eq.s32.totalorder %s23, 0
      %p76 = por %p74, %p75
      %p77 = scmp.ne.s32.totalorder %s69, %s71
      %p78 = scmp.eq.s32.totalorder %s28, 1
      %p79 = por %p77, %p78
      %p80 = scmp.ne.s32.totalorder %s71, %s72
      %p81 = scmp.eq.s32.totalorder %s28, 0
      %p82 = por %p80, %p81
      %p83 = scmp.ne.s32.totalorder %s71, %s72
      %p84 = scmp.eq.s32.totalorder %s29, 1
      %p85 = por %p83, %p84
      %p87 = scmp.ne.s32.totalorder %s72, %s86
      %p88 = scmp.eq.s32.totalorder %s29, 0
      %p89 = por %p87, %p88
      %s90 = ssub.s32 %s31, %s38
      %p91 = scmp.eq.s32.totalorder %s90, 0
      %s93 = sadd.s32 %s92, 1
      %s94 = scalar_select %p91, %s92, %s93
      %p97 = pneg %p91
      %p98 = scmp.eq.s32.totalorder %s23, 1
      %p99 = por %p97, %p98
      %p100 = scmp.ne.s32.totalorder %s92, %s95
      %p101 = scmp.eq.s32.totalorder %s23, 0
      %p102 = por %p100, %p101
      %p103 = scmp.ne.s32.totalorder %s92, %s95
      %p104 = scmp.eq.s32.totalorder %s28, 1
      %p105 = por %p103, %p104
      %p106 = scmp.ne.s32.totalorder %s95, %s96
      %p107 = scmp.eq.s32.totalorder %s28, 0
      %p108 = por %p106, %p107
      %p109 = scmp.ne.s32.totalorder %s95, %s96
      %p110 = scmp.eq.s32.totalorder %s29, 1
      %p111 = por %p109, %p110
      %p113 = scmp.ne.s32.totalorder %s96, %s112
      %p114 = scmp.eq.s32.totalorder %s29, 0
      %p115 = por %p113, %p114
      %s116 = ssub.s32 %s31, %s38
      %p117 = scmp.eq.s32.totalorder %s116, 0
      %s119 = sadd.s32 %s118, 1
      %s120 = scalar_select %p117, %s118, %s119
      %p123 = pneg %p117
      %p124 = scmp.eq.s32.totalorder %s23, 1
      %p125 = por %p123, %p124
      %p126 = scmp.ne.s32.totalorder %s118, %s121
      %p127 = scmp.eq.s32.totalorder %s23, 0
      %p128 = por %p126, %p127
      %p129 = scmp.ne.s32.totalorder %s118, %s121
      %p130 = scmp.eq.s32.totalorder %s28, 1
      %p131 = por %p129, %p130
      %p132 = scmp.ne.s32.totalorder %s121, %s122
      %p133 = scmp.eq.s32.totalorder %s28, 0
      %p134 = por %p132, %p133
      %p135 = scmp.ne.s32.totalorder %s121, %s122
      %p136 = scmp.eq.s32.totalorder %s29, 1
      %p137 = por %p135, %p136
      %p139 = scmp.ne.s32.totalorder %s122, %s138
      %p140 = scmp.eq.s32.totalorder %s29, 0
      %p141 = por %p139, %p140
      %s142 = ssub.s32 %s31, %s38
      %p143 = scmp.eq.s32.totalorder %s142, 0
      %s145 = sadd.s32 %s144, 1
      %s146 = scalar_select %p143, %s144, %s145
      %p149 = pneg %p143
      %p150 = scmp.eq.s32.totalorder %s23, 1
      %p151 = por %p149, %p150
      %p152 = scmp.ne.s32.totalorder %s144, %s147
      %p153 = scmp.eq.s32.totalorder %s23, 0
      %p154 = por %p152, %p153
      %p155 = scmp.ne.s32.totalorder %s144, %s147
      %p156 = scmp.eq.s32.totalorder %s28, 1
      %p157 = por %p155, %p156
      %p158 = scmp.ne.s32.totalorder %s147, %s148
      %p159 = scmp.eq.s32.totalorder %s28, 0
      %p160 = por %p158, %p159
      %p161 = scmp.ne.s32.totalorder %s147, %s148
      %p162 = scmp.eq.s32.totalorder %s29, 1
      %p163 = por %p161, %p162
      %p165 = scmp.ne.s32.totalorder %s148, %s164
      %p166 = scmp.eq.s32.totalorder %s29, 0
      %p167 = por %p165, %p166
      %s168 = ssub.s32 %s30, %s42
      %p169 = scmp.eq.s32.totalorder %s168, 0
      %s171 = sadd.s32 %s170, 1
      %s172 = scalar_select %p169, %s170, %s171
      %p175 = pneg %p169
      %p176 = scmp.eq.s32.totalorder %s23, 1
      %p177 = por %p175, %p176
      %p178 = scmp.ne.s32.totalorder %s170, %s173
      %p179 = scmp.eq.s32.totalorder %s23, 0
      %p180 = por %p178, %p179
      %p181 = scmp.ne.s32.totalorder %s170, %s173
      %p182 = scmp.eq.s32.totalorder %s28, 1
      %p183 = por %p181, %p182
      %p184 = scmp.ne.s32.totalorder %s173, %s174
      %p185 = scmp.eq.s32.totalorder %s28, 0
      %p186 = por %p184, %p185
      %p187 = scmp.ne.s32.totalorder %s173, %s174
      %p188 = scmp.eq.s32.totalorder %s29, 1
      %p189 = por %p187, %p188
      %p191 = scmp.ne.s32.totalorder %s174, %s190
      %p192 = scmp.eq.s32.totalorder %s29, 0
      %p193 = por %p191, %p192
      %s194 = ssub.s32 %s30, %s42
      %p195 = scmp.eq.s32.totalorder %s194, 0
      %s197 = sadd.s32 %s196, 1
      %s198 = scalar_select %p195, %s196, %s197
      %p201 = pneg %p195
      %p202 = scmp.eq.s32.totalorder %s23, 1
      %p203 = por %p201, %p202
      %p204 = scmp.ne.s32.totalorder %s196, %s199
      %p205 = scmp.eq.s32.totalorder %s23, 0
      %p206 = por %p204, %p205
      %p207 = scmp.ne.s32.totalorder %s196, %s199
      %p208 = scmp.eq.s32.totalorder %s28, 1
      %p209 = por %p207, %p208
      %p210 = scmp.ne.s32.totalorder %s199, %s200
      %p211 = scmp.eq.s32.totalorder %s28, 0
      %p212 = por %p210, %p211
      %p213 = scmp.ne.s32.totalorder %s199, %s200
      %p214 = scmp.eq.s32.totalorder %s29, 1
      %p215 = por %p213, %p214
      %p217 = scmp.ne.s32.totalorder %s200, %s216
      %p218 = scmp.eq.s32.totalorder %s29, 0
      %p219 = por %p217, %p218
      %p220 = scmp.le.s32.totalorder 1, %s23
      %p221 = scmp.lt.s32.totalorder %s23, 3
      %p222 = pnand %p220, %p221
      %p223 = pneg %p222
      // Predicated region
      $region9: #{conditional_transformer.26} parent=5 // pred_check
        _
      $region10: #{conditional_transformer.26} parent=5 // pred_check_branch
        %225 = sbr.rel (%p222) target = $region12
      $region11: #{conditional_transformer.26} parent=5 // pred_region
        %s226 = ssub.s32 %s23, 1
        // Predicated region
        $region13: #{conditional_transformer.26} parent=11 // pred_check
          %p227 = pneg %p82
        $region14: #{conditional_transformer.26} parent=11 // pred_check_branch
          %229 = sbr.rel (%p227) target = $region16
        $region15: #{conditional_transformer.26} parent=11 // pred_region
          %s231 = ssub.s32 16, 16
          %232 = vsyncadd [#allocation8], %s231
          %s234 = sshll.u32 [#allocation7], 4
          %s235 = int_to_ptr.vmem [resolvable:$true] %s234
          %237 = dma.hbm_to_vmem [thread:$0]  %s1, 16, %s235, [#allocation8]
        $region16: #{conditional_transformer.26} parent=11 // pred_fallthru
          _
        // Predicated region
        $region17: #{conditional_transformer.26} parent=11 // pred_check
          %p238 = pneg %p108
        $region18: #{conditional_transformer.26} parent=11 // pred_check_branch
          %240 = sbr.rel (%p238) target = $region20
        $region19: #{conditional_transformer.26} parent=11 // pred_region
          %s242 = ssub.s32 256, 256
          %243 = vsyncadd [#allocation8], %s242
          %s244 = smul.addr %s33, 64
          %s245 = scalar_lea.hbm %s2, %s244
          %s246 = sshll.u32 [#allocation9], 4
          %s247 = int_to_ptr.vmem [resolvable:$true] %s246
          %252 = dma.hbm_to_vmem [thread:$0]  %s245, 256, %s247, [#allocation8], 64, 64, 4
        $region20: #{conditional_transformer.26} parent=11 // pred_fallthru
          _
        // Predicated region
        $region21: #{conditional_transformer.26} parent=11 // pred_check
          %p253 = pneg %p134
        $region22: #{conditional_transformer.26} parent=11 // pred_check_branch
          %255 = sbr.rel (%p253) target = $region24
        $region23: #{conditional_transformer.26} parent=11 // pred_region
          %s257 = ssub.s32 256, 256
          %258 = vsyncadd [#allocation11], %s257
          %s259 = smul.addr %s33, 64
          %s260 = scalar_lea.hbm %s3, %s259
          %s261 = sshll.u32 [#allocation10], 4
          %s262 = int_to_ptr.vmem [resolvable:$true] %s261
          %267 = dma.hbm_to_vmem [thread:$0]  %s260, 256, %s262, [#allocation11], 64, 64, 4
        $region24: #{conditional_transformer.26} parent=11 // pred_fallthru
          _
        // Predicated region
        $region25: #{conditional_transformer.26} parent=11 // pred_check
          %p268 = pneg %p160
        $region26: #{conditional_transformer.26} parent=11 // pred_check_branch
          %270 = sbr.rel (%p268) target = $region28
        $region27: #{conditional_transformer.26} parent=11 // pred_region
          %s271 = smul.u32 11, %s33
          %s273 = ssub.s32 704, 704
          %274 = vsyncadd [#allocation11], %s273
          %s275 = smul.addr %s271, 64
          %s276 = scalar_lea.hbm %s4, %s275
          %s277 = sshll.u32 [#allocation12], 4
          %s278 = int_to_ptr.vmem [resolvable:$true] %s277
          %283 = dma.hbm_to_vmem [thread:$0]  %s276, 704, %s278, [#allocation11], 64, 64, 4
        $region28: #{conditional_transformer.26} parent=11 // pred_fallthru
          _
      $region12: #{conditional_transformer.26} parent=5 // pred_fallthru
        _
      %p284 = scmp.lt.s32.totalorder %s23, 2
      // Predicated region
      $region29: #{conditional_transformer.26} parent=5 // pred_check
        %p285 = pneg %p284
      $region30: #{conditional_transformer.26} parent=5 // pred_check_branch
        %287 = sbr.rel (%p285) target = $region32
      $region31: #{conditional_transformer.26} parent=5 // pred_region
        // Predicated region
        $region33: #{conditional_transformer.26} parent=31 // pred_check
          %p288 = pneg %p55
        $region34: #{conditional_transformer.26} parent=31 // pred_check_branch
          %290 = sbr.rel (%p288) target = $region36
        $region35: #{conditional_transformer.26} parent=31 // pred_region
          %s291 = sand.u32 %s45, 1
          %s292 = scalar_lea.sflag [#allocation5], %s291
          %s293 = sand.u32 %s45, 1
          %s294 = smul.addr %s293, 4
          %s295 = scalar_lea.vmem [#allocation4], %s294
          %s297 = ssub.s32 64, 64
          %298 = vsyncadd %s292, %s297
          %s299 = smul.addr %s30, 64
          %s300 = scalar_lea.hbm %s0, %s299
          %s302 = sshll.u32 %s295, 4
          %s303 = int_to_ptr.vmem [resolvable:$true] %s302
          %305 = dma.hbm_to_vmem [thread:$0]  %s300, 64, %s303, %s292
        $region36: #{conditional_transformer.26} parent=31 // pred_fallthru
          _
        // Predicated region
        $region37: #{conditional_transformer.26} parent=31 // pred_check
          %p306 = pneg %p180
        $region38: #{conditional_transformer.26} parent=31 // pred_check_branch
          %308 = sbr.rel (%p306) target = $region40
        $region39: #{conditional_transformer.26} parent=31 // pred_region
          %s309 = sand.u32 %s170, 1
          %s310 = scalar_lea.sflag [#allocation14], %s309
          %s311 = sand.u32 %s170, 1
          %s312 = smul.addr %s311, 4
          %s313 = scalar_lea.vmem [#allocation13], %s312
          %s315 = ssub.s32 64, 64
          %316 = vsyncadd %s310, %s315
          %s317 = smul.addr %s30, 64
          %s318 = scalar_lea.hbm %s5, %s317
          %s320 = sshll.u32 %s313, 4
          %s321 = int_to_ptr.vmem [resolvable:$true] %s320
          %323 = dma.hbm_to_vmem [thread:$0]  %s318, 64, %s321, %s310
        $region40: #{conditional_transformer.26} parent=31 // pred_fallthru
          _
      $region32: #{conditional_transformer.26} parent=5 // pred_fallthru
        _
      %p324 = scmp.le.s32.totalorder 1, %s23
      %p325 = scmp.lt.s32.totalorder %s23, 3
      %p326 = pnand %p324, %p325
      %p327 = pneg %p326
      // Predicated region
      $region41: #{conditional_transformer.26} parent=5 // pred_check
        _
      $region42: #{conditional_transformer.26} parent=5 // pred_check_branch
        %329 = sbr.rel (%p326) target = $region44
      $region43: #{conditional_transformer.26} parent=5 // pred_region
        %s330 = ssub.s32 %s23, 1
        %s331 = sand.u32 %s48, 1
        %s332 = scalar_lea.sflag [#allocation5], %s331
        %s333 = sand.u32 %s48, 1
        %s334 = smul.addr %s333, 4
        %s335 = scalar_lea.vmem [#allocation4], %s334
        // Predicated region
        $region45: #{conditional_transformer.26} parent=43 // pred_check
          %p336 = pneg %p61
        $region46: #{conditional_transformer.26} parent=43 // pred_check_branch
          %338 = sbr.rel (%p336) target = $region48
        $region47: #{conditional_transformer.26} parent=43 // pred_region
          %339 = dma.done %s332, 64
        $region48: #{conditional_transformer.26} parent=43 // pred_fallthru
          _
        // Predicated region
        $region49: #{conditional_transformer.26} parent=43 // pred_check
          %p340 = pneg %p82
        $region50: #{conditional_transformer.26} parent=43 // pred_check_branch
          %342 = sbr.rel (%p340) target = $region52
        $region51: #{conditional_transformer.26} parent=43 // pred_region
          %343 = dma.done [#allocation8], 16
        $region52: #{conditional_transformer.26} parent=43 // pred_fallthru
          _
        // Predicated region
        $region53: #{conditional_transformer.26} parent=43 // pred_check
          %p344 = pneg %p108
        $region54: #{conditional_transformer.26} parent=43 // pred_check_branch
          %346 = sbr.rel (%p344) target = $region56
        $region55: #{conditional_transformer.26} parent=43 // pred_region
          %347 = dma.done [#allocation8], 256
        $region56: #{conditional_transformer.26} parent=43 // pred_fallthru
          _
        // Predicated region
        $region57: #{conditional_transformer.26} parent=43 // pred_check
          %p348 = pneg %p134
        $region58: #{conditional_transformer.26} parent=43 // pred_check_branch
          %350 = sbr.rel (%p348) target = $region60
        $region59: #{conditional_transformer.26} parent=43 // pred_region
          %351 = dma.done [#allocation11], 256
        $region60: #{conditional_transformer.26} parent=43 // pred_fallthru
          _
        // Predicated region
        $region61: #{conditional_transformer.26} parent=43 // pred_check
          %p352 = pneg %p160
        $region62: #{conditional_transformer.26} parent=43 // pred_check_branch
          %354 = sbr.rel (%p352) target = $region64
        $region63: #{conditional_transformer.26} parent=43 // pred_region
          %355 = dma.done [#allocation11], 704
        $region64: #{conditional_transformer.26} parent=43 // pred_fallthru
          _
        %s356 = sand.u32 %s173, 1
        %s357 = scalar_lea.sflag [#allocation14], %s356
        %s358 = sand.u32 %s173, 1
        %s359 = smul.addr %s358, 4
        %s360 = scalar_lea.vmem [#allocation13], %s359
        // Predicated region
        $region65: #{conditional_transformer.26} parent=43 // pred_check
          %p361 = pneg %p186
        $region66: #{conditional_transformer.26} parent=43 // pred_check_branch
          %363 = sbr.rel (%p361) target = $region68
        $region67: #{conditional_transformer.26} parent=43 // pred_region
          %364 = dma.done %s357, 64
        $region68: #{conditional_transformer.26} parent=43 // pred_fallthru
          _
        %s365 = sand.u32 %s48, 1
        %s366 = scalar_lea.sflag [#allocation5], %s365
        %s367 = sand.u32 %s48, 1
        %s368 = smul.addr %s367, 4
        %s369 = scalar_lea.vmem [#allocation4], %s368
        %p370 = pneg %p61
        %p371 = pneg %p58
        %p372 = pneg %p82
        %p373 = pneg %p79
        %p374 = pneg %p108
        %p375 = pneg %p105
        %p376 = pneg %p134
        %p377 = pneg %p131
        %p378 = pneg %p160
        %p379 = pneg %p157
        %s380 = sand.u32 %s173, 1
        %s381 = scalar_lea.sflag [#allocation14], %s380
        %s382 = sand.u32 %s173, 1
        %s383 = smul.addr %s382, 4
        %s384 = scalar_lea.vmem [#allocation13], %s383
        %p385 = pneg %p186
        %p386 = pneg %p183
        %p387 = pneg %p212
        %p388 = pneg %p209
        %s389 = sand.u32 %s199, 1
        %s390 = scalar_lea.sflag [#allocation6], %s389
        %s391 = sand.u32 %s199, 1
        %s392 = smul.addr %s391, 4
        %s393 = scalar_lea.vmem [#allocation15], %s392
        %s394 = smul.u32 11, %s33
        %p396 = scmp.eq.s32.totalorder %s33, 0
        // Predicated region
        $region69: #{conditional_transformer.26} parent=43 // pred_check
          %p397 = pneg %p396
        $region70: #{conditional_transformer.26} parent=43 // pred_check_branch
          %399 = sbr.rel (%p397) target = $region72
        $region71: #{conditional_transformer.26} parent=43 // pred_region
          %vm400 = vcmask 261120
          %401 = vst.msk [vmem:[#allocation2] sm:$0xff] %vm400, 0.0
          %v402 = vld [vmem:[%s335] sm:$0xf]
          %v403 = vunpack.c.l.bf16 %v402
          %v404 = vmul.f32 %v403, %v403
          %v405 = vsel %vm400, %v404, 0.0
          %406 = vadd.xlane.f32.xlu0 %v405
          %v407 = vpop.xlane.xlu0 %406
          %v408 = vrcp.pop 32.0
          %v409 = vmul.f32 %v407, %v408
          %v410 = vadd.f32 %v409, 1e-08
          %v411 = vrsqrt.pop %v410
          %v412 = vmul.f32 %v403, %v411
          %v413 = vld [vmem:[#allocation7] sm:$0x1]
          %v415 = vlaneseq
          %v416 = vshrl.u32 %v415, 7
          %v417 = vsub.s32 0, %v416
          %v418 = vrot.slane %v413, %v417
          %v420 = vmul.f32 %v412, %v418
          %v421 = vpack.c.bf16 %v420, %v420
          %vm422 = vcmask 257024
          %423 = vst.msk [vmem:[#allocation3] sm:$0xf] %vm422, %v421
        $region72: #{conditional_transformer.26} parent=43 // pred_fallthru
          _
        %v424 = vld [vmem:[#allocation3] sm:$0xf]
        %v425 = vld [vmem:[#allocation9] sm:$0xf]
        %v426 = vld [vmem:[#allocation9 + $0x4] sm:$0xf]
        %v427 = vld [vmem:[#allocation9 + $0x8] sm:$0xf]
        %v428 = vld [vmem:[#allocation9 + $0xc] sm:$0xf]
        %v433 = vunpack.c.l.b16 %v425
        %v434 = vunpack.c.l.b16 %v426
        %v435 = vunpack.c.l.b16 %v427
        %v436 = vunpack.c.l.b16 %v428
        %v437 = vpack.c.b16 %v434, %v433
        %v438 = vpack.c.b16 %v436, %v435
        %vm441 = vcmask 261120
        %v443 = vsel %vm441, %v424, 0
        %445 = vmatprep.subr.bf16.mxu0 0
        %446 = vmatpush1.bf16.msra.mxu0 %v437
        %447 = vmatprep.subr.bf16.mxu0 0
        %448 = vmatpush1.bf16.msra.mxu0 %v438
        %449 = vmatprep.subr.bf16.mxu0 0
        %450 = vmatpush1.bf16.msra.mxu0 0
        %451 = vmatprep.subr.bf16.mxu0 0
        %452 = vmatpush1.bf16.msra.mxu0 0
        %453 = vmatprep.subr.bf16.mxu0 0
        %454 = vmatpush1.bf16.msra.mxu0 0
        %455 = vmatprep.subr.bf16.mxu0 0
        %456 = vmatpush1.bf16.msra.mxu0 0
        %457 = vmatprep.subr.bf16.mxu0 0
        %458 = vmatpush1.bf16.msra.mxu0 0
        %459 = vmatprep.subr.bf16.mxu0 0
        %460 = vmatpush1.bf16.msra.mxu0 0
        %461 = vmatprep.subr.bf16.mxu0 0
        %462 = vmatpush1.bf16.msra.mxu0 0
        %463 = vmatprep.subr.bf16.mxu0 0
        %464 = vmatpush1.bf16.msra.mxu0 0
        %465 = vmatprep.subr.bf16.mxu0 0
        %466 = vmatpush1.bf16.msra.mxu0 0
        %467 = vmatprep.subr.bf16.mxu0 0
        %468 = vmatpush1.bf16.msra.mxu0 0
        %469 = vmatprep.subr.bf16.mxu0 0
        %470 = vmatpush1.bf16.msra.mxu0 0
        %471 = vmatprep.subr.bf16.mxu0 0
        %472 = vmatpush1.bf16.msra.mxu0 0
        %473 = vmatprep.subr.bf16.mxu0 0
        %474 = vmatpush1.bf16.msra.mxu0 0
        %475 = vmatprep.subr.bf16.mxu0 0
        %476 = vmatpush1.bf16.msra.mxu0 0
        %477 = vmatprep.mubr.bf16.mxu0 0
        %478 = vmatmul.mubr.bf16.gmra.mrb[0].mxu0 %v443
        %v479 = vpop.f32.mrb[0].mxu0
        %v480 = vadd.f32 0.0, %v479
        %v481 = vpop.f32.mrb[0].mxu0
        %v482 = vpop.f32.mrb[0].mxu0
        %v483 = vpop.f32.mrb[0].mxu0
        %484 = vdwg.mxu0
        %v485 = vld [vmem:[#allocation10] sm:$0xf]
        %v486 = vld [vmem:[#allocation10 + $0x4] sm:$0xf]
        %v487 = vld [vmem:[#allocation10 + $0x8] sm:$0xf]
        %v488 = vld [vmem:[#allocation10 + $0xc] sm:$0xf]
        %v493 = vunpack.c.l.b16 %v485
        %v494 = vunpack.c.l.b16 %v486
        %v495 = vunpack.c.l.b16 %v487
        %v496 = vunpack.c.l.b16 %v488
        %v497 = vpack.c.b16 %v494, %v493
        %v498 = vpack.c.b16 %v496, %v495
        %501 = vmatprep.subr.bf16.mxu0 0
        %502 = vmatpush1.bf16.msra.mxu0 %v497
        %503 = vmatprep.subr.bf16.mxu0 0
        %504 = vmatpush1.bf16.msra.mxu0 %v498
        %505 = vmatprep.subr.bf16.mxu0 0
        %506 = vmatpush1.bf16.msra.mxu0 0
        %507 = vmatprep.subr.bf16.mxu0 0
        %508 = vmatpush1.bf16.msra.mxu0 0
        %509 = vmatprep.subr.bf16.mxu0 0
        %510 = vmatpush1.bf16.msra.mxu0 0
        %511 = vmatprep.subr.bf16.mxu0 0
        %512 = vmatpush1.bf16.msra.mxu0 0
        %513 = vmatprep.subr.bf16.mxu0 0
        %514 = vmatpush1.bf16.msra.mxu0 0
        %515 = vmatprep.subr.bf16.mxu0 0
        %516 = vmatpush1.bf16.msra.mxu0 0
        %517 = vmatprep.subr.bf16.mxu0 0
        %518 = vmatpush1.bf16.msra.mxu0 0
        %519 = vmatprep.subr.bf16.mxu0 0
        %520 = vmatpush1.bf16.msra.mxu0 0
        %521 = vmatprep.subr.bf16.mxu0 0
        %522 = vmatpush1.bf16.msra.mxu0 0
        %523 = vmatprep.subr.bf16.mxu0 0
        %524 = vmatpush1.bf16.msra.mxu0 0
        %525 = vmatprep.subr.bf16.mxu0 0
        %526 = vmatpush1.bf16.msra.mxu0 0
        %527 = vmatprep.subr.bf16.mxu0 0
        %528 = vmatpush1.bf16.msra.mxu0 0
        %529 = vmatprep.subr.bf16.mxu0 0
        %530 = vmatpush1.bf16.msra.mxu0 0
        %531 = vmatprep.subr.bf16.mxu0 0
        %532 = vmatpush1.bf16.msra.mxu0 0
        %533 = vmatprep.mubr.bf16.mxu0 0
        %534 = vmatmul.mubr.bf16.gmra.mrb[0].mxu0 %v443
        %v535 = vpop.f32.mrb[0].mxu0
        %v536 = vadd.f32 0.0, %v535
        %v537 = vpop.f32.mrb[0].mxu0
        %v538 = vpop.f32.mrb[0].mxu0
        %v539 = vpop.f32.mrb[0].mxu0
        %540 = vdwg.mxu0
        %v541 = vxor.u32 %v480, 2147483648
        %v542 = vmul.f32 %v541, 1.442695
        %v543 = vpow.pop %v542
        %v544 = vadd.f32 %v543, 1.0
        %v545 = vrcp.pop %v544
        %v546 = vmul.f32 1.0, %v545
        %v547 = vmul.f32 %v480, %v546
        %v548 = vmul.f32 %v547, %v536
        %v549 = vld [vmem:[#allocation2] sm:$0xff]
        %v550 = vpack.c.bf16 %v548, %v548
        %v551 = vld [vmem:[#allocation12] sm:$0xf]
        %v552 = vld [vmem:[#allocation12 + $0x4] sm:$0xf]
        %v553 = vld [vmem:[#allocation12 + $0x8] sm:$0xf]
        %v554 = vld [vmem:[#allocation12 + $0xc] sm:$0xf]
        %v555 = vld [vmem:[#allocation12 + $0x10] sm:$0xf]
        %v556 = vld [vmem:[#allocation12 + $0x14] sm:$0xf]
        %v557 = vld [vmem:[#allocation12 + $0x18] sm:$0xf]
        %v558 = vld [vmem:[#allocation12 + $0x1c] sm:$0xf]
        %v559 = vld [vmem:[#allocation12 + $0x20] sm:$0xf]
        %v560 = vld [vmem:[#allocation12 + $0x24] sm:$0xf]
        %v561 = vld [vmem:[#allocation12 + $0x28] sm:$0x7]
        %v573 = vunpack.c.l.b16 %v551
        %v574 = vunpack.c.l.b16 %v552
        %v575 = vunpack.c.l.b16 %v553
        %v576 = vunpack.c.l.b16 %v554
        %v577 = vunpack.c.l.b16 %v555
        %v578 = vunpack.c.l.b16 %v556
        %v579 = vunpack.c.l.b16 %v557
        %v580 = vunpack.c.l.b16 %v558
        %v581 = vunpack.c.l.b16 %v559
        %v582 = vunpack.c.l.b16 %v560
        %v583 = vunpack.c.l.b16 %v561
        %v584 = vpack.c.b16 %v574, %v573
        %v585 = vpack.c.b16 %v576, %v575
        %v586 = vpack.c.b16 %v578, %v577
        %v587 = vpack.c.b16 %v580, %v579
        %v588 = vpack.c.b16 %v582, %v581
        %v589 = vpack.c.b16 %v583, %v583
        %vm595 = vcmask 695296
        %v597 = vsel %vm595, %v550, 0
        %vm599 = vcmask 1041408
        %vm600 = vcmask 1042432
        %v601 = vsel %vm599, 4294967295, 65535
        %v602 = vsel %vm600, %v601, 0
        %v604 = vand.u32 %v589, %v602
        %606 = vmatprep.subr.bf16.mxu0 0
        %607 = vmatpush1.bf16.msra.mxu0 %v584
        %608 = vmatprep.subr.bf16.mxu0 0
        %609 = vmatpush1.bf16.msra.mxu0 %v585
        %610 = vmatprep.subr.bf16.mxu0 0
        %611 = vmatpush1.bf16.msra.mxu0 %v586
        %612 = vmatprep.subr.bf16.mxu0 0
        %613 = vmatpush1.bf16.msra.mxu0 %v587
        %614 = vmatprep.subr.bf16.mxu0 0
        %615 = vmatpush1.bf16.msra.mxu0 %v588
        %616 = vmatprep.subr.bf16.mxu0 0
        %617 = vmatpush1.bf16.msra.mxu0 %v604
        %618 = vmatprep.subr.bf16.mxu0 0
        %619 = vmatpush1.bf16.msra.mxu0 0
        %620 = vmatprep.subr.bf16.mxu0 0
        %621 = vmatpush1.bf16.msra.mxu0 0
        %622 = vmatprep.subr.bf16.mxu0 0
        %623 = vmatpush1.bf16.msra.mxu0 0
        %624 = vmatprep.subr.bf16.mxu0 0
        %625 = vmatpush1.bf16.msra.mxu0 0
        %626 = vmatprep.subr.bf16.mxu0 0
        %627 = vmatpush1.bf16.msra.mxu0 0
        %628 = vmatprep.subr.bf16.mxu0 0
        %629 = vmatpush1.bf16.msra.mxu0 0
        %630 = vmatprep.subr.bf16.mxu0 0
        %631 = vmatpush1.bf16.msra.mxu0 0
        %632 = vmatprep.subr.bf16.mxu0 0
        %633 = vmatpush1.bf16.msra.mxu0 0
        %634 = vmatprep.subr.bf16.mxu0 0
        %635 = vmatpush1.bf16.msra.mxu0 0
        %636 = vmatprep.subr.bf16.mxu0 0
        %637 = vmatpush1.bf16.msra.mxu0 0
        %638 = vmatprep.mubr.bf16.mxu0 0
        %639 = vmatmul.mubr.bf16.gmra.mrb[0].mxu0 %v597
        %v640 = vpop.f32.mrb[0].mxu0
        %v641 = vadd.f32 0.0, %v640
        %v642 = vpop.f32.mrb[0].mxu0
        %v643 = vpop.f32.mrb[0].mxu0
        %v644 = vpop.f32.mrb[0].mxu0
        %645 = vdwg.mxu0
        %v646 = vadd.f32 %v549, %v641
        %647 = vst.msk [vmem:[#allocation2] sm:$0xff] %vm441, %v646
        // Predicated region
        $region73: #{conditional_transformer.26} parent=43 // pred_check
          %p648 = pneg %p396
        $region74: #{conditional_transformer.26} parent=43 // pred_check_branch
          %650 = sbr.rel (%p648) target = $region76
        $region75: #{conditional_transformer.26} parent=43 // pred_region
          %v651 = vld [vmem:[#allocation2] sm:$0xff]
          %v652 = vld [vmem:[%s360] sm:$0xf]
          %v653 = vunpack.c.l.bf16 %v652
          %v654 = vadd.f32 %v651, %v653
          %v655 = vpack.c.bf16 %v654, %v654
          %vm656 = vcmask 257024
          %657 = vst.msk [vmem:[%s393] sm:$0xf] %vm656, %v655
        $region76: #{conditional_transformer.26} parent=43 // pred_fallthru
          _
        %s658 = sand.u32 %s199, 1
        %s659 = scalar_lea.sflag [#allocation6], %s658
        %s660 = sand.u32 %s199, 1
        %s661 = smul.addr %s660, 4
        %s662 = scalar_lea.vmem [#allocation15], %s661
        // Predicated region
        $region77: #{conditional_transformer.26} parent=43 // pred_check
          %p663 = pneg %p209
        $region78: #{conditional_transformer.26} parent=43 // pred_check_branch
          %665 = sbr.rel (%p663) target = $region80
        $region79: #{conditional_transformer.26} parent=43 // pred_region
          %s667 = ssub.s32 64, 64
          %668 = vsyncadd %s659, %s667
          %s669 = smul.addr %s32, 64
          %s670 = scalar_lea.hbm %s6, %s669
          %s672 = sshll.u32 %s662, 4
          %s673 = int_to_ptr.vmem [resolvable:$true] %s672
          %675 = dma.vmem_to_hbm [thread:$0]  %s673, 64, %s670, %s659
        $region80: #{conditional_transformer.26} parent=43 // pred_fallthru
          _
      $region44: #{conditional_transformer.26} parent=5 // pred_fallthru
        _
      %p676 = scmp.le.s32.totalorder 2, %s23
      // Predicated region
      $region81: #{conditional_transformer.26} parent=5 // pred_check
        %p677 = pneg %p676
      $region82: #{conditional_transformer.26} parent=5 // pred_check_branch
        %679 = sbr.rel (%p677) target = $region84
      $region83: #{conditional_transformer.26} parent=5 // pred_region
        %s680 = ssub.s32 %s23, 2
        // Predicated region
        $region85: #{conditional_transformer.26} parent=83 // pred_check
          %p681 = pneg %p215
        $region86: #{conditional_transformer.26} parent=83 // pred_check_branch
          %683 = sbr.rel (%p681) target = $region88
        $region87: #{conditional_transformer.26} parent=83 // pred_region
          %s684 = sand.u32 %s200, 1
          %s685 = scalar_lea.sflag [#allocation6], %s684
          %s686 = sand.u32 %s200, 1
          %s687 = smul.addr %s686, 4
          %s688 = scalar_lea.vmem [#allocation15], %s687
          %689 = dma.done %s685, 64
        $region88: #{conditional_transformer.26} parent=83 // pred_fallthru
          _
      $region84: #{conditional_transformer.26} parent=5 // pred_fallthru
        _
    $region6: #{conditional_transformer.26} parent=1 // loop_footer
      %s27 = sadd.s32 1, %s23
    $region7: #{conditional_transformer.26} parent=1 // loop_footer_branch
      %22 = sbr.rel target = $region3
    $region8: #{conditional_transformer.26} parent=1 // loop_exit
      _
    %690 = vsyncpa [#allocation5], 1
    %s691 = scalar_lea.sflag [#allocation5], 1
    %692 = vsyncpa %s691, 1
    %693 = vsyncpa [#allocation8], 1
    %694 = vsyncpa [#allocation11], 1
    %695 = vsyncpa [#allocation14], 1
    %s696 = scalar_lea.sflag [#allocation14], 1
    %697 = vsyncpa %s696, 1
    %698 = vsyncpa [#allocation6], 1
    %s699 = scalar_lea.sflag [#allocation6], 1
    %700 = vsyncpa %s699, 1

// kernel: conditional_transformer.24
$region0: #{conditional_transformer.24}
  #allocation0 [shape = 'u32[]', space=smem, size = 0x4, offset = 0x4, fixed_abs, tag = 'smem constant byte address 0x4 - core index']
  #allocation1 [shape = 'u32[144,128]{1,0:T(1,128)}', space=vmem, size = 0x12000, scoped, tag = 'internal scratch']
  #allocation2 [shape = 'bf16[8,32]{1,0:T(8,128)(2,1)}', space=vmem, size = 0x800, scoped, tag = 'scratch operand']
  #allocation3 [shape = 'f32[8,4]{1,0:T(8,128)}', space=vmem, size = 0x1000, scoped, tag = 'scratch operand']
  #allocation4 [shape = 'f32[8,4]{1,0:T(8,128)}', space=vmem, size = 0x1000, scoped, tag = 'scratch operand']
  #allocation5 [shape = 'f32[4,8,8]{2,1,0:T(8,128)}', space=vmem, size = 0x4000, scoped, tag = 'scratch operand']
  %s0 = inlined_call_operand.hbm [shape: bf16[32,32], index: 0, kind: input, shape index: {}]
  %s1 = inlined_call_operand.hbm [shape: bf16[2,8,32], index: 1, kind: input, shape index: {}]
  %s2 = inlined_call_operand.hbm [shape: bf16[2,12,64], index: 2, kind: input, shape index: {}]
  %s3 = inlined_call_operand.hbm [shape: f32[8,32], index: 3, kind: input, shape index: {}]
  %s4 = inlined_call_operand.hbm [shape: f32[8,32], index: 4, kind: input, shape index: {}]
  %s5 = inlined_call_operand.hbm [shape: f32[12,32], index: 5, kind: input, shape index: {}]
  %s6 = inlined_call_operand.hbm [shape: f32[12,32], index: 6, kind: input, shape index: {}]
  %s7 = inlined_call_operand.hbm [shape: bf16[2,8,32], index: 7, kind: output, shape index: {}]
  %s8 = sld [smem:[#allocation0]]
  $region97: #{conditional_transformer.24} parent=0
    _
  %s10 = ssub.s32 1, %s8
  %s11 = scalar_select 0, %s10, %s8
  $region1: #{conditional_transformer.24} parent=0
    #allocation6 [shape = 'u8[8192]{0}', space=vmem, size = 0x2000, scoped, tag = 'input window, operand 0, single buffered']
    #allocation7 [shape = 's32[2]{0}', space=sflag, size = 0x8, scoped, tag = 'scoped memory for conditional_transformer.24']
    #allocation8 [shape = 's32[2]{0}', space=sflag, size = 0x8, scoped, tag = 'scoped memory for conditional_transformer.24']
    #allocation9 [shape = 'u8[4096]{0}', space=vmem, size = 0x1000, scoped, tag = 'input window, operand 1']
    #allocation10 [shape = 's32[2]{0}', space=sflag, size = 0x8, scoped, tag = 'scoped memory for conditional_transformer.24']
    #allocation11 [shape = 'u8[8192]{0}', space=vmem, size = 0x2000, scoped, tag = 'input window, operand 2']
    #allocation12 [shape = 'u8[4096]{0}', space=vmem, size = 0x1000, scoped, tag = 'input window, operand 3, single buffered']
    #allocation13 [shape = 's32[1]{0}', space=sflag, size = 0x4, scoped, tag = 'scoped memory for conditional_transformer.24']
    #allocation14 [shape = 'u8[4096]{0}', space=vmem, size = 0x1000, scoped, tag = 'input window, operand 4, single buffered']
    #allocation15 [shape = 'u8[8192]{0}', space=vmem, size = 0x2000, scoped, tag = 'input window, operand 5, single buffered']
    #allocation16 [shape = 's32[1]{0}', space=sflag, size = 0x4, scoped, tag = 'scoped memory for conditional_transformer.24']
    #allocation17 [shape = 'u8[8192]{0}', space=vmem, size = 0x2000, scoped, tag = 'input window, operand 6, single buffered']
    #allocation18 [shape = 'u8[4096]{0}', space=vmem, size = 0x1000, scoped, tag = 'output window, operand 0']
    %12 = vsyncpa [#allocation7], 0
    %13 = vsyncpa [#allocation10], 0
    %s14 = scalar_lea.sflag [#allocation10], 1
    %15 = vsyncpa %s14, 0
    %16 = vsyncpa [#allocation13], 0
    %17 = vsyncpa [#allocation16], 0
    %18 = vsyncpa [#allocation8], 0
    %s19 = scalar_lea.sflag [#allocation8], 1
    %20 = vsyncpa %s19, 0
    loop: start=0, step=1, limit=4
    $region2: #{conditional_transformer.24} parent=1 // loop_pre_header
      _
    $region3: #{conditional_transformer.24} parent=1 // loop_header
      %s22 = sphi 0, %s26
      %p23 = scmp.ge.s32.totalorder %s22, 4
      %s29 = sphi 0, %s48
      %s30 = sphi 0, %s44
      %s31 = sphi 0, %s40
      %s32 = sphi 0, %s29
      %s33 = sphi 0, %s30
      %s34 = sphi 0, %s31
      %s35 = sphi 0, %s32
      %s36 = sphi 0, %s33
      %s37 = sphi 0, %s34
      %s49 = sphi 0, %s49
      %s51 = sphi 0, %s49
      %s52 = sphi 0, %s51
      %s66 = sphi 0, %s52
      %s74 = sphi 0, %s76
      %s77 = sphi 0, %s74
      %s78 = sphi 0, %s77
      %s94 = sphi 0, %s78
      %s102 = sphi 0, %s104
      %s105 = sphi 0, %s102
      %s106 = sphi 0, %s105
      %s122 = sphi 0, %s106
      %s128 = sphi 0, %s130
      %s131 = sphi 0, %s128
      %s132 = sphi 0, %s131
      %s148 = sphi 0, %s132
      %s154 = sphi 0, %s156
      %s157 = sphi 0, %s154
      %s158 = sphi 0, %s157
      %s174 = sphi 0, %s158
      %s180 = sphi 0, %s182
      %s183 = sphi 0, %s180
      %s184 = sphi 0, %s183
      %s200 = sphi 0, %s184
      %s206 = sphi 0, %s208
      %s209 = sphi 0, %s206
      %s210 = sphi 0, %s209
      %s226 = sphi 0, %s210
      %s234 = sphi 0, %s236
      %s237 = sphi 0, %s234
      %s238 = sphi 0, %s237
      %s254 = sphi 0, %s238
    $region4: #{conditional_transformer.24} parent=1 // loop_header_branch
      %25 = sbr.rel (%p23) target = $region8
    $region5: #{conditional_transformer.24} parent=1 // loop_body
      %s27 = ssub.s32 %s22, 1
      %s28 = ssub.s32 %s22, 2
      %s38 = sadd.s32 1, %s31
      %p39 = scmp.ge.s32.totalorder %s38, 1
      %s40 = scalar_select %p39, 0, %s38
      %s41 = sadd.s32 1, %s30
      %s42 = scalar_select %p39, %s41, %s30
      %p43 = scmp.ge.s32.totalorder %s42, 1
      %s44 = scalar_select %p43, 0, %s42
      %s45 = sadd.s32 1, %s29
      %s46 = scalar_select %p43, %s45, %s29
      %p47 = scmp.ge.s32.totalorder %s46, 2
      %s48 = scalar_select %p47, 0, %s46
      %s50 = sadd.s32 %s49, 1
      %p53 = scmp.eq.s32.totalorder %s22, 1
      %p54 = scmp.ne.s32.totalorder %s49, %s51
      %p55 = scmp.eq.s32.totalorder %s22, 0
      %p56 = por %p54, %p55
      %p57 = scmp.ne.s32.totalorder %s49, %s51
      %p58 = scmp.eq.s32.totalorder %s27, 1
      %p59 = por %p57, %p58
      %p60 = scmp.ne.s32.totalorder %s51, %s52
      %p61 = scmp.eq.s32.totalorder %s27, 0
      %p62 = por %p60, %p61
      %p63 = scmp.ne.s32.totalorder %s51, %s52
      %p64 = scmp.eq.s32.totalorder %s28, 1
      %p65 = por %p63, %p64
      %p67 = scmp.ne.s32.totalorder %s52, %s66
      %p68 = scmp.eq.s32.totalorder %s28, 0
      %p69 = por %p67, %p68
      %s70 = ssub.s32 %s29, %s48
      %s71 = ssub.s32 %s30, %s44
      %s72 = sor.u32 %s70, %s71
      %p73 = scmp.eq.s32.totalorder %s72, 0
      %s75 = sadd.s32 %s74, 1
      %s76 = scalar_select %p73, %s74, %s75
      %p79 = pneg %p73
      %p80 = scmp.eq.s32.totalorder %s22, 1
      %p81 = por %p79, %p80
      %p82 = scmp.ne.s32.totalorder %s74, %s77
      %p83 = scmp.eq.s32.totalorder %s22, 0
      %p84 = por %p82, %p83
      %p85 = scmp.ne.s32.totalorder %s74, %s77
      %p86 = scmp.eq.s32.totalorder %s27, 1
      %p87 = por %p85, %p86
      %p88 = scmp.ne.s32.totalorder %s77, %s78
      %p89 = scmp.eq.s32.totalorder %s27, 0
      %p90 = por %p88, %p89
      %p91 = scmp.ne.s32.totalorder %s77, %s78
      %p92 = scmp.eq.s32.totalorder %s28, 1
      %p93 = por %p91, %p92
      %p95 = scmp.ne.s32.totalorder %s78, %s94
      %p96 = scmp.eq.s32.totalorder %s28, 0
      %p97 = por %p95, %p96
      %s98 = ssub.s32 %s29, %s48
      %s99 = ssub.s32 %s31, %s40
      %s100 = sor.u32 %s98, %s99
      %p101 = scmp.eq.s32.totalorder %s100, 0
      %s103 = sadd.s32 %s102, 1
      %s104 = scalar_select %p101, %s102, %s103
      %p107 = pneg %p101
      %p108 = scmp.eq.s32.totalorder %s22, 1
      %p109 = por %p107, %p108
      %p110 = scmp.ne.s32.totalorder %s102, %s105
      %p111 = scmp.eq.s32.totalorder %s22, 0
      %p112 = por %p110, %p111
      %p113 = scmp.ne.s32.totalorder %s102, %s105
      %p114 = scmp.eq.s32.totalorder %s27, 1
      %p115 = por %p113, %p114
      %p116 = scmp.ne.s32.totalorder %s105, %s106
      %p117 = scmp.eq.s32.totalorder %s27, 0
      %p118 = por %p116, %p117
      %p119 = scmp.ne.s32.totalorder %s105, %s106
      %p120 = scmp.eq.s32.totalorder %s28, 1
      %p121 = por %p119, %p120
      %p123 = scmp.ne.s32.totalorder %s106, %s122
      %p124 = scmp.eq.s32.totalorder %s28, 0
      %p125 = por %p123, %p124
      %s126 = ssub.s32 %s30, %s44
      %p127 = scmp.eq.s32.totalorder %s126, 0
      %s129 = sadd.s32 %s128, 1
      %s130 = scalar_select %p127, %s128, %s129
      %p133 = pneg %p127
      %p134 = scmp.eq.s32.totalorder %s22, 1
      %p135 = por %p133, %p134
      %p136 = scmp.ne.s32.totalorder %s128, %s131
      %p137 = scmp.eq.s32.totalorder %s22, 0
      %p138 = por %p136, %p137
      %p139 = scmp.ne.s32.totalorder %s128, %s131
      %p140 = scmp.eq.s32.totalorder %s27, 1
      %p141 = por %p139, %p140
      %p142 = scmp.ne.s32.totalorder %s131, %s132
      %p143 = scmp.eq.s32.totalorder %s27, 0
      %p144 = por %p142, %p143
      %p145 = scmp.ne.s32.totalorder %s131, %s132
      %p146 = scmp.eq.s32.totalorder %s28, 1
      %p147 = por %p145, %p146
      %p149 = scmp.ne.s32.totalorder %s132, %s148
      %p150 = scmp.eq.s32.totalorder %s28, 0
      %p151 = por %p149, %p150
      %s152 = ssub.s32 %s30, %s44
      %p153 = scmp.eq.s32.totalorder %s152, 0
      %s155 = sadd.s32 %s154, 1
      %s156 = scalar_select %p153, %s154, %s155
      %p159 = pneg %p153
      %p160 = scmp.eq.s32.totalorder %s22, 1
      %p161 = por %p159, %p160
      %p162 = scmp.ne.s32.totalorder %s154, %s157
      %p163 = scmp.eq.s32.totalorder %s22, 0
      %p164 = por %p162, %p163
      %p165 = scmp.ne.s32.totalorder %s154, %s157
      %p166 = scmp.eq.s32.totalorder %s27, 1
      %p167 = por %p165, %p166
      %p168 = scmp.ne.s32.totalorder %s157, %s158
      %p169 = scmp.eq.s32.totalorder %s27, 0
      %p170 = por %p168, %p169
      %p171 = scmp.ne.s32.totalorder %s157, %s158
      %p172 = scmp.eq.s32.totalorder %s28, 1
      %p173 = por %p171, %p172
      %p175 = scmp.ne.s32.totalorder %s158, %s174
      %p176 = scmp.eq.s32.totalorder %s28, 0
      %p177 = por %p175, %p176
      %s178 = ssub.s32 %s31, %s40
      %p179 = scmp.eq.s32.totalorder %s178, 0
      %s181 = sadd.s32 %s180, 1
      %s182 = scalar_select %p179, %s180, %s181
      %p185 = pneg %p179
      %p186 = scmp.eq.s32.totalorder %s22, 1
      %p187 = por %p185, %p186
      %p188 = scmp.ne.s32.totalorder %s180, %s183
      %p189 = scmp.eq.s32.totalorder %s22, 0
      %p190 = por %p188, %p189
      %p191 = scmp.ne.s32.totalorder %s180, %s183
      %p192 = scmp.eq.s32.totalorder %s27, 1
      %p193 = por %p191, %p192
      %p194 = scmp.ne.s32.totalorder %s183, %s184
      %p195 = scmp.eq.s32.totalorder %s27, 0
      %p196 = por %p194, %p195
      %p197 = scmp.ne.s32.totalorder %s183, %s184
      %p198 = scmp.eq.s32.totalorder %s28, 1
      %p199 = por %p197, %p198
      %p201 = scmp.ne.s32.totalorder %s184, %s200
      %p202 = scmp.eq.s32.totalorder %s28, 0
      %p203 = por %p201, %p202
      %s204 = ssub.s32 %s31, %s40
      %p205 = scmp.eq.s32.totalorder %s204, 0
      %s207 = sadd.s32 %s206, 1
      %s208 = scalar_select %p205, %s206, %s207
      %p211 = pneg %p205
      %p212 = scmp.eq.s32.totalorder %s22, 1
      %p213 = por %p211, %p212
      %p214 = scmp.ne.s32.totalorder %s206, %s209
      %p215 = scmp.eq.s32.totalorder %s22, 0
      %p216 = por %p214, %p215
      %p217 = scmp.ne.s32.totalorder %s206, %s209
      %p218 = scmp.eq.s32.totalorder %s27, 1
      %p219 = por %p217, %p218
      %p220 = scmp.ne.s32.totalorder %s209, %s210
      %p221 = scmp.eq.s32.totalorder %s27, 0
      %p222 = por %p220, %p221
      %p223 = scmp.ne.s32.totalorder %s209, %s210
      %p224 = scmp.eq.s32.totalorder %s28, 1
      %p225 = por %p223, %p224
      %p227 = scmp.ne.s32.totalorder %s210, %s226
      %p228 = scmp.eq.s32.totalorder %s28, 0
      %p229 = por %p227, %p228
      %s230 = ssub.s32 %s29, %s48
      %s231 = ssub.s32 %s30, %s44
      %s232 = sor.u32 %s230, %s231
      %p233 = scmp.eq.s32.totalorder %s232, 0
      %s235 = sadd.s32 %s234, 1
      %s236 = scalar_select %p233, %s234, %s235
      %p239 = pneg %p233
      %p240 = scmp.eq.s32.totalorder %s22, 1
      %p241 = por %p239, %p240
      %p242 = scmp.ne.s32.totalorder %s234, %s237
      %p243 = scmp.eq.s32.totalorder %s22, 0
      %p244 = por %p242, %p243
      %p245 = scmp.ne.s32.totalorder %s234, %s237
      %p246 = scmp.eq.s32.totalorder %s27, 1
      %p247 = por %p245, %p246
      %p248 = scmp.ne.s32.totalorder %s237, %s238
      %p249 = scmp.eq.s32.totalorder %s27, 0
      %p250 = por %p248, %p249
      %p251 = scmp.ne.s32.totalorder %s237, %s238
      %p252 = scmp.eq.s32.totalorder %s28, 1
      %p253 = por %p251, %p252
      %p255 = scmp.ne.s32.totalorder %s238, %s254
      %p256 = scmp.eq.s32.totalorder %s28, 0
      %p257 = por %p255, %p256
      %p258 = scmp.le.s32.totalorder 1, %s22
      %p259 = scmp.lt.s32.totalorder %s22, 3
      %p260 = pnand %p258, %p259
      %p261 = pneg %p260
      // Predicated region
      $region9: #{conditional_transformer.24} parent=5 // pred_check
        _
      $region10: #{conditional_transformer.24} parent=5 // pred_check_branch
        %263 = sbr.rel (%p260) target = $region12
      $region11: #{conditional_transformer.24} parent=5 // pred_region
        %s264 = ssub.s32 %s22, 1
        // Predicated region
        $region13: #{conditional_transformer.24} parent=11 // pred_check
          %p265 = pneg %p62
        $region14: #{conditional_transformer.24} parent=11 // pred_check_branch
          %267 = sbr.rel (%p265) target = $region16
        $region15: #{conditional_transformer.24} parent=11 // pred_region
          %s269 = ssub.s32 256, 256
          %270 = vsyncadd [#allocation7], %s269
          %s271 = sshll.u32 [#allocation6], 4
          %s272 = int_to_ptr.vmem [resolvable:$true] %s271
          %277 = dma.hbm_to_vmem [thread:$0]  %s0, 256, %s272, [#allocation7], 64, 64, 4
        $region16: #{conditional_transformer.24} parent=11 // pred_fallthru
          _
        // Predicated region
        $region17: #{conditional_transformer.24} parent=11 // pred_check
          %p278 = pneg %p144
        $region18: #{conditional_transformer.24} parent=11 // pred_check_branch
          %280 = sbr.rel (%p278) target = $region20
        $region19: #{conditional_transformer.24} parent=11 // pred_region
          %s282 = ssub.s32 128, 128
          %283 = vsyncadd [#allocation13], %s282
          %s284 = smul.addr %s33, 128
          %s285 = scalar_lea.hbm %s3, %s284
          %s287 = sshll.u32 [#allocation12], 4
          %s288 = int_to_ptr.vmem [resolvable:$true] %s287
          %290 = dma.hbm_to_vmem [thread:$0]  %s285, 128, %s288, [#allocation13]
        $region20: #{conditional_transformer.24} parent=11 // pred_fallthru
          _
        // Predicated region
        $region21: #{conditional_transformer.24} parent=11 // pred_check
          %p291 = pneg %p170
        $region22: #{conditional_transformer.24} parent=11 // pred_check_branch
          %293 = sbr.rel (%p291) target = $region24
        $region23: #{conditional_transformer.24} parent=11 // pred_region
          %s295 = ssub.s32 128, 128
          %296 = vsyncadd [#allocation13], %s295
          %s297 = smul.addr %s33, 128
          %s298 = scalar_lea.hbm %s4, %s297
          %s300 = sshll.u32 [#allocation14], 4
          %s301 = int_to_ptr.vmem [resolvable:$true] %s300
          %303 = dma.hbm_to_vmem [thread:$0]  %s298, 128, %s301, [#allocation13]
        $region24: #{conditional_transformer.24} parent=11 // pred_fallthru
          _
        // Predicated region
        $region25: #{conditional_transformer.24} parent=11 // pred_check
          %p304 = pneg %p196
        $region26: #{conditional_transformer.24} parent=11 // pred_check_branch
          %306 = sbr.rel (%p304) target = $region28
        $region27: #{conditional_transformer.24} parent=11 // pred_region
          %s307 = smul.u32 2, %s34
          %s309 = ssub.s32 256, 256
          %310 = vsyncadd [#allocation16], %s309
          %s311 = smul.addr %s307, 128
          %s312 = scalar_lea.hbm %s5, %s311
          %s313 = sshll.u32 [#allocation15], 4
          %s314 = int_to_ptr.vmem [resolvable:$true] %s313
          %319 = dma.hbm_to_vmem [thread:$0]  %s312, 256, %s314, [#allocation16], 128, 128, 8
        $region28: #{conditional_transformer.24} parent=11 // pred_fallthru
          _
        // Predicated region
        $region29: #{conditional_transformer.24} parent=11 // pred_check
          %p320 = pneg %p222
        $region30: #{conditional_transformer.24} parent=11 // pred_check_branch
          %322 = sbr.rel (%p320) target = $region32
        $region31: #{conditional_transformer.24} parent=11 // pred_region
          %s323 = smul.u32 2, %s34
          %s325 = ssub.s32 256, 256
          %326 = vsyncadd [#allocation16], %s325
          %s327 = smul.addr %s323, 128
          %s328 = scalar_lea.hbm %s6, %s327
          %s329 = sshll.u32 [#allocation17], 4
          %s330 = int_to_ptr.vmem [resolvable:$true] %s329
          %335 = dma.hbm_to_vmem [thread:$0]  %s328, 256, %s330, [#allocation16], 128, 128, 8
        $region32: #{conditional_transformer.24} parent=11 // pred_fallthru
          _
      $region12: #{conditional_transformer.24} parent=5 // pred_fallthru
        _
      %p336 = scmp.lt.s32.totalorder %s22, 2
      // Predicated region
      $region33: #{conditional_transformer.24} parent=5 // pred_check
        %p337 = pneg %p336
      $region34: #{conditional_transformer.24} parent=5 // pred_check_branch
        %339 = sbr.rel (%p337) target = $region36
      $region35: #{conditional_transformer.24} parent=5 // pred_region
        // Predicated region
        $region37: #{conditional_transformer.24} parent=35 // pred_check
          %p340 = pneg %p84
        $region38: #{conditional_transformer.24} parent=35 // pred_check_branch
          %342 = sbr.rel (%p340) target = $region40
        $region39: #{conditional_transformer.24} parent=35 // pred_region
          %s343 = sand.u32 %s22, 1
          %s344 = scalar_lea.sflag [#allocation10], %s343
          %s345 = sand.u32 %s74, 1
          %s346 = smul.addr %s345, 4
          %s347 = scalar_lea.vmem [#allocation9], %s346
          %s349 = ssub.s32 64, 64
          %350 = vsyncadd %s344, %s349
          %s351 = sadd.s32 %s30, %s29
          %s352 = smul.addr %s351, 64
          %s353 = scalar_lea.hbm %s1, %s352
          %s355 = sshll.u32 %s347, 4
          %s356 = int_to_ptr.vmem [resolvable:$true] %s355
          %358 = dma.hbm_to_vmem [thread:$0]  %s353, 64, %s356, %s344
        $region40: #{conditional_transformer.24} parent=35 // pred_fallthru
          _
        // Predicated region
        $region41: #{conditional_transformer.24} parent=35 // pred_check
          %p359 = pneg %p112
        $region42: #{conditional_transformer.24} parent=35 // pred_check_branch
          %361 = sbr.rel (%p359) target = $region44
        $region43: #{conditional_transformer.24} parent=35 // pred_region
          %s362 = sand.u32 %s22, 1
          %s363 = scalar_lea.sflag [#allocation10], %s362
          %s364 = sand.u32 %s102, 1
          %s365 = smul.addr %s364, 8
          %s366 = scalar_lea.vmem [#allocation11], %s365
          %s367 = smul.u32 2, %s31
          %s369 = ssub.s32 128, 128
          %370 = vsyncadd %s363, %s369
          %s371 = smul.addr %s29, 2
          %s372 = sadd.s32 %s367, %s371
          %s373 = smul.addr %s372, 64
          %s374 = scalar_lea.hbm %s2, %s373
          %s375 = sshll.u32 %s366, 4
          %s376 = int_to_ptr.vmem [resolvable:$true] %s375
          %381 = dma.hbm_to_vmem [thread:$0]  %s374, 128, %s376, %s363, 64, 64, 4
        $region44: #{conditional_transformer.24} parent=35 // pred_fallthru
          _
      $region36: #{conditional_transformer.24} parent=5 // pred_fallthru
        _
      %p382 = scmp.le.s32.totalorder 1, %s22
      %p383 = scmp.lt.s32.totalorder %s22, 3
      %p384 = pnand %p382, %p383
      %p385 = pneg %p384
      // Predicated region
      $region45: #{conditional_transformer.24} parent=5 // pred_check
        _
      $region46: #{conditional_transformer.24} parent=5 // pred_check_branch
        %387 = sbr.rel (%p384) target = $region48
      $region47: #{conditional_transformer.24} parent=5 // pred_region
        %s388 = ssub.s32 %s22, 1
        // Predicated region
        $region49: #{conditional_transformer.24} parent=47 // pred_check
          %p389 = pneg %p62
        $region50: #{conditional_transformer.24} parent=47 // pred_check_branch
          %391 = sbr.rel (%p389) target = $region52
        $region51: #{conditional_transformer.24} parent=47 // pred_region
          %392 = dma.done [#allocation7], 256
        $region52: #{conditional_transformer.24} parent=47 // pred_fallthru
          _
        %s393 = sand.u32 %s27, 1
        %s394 = scalar_lea.sflag [#allocation10], %s393
        %s395 = sand.u32 %s77, 1
        %s396 = smul.addr %s395, 4
        %s397 = scalar_lea.vmem [#allocation9], %s396
        // Predicated region
        $region53: #{conditional_transformer.24} parent=47 // pred_check
          %p398 = pneg %p90
        $region54: #{conditional_transformer.24} parent=47 // pred_check_branch
          %400 = sbr.rel (%p398) target = $region56
        $region55: #{conditional_transformer.24} parent=47 // pred_region
          %401 = dma.done %s394, 64
        $region56: #{conditional_transformer.24} parent=47 // pred_fallthru
          _
        %s402 = sand.u32 %s27, 1
        %s403 = scalar_lea.sflag [#allocation10], %s402
        %s404 = sand.u32 %s105, 1
        %s405 = smul.addr %s404, 8
        %s406 = scalar_lea.vmem [#allocation11], %s405
        // Predicated region
        $region57: #{conditional_transformer.24} parent=47 // pred_check
          %p407 = pneg %p118
        $region58: #{conditional_transformer.24} parent=47 // pred_check_branch
          %409 = sbr.rel (%p407) target = $region60
        $region59: #{conditional_transformer.24} parent=47 // pred_region
          %410 = dma.done %s403, 128
        $region60: #{conditional_transformer.24} parent=47 // pred_fallthru
          _
        // Predicated region
        $region61: #{conditional_transformer.24} parent=47 // pred_check
          %p411 = pneg %p144
        $region62: #{conditional_transformer.24} parent=47 // pred_check_branch
          %413 = sbr.rel (%p411) target = $region64
        $region63: #{conditional_transformer.24} parent=47 // pred_region
          %414 = dma.done [#allocation13], 128
        $region64: #{conditional_transformer.24} parent=47 // pred_fallthru
          _
        // Predicated region
        $region65: #{conditional_transformer.24} parent=47 // pred_check
          %p415 = pneg %p170
        $region66: #{conditional_transformer.24} parent=47 // pred_check_branch
          %417 = sbr.rel (%p415) target = $region68
        $region67: #{conditional_transformer.24} parent=47 // pred_region
          %418 = dma.done [#allocation13], 128
        $region68: #{conditional_transformer.24} parent=47 // pred_fallthru
          _
        // Predicated region
        $region69: #{conditional_transformer.24} parent=47 // pred_check
          %p419 = pneg %p196
        $region70: #{conditional_transformer.24} parent=47 // pred_check_branch
          %421 = sbr.rel (%p419) target = $region72
        $region71: #{conditional_transformer.24} parent=47 // pred_region
          %422 = dma.done [#allocation16], 256
        $region72: #{conditional_transformer.24} parent=47 // pred_fallthru
          _
        // Predicated region
        $region73: #{conditional_transformer.24} parent=47 // pred_check
          %p423 = pneg %p222
        $region74: #{conditional_transformer.24} parent=47 // pred_check_branch
          %425 = sbr.rel (%p423) target = $region76
        $region75: #{conditional_transformer.24} parent=47 // pred_region
          %426 = dma.done [#allocation16], 256
        $region76: #{conditional_transformer.24} parent=47 // pred_fallthru
          _
        %p427 = pneg %p62
        %p428 = pneg %p59
        %s429 = sand.u32 %s27, 1
        %s430 = scalar_lea.sflag [#allocation10], %s429
        %s431 = sand.u32 %s77, 1
        %s432 = smul.addr %s431, 4
        %s433 = scalar_lea.vmem [#allocation9], %s432
        %p434 = pneg %p90
        %p435 = pneg %p87
        %s436 = sand.u32 %s27, 1
        %s437 = scalar_lea.sflag [#allocation10], %s436
        %s438 = sand.u32 %s105, 1
        %s439 = smul.addr %s438, 8
        %s440 = scalar_lea.vmem [#allocation11], %s439
        %p441 = pneg %p118
        %p442 = pneg %p115
        %p443 = pneg %p144
        %p444 = pneg %p141
        %p445 = pneg %p170
        %p446 = pneg %p167
        %p447 = pneg %p196
        %p448 = pneg %p193
        %p449 = pneg %p222
        %p450 = pneg %p219
        %p451 = pneg %p250
        %p452 = pneg %p247
        %s453 = sand.u32 %s237, 1
        %s454 = scalar_lea.sflag [#allocation8], %s453
        %s455 = sand.u32 %s237, 1
        %s456 = smul.addr %s455, 4
        %s457 = scalar_lea.vmem [#allocation18], %s456
        %s458 = smul.u32 2, %s34
        %s459 = smul.u32 2, %s34
        %s460 = smul.u32 2, %s34
        %v462 = vld [vmem:[#allocation6] sm:$0xf]
        %v463 = vld [vmem:[#allocation6 + $0x4] sm:$0xf]
        %v464 = vld [vmem:[#allocation6 + $0x8] sm:$0xf]
        %v465 = vld [vmem:[#allocation6 + $0xc] sm:$0xf]
        %p466 = scmp.eq.s32.totalorder %s34, 0
        // Predicated region
        $region77: #{conditional_transformer.24} parent=47 // pred_check
          %p467 = pneg %p466
        $region78: #{conditional_transformer.24} parent=47 // pred_check_branch
          %469 = sbr.rel (%p467) target = $region80
        $region79: #{conditional_transformer.24} parent=47 // pred_region
          %v470 = vld [vmem:[%s397] sm:$0xf]
          %v475 = vunpack.c.l.b16 %v462
          %v476 = vunpack.c.l.b16 %v463
          %v477 = vunpack.c.l.b16 %v464
          %v478 = vunpack.c.l.b16 %v465
          %v479 = vpack.c.b16 %v476, %v475
          %v480 = vpack.c.b16 %v478, %v477
          %vm483 = vcmask 261120
          %v485 = vsel %vm483, %v470, 0
          %487 = vmatprep.subr.bf16.mxu0 0
          %488 = vmatpush1.bf16.msra.mxu0 %v479
          %489 = vmatprep.subr.bf16.mxu0 0
          %490 = vmatpush1.bf16.msra.mxu0 %v480
          %491 = vmatprep.subr.bf16.mxu0 0
          %492 = vmatpush1.bf16.msra.mxu0 0
          %493 = vmatprep.subr.bf16.mxu0 0
          %494 = vmatpush1.bf16.msra.mxu0 0
          %495 = vmatprep.subr.bf16.mxu0 0
          %496 = vmatpush1.bf16.msra.mxu0 0
          %497 = vmatprep.subr.bf16.mxu0 0
          %498 = vmatpush1.bf16.msra.mxu0 0
          %499 = vmatprep.subr.bf16.mxu0 0
          %500 = vmatpush1.bf16.msra.mxu0 0
          %501 = vmatprep.subr.bf16.mxu0 0
          %502 = vmatpush1.bf16.msra.mxu0 0
          %503 = vmatprep.subr.bf16.mxu0 0
          %504 = vmatpush1.bf16.msra.mxu0 0
          %505 = vmatprep.subr.bf16.mxu0 0
          %506 = vmatpush1.bf16.msra.mxu0 0
          %507 = vmatprep.subr.bf16.mxu0 0
          %508 = vmatpush1.bf16.msra.mxu0 0
          %509 = vmatprep.subr.bf16.mxu0 0
          %510 = vmatpush1.bf16.msra.mxu0 0
          %511 = vmatprep.subr.bf16.mxu0 0
          %512 = vmatpush1.bf16.msra.mxu0 0
          %513 = vmatprep.subr.bf16.mxu0 0
          %514 = vmatpush1.bf16.msra.mxu0 0
          %515 = vmatprep.subr.bf16.mxu0 0
          %516 = vmatpush1.bf16.msra.mxu0 0
          %517 = vmatprep.subr.bf16.mxu0 0
          %518 = vmatpush1.bf16.msra.mxu0 0
          %519 = vmatprep.mubr.bf16.mxu0 0
          %520 = vmatmul.mubr.bf16.gmra.mrb[0].mxu0 %v485
          %v521 = vpop.f32.mrb[0].mxu0
          %v522 = vadd.f32 0.0, %v521
          %v523 = vpop.f32.mrb[0].mxu0
          %v524 = vpop.f32.mrb[0].mxu0
          %v525 = vpop.f32.mrb[0].mxu0
          %526 = vdwg.mxu0
          %v527 = vunpack.c.l.bf16 %v470
          %v528 = vld [vmem:[#allocation12] sm:$0xff]
          %v529 = vmul.f32 %v527, %v528
          %v530 = vld [vmem:[#allocation14] sm:$0xff]
          %v531 = vmul.f32 %v522, %v530
          %v532 = vadd.f32 %v529, %v531
          %v533 = vpack.c.bf16 %v532, %v532
          %vm534 = vcmask 257024
          %535 = vst.msk [vmem:[#allocation2] sm:$0xf] %vm534, %v533
          %vm536 = vcmask 31744
          %537 = vst.msk [vmem:[#allocation3] sm:$0xff] %vm536, -inf
          %538 = vst.msk [vmem:[#allocation4] sm:$0xff] %vm536, 0.0
          %vm539 = vcmask 64512
          %540 = vst.msk [vmem:[#allocation5] sm:$0xff] %vm539, 0.0
          %541 = vst.msk [vmem:[#allocation5 + $0x8] sm:$0xff] %vm539, 0.0
          %542 = vst.msk [vmem:[#allocation5 + $0x10] sm:$0xff] %vm539, 0.0
          %543 = vst.msk [vmem:[#allocation5 + $0x18] sm:$0xff] %vm539, 0.0
        $region80: #{conditional_transformer.24} parent=47 // pred_fallthru
          _
        %v544 = vld [vmem:[%s406] sm:$0xf]
        %v545 = vld [vmem:[%s406 + $0x4] sm:$0x3]
        %v548 = vunpack.c.l.b16 %v544
        %v549 = vunpack.c.l.b16 %v545
        %v550 = vpack.c.b16 %v549, %v548
        %v555 = vunpack.c.l.b16 %v462
        %v556 = vunpack.c.l.b16 %v463
        %v557 = vunpack.c.l.b16 %v464
        %v558 = vunpack.c.l.b16 %v465
        %v559 = vpack.c.b16 %v556, %v555
        %v560 = vpack.c.b16 %v558, %v557
        %vm563 = vcmask 261120
        %v565 = vsel %vm563, %v550, 0
        %567 = vmatprep.subr.bf16.mxu0 0
        %568 = vmatpush1.bf16.msra.mxu0 %v559
        %569 = vmatprep.subr.bf16.mxu0 0
        %570 = vmatpush1.bf16.msra.mxu0 %v560
        %571 = vmatprep.subr.bf16.mxu0 0
        %572 = vmatpush1.bf16.msra.mxu0 0
        %573 = vmatprep.subr.bf16.mxu0 0
        %574 = vmatpush1.bf16.msra.mxu0 0
        %575 = vmatprep.subr.bf16.mxu0 0
        %576 = vmatpush1.bf16.msra.mxu0 0
        %577 = vmatprep.subr.bf16.mxu0 0
        %578 = vmatpush1.bf16.msra.mxu0 0
        %579 = vmatprep.subr.bf16.mxu0 0
        %580 = vmatpush1.bf16.msra.mxu0 0
        %581 = vmatprep.subr.bf16.mxu0 0
        %582 = vmatpush1.bf16.msra.mxu0 0
        %583 = vmatprep.subr.bf16.mxu0 0
        %584 = vmatpush1.bf16.msra.mxu0 0
        %585 = vmatprep.subr.bf16.mxu0 0
        %586 = vmatpush1.bf16.msra.mxu0 0
        %587 = vmatprep.subr.bf16.mxu0 0
        %588 = vmatpush1.bf16.msra.mxu0 0
        %589 = vmatprep.subr.bf16.mxu0 0
        %590 = vmatpush1.bf16.msra.mxu0 0
        %591 = vmatprep.subr.bf16.mxu0 0
        %592 = vmatpush1.bf16.msra.mxu0 0
        %593 = vmatprep.subr.bf16.mxu0 0
        %594 = vmatpush1.bf16.msra.mxu0 0
        %595 = vmatprep.subr.bf16.mxu0 0
        %596 = vmatpush1.bf16.msra.mxu0 0
        %597 = vmatprep.subr.bf16.mxu0 0
        %598 = vmatpush1.bf16.msra.mxu0 0
        %599 = vmatprep.mubr.bf16.mxu0 0
        %600 = vmatmul.mubr.bf16.gmra.mrb[0].mxu0 %v565
        %v601 = vpop.f32.mrb[0].mxu0
        %v602 = vadd.f32 0.0, %v601
        %v603 = vpop.f32.mrb[0].mxu0
        %v604 = vpop.f32.mrb[0].mxu0
        %v605 = vadd.f32 0.0, %v604
        %v606 = vpop.f32.mrb[0].mxu0
        %607 = vdwg.mxu0
        %v608 = vunpack.c.l.bf16 %v544
        %v609 = vunpack.c.l.bf16 %v545
        %v610 = vld [vmem:[#allocation15] sm:$0xff]
        %v611 = vld [vmem:[#allocation15 + $0x8] sm:$0xf]
        %v612 = vmul.f32 %v608, %v610
        %v613 = vmul.f32 %v609, %v611
        %v614 = vld [vmem:[#allocation17] sm:$0xff]
        %v615 = vld [vmem:[#allocation17 + $0x8] sm:$0xf]
        %v616 = vmul.f32 %v602, %v614
        %v617 = vmul.f32 %v605, %v615
        %v618 = vadd.f32 %v612, %v616
        %v619 = vadd.f32 %v613, %v617
        %v620 = vpack.c.bf16 %v619, %v618
        %v621 = vld [vmem:[#allocation2] sm:$0xf]
        %v622 = vld [vmem:[#allocation3] sm:$0xff]
        %v623 = vld [vmem:[#allocation4] sm:$0xff]
        %vm624 = vcmask 64512
        %v626 = vsel %vm624, %v621, 0
        %v629 = vsel %vm624, %v620, 0
        %631 = vmatprep.subr.bf16.mxu0 0
        %632 = vmatpush1.bf16.xpose.msra.mxu0 %v629
        %633 = vmatprep.subr.bf16.mxu0 0
        %634 = vmatpush1.bf16.xpose.msra.mxu0 0
        %635 = vmatprep.subr.bf16.mxu0 0
        %636 = vmatpush1.bf16.xpose.msra.mxu0 0
        %637 = vmatprep.subr.bf16.mxu0 0
        %638 = vmatpush1.bf16.xpose.msra.mxu0 0
        %639 = vmatprep.subr.bf16.mxu0 0
        %640 = vmatpush1.bf16.xpose.msra.mxu0 0
        %641 = vmatprep.subr.bf16.mxu0 0
        %642 = vmatpush1.bf16.xpose.msra.mxu0 0
        %643 = vmatprep.subr.bf16.mxu0 0
        %644 = vmatpush1.bf16.xpose.msra.mxu0 0
        %645 = vmatprep.subr.bf16.mxu0 0
        %646 = vmatpush1.bf16.xpose.msra.mxu0 0
        %647 = vmatprep.subr.bf16.mxu0 0
        %648 = vmatpush1.bf16.xpose.msra.mxu0 0
        %649 = vmatprep.subr.bf16.mxu0 0
        %650 = vmatpush1.bf16.xpose.msra.mxu0 0
        %651 = vmatprep.subr.bf16.mxu0 0
        %652 = vmatpush1.bf16.xpose.msra.mxu0 0
        %653 = vmatprep.subr.bf16.mxu0 0
        %654 = vmatpush1.bf16.xpose.msra.mxu0 0
        %655 = vmatprep.subr.bf16.mxu0 0
        %656 = vmatpush1.bf16.xpose.msra.mxu0 0
        %657 = vmatprep.subr.bf16.mxu0 0
        %658 = vmatpush1.bf16.xpose.msra.mxu0 0
        %659 = vmatprep.subr.bf16.mxu0 0
        %660 = vmatpush1.bf16.xpose.msra.mxu0 0
        %661 = vmatprep.subr.bf16.mxu0 0
        %662 = vmatpush1.bf16.xpose.msra.mxu0 0
        %663 = vmatprep.mubr.bf16.mxu0 0
        %664 = vmatmul.mubr.bf16.gmra.mrb[0].mxu0 %v626
        %v665 = vpop.f32.mrb[0].mxu0
        %v666 = vadd.f32 0.0, %v665
        %v667 = vpop.f32.mrb[0].mxu0
        %v668 = vpop.f32.mrb[0].mxu0
        %v669 = vpop.f32.mrb[0].mxu0
        %670 = vdwg.mxu0
        %vm671 = vcmask 97280
        %v672 = vsel %vm671, %v666, -inf
        %673 = vmax.xlane.f32.xlu0 %v672
        %v674 = vpop.xlane.xlu0 %673
        %v675 = vmax.f32 %v622, %v674
        %v676 = vsub.f32 %v622, %v675
        %v677 = vmul.f32 %v676, 1.442695
        %v678 = vpow.pop %v677
        %680 = vset.pattern.permute.xlu0 0
        %681 = vperm.xlu0 %680, %v675
        %v682 = vpop.permute.xlu0 %681
        %v684 = vsub.f32 %v666, %v682
        %v685 = vmul.f32 %v684, 1.442695
        %v686 = vpow.pop %v685
        %v687 = vmul.f32 %v678, %v623
        %v688 = vsel %vm671, %v686, 0.0
        %689 = vadd.xlane.f32.xlu0 %v688
        %v690 = vpop.xlane.xlu0 %689
        %v691 = vadd.f32 %v687, %v690
        %v692 = vld [vmem:[#allocation5] sm:$0xff]
        %694 = vset.pattern.permute.xlu0 0
        %695 = vperm.xlu0 %694, %v678
        %v696 = vpop.permute.xlu0 %695
        %v698 = vmul.f32 %v696, %v692
        %v699 = vpack.c.bf16 %v686, %v686
        %700 = vrot.lane.b32.xlu0 %v550, 96
        %v701 = vpop.permute.xlu0 %700
        %v703 = vsel %vm671, %v699, 0
        %vm705 = vcmask 1045504
        %v707 = vsel %vm705, %v701, 0
        %709 = vmatprep.subr.bf16.mxu0 0
        %710 = vmatpush1.bf16.msra.mxu0 %v707
        %711 = vmatprep.subr.bf16.mxu0 0
        %712 = vmatpush1.bf16.msra.mxu0 0
        %713 = vmatprep.subr.bf16.mxu0 0
        %714 = vmatpush1.bf16.msra.mxu0 0
        %715 = vmatprep.subr.bf16.mxu0 0
        %716 = vmatpush1.bf16.msra.mxu0 0
        %717 = vmatprep.subr.bf16.mxu0 0
        %718 = vmatpush1.bf16.msra.mxu0 0
        %719 = vmatprep.subr.bf16.mxu0 0
        %720 = vmatpush1.bf16.msra.mxu0 0
        %721 = vmatprep.subr.bf16.mxu0 0
        %722 = vmatpush1.bf16.msra.mxu0 0
        %723 = vmatprep.subr.bf16.mxu0 0
        %724 = vmatpush1.bf16.msra.mxu0 0
        %725 = vmatprep.subr.bf16.mxu0 0
        %726 = vmatpush1.bf16.msra.mxu0 0
        %727 = vmatprep.subr.bf16.mxu0 0
        %728 = vmatpush1.bf16.msra.mxu0 0
        %729 = vmatprep.subr.bf16.mxu0 0
        %730 = vmatpush1.bf16.msra.mxu0 0
        %731 = vmatprep.subr.bf16.mxu0 0
        %732 = vmatpush1.bf16.msra.mxu0 0
        %733 = vmatprep.subr.bf16.mxu0 0
        %734 = vmatpush1.bf16.msra.mxu0 0
        %735 = vmatprep.subr.bf16.mxu0 0
        %736 = vmatpush1.bf16.msra.mxu0 0
        %737 = vmatprep.subr.bf16.mxu0 0
        %738 = vmatpush1.bf16.msra.mxu0 0
        %739 = vmatprep.subr.bf16.mxu0 0
        %740 = vmatpush1.bf16.msra.mxu0 0
        %741 = vmatprep.mubr.bf16.mxu0 0
        %742 = vmatmul.mubr.bf16.gmra.mrb[0].mxu0 %v703
        %v743 = vpop.f32.mrb[0].mxu0
        %v744 = vadd.f32 0.0, %v743
        %v745 = vpop.f32.mrb[0].mxu0
        %v746 = vpop.f32.mrb[0].mxu0
        %v747 = vpop.f32.mrb[0].mxu0
        %748 = vdwg.mxu0
        %v749 = vadd.f32 %v698, %v744
        %750 = vst.msk [vmem:[#allocation5] sm:$0xff] %vm624, %v749
        %v752 = vunpack.c.l.b16 %v621
        %v753 = vpack.c.b16 %v752, %v752
        %754 = vrot.lane.b32.xlu0 %v753, 120
        %v755 = vpop.permute.xlu0 %754
        %757 = vrot.lane.b32.xlu0 %v620, 120
        %v758 = vpop.permute.xlu0 %757
        %v760 = vsel %vm624, %v755, 0
        %v763 = vsel %vm624, %v758, 0
        %765 = vmatprep.subr.bf16.mxu0 0
        %766 = vmatpush1.bf16.xpose.msra.mxu0 %v763
        %767 = vmatprep.subr.bf16.mxu0 0
        %768 = vmatpush1.bf16.xpose.msra.mxu0 0
        %769 = vmatprep.subr.bf16.mxu0 0
        %770 = vmatpush1.bf16.xpose.msra.mxu0 0
        %771 = vmatprep.subr.bf16.mxu0 0
        %772 = vmatpush1.bf16.xpose.msra.mxu0 0
        %773 = vmatprep.subr.bf16.mxu0 0
        %774 = vmatpush1.bf16.xpose.msra.mxu0 0
        %775 = vmatprep.subr.bf16.mxu0 0
        %776 = vmatpush1.bf16.xpose.msra.mxu0 0
        %777 = vmatprep.subr.bf16.mxu0 0
        %778 = vmatpush1.bf16.xpose.msra.mxu0 0
        %779 = vmatprep.subr.bf16.mxu0 0
        %780 = vmatpush1.bf16.xpose.msra.mxu0 0
        %781 = vmatprep.subr.bf16.mxu0 0
        %782 = vmatpush1.bf16.xpose.msra.mxu0 0
        %783 = vmatprep.subr.bf16.mxu0 0
        %784 = vmatpush1.bf16.xpose.msra.mxu0 0
        %785 = vmatprep.subr.bf16.mxu0 0
        %786 = vmatpush1.bf16.xpose.msra.mxu0 0
        %787 = vmatprep.subr.bf16.mxu0 0
        %788 = vmatpush1.bf16.xpose.msra.mxu0 0
        %789 = vmatprep.subr.bf16.mxu0 0
        %790 = vmatpush1.bf16.xpose.msra.mxu0 0
        %791 = vmatprep.subr.bf16.mxu0 0
        %792 = vmatpush1.bf16.xpose.msra.mxu0 0
        %793 = vmatprep.subr.bf16.mxu0 0
        %794 = vmatpush1.bf16.xpose.msra.mxu0 0
        %795 = vmatprep.subr.bf16.mxu0 0
        %796 = vmatpush1.bf16.xpose.msra.mxu0 0
        %797 = vmatprep.mubr.bf16.mxu0 0
        %798 = vmatmul.mubr.bf16.gmra.mrb[0].mxu0 %v760
        %v799 = vpop.f32.mrb[0].mxu0
        %v800 = vadd.f32 0.0, %v799
        %v801 = vpop.f32.mrb[0].mxu0
        %v802 = vpop.f32.mrb[0].mxu0
        %v803 = vpop.f32.mrb[0].mxu0
        %804 = vdwg.mxu0
        %v805 = vsel %vm671, %v800, -inf
        %806 = vmax.xlane.f32.xlu0 %v805
        %v807 = vpop.xlane.xlu0 %806
        %v808 = vmax.f32 %v622, %v807
        %v809 = vsub.f32 %v622, %v808
        %v810 = vmul.f32 %v809, 1.442695
        %v811 = vpow.pop %v810
        %813 = vset.pattern.permute.xlu0 1
        %814 = vperm.xlu0 %813, %v808
        %v815 = vpop.permute.xlu0 %814
        %v817 = vsub.f32 %v800, %v815
        %v818 = vmul.f32 %v817, 1.442695
        %v819 = vpow.pop %v818
        %v820 = vmul.f32 %v811, %v623
        %v821 = vsel %vm671, %v819, 0.0
        %822 = vadd.xlane.f32.xlu0 %v821
        %v823 = vpop.xlane.xlu0 %822
        %v824 = vadd.f32 %v820, %v823
        %s825 = scalar_lea.vmem [#allocation5], 8
        %v826 = vld [vmem:[%s825] sm:$0xff]
        %828 = vset.pattern.permute.xlu0 1
        %829 = vperm.xlu0 %828, %v811
        %v830 = vpop.permute.xlu0 %829
        %v832 = vmul.f32 %v830, %v826
        %v833 = vpack.c.bf16 %v819, %v819
        %834 = vrot.lane.b32.xlu0 %v550, 88
        %v835 = vpop.permute.xlu0 %834
        %v837 = vsel %vm671, %v833, 0
        %v840 = vsel %vm705, %v835, 0
        %842 = vmatprep.subr.bf16.mxu0 0
        %843 = vmatpush1.bf16.msra.mxu0 %v840
        %844 = vmatprep.subr.bf16.mxu0 0
        %845 = vmatpush1.bf16.msra.mxu0 0
        %846 = vmatprep.subr.bf16.mxu0 0
        %847 = vmatpush1.bf16.msra.mxu0 0
        %848 = vmatprep.subr.bf16.mxu0 0
        %849 = vmatpush1.bf16.msra.mxu0 0
        %850 = vmatprep.subr.bf16.mxu0 0
        %851 = vmatpush1.bf16.msra.mxu0 0
        %852 = vmatprep.subr.bf16.mxu0 0
        %853 = vmatpush1.bf16.msra.mxu0 0
        %854 = vmatprep.subr.bf16.mxu0 0
        %855 = vmatpush1.bf16.msra.mxu0 0
        %856 = vmatprep.subr.bf16.mxu0 0
        %857 = vmatpush1.bf16.msra.mxu0 0
        %858 = vmatprep.subr.bf16.mxu0 0
        %859 = vmatpush1.bf16.msra.mxu0 0
        %860 = vmatprep.subr.bf16.mxu0 0
        %861 = vmatpush1.bf16.msra.mxu0 0
        %862 = vmatprep.subr.bf16.mxu0 0
        %863 = vmatpush1.bf16.msra.mxu0 0
        %864 = vmatprep.subr.bf16.mxu0 0
        %865 = vmatpush1.bf16.msra.mxu0 0
        %866 = vmatprep.subr.bf16.mxu0 0
        %867 = vmatpush1.bf16.msra.mxu0 0
        %868 = vmatprep.subr.bf16.mxu0 0
        %869 = vmatpush1.bf16.msra.mxu0 0
        %870 = vmatprep.subr.bf16.mxu0 0
        %871 = vmatpush1.bf16.msra.mxu0 0
        %872 = vmatprep.subr.bf16.mxu0 0
        %873 = vmatpush1.bf16.msra.mxu0 0
        %874 = vmatprep.mubr.bf16.mxu0 0
        %875 = vmatmul.mubr.bf16.gmra.mrb[0].mxu0 %v837
        %v876 = vpop.f32.mrb[0].mxu0
        %v877 = vadd.f32 0.0, %v876
        %v878 = vpop.f32.mrb[0].mxu0
        %v879 = vpop.f32.mrb[0].mxu0
        %v880 = vpop.f32.mrb[0].mxu0
        %881 = vdwg.mxu0
        %v882 = vadd.f32 %v832, %v877
        %883 = vst.msk [vmem:[%s825] sm:$0xff] %vm624, %v882
        %884 = vrot.lane.b32.xlu0 %v753, 112
        %v885 = vpop.permute.xlu0 %884
        %886 = vrot.lane.b32.xlu0 %v620, 112
        %v887 = vpop.permute.xlu0 %886
        %v889 = vsel %vm624, %v885, 0
        %v892 = vsel %vm624, %v887, 0
        %894 = vmatprep.subr.bf16.mxu0 0
        %895 = vmatpush1.bf16.xpose.msra.mxu0 %v892
        %896 = vmatprep.subr.bf16.mxu0 0
        %897 = vmatpush1.bf16.xpose.msra.mxu0 0
        %898 = vmatprep.subr.bf16.mxu0 0
        %899 = vmatpush1.bf16.xpose.msra.mxu0 0
        %900 = vmatprep.subr.bf16.mxu0 0
        %901 = vmatpush1.bf16.xpose.msra.mxu0 0
        %902 = vmatprep.subr.bf16.mxu0 0
        %903 = vmatpush1.bf16.xpose.msra.mxu0 0
        %904 = vmatprep.subr.bf16.mxu0 0
        %905 = vmatpush1.bf16.xpose.msra.mxu0 0
        %906 = vmatprep.subr.bf16.mxu0 0
        %907 = vmatpush1.bf16.xpose.msra.mxu0 0
        %908 = vmatprep.subr.bf16.mxu0 0
        %909 = vmatpush1.bf16.xpose.msra.mxu0 0
        %910 = vmatprep.subr.bf16.mxu0 0
        %911 = vmatpush1.bf16.xpose.msra.mxu0 0
        %912 = vmatprep.subr.bf16.mxu0 0
        %913 = vmatpush1.bf16.xpose.msra.mxu0 0
        %914 = vmatprep.subr.bf16.mxu0 0
        %915 = vmatpush1.bf16.xpose.msra.mxu0 0
        %916 = vmatprep.subr.bf16.mxu0 0
        %917 = vmatpush1.bf16.xpose.msra.mxu0 0
        %918 = vmatprep.subr.bf16.mxu0 0
        %919 = vmatpush1.bf16.xpose.msra.mxu0 0
        %920 = vmatprep.subr.bf16.mxu0 0
        %921 = vmatpush1.bf16.xpose.msra.mxu0 0
        %922 = vmatprep.subr.bf16.mxu0 0
        %923 = vmatpush1.bf16.xpose.msra.mxu0 0
        %924 = vmatprep.subr.bf16.mxu0 0
        %925 = vmatpush1.bf16.xpose.msra.mxu0 0
        %926 = vmatprep.mubr.bf16.mxu0 0
        %927 = vmatmul.mubr.bf16.gmra.mrb[0].mxu0 %v889
        %v928 = vpop.f32.mrb[0].mxu0
        %v929 = vadd.f32 0.0, %v928
        %v930 = vpop.f32.mrb[0].mxu0
        %v931 = vpop.f32.mrb[0].mxu0
        %v932 = vpop.f32.mrb[0].mxu0
        %933 = vdwg.mxu0
        %v934 = vsel %vm671, %v929, -inf
        %935 = vmax.xlane.f32.xlu0 %v934
        %v936 = vpop.xlane.xlu0 %935
        %v937 = vmax.f32 %v622, %v936
        %v938 = vsub.f32 %v622, %v937
        %v939 = vmul.f32 %v938, 1.442695
        %v940 = vpow.pop %v939
        %942 = vset.pattern.permute.xlu0 2
        %943 = vperm.xlu0 %942, %v937
        %v944 = vpop.permute.xlu0 %943
        %v946 = vsub.f32 %v929, %v944
        %v947 = vmul.f32 %v946, 1.442695
        %v948 = vpow.pop %v947
        %v949 = vmul.f32 %v940, %v623
        %v950 = vsel %vm671, %v948, 0.0
        %951 = vadd.xlane.f32.xlu0 %v950
        %v952 = vpop.xlane.xlu0 %951
        %v953 = vadd.f32 %v949, %v952
        %s954 = scalar_lea.vmem [#allocation5], 16
        %v955 = vld [vmem:[%s954] sm:$0xff]
        %957 = vset.pattern.permute.xlu0 2
        %958 = vperm.xlu0 %957, %v940
        %v959 = vpop.permute.xlu0 %958
        %v961 = vmul.f32 %v959, %v955
        %v962 = vpack.c.bf16 %v948, %v948
        %963 = vrot.lane.b32.xlu0 %v550, 80
        %v964 = vpop.permute.xlu0 %963
        %v966 = vsel %vm671, %v962, 0
        %v969 = vsel %vm705, %v964, 0
        %971 = vmatprep.subr.bf16.mxu0 0
        %972 = vmatpush1.bf16.msra.mxu0 %v969
        %973 = vmatprep.subr.bf16.mxu0 0
        %974 = vmatpush1.bf16.msra.mxu0 0
        %975 = vmatprep.subr.bf16.mxu0 0
        %976 = vmatpush1.bf16.msra.mxu0 0
        %977 = vmatprep.subr.bf16.mxu0 0
        %978 = vmatpush1.bf16.msra.mxu0 0
        %979 = vmatprep.subr.bf16.mxu0 0
        %980 = vmatpush1.bf16.msra.mxu0 0
        %981 = vmatprep.subr.bf16.mxu0 0
        %982 = vmatpush1.bf16.msra.mxu0 0
        %983 = vmatprep.subr.bf16.mxu0 0
        %984 = vmatpush1.bf16.msra.mxu0 0
        %985 = vmatprep.subr.bf16.mxu0 0
        %986 = vmatpush1.bf16.msra.mxu0 0
        %987 = vmatprep.subr.bf16.mxu0 0
        %988 = vmatpush1.bf16.msra.mxu0 0
        %989 = vmatprep.subr.bf16.mxu0 0
        %990 = vmatpush1.bf16.msra.mxu0 0
        %991 = vmatprep.subr.bf16.mxu0 0
        %992 = vmatpush1.bf16.msra.mxu0 0
        %993 = vmatprep.subr.bf16.mxu0 0
        %994 = vmatpush1.bf16.msra.mxu0 0
        %995 = vmatprep.subr.bf16.mxu0 0
        %996 = vmatpush1.bf16.msra.mxu0 0
        %997 = vmatprep.subr.bf16.mxu0 0
        %998 = vmatpush1.bf16.msra.mxu0 0
        %999 = vmatprep.subr.bf16.mxu0 0
        %1000 = vmatpush1.bf16.msra.mxu0 0
        %1001 = vmatprep.subr.bf16.mxu0 0
        %1002 = vmatpush1.bf16.msra.mxu0 0
        %1003 = vmatprep.mubr.bf16.mxu0 0
        %1004 = vmatmul.mubr.bf16.gmra.mrb[0].mxu0 %v966
        %v1005 = vpop.f32.mrb[0].mxu0
        %v1006 = vadd.f32 0.0, %v1005
        %v1007 = vpop.f32.mrb[0].mxu0
        %v1008 = vpop.f32.mrb[0].mxu0
        %v1009 = vpop.f32.mrb[0].mxu0
        %1010 = vdwg.mxu0
        %v1011 = vadd.f32 %v961, %v1006
        %1012 = vst.msk [vmem:[%s954] sm:$0xff] %vm624, %v1011
        %1013 = vrot.lane.b32.xlu0 %v753, 104
        %v1014 = vpop.permute.xlu0 %1013
        %1015 = vrot.lane.b32.xlu0 %v620, 104
        %v1016 = vpop.permute.xlu0 %1015
        %v1018 = vsel %vm624, %v1014, 0
        %v1021 = vsel %vm624, %v1016, 0
        %1023 = vmatprep.subr.bf16.mxu0 0
        %1024 = vmatpush1.bf16.xpose.msra.mxu0 %v1021
        %1025 = vmatprep.subr.bf16.mxu0 0
        %1026 = vmatpush1.bf16.xpose.msra.mxu0 0
        %1027 = vmatprep.subr.bf16.mxu0 0
        %1028 = vmatpush1.bf16.xpose.msra.mxu0 0
        %1029 = vmatprep.subr.bf16.mxu0 0
        %1030 = vmatpush1.bf16.xpose.msra.mxu0 0
        %1031 = vmatprep.subr.bf16.mxu0 0
        %1032 = vmatpush1.bf16.xpose.msra.mxu0 0
        %1033 = vmatprep.subr.bf16.mxu0 0
        %1034 = vmatpush1.bf16.xpose.msra.mxu0 0
        %1035 = vmatprep.subr.bf16.mxu0 0
        %1036 = vmatpush1.bf16.xpose.msra.mxu0 0
        %1037 = vmatprep.subr.bf16.mxu0 0
        %1038 = vmatpush1.bf16.xpose.msra.mxu0 0
        %1039 = vmatprep.subr.bf16.mxu0 0
        %1040 = vmatpush1.bf16.xpose.msra.mxu0 0
        %1041 = vmatprep.subr.bf16.mxu0 0
        %1042 = vmatpush1.bf16.xpose.msra.mxu0 0
        %1043 = vmatprep.subr.bf16.mxu0 0
        %1044 = vmatpush1.bf16.xpose.msra.mxu0 0
        %1045 = vmatprep.subr.bf16.mxu0 0
        %1046 = vmatpush1.bf16.xpose.msra.mxu0 0
        %1047 = vmatprep.subr.bf16.mxu0 0
        %1048 = vmatpush1.bf16.xpose.msra.mxu0 0
        %1049 = vmatprep.subr.bf16.mxu0 0
        %1050 = vmatpush1.bf16.xpose.msra.mxu0 0
        %1051 = vmatprep.subr.bf16.mxu0 0
        %1052 = vmatpush1.bf16.xpose.msra.mxu0 0
        %1053 = vmatprep.subr.bf16.mxu0 0
        %1054 = vmatpush1.bf16.xpose.msra.mxu0 0
        %1055 = vmatprep.mubr.bf16.mxu0 0
        %1056 = vmatmul.mubr.bf16.gmra.mrb[0].mxu0 %v1018
        %v1057 = vpop.f32.mrb[0].mxu0
        %v1058 = vadd.f32 0.0, %v1057
        %v1059 = vpop.f32.mrb[0].mxu0
        %v1060 = vpop.f32.mrb[0].mxu0
        %v1061 = vpop.f32.mrb[0].mxu0
        %1062 = vdwg.mxu0
        %v1063 = vsel %vm671, %v1058, -inf
        %1064 = vmax.xlane.f32.xlu0 %v1063
        %v1065 = vpop.xlane.xlu0 %1064
        %v1066 = vmax.f32 %v622, %v1065
        %v1067 = vsub.f32 %v622, %v1066
        %v1068 = vmul.f32 %v1067, 1.442695
        %v1069 = vpow.pop %v1068
        %1071 = vset.pattern.permute.xlu0 3
        %1072 = vperm.xlu0 %1071, %v1066
        %v1073 = vpop.permute.xlu0 %1072
        %v1075 = vsub.f32 %v1058, %v1073
        %v1076 = vmul.f32 %v1075, 1.442695
        %v1077 = vpow.pop %v1076
        %v1078 = vmul.f32 %v1069, %v623
        %v1079 = vsel %vm671, %v1077, 0.0
        %1080 = vadd.xlane.f32.xlu0 %v1079
        %v1081 = vpop.xlane.xlu0 %1080
        %v1082 = vadd.f32 %v1078, %v1081
        %s1083 = scalar_lea.vmem [#allocation5], 24
        %v1084 = vld [vmem:[%s1083] sm:$0xff]
        %1086 = vset.pattern.permute.xlu0 3
        %1087 = vperm.xlu0 %1086, %v1069
        %v1088 = vpop.permute.xlu0 %1087
        %v1090 = vmul.f32 %v1088, %v1084
        %v1091 = vpack.c.bf16 %v1077, %v1077
        %1092 = vrot.lane.b32.xlu0 %v550, 72
        %v1093 = vpop.permute.xlu0 %1092
        %v1095 = vsel %vm671, %v1091, 0
        %v1098 = vsel %vm705, %v1093, 0
        %1100 = vmatprep.subr.bf16.mxu0 0
        %1101 = vmatpush1.bf16.msra.mxu0 %v1098
        %1102 = vmatprep.subr.bf16.mxu0 0
        %1103 = vmatpush1.bf16.msra.mxu0 0
        %1104 = vmatprep.subr.bf16.mxu0 0
        %1105 = vmatpush1.bf16.msra.mxu0 0
        %1106 = vmatprep.subr.bf16.mxu0 0
        %1107 = vmatpush1.bf16.msra.mxu0 0
        %1108 = vmatprep.subr.bf16.mxu0 0
        %1109 = vmatpush1.bf16.msra.mxu0 0
        %1110 = vmatprep.subr.bf16.mxu0 0
        %1111 = vmatpush1.bf16.msra.mxu0 0
        %1112 = vmatprep.subr.bf16.mxu0 0
        %1113 = vmatpush1.bf16.msra.mxu0 0
        %1114 = vmatprep.subr.bf16.mxu0 0
        %1115 = vmatpush1.bf16.msra.mxu0 0
        %1116 = vmatprep.subr.bf16.mxu0 0
        %1117 = vmatpush1.bf16.msra.mxu0 0
        %1118 = vmatprep.subr.bf16.mxu0 0
        %1119 = vmatpush1.bf16.msra.mxu0 0
        %1120 = vmatprep.subr.bf16.mxu0 0
        %1121 = vmatpush1.bf16.msra.mxu0 0
        %1122 = vmatprep.subr.bf16.mxu0 0
        %1123 = vmatpush1.bf16.msra.mxu0 0
        %1124 = vmatprep.subr.bf16.mxu0 0
        %1125 = vmatpush1.bf16.msra.mxu0 0
        %1126 = vmatprep.subr.bf16.mxu0 0
        %1127 = vmatpush1.bf16.msra.mxu0 0
        %1128 = vmatprep.subr.bf16.mxu0 0
        %1129 = vmatpush1.bf16.msra.mxu0 0
        %1130 = vmatprep.subr.bf16.mxu0 0
        %1131 = vmatpush1.bf16.msra.mxu0 0
        %1132 = vmatprep.mubr.bf16.mxu0 0
        %1133 = vmatmul.mubr.bf16.gmra.mrb[0].mxu0 %v1095
        %v1134 = vpop.f32.mrb[0].mxu0
        %v1135 = vadd.f32 0.0, %v1134
        %v1136 = vpop.f32.mrb[0].mxu0
        %v1137 = vpop.f32.mrb[0].mxu0
        %v1138 = vpop.f32.mrb[0].mxu0
        %1139 = vdwg.mxu0
        %v1140 = vadd.f32 %v1090, %v1135
        %1141 = vst.msk [vmem:[%s1083] sm:$0xff] %vm624, %v1140
        %vm1142 = vcmask 7168
        %v1143 = vsel %vm1142, %v675, %v808
        %vm1144 = vcmask 15360
        %v1145 = vsel %vm1144, %v1143, %v937
        %vm1146 = vcmask 23552
        %v1147 = vsel %vm1146, %v1145, %v1066
        %vm1148 = vcmask 31744
        %1149 = vst.msk [vmem:[#allocation3] sm:$0xff] %vm1148, %v1147
        %v1150 = vsel %vm1142, %v691, %v824
        %v1151 = vsel %vm1144, %v1150, %v953
        %v1152 = vsel %vm1146, %v1151, %v1082
        %1153 = vst.msk [vmem:[#allocation4] sm:$0xff] %vm1148, %v1152
        // Predicated region
        $region81: #{conditional_transformer.24} parent=47 // pred_check
          %p1154 = pneg %p466
        $region82: #{conditional_transformer.24} parent=47 // pred_check_branch
          %1156 = sbr.rel (%p1154) target = $region84
        $region83: #{conditional_transformer.24} parent=47 // pred_region
          %v1157 = vld [vmem:[#allocation4] sm:$0xff]
          %v1158 = vrcp.pop %v1157
          %v1159 = vld [vmem:[#allocation5] sm:$0xff]
          %1161 = vset.pattern.permute.xlu0 0
          %1162 = vperm.xlu0 %1161, %v1158
          %v1163 = vpop.permute.xlu0 %1162
          %v1165 = vmul.f32 %v1159, %v1163
          %v1166 = vld [vmem:[%s825] sm:$0xff]
          %1167 = vset.pattern.permute.xlu0 1
          %1168 = vperm.xlu0 %1167, %v1158
          %v1169 = vpop.permute.xlu0 %1168
          %v1171 = vmul.f32 %v1166, %v1169
          %v1172 = vld [vmem:[%s954] sm:$0xff]
          %1173 = vset.pattern.permute.xlu0 2
          %1174 = vperm.xlu0 %1173, %v1158
          %v1175 = vpop.permute.xlu0 %1174
          %v1177 = vmul.f32 %v1172, %v1175
          %v1178 = vld [vmem:[%s1083] sm:$0xff]
          %1179 = vset.pattern.permute.xlu0 3
          %1180 = vperm.xlu0 %1179, %v1158
          %v1181 = vpop.permute.xlu0 %1180
          %v1183 = vmul.f32 %v1178, %v1181
          %1185 = vrot.lane.b32.xlu0 %v1171, 8
          %v1186 = vpop.permute.xlu0 %1185
          %1189 = vrot.lane.b32.xlu0 %v1177, 16
          %v1190 = vpop.permute.xlu0 %1189
          %1193 = vrot.lane.b32.xlu0 %v1183, 24
          %v1194 = vpop.permute.xlu0 %1193
          %v1196 = vsel %vm624, %v1165, %v1186
          %vm1197 = vcmask 130048
          %v1198 = vsel %vm1197, %v1196, %v1190
          %vm1199 = vcmask 195584
          %v1200 = vsel %vm1199, %v1198, %v1194
          %v1201 = vpack.c.bf16 %v1200, %v1200
          %vm1202 = vcmask 257024
          %1203 = vst.msk [vmem:[%s457] sm:$0xf] %vm1202, %v1201
        $region84: #{conditional_transformer.24} parent=47 // pred_fallthru
          _
        %s1204 = sand.u32 %s237, 1
        %s1205 = scalar_lea.sflag [#allocation8], %s1204
        %s1206 = sand.u32 %s237, 1
        %s1207 = smul.addr %s1206, 4
        %s1208 = scalar_lea.vmem [#allocation18], %s1207
        // Predicated region
        $region85: #{conditional_transformer.24} parent=47 // pred_check
          %p1209 = pneg %p247
        $region86: #{conditional_transformer.24} parent=47 // pred_check_branch
          %1211 = sbr.rel (%p1209) target = $region88
        $region87: #{conditional_transformer.24} parent=47 // pred_region
          %s1213 = ssub.s32 64, 64
          %1214 = vsyncadd %s1205, %s1213
          %s1215 = sadd.s32 %s33, %s32
          %s1216 = smul.addr %s1215, 64
          %s1217 = scalar_lea.hbm %s7, %s1216
          %s1219 = sshll.u32 %s1208, 4
          %s1220 = int_to_ptr.vmem [resolvable:$true] %s1219
          %1222 = dma.vmem_to_hbm [thread:$0]  %s1220, 64, %s1217, %s1205
        $region88: #{conditional_transformer.24} parent=47 // pred_fallthru
          _
      $region48: #{conditional_transformer.24} parent=5 // pred_fallthru
        _
      %p1223 = scmp.le.s32.totalorder 2, %s22
      // Predicated region
      $region89: #{conditional_transformer.24} parent=5 // pred_check
        %p1224 = pneg %p1223
      $region90: #{conditional_transformer.24} parent=5 // pred_check_branch
        %1226 = sbr.rel (%p1224) target = $region92
      $region91: #{conditional_transformer.24} parent=5 // pred_region
        %s1227 = ssub.s32 %s22, 2
        // Predicated region
        $region93: #{conditional_transformer.24} parent=91 // pred_check
          %p1228 = pneg %p253
        $region94: #{conditional_transformer.24} parent=91 // pred_check_branch
          %1230 = sbr.rel (%p1228) target = $region96
        $region95: #{conditional_transformer.24} parent=91 // pred_region
          %s1231 = sand.u32 %s238, 1
          %s1232 = scalar_lea.sflag [#allocation8], %s1231
          %s1233 = sand.u32 %s238, 1
          %s1234 = smul.addr %s1233, 4
          %s1235 = scalar_lea.vmem [#allocation18], %s1234
          %1236 = dma.done %s1232, 64
        $region96: #{conditional_transformer.24} parent=91 // pred_fallthru
          _
      $region92: #{conditional_transformer.24} parent=5 // pred_fallthru
        _
    $region6: #{conditional_transformer.24} parent=1 // loop_footer
      %s26 = sadd.s32 1, %s22
    $region7: #{conditional_transformer.24} parent=1 // loop_footer_branch
      %21 = sbr.rel target = $region3
    $region8: #{conditional_transformer.24} parent=1 // loop_exit
      _
    %1237 = vsyncpa [#allocation7], 1
    %s1238 = scalar_lea.sflag [#allocation7], 1
    %1239 = vsyncpa %s1238, 1
    %1240 = vsyncpa [#allocation10], 1
    %s1241 = scalar_lea.sflag [#allocation10], 1
    %1242 = vsyncpa %s1241, 1
    %1243 = vsyncpa [#allocation13], 1
    %1244 = vsyncpa [#allocation16], 1
    %1245 = vsyncpa [#allocation8], 1
    %s1246 = scalar_lea.sflag [#allocation8], 1
    %1247 = vsyncpa %s1246, 1

</llo_original>
